<compile_context>
chip_gen: v6e
topology: v6e:2x2x1
jax: 0.10.0
libtpu: 0.0.40
codegen_flags: <defaults>
</compile_context>

<pallas_src>
import functools
import math

import jax
import jax.numpy as jnp
from jax.experimental import pallas as pl
from jax.experimental.pallas import tpu as pltpu

MXU_DTYPE = jnp.bfloat16     # matmul operand dtype (accumulation always f32)
ACT_DTYPE = jnp.bfloat16     # inter-kernel activation dtype
LN_EPS = 1e-5                # PyTorch nn.LayerNorm default


def _vmem_limit_bytes():
    # Generation-aware scoped-VMEM budget: ~3/4 of physical VMEM, capped at 96 MiB
    # (v5e/v6e: 96 MiB, v7x: 48 MiB), with a conservative fallback.
    try:
        cap = pltpu.get_tpu_info().vmem_capacity_bytes
        return int(min(cap * 3 // 4, 96 * 1024 * 1024))
    except Exception:
        return 32 * 1024 * 1024


_VMEM_LIMIT = _vmem_limit_bytes()


def _cp(n_axes):
    return pltpu.CompilerParams(
        dimension_semantics=("parallel",) * n_axes,
        vmem_limit_bytes=_VMEM_LIMIT)


def _col_block(n, target=512):
    """Column tile for the vocab projection: largest multiple of 128 <= target dividing n,
    else the full dim (small / awkward vocabularies)."""
    if n <= target or n % 128 != 0:
        return n
    bn = (target // 128) * 128
    while bn >= 128:
        if n % bn == 0:
            return bn
        bn -= 128
    return n


# ----------------------------------------------------------------------------
# In-kernel helpers
# ----------------------------------------------------------------------------

def _mm(x, w_ref):
    # bf16 MXU matmul with f32 accumulation.
    return jnp.dot(x.astype(w_ref.dtype), w_ref[...], preferred_element_type=jnp.float32)


def _ln(z, g, b):
    mean = jnp.mean(z, axis=-1, keepdims=True)
    var = jnp.mean(jnp.square(z - mean), axis=-1, keepdims=True)
    return (z - mean) * jax.lax.rsqrt(var + LN_EPS) * g + b


def _attn_heads(q, k, v, wo, mask, n_heads):
    """q: (Lq, E), k/v: (Lk, E), wo: (E, E) out-projection weight (bf16),
    mask: additive f32 (Lq or 1, Lk) or None.
    Returns (Lq, E) f32 = concat_heads(softmax(q kT / sqrt(dh) + mask) v) @ wo (without bias),
    computed per head with the head output accumulated directly through its wo slice
    (no k.T transpose, no head concatenate)."""
    lq, e = q.shape
    dh = e // n_heads
    scale = jnp.float32(1.0 / math.sqrt(dh))
    out = jnp.zeros((lq, e), jnp.float32)
    for h in range(n_heads):
        sl = slice(h * dh, (h + 1) * dh)
        qh = q[:, sl].astype(MXU_DTYPE)
        kh = k[:, sl].astype(MXU_DTYPE)
        vh = v[:, sl].astype(MXU_DTYPE)
        # QK^T without materializing K^T: contract on the head dim directly.
        s = jax.lax.dot_general(qh, kh, (((1,), (1,)), ((), ())),
                                preferred_element_type=jnp.float32) * scale
        if mask is not None:
            s = s + mask
        m = jnp.max(s, axis=-1, keepdims=True)
        m = jnp.where(m == -jnp.inf, jnp.float32(0.0), m)        # fully-masked-row guard
        p = jnp.exp(s - m)
        denom = jnp.sum(p, axis=-1, keepdims=True)
        denom = jnp.where(denom == 0.0, jnp.float32(1.0), denom)  # avoid 0*inf -> NaN
        p = p * pl.reciprocal(denom, approx=True)                  # EUP reciprocal
        pv = jnp.dot(p.astype(MXU_DTYPE), vh, preferred_element_type=jnp.float32)
        out = out + jnp.dot(pv.astype(MXU_DTYPE), wo[sl, :],
                            preferred_element_type=jnp.float32)
    return out


# ----------------------------------------------------------------------------
# Pallas kernels (one per transformer layer / small epilogues)
# ----------------------------------------------------------------------------

def _encoder_layer_kernel(n_heads,
                          x_ref, causal_ref, pad_ref,
                          w_qkv_ref, b_qkv_ref, wo_ref, bo_ref, g1_ref, be1_ref,
                          w1_ref, b1_ref, w2_ref, b2_ref, g2_ref, be2_ref,
                          o_ref):
    e = x_ref.shape[-1]
    x = x_ref[0].astype(jnp.float32)                  # (S, E)
    mask = causal_ref[0] + pad_ref[0]                 # (S, S) + (1, S) -> (S, S) additive
    # --- self-attention sub-layer (post-norm) ---
    qkv = _mm(x, w_qkv_ref) + b_qkv_ref[...]          # fused (E, 3E) projection
    attn = _attn_heads(qkv[:, :e], qkv[:, e:2 * e], qkv[:, 2 * e:],
                       wo_ref[...], mask, n_heads) + bo_ref[...]
    x = _ln(x + attn, g1_ref[...], be1_ref[...])
    # --- FFN sub-layer ---
    h = jnp.maximum(_mm(x, w1_ref) + b1_ref[...], 0.0)
    y = _mm(h, w2_ref) + b2_ref[...]
    o_ref[0] = _ln(x + y, g2_ref[...], be2_ref[...]).astype(o_ref.dtype)


def _decoder_layer_kernel(n_heads,
                          y_ref, mem_ref, pad_ref,
                          w_qkv_ref, b_qkv_ref, wo_ref, bo_ref, g1_ref, be1_ref,
                          wq_ref, bq_ref, wkv_ref, bkv_ref, wo2_ref, bo2_ref, g2_ref, be2_ref,
                          w1_ref, b1_ref, w2_ref, b2_ref, g3_ref, be3_ref,
                          o_ref):
    e = y_ref.shape[-1]
    x = y_ref[0].astype(jnp.float32)                  # (T, E)
    mask = pad_ref[0]                                 # (1, T) additive (no decoder attn_mask)
    # --- self-attention sub-layer ---
    qkv = _mm(x, w_qkv_ref) + b_qkv_ref[...]
    attn = _attn_heads(qkv[:, :e], qkv[:, e:2 * e], qkv[:, 2 * e:],
                       wo_ref[...], mask, n_heads) + bo_ref[...]
    x = _ln(x + attn, g1_ref[...], be1_ref[...])
    # --- cross-attention sub-layer (memory masks are None in the module) ---
    q2 = _mm(x, wq_ref) + bq_ref[...]
    kv = _mm(mem_ref[0], wkv_ref) + bkv_ref[...]
    attn2 = _attn_heads(q2, kv[:, :e], kv[:, e:],
                        wo2_ref[...], None, n_heads) + bo2_ref[...]
    x = _ln(x + attn2, g2_ref[...], be2_ref[...])
    # --- FFN sub-layer ---
    h = jnp.maximum(_mm(x, w1_ref) + b1_ref[...], 0.0)
    y = _mm(h, w2_ref) + b2_ref[...]
    o_ref[0] = _ln(x + y, g3_ref[...], be3_ref[...]).astype(o_ref.dtype)


def _ln_kernel(x_ref, g_ref, b_ref, o_ref):
    o_ref[0] = _ln(x_ref[0].astype(jnp.float32), g_ref[...], b_ref[...]).astype(o_ref.dtype)


def _ln_linear_kernel(x_ref, g_ref, b_ref, w_ref, bias_ref, o_ref):
    # Fused final decoder LayerNorm + vocabulary projection (column-tiled weight).
    xn = _ln(x_ref[0].astype(jnp.float32), g_ref[...], b_ref[...])
    o_ref[0] = (_mm(xn, w_ref) + bias_ref[...]).astype(o_ref.dtype)


# ----------------------------------------------------------------------------
# Kernel wrappers
# ----------------------------------------------------------------------------

def encoder_layer(x, causal, pad, p, n_heads):
    B, S, E = x.shape
    F = p["ff_w1"].shape[-1]
    row = lambda b: (b, 0, 0)
    c2 = lambda b: (0, 0)
    c3 = lambda b: (0, 0, 0)
    in_specs = [
        pl.BlockSpec((1, S, E), row),          # x
        pl.BlockSpec((1, S, S), c3),           # causal mask (batch-invariant)
        pl.BlockSpec((1, 1, S), row),          # key-padding mask (per batch)
        pl.BlockSpec((E, 3 * E), c2), pl.BlockSpec((1, 3 * E), c2),     # qkv
        pl.BlockSpec((E, E), c2), pl.BlockSpec((1, E), c2),             # out proj
        pl.BlockSpec((1, E), c2), pl.BlockSpec((1, E), c2),             # norm1
        pl.BlockSpec((E, F), c2), pl.BlockSpec((1, F), c2),             # ffn w1
        pl.BlockSpec((F, E), c2), pl.BlockSpec((1, E), c2),             # ffn w2
        pl.BlockSpec((1, E), c2), pl.BlockSpec((1, E), c2),             # norm2
    ]
    return pl.pallas_call(
        functools.partial(_encoder_layer_kernel, n_heads),
        out_shape=jax.ShapeDtypeStruct((B, S, E), ACT_DTYPE),
        grid=(B,), in_specs=in_specs,
        out_specs=pl.BlockSpec((1, S, E), row),
        compiler_params=_cp(1),
    )(x, causal, pad,
      p["w_qkv"], p["b_qkv"], p["wo"], p["bo"], p["norm1_g"], p["norm1_b"],
      p["ff_w1"], p["ff_b1"], p["ff_w2"], p["ff_b2"], p["norm2_g"], p["norm2_b"])


def decoder_layer(y, memory, pad, p, n_heads):
    B, T, E = y.shape
    S = memory.shape[1]
    F = p["ff_w1"].shape[-1]
    row = lambda b: (b, 0, 0)
    c2 = lambda b: (0, 0)
    in_specs = [
        pl.BlockSpec((1, T, E), row),          # y
        pl.BlockSpec((1, S, E), row),          # memory
        pl.BlockSpec((1, 1, T), row),          # key-padding mask (per batch)
        pl.BlockSpec((E, 3 * E), c2), pl.BlockSpec((1, 3 * E), c2),     # self-attn qkv
        pl.BlockSpec((E, E), c2), pl.BlockSpec((1, E), c2),             # self-attn out
        pl.BlockSpec((1, E), c2), pl.BlockSpec((1, E), c2),             # norm1
        pl.BlockSpec((E, E), c2), pl.BlockSpec((1, E), c2),             # cross q
        pl.BlockSpec((E, 2 * E), c2), pl.BlockSpec((1, 2 * E), c2),     # cross kv
        pl.BlockSpec((E, E), c2), pl.BlockSpec((1, E), c2),             # cross out
        pl.BlockSpec((1, E), c2), pl.BlockSpec((1, E), c2),             # norm2
        pl.BlockSpec((E, F), c2), pl.BlockSpec((1, F), c2),             # ffn w1
        pl.BlockSpec((F, E), c2), pl.BlockSpec((1, E), c2),             # ffn w2
        pl.BlockSpec((1, E), c2), pl.BlockSpec((1, E), c2),             # norm3
    ]
    return pl.pallas_call(
        functools.partial(_decoder_layer_kernel, n_heads),
        out_shape=jax.ShapeDtypeStruct((B, T, E), ACT_DTYPE),
        grid=(B,), in_specs=in_specs,
        out_specs=pl.BlockSpec((1, T, E), row),
        compiler_params=_cp(1),
    )(y, memory, pad,
      p["w_qkv"], p["b_qkv"], p["wo"], p["bo"], p["norm1_g"], p["norm1_b"],
      p["ca_wq"], p["ca_bq"], p["ca_wkv"], p["ca_bkv"], p["ca_wo"], p["ca_bo"],
      p["norm2_g"], p["norm2_b"],
      p["ff_w1"], p["ff_b1"], p["ff_w2"], p["ff_b2"], p["norm3_g"], p["norm3_b"])


def layernorm(x, g, b):
    B, L, E = x.shape
    return pl.pallas_call(
        _ln_kernel,
        out_shape=jax.ShapeDtypeStruct((B, L, E), ACT_DTYPE),
        grid=(B,),
        in_specs=[pl.BlockSpec((1, L, E), lambda i: (i, 0, 0)),
                  pl.BlockSpec((1, E), lambda i: (0, 0)),
                  pl.BlockSpec((1, E), lambda i: (0, 0))],
        out_specs=pl.BlockSpec((1, L, E), lambda i: (i, 0, 0)),
        compiler_params=_cp(1),
    )(x, g, b)


def ln_predict(x, g, b, w, bias):
    """logits = LayerNorm(x) @ w + bias, tiled over vocabulary columns."""
    B, L, E = x.shape
    V = w.shape[-1]
    bn = _col_block(V)
    return pl.pallas_call(
        _ln_linear_kernel,
        out_shape=jax.ShapeDtypeStruct((B, L, V), jnp.float32),
        grid=(B, V // bn),
        in_specs=[pl.BlockSpec((1, L, E), lambda i, j: (i, 0, 0)),
                  pl.BlockSpec((1, E), lambda i, j: (0, 0)),
                  pl.BlockSpec((1, E), lambda i, j: (0, 0)),
                  pl.BlockSpec((E, bn), lambda i, j: (0, j)),
                  pl.BlockSpec((1, bn), lambda i, j: (0, j))],
        out_specs=pl.BlockSpec((1, L, bn), lambda i, j: (i, 0, j)),
        compiler_params=_cp(2),
    )(x, g, b, w, bias)


# ----------------------------------------------------------------------------
# Forward pass (nn.Transformer defaults: post-norm, ReLU FFN, final stack norms)
# ----------------------------------------------------------------------------

def seq2seq_trans_forward(params, enc_inp, dec_inp, tgt_mask,
                          tgt_key_padding_mask, src_key_padding_mask, n_heads):
    # The module's (buggy but real) mask routing requires src_len == tgt_len.
    assert enc_inp.shape[1] == dec_inp.shape[1], "Seq2SeqTrans mask routing needs S == T"
    S, T = enc_inp.shape[1], dec_inp.shape[1]
    pe = params["pe"]

    # Embedding gather + positional add left to XLA (gather + one VPU add); a dedicated
    # pallas_call here was pure launch/DMA overhead.
    enc_x = (jnp.take(params["enc_emb"], enc_inp, axis=0) + pe[:S][None]).astype(ACT_DTYPE)
    dec_x = (jnp.take(params["dec_emb"], dec_inp, axis=0) + pe[:T][None]).astype(ACT_DTYPE)

    neg_inf = jnp.float32(-jnp.inf)
    # --- mask routing exactly as in Seq2SeqTrans.forward ---
    # encoder self-attn: src_mask = caller's tgt_mask (causal), src_key_padding = tgt_key_padding
    causal = tgt_mask.astype(jnp.float32)[None]                                  # (1, S, S)
    enc_pad = jnp.where(tgt_key_padding_mask[:, None, :], neg_inf, 0.0)          # (B, 1, S)
    # decoder self-attn: no attn_mask, tgt_key_padding = caller's src_key_padding
    dec_pad = jnp.where(src_key_padding_mask[:, None, :], neg_inf, 0.0)          # (B, 1, T)
    # cross-attention: no masks

    # Encoder stack + final norm
    x = enc_x
    for p in params["enc_layers"]:
        x = encoder_layer(x, causal, enc_pad, p, n_heads)
    memory = layernorm(x, params["enc_norm_g"], params["enc_norm_b"])

    # Decoder stack; final decoder norm is fused into the prediction head
    y = dec_x
    for p in params["dec_layers"]:
        y = decoder_layer(y, memory, dec_pad, p, n_heads)

    return ln_predict(y, params["dec_norm_g"], params["dec_norm_b"],
                      params["pred_w"], params["pred_b"])


# ----------------------------------------------------------------------------
# Deterministic parameter construction
# ----------------------------------------------------------------------------

def make_positional_encoding(max_len, emb_size):
    position = jnp.arange(max_len, dtype=jnp.float32).reshape(max_len, 1)
    den = jnp.exp(jnp.arange(0, emb_size, 2, dtype=jnp.float32)
                  * -(math.log(10000.0) / emb_size))
    pe = jnp.zeros((max_len, emb_size), jnp.float32)
    pe = pe.at[:, 0::2].set(jnp.sin(position * den))
    pe = pe.at[:, 1::2].set(jnp.cos(position * den))
    return pe


def init_params(key, input_dim, output_dim, emb_size, n_heads, num_layers, max_len=64):
    keys = iter(jax.random.split(key, 4096))

    def w(shape, scale=0.05, dtype=MXU_DTYPE):
        return (scale * jax.random.normal(next(keys), shape, jnp.float32)).astype(dtype)

    def zeros(n):
        return jnp.zeros((1, n), jnp.float32)

    def ones(n):
        return jnp.ones((1, n), jnp.float32)

    ff = 4 * emb_size

    def enc_layer():
        return dict(
            w_qkv=w((emb_size, 3 * emb_size)), b_qkv=zeros(3 * emb_size),
            wo=w((emb_size, emb_size)), bo=zeros(emb_size),
            norm1_g=ones(emb_size), norm1_b=zeros(emb_size),
            ff_w1=w((emb_size, ff)), ff_b1=zeros(ff),
            ff_w2=w((ff, emb_size)), ff_b2=zeros(emb_size),
            norm2_g=ones(emb_size), norm2_b=zeros(emb_size))

    def dec_layer():
        d = enc_layer()
        d.update(
            ca_wq=w((emb_size, emb_size)), ca_bq=zeros(emb_size),
            ca_wkv=w((emb_size, 2 * emb_size)), ca_bkv=zeros(2 * emb_size),
            ca_wo=w((emb_size, emb_size)), ca_bo=zeros(emb_size),
            norm3_g=ones(emb_size), norm3_b=zeros(emb_size))
        return d

    return dict(
        enc_emb=w((input_dim, emb_size), scale=1.0, dtype=jnp.float32),
        dec_emb=w((output_dim, emb_size), scale=1.0, dtype=jnp.float32),
        pe=make_positional_encoding(max_len, emb_size),
        enc_layers=[enc_layer() for _ in range(num_layers)],
        dec_layers=[dec_layer() for _ in range(num_layers)],
        enc_norm_g=ones(emb_size), enc_norm_b=zeros(emb_size),
        dec_norm_g=ones(emb_size), dec_norm_b=zeros(emb_size),
        pred_w=w((emb_size, output_dim)), pred_b=zeros(output_dim))


# ----------------------------------------------------------------------------
# Demo
# ----------------------------------------------------------------------------

if __name__ == "__main__":
    input_dim, output_dim = 16, 17
    emb_size, n_heads, num_layers = 32, 4, 2
    B, S, T = 2, 8, 8  # S == T required by the module's mask routing

    key = jax.random.PRNGKey(0)
    k_par, k_enc, k_dec = jax.random.split(key, 3)
    params = init_params(k_par, input_dim, output_dim, emb_size, n_heads, num_layers)

    enc_inp = jax.random.randint(k_enc, (B, S), 0, input_dim, dtype=jnp.int32)
    dec_inp = jax.random.randint(k_dec, (B, T), 0, output_dim, dtype=jnp.int32)

    # Causal float mask (like nn.Transformer.generate_square_subsequent_mask)
    tgt_mask = jnp.where(jnp.triu(jnp.ones((T, T), jnp.bool_), k=1),
                         jnp.float32(-jnp.inf), jnp.float32(0.0))
    # Boolean key-padding masks (True = pad). Last position padded for batch 1 only.
    tgt_key_padding_mask = jnp.array(
        [[False] * S, [False] * (S - 1) + [True]], dtype=jnp.bool_)
    src_key_padding_mask = jnp.array(
        [[False] * T, [False] * (T - 1) + [True]], dtype=jnp.bool_)

    fwd = jax.jit(functools.partial(seq2seq_trans_forward, n_heads=n_heads))
    out = fwd(params, enc_inp, dec_inp, tgt_mask,
              tgt_key_padding_mask, src_key_padding_mask)
    out = jax.block_until_ready(out)

    assert out.shape == (B, T, output_dim), out.shape
    assert bool(jnp.all(jnp.isfinite(out)))
    print("KERNEL_OK")
</pallas_src>

<mosaic_0001>
module attributes {stable_mosaic.version = 11 : i64} {
  func.func @_ln_kernel(%arg0: i32, %arg1: memref<1x8x32xbf16, #tpu.memory_space<vmem>>, %arg2: memref<1x32xf32, #tpu.memory_space<vmem>>, %arg3: memref<1x32xf32, #tpu.memory_space<vmem>>, %arg4: memref<1x8x32xbf16, #tpu.memory_space<vmem>>) attributes {dimension_semantics = [#tpu.dimension_semantics<parallel>], iteration_bounds = array<i64: 2>, scalar_prefetch = 0 : i64, scratch_operands = 0 : i64, tpu.core_type = #tpu.core_type<tc>, window_params = [{transform_indices = @transform_0, window_bounds = array<i64: 1, 8, 32>}, {pipeline_mode = #tpu.pipeline_mode<synchronous>, transform_indices = @transform_1, window_bounds = array<i64: 1, 32>}, {pipeline_mode = #tpu.pipeline_mode<synchronous>, transform_indices = @transform_2, window_bounds = array<i64: 1, 32>}, {transform_indices = @transform_3, window_bounds = array<i64: 1, 8, 32>}]} {
    %c0 = arith.constant 0 : index
    %c0_0 = arith.constant 0 : index
    %c0_1 = arith.constant 0 : index
    %0 = vector.load %arg1[%c0, %c0_0, %c0_1] : memref<1x8x32xbf16, #tpu.memory_space<vmem>>, vector<1x8x32xbf16>
    %1 = vector.shape_cast %0 : vector<1x8x32xbf16> to vector<8x32xbf16>
    %2 = arith.extf %1 : vector<8x32xbf16> to vector<8x32xf32>
    %c0_2 = arith.constant 0 : index
    %c0_3 = arith.constant 0 : index
    %3 = vector.load %arg2[%c0_2, %c0_3] : memref<1x32xf32, #tpu.memory_space<vmem>>, vector<1x32xf32>
    %c0_4 = arith.constant 0 : index
    %c0_5 = arith.constant 0 : index
    %4 = vector.load %arg3[%c0_4, %c0_5] : memref<1x32xf32, #tpu.memory_space<vmem>>, vector<1x32xf32>
    %cst = arith.constant dense<0.000000e+00> : vector<8xf32>
    %5 = vector.multi_reduction <add>, %2, %cst [1] : vector<8x32xf32> to vector<8xf32>
    %6 = vector.shape_cast %5 : vector<8xf32> to vector<8x1xf32>
    %cst_6 = arith.constant 3.200000e+01 : f32
    %7 = vector.broadcast %cst_6 : f32 to vector<8x1xf32>
    %8 = arith.divf %6, %7 : vector<8x1xf32>
    %9 = vector.broadcast %8 : vector<8x1xf32> to vector<8x32xf32>
    %10 = arith.subf %2, %9 : vector<8x32xf32>
    %11 = arith.mulf %10, %10 : vector<8x32xf32>
    %cst_7 = arith.constant dense<0.000000e+00> : vector<8xf32>
    %12 = vector.multi_reduction <add>, %11, %cst_7 [1] : vector<8x32xf32> to vector<8xf32>
    %13 = vector.shape_cast %12 : vector<8xf32> to vector<8x1xf32>
    %cst_8 = arith.constant 3.200000e+01 : f32
    %14 = vector.broadcast %cst_8 : f32 to vector<8x1xf32>
    %15 = arith.divf %13, %14 : vector<8x1xf32>
    %16 = vector.broadcast %8 : vector<8x1xf32> to vector<8x32xf32>
    %17 = arith.subf %2, %16 : vector<8x32xf32>
    %cst_9 = arith.constant 9.99999974E-6 : f32
    %18 = vector.broadcast %cst_9 : f32 to vector<8x1xf32>
    %19 = arith.addf %15, %18 : vector<8x1xf32>
    %20 = math.rsqrt %19 : vector<8x1xf32>
    %21 = vector.broadcast %20 : vector<8x1xf32> to vector<8x32xf32>
    %22 = arith.mulf %17, %21 : vector<8x32xf32>
    %23 = vector.broadcast %3 : vector<1x32xf32> to vector<8x32xf32>
    %24 = arith.mulf %22, %23 : vector<8x32xf32>
    %25 = vector.broadcast %4 : vector<1x32xf32> to vector<8x32xf32>
    %26 = arith.addf %24, %25 : vector<8x32xf32>
    %27 = arith.truncf %26 : vector<8x32xf32> to vector<8x32xbf16>
    %c0_10 = arith.constant 0 : index
    %c0_11 = arith.constant 0 : index
    %c0_12 = arith.constant 0 : index
    %28 = vector.load %arg4[%c0_10, %c0_11, %c0_12] : memref<1x8x32xbf16, #tpu.memory_space<vmem>>, vector<1x8x32xbf16>
    %29 = vector.shape_cast %28 : vector<1x8x32xbf16> to vector<8x32xbf16>
    %30 = vector.shape_cast %27 : vector<8x32xbf16> to vector<1x8x32xbf16>
    tpu.vector_store %arg4[%c0_10, %c0_11, %c0_12], %30 {strides = array<i32>} : memref<1x8x32xbf16, #tpu.memory_space<vmem>>, vector<1x8x32xbf16>,
    return
  }
  func.func @transform_0(%arg0: i32) -> (i32, i32, i32) {
    %c0_i32 = arith.constant 0 : i32
    %c0_i32_0 = arith.constant 0 : i32
    %c0_i32_1 = arith.constant 0 : i32
    return %arg0, %c0_i32, %c0_i32_0 : i32, i32, i32
  }
  func.func @transform_1(%arg0: i32) -> (i32, i32) {
    %c0_i32 = arith.constant 0 : i32
    %c0_i32_0 = arith.constant 0 : i32
    %c0_i32_1 = arith.constant 0 : i32
    return %c0_i32, %c0_i32_0 : i32, i32
  }
  func.func @transform_2(%arg0: i32) -> (i32, i32) {
    %c0_i32 = arith.constant 0 : i32
    %c0_i32_0 = arith.constant 0 : i32
    %c0_i32_1 = arith.constant 0 : i32
    return %c0_i32, %c0_i32_0 : i32, i32
  }
  func.func @transform_3(%arg0: i32) -> (i32, i32, i32) {
    %c0_i32 = arith.constant 0 : i32
    %c0_i32_0 = arith.constant 0 : i32
    %c0_i32_1 = arith.constant 0 : i32
    return %arg0, %c0_i32, %c0_i32_0 : i32, i32, i32
  }
}

module attributes {stable_mosaic.version = 11 : i64} {
  func.func @_encoder_layer_kernel(%arg0: i32, %arg1: memref<1x8x32xbf16, #tpu.memory_space<vmem>>, %arg2: memref<1x8x8xf32, #tpu.memory_space<vmem>>, %arg3: memref<1x1x8xf32, #tpu.memory_space<vmem>>, %arg4: memref<32x96xbf16, #tpu.memory_space<vmem>>, %arg5: memref<1x96xf32, #tpu.memory_space<vmem>>, %arg6: memref<32x32xbf16, #tpu.memory_space<vmem>>, %arg7: memref<1x32xf32, #tpu.memory_space<vmem>>, %arg8: memref<1x32xf32, #tpu.memory_space<vmem>>, %arg9: memref<1x32xf32, #tpu.memory_space<vmem>>, %arg10: memref<32x128xbf16, #tpu.memory_space<vmem>>, %arg11: memref<1x128xf32, #tpu.memory_space<vmem>>, %arg12: memref<128x32xbf16, #tpu.memory_space<vmem>>, %arg13: memref<1x32xf32, #tpu.memory_space<vmem>>, %arg14: memref<1x32xf32, #tpu.memory_space<vmem>>, %arg15: memref<1x32xf32, #tpu.memory_space<vmem>>, %arg16: memref<1x8x32xbf16, #tpu.memory_space<vmem>>) attributes {dimension_semantics = [#tpu.dimension_semantics<parallel>], iteration_bounds = array<i64: 2>, scalar_prefetch = 0 : i64, scratch_operands = 0 : i64, tpu.core_type = #tpu.core_type<tc>, window_params = [{transform_indices = @transform_0, window_bounds = array<i64: 1, 8, 32>}, {pipeline_mode = #tpu.pipeline_mode<synchronous>, transform_indices = @transform_1, window_bounds = array<i64: 1, 8, 8>}, {transform_indices = @transform_2, window_bounds = array<i64: 1, 1, 8>}, {pipeline_mode = #tpu.pipeline_mode<synchronous>, transform_indices = @transform_3, window_bounds = array<i64: 32, 96>}, {pipeline_mode = #tpu.pipeline_mode<synchronous>, transform_indices = @transform_4, window_bounds = array<i64: 1, 96>}, {pipeline_mode = #tpu.pipeline_mode<synchronous>, transform_indices = @transform_5, window_bounds = array<i64: 32, 32>}, {pipeline_mode = #tpu.pipeline_mode<synchronous>, transform_indices = @transform_6, window_bounds = array<i64: 1, 32>}, {pipeline_mode = #tpu.pipeline_mode<synchronous>, transform_indices = @transform_7, window_bounds = array<i64: 1, 32>}, {pipeline_mode = #tpu.pipeline_mode<synchronous>, transform_indices = @transform_8, window_bounds = array<i64: 1, 32>}, {pipeline_mode = #tpu.pipeline_mode<synchronous>, transform_indices = @transform_9, window_bounds = array<i64: 32, 128>}, {pipeline_mode = #tpu.pipeline_mode<synchronous>, transform_indices = @transform_10, window_bounds = array<i64: 1, 128>}, {pipeline_mode = #tpu.pipeline_mode<synchronous>, transform_indices = @transform_11, window_bounds = array<i64: 128, 32>}, {pipeline_mode = #tpu.pipeline_mode<synchronous>, transform_indices = @transform_12, window_bounds = array<i64: 1, 32>}, {pipeline_mode = #tpu.pipeline_mode<synchronous>, transform_indices = @transform_13, window_bounds = array<i64: 1, 32>}, {pipeline_mode = #tpu.pipeline_mode<synchronous>, transform_indices = @transform_14, window_bounds = array<i64: 1, 32>}, {transform_indices = @transform_15, window_bounds = array<i64: 1, 8, 32>}]} {
    %c0 = arith.constant 0 : index
    %c0_0 = arith.constant 0 : index
    %c0_1 = arith.constant 0 : index
    %0 = vector.load %arg1[%c0, %c0_0, %c0_1] : memref<1x8x32xbf16, #tpu.memory_space<vmem>>, vector<1x8x32xbf16>
    %1 = vector.shape_cast %0 : vector<1x8x32xbf16> to vector<8x32xbf16>
    %2 = arith.extf %1 : vector<8x32xbf16> to vector<8x32xf32>
    %c0_2 = arith.constant 0 : index
    %c0_3 = arith.constant 0 : index
    %c0_4 = arith.constant 0 : index
    %3 = vector.load %arg2[%c0_2, %c0_3, %c0_4] : memref<1x8x8xf32, #tpu.memory_space<vmem>>, vector<1x8x8xf32>
    %4 = vector.shape_cast %3 : vector<1x8x8xf32> to vector<8x8xf32>
    %c0_5 = arith.constant 0 : index
    %c0_6 = arith.constant 0 : index
    %c0_7 = arith.constant 0 : index
    %5 = vector.load %arg3[%c0_5, %c0_6, %c0_7] : memref<1x1x8xf32, #tpu.memory_space<vmem>>, vector<1x1x8xf32>
    %6 = vector.shape_cast %5 : vector<1x1x8xf32> to vector<1x8xf32>
    %7 = vector.broadcast %6 : vector<1x8xf32> to vector<8x8xf32>
    %8 = arith.addf %4, %7 : vector<8x8xf32>
    %9 = arith.truncf %2 : vector<8x32xf32> to vector<8x32xbf16>
    %c0_8 = arith.constant 0 : index
    %c0_9 = arith.constant 0 : index
    %10 = vector.load %arg4[%c0_8, %c0_9] : memref<32x96xbf16, #tpu.memory_space<vmem>>, vector<32x96xbf16>
    %cst = arith.constant dense<0.000000e+00> : vector<8x96xf32>
    %11 = tpu.matmul %9, %10, %cst {dimension_numbers = #tpu.dot_dimension_numbers<[1], [0], [0], [1], [0, 0, 1, 1], [], []>} : vector<8x32xbf16>, vector<32x96xbf16>, vector<8x96xf32> -> vector<8x96xf32>
    %c0_10 = arith.constant 0 : index
    %c0_11 = arith.constant 0 : index
    %12 = vector.load %arg5[%c0_10, %c0_11] : memref<1x96xf32, #tpu.memory_space<vmem>>, vector<1x96xf32>
    %13 = vector.broadcast %12 : vector<1x96xf32> to vector<8x96xf32>
    %14 = arith.addf %11, %13 : vector<8x96xf32>
    %15 = vector.extract_strided_slice %14 {offsets = [0, 0], sizes = [8, 32], strides = [1, 1]} : vector<8x96xf32> to vector<8x32xf32>
    %16 = vector.extract_strided_slice %14 {offsets = [0, 32], sizes = [8, 32], strides = [1, 1]} : vector<8x96xf32> to vector<8x32xf32>
    %17 = vector.extract_strided_slice %14 {offsets = [0, 64], sizes = [8, 32], strides = [1, 1]} : vector<8x96xf32> to vector<8x32xf32>
    %c0_12 = arith.constant 0 : index
    %c0_13 = arith.constant 0 : index
    %18 = vector.load %arg6[%c0_12, %c0_13] : memref<32x32xbf16, #tpu.memory_space<vmem>>, vector<32x32xbf16>
    %cst_14 = arith.constant 0.000000e+00 : f32
    %19 = vector.broadcast %cst_14 : f32 to vector<8x32xf32>
    %20 = vector.extract_strided_slice %15 {offsets = [0, 0], sizes = [8, 8], strides = [1, 1]} : vector<8x32xf32> to vector<8x8xf32>
    %21 = arith.truncf %20 : vector<8x8xf32> to vector<8x8xbf16>
    %22 = vector.extract_strided_slice %16 {offsets = [0, 0], sizes = [8, 8], strides = [1, 1]} : vector<8x32xf32> to vector<8x8xf32>
    %23 = arith.truncf %22 : vector<8x8xf32> to vector<8x8xbf16>
    %24 = vector.extract_strided_slice %17 {offsets = [0, 0], sizes = [8, 8], strides = [1, 1]} : vector<8x32xf32> to vector<8x8xf32>
    %25 = arith.truncf %24 : vector<8x8xf32> to vector<8x8xbf16>
    %cst_15 = arith.constant dense<0.000000e+00> : vector<8x8xf32>
    %26 = tpu.matmul %21, %23, %cst_15 {dimension_numbers = #tpu.dot_dimension_numbers<[1], [1], [0], [0], [0, 0, 1, 0], [], []>} : vector<8x8xbf16>, vector<8x8xbf16>, vector<8x8xf32> -> vector<8x8xf32>
    %cst_16 = arith.constant 0.353553385 : f32
    %27 = vector.broadcast %cst_16 : f32 to vector<8x8xf32>
    %28 = arith.mulf %26, %27 : vector<8x8xf32>
    %29 = arith.addf %28, %8 : vector<8x8xf32>
    %cst_17 = arith.constant dense<0xFF800000> : vector<8xf32>
    %30 = vector.multi_reduction <maximumf>, %29, %cst_17 [1] : vector<8x8xf32> to vector<8xf32>
    %31 = vector.shape_cast %30 : vector<8xf32> to vector<8x1xf32>
    %cst_18 = arith.constant 0xFF800000 : f32
    %32 = vector.broadcast %cst_18 : f32 to vector<8x1xf32>
    %33 = arith.cmpf oeq, %31, %32 : vector<8x1xf32>
    %cst_19 = arith.constant 0.000000e+00 : f32
    %34 = vector.broadcast %cst_19 : f32 to vector<8x1xf32>
    %35 = arith.select %33, %34, %31 : vector<8x1xi1>, vector<8x1xf32>
    %36 = vector.broadcast %35 : vector<8x1xf32> to vector<8x8xf32>
    %37 = arith.subf %29, %36 : vector<8x8xf32>
    %38 = math.exp %37 : vector<8x8xf32>
    %cst_20 = arith.constant dense<0.000000e+00> : vector<8xf32>
    %39 = vector.multi_reduction <add>, %38, %cst_20 [1] : vector<8x8xf32> to vector<8xf32>
    %40 = vector.shape_cast %39 : vector<8xf32> to vector<8x1xf32>
    %cst_21 = arith.constant 0.000000e+00 : f32
    %41 = vector.broadcast %cst_21 : f32 to vector<8x1xf32>
    %42 = arith.cmpf oeq, %40, %41 : vector<8x1xf32>
    %cst_22 = arith.constant 1.000000e+00 : f32
    %43 = vector.broadcast %cst_22 : f32 to vector<8x1xf32>
    %44 = arith.select %42, %43, %40 : vector<8x1xi1>, vector<8x1xf32>
    %45 = tpu.reciprocal %44 {approx = true} : vector<8x1xf32> -> vector<8x1xf32>
    %46 = vector.broadcast %45 : vector<8x1xf32> to vector<8x8xf32>
    %47 = arith.mulf %38, %46 : vector<8x8xf32>
    %48 = arith.truncf %47 : vector<8x8xf32> to vector<8x8xbf16>
    %cst_23 = arith.constant dense<0.000000e+00> : vector<8x8xf32>
    %49 = tpu.matmul %48, %25, %cst_23 {dimension_numbers = #tpu.dot_dimension_numbers<[1], [0], [0], [1], [0, 0, 1, 1], [], []>} : vector<8x8xbf16>, vector<8x8xbf16>, vector<8x8xf32> -> vector<8x8xf32>
    %50 = arith.truncf %49 : vector<8x8xf32> to vector<8x8xbf16>
    %51 = vector.extract_strided_slice %18 {offsets = [0, 0], sizes = [8, 32], strides = [1, 1]} : vector<32x32xbf16> to vector<8x32xbf16>
    %cst_24 = arith.constant dense<0.000000e+00> : vector<8x32xf32>
    %52 = tpu.matmul %50, %51, %cst_24 {dimension_numbers = #tpu.dot_dimension_numbers<[1], [0], [0], [1], [0, 0, 1, 1], [], []>} : vector<8x8xbf16>, vector<8x32xbf16>, vector<8x32xf32> -> vector<8x32xf32>
    %53 = arith.addf %19, %52 : vector<8x32xf32>
    %54 = vector.extract_strided_slice %15 {offsets = [0, 8], sizes = [8, 8], strides = [1, 1]} : vector<8x32xf32> to vector<8x8xf32>
    %55 = arith.truncf %54 : vector<8x8xf32> to vector<8x8xbf16>
    %56 = vector.extract_strided_slice %16 {offsets = [0, 8], sizes = [8, 8], strides = [1, 1]} : vector<8x32xf32> to vector<8x8xf32>
    %57 = arith.truncf %56 : vector<8x8xf32> to vector<8x8xbf16>
    %58 = vector.extract_strided_slice %17 {offsets = [0, 8], sizes = [8, 8], strides = [1, 1]} : vector<8x32xf32> to vector<8x8xf32>
    %59 = arith.truncf %58 : vector<8x8xf32> to vector<8x8xbf16>
    %cst_25 = arith.constant dense<0.000000e+00> : vector<8x8xf32>
    %60 = tpu.matmul %55, %57, %cst_25 {dimension_numbers = #tpu.dot_dimension_numbers<[1], [1], [0], [0], [0, 0, 1, 0], [], []>} : vector<8x8xbf16>, vector<8x8xbf16>, vector<8x8xf32> -> vector<8x8xf32>
    %cst_26 = arith.constant 0.353553385 : f32
    %61 = vector.broadcast %cst_26 : f32 to vector<8x8xf32>
    %62 = arith.mulf %60, %61 : vector<8x8xf32>
    %63 = arith.addf %62, %8 : vector<8x8xf32>
    %cst_27 = arith.constant dense<0xFF800000> : vector<8xf32>
    %64 = vector.multi_reduction <maximumf>, %63, %cst_27 [1] : vector<8x8xf32> to vector<8xf32>
    %65 = vector.shape_cast %64 : vector<8xf32> to vector<8x1xf32>
    %cst_28 = arith.constant 0xFF800000 : f32
    %66 = vector.broadcast %cst_28 : f32 to vector<8x1xf32>
    %67 = arith.cmpf oeq, %65, %66 : vector<8x1xf32>
    %cst_29 = arith.constant 0.000000e+00 : f32
    %68 = vector.broadcast %cst_29 : f32 to vector<8x1xf32>
    %69 = arith.select %67, %68, %65 : vector<8x1xi1>, vector<8x1xf32>
    %70 = vector.broadcast %69 : vector<8x1xf32> to vector<8x8xf32>
    %71 = arith.subf %63, %70 : vector<8x8xf32>
    %72 = math.exp %71 : vector<8x8xf32>
    %cst_30 = arith.constant dense<0.000000e+00> : vector<8xf32>
    %73 = vector.multi_reduction <add>, %72, %cst_30 [1] : vector<8x8xf32> to vector<8xf32>
    %74 = vector.shape_cast %73 : vector<8xf32> to vector<8x1xf32>
    %cst_31 = arith.constant 0.000000e+00 : f32
    %75 = vector.broadcast %cst_31 : f32 to vector<8x1xf32>
    %76 = arith.cmpf oeq, %74, %75 : vector<8x1xf32>
    %cst_32 = arith.constant 1.000000e+00 : f32
    %77 = vector.broadcast %cst_32 : f32 to vector<8x1xf32>
    %78 = arith.select %76, %77, %74 : vector<8x1xi1>, vector<8x1xf32>
    %79 = tpu.reciprocal %78 {approx = true} : vector<8x1xf32> -> vector<8x1xf32>
    %80 = vector.broadcast %79 : vector<8x1xf32> to vector<8x8xf32>
    %81 = arith.mulf %72, %80 : vector<8x8xf32>
    %82 = arith.truncf %81 : vector<8x8xf32> to vector<8x8xbf16>
    %cst_33 = arith.constant dense<0.000000e+00> : vector<8x8xf32>
    %83 = tpu.matmul %82, %59, %cst_33 {dimension_numbers = #tpu.dot_dimension_numbers<[1], [0], [0], [1], [0, 0, 1, 1], [], []>} : vector<8x8xbf16>, vector<8x8xbf16>, vector<8x8xf32> -> vector<8x8xf32>
    %84 = arith.truncf %83 : vector<8x8xf32> to vector<8x8xbf16>
    %85 = vector.extract_strided_slice %18 {offsets = [8, 0], sizes = [8, 32], strides = [1, 1]} : vector<32x32xbf16> to vector<8x32xbf16>
    %cst_34 = arith.constant dense<0.000000e+00> : vector<8x32xf32>
    %86 = tpu.matmul %84, %85, %cst_34 {dimension_numbers = #tpu.dot_dimension_numbers<[1], [0], [0], [1], [0, 0, 1, 1], [], []>} : vector<8x8xbf16>, vector<8x32xbf16>, vector<8x32xf32> -> vector<8x32xf32>
    %87 = arith.addf %53, %86 : vector<8x32xf32>
    %88 = vector.extract_strided_slice %15 {offsets = [0, 16], sizes = [8, 8], strides = [1, 1]} : vector<8x32xf32> to vector<8x8xf32>
    %89 = arith.truncf %88 : vector<8x8xf32> to vector<8x8xbf16>
    %90 = vector.extract_strided_slice %16 {offsets = [0, 16], sizes = [8, 8], strides = [1, 1]} : vector<8x32xf32> to vector<8x8xf32>
    %91 = arith.truncf %90 : vector<8x8xf32> to vector<8x8xbf16>
    %92 = vector.extract_strided_slice %17 {offsets = [0, 16], sizes = [8, 8], strides = [1, 1]} : vector<8x32xf32> to vector<8x8xf32>
    %93 = arith.truncf %92 : vector<8x8xf32> to vector<8x8xbf16>
    %cst_35 = arith.constant dense<0.000000e+00> : vector<8x8xf32>
    %94 = tpu.matmul %89, %91, %cst_35 {dimension_numbers = #tpu.dot_dimension_numbers<[1], [1], [0], [0], [0, 0, 1, 0], [], []>} : vector<8x8xbf16>, vector<8x8xbf16>, vector<8x8xf32> -> vector<8x8xf32>
    %cst_36 = arith.constant 0.353553385 : f32
    %95 = vector.broadcast %cst_36 : f32 to vector<8x8xf32>
    %96 = arith.mulf %94, %95 : vector<8x8xf32>
    %97 = arith.addf %96, %8 : vector<8x8xf32>
    %cst_37 = arith.constant dense<0xFF800000> : vector<8xf32>
    %98 = vector.multi_reduction <maximumf>, %97, %cst_37 [1] : vector<8x8xf32> to vector<8xf32>
    %99 = vector.shape_cast %98 : vector<8xf32> to vector<8x1xf32>
    %cst_38 = arith.constant 0xFF800000 : f32
    %100 = vector.broadcast %cst_38 : f32 to vector<8x1xf32>
    %101 = arith.cmpf oeq, %99, %100 : vector<8x1xf32>
    %cst_39 = arith.constant 0.000000e+00 : f32
    %102 = vector.broadcast %cst_39 : f32 to vector<8x1xf32>
    %103 = arith.select %101, %102, %99 : vector<8x1xi1>, vector<8x1xf32>
    %104 = vector.broadcast %103 : vector<8x1xf32> to vector<8x8xf32>
    %105 = arith.subf %97, %104 : vector<8x8xf32>
    %106 = math.exp %105 : vector<8x8xf32>
    %cst_40 = arith.constant dense<0.000000e+00> : vector<8xf32>
    %107 = vector.multi_reduction <add>, %106, %cst_40 [1] : vector<8x8xf32> to vector<8xf32>
    %108 = vector.shape_cast %107 : vector<8xf32> to vector<8x1xf32>
    %cst_41 = arith.constant 0.000000e+00 : f32
    %109 = vector.broadcast %cst_41 : f32 to vector<8x1xf32>
    %110 = arith.cmpf oeq, %108, %109 : vector<8x1xf32>
    %cst_42 = arith.constant 1.000000e+00 : f32
    %111 = vector.broadcast %cst_42 : f32 to vector<8x1xf32>
    %112 = arith.select %110, %111, %108 : vector<8x1xi1>, vector<8x1xf32>
    %113 = tpu.reciprocal %112 {approx = true} : vector<8x1xf32> -> vector<8x1xf32>
    %114 = vector.broadcast %113 : vector<8x1xf32> to vector<8x8xf32>
    %115 = arith.mulf %106, %114 : vector<8x8xf32>
    %116 = arith.truncf %115 : vector<8x8xf32> to vector<8x8xbf16>
    %cst_43 = arith.constant dense<0.000000e+00> : vector<8x8xf32>
    %117 = tpu.matmul %116, %93, %cst_43 {dimension_numbers = #tpu.dot_dimension_numbers<[1], [0], [0], [1], [0, 0, 1, 1], [], []>} : vector<8x8xbf16>, vector<8x8xbf16>, vector<8x8xf32> -> vector<8x8xf32>
    %118 = arith.truncf %117 : vector<8x8xf32> to vector<8x8xbf16>
    %119 = vector.extract_strided_slice %18 {offsets = [16, 0], sizes = [8, 32], strides = [1, 1]} : vector<32x32xbf16> to vector<8x32xbf16>
    %cst_44 = arith.constant dense<0.000000e+00> : vector<8x32xf32>
    %120 = tpu.matmul %118, %119, %cst_44 {dimension_numbers = #tpu.dot_dimension_numbers<[1], [0], [0], [1], [0, 0, 1, 1], [], []>} : vector<8x8xbf16>, vector<8x32xbf16>, vector<8x32xf32> -> vector<8x32xf32>
    %121 = arith.addf %87, %120 : vector<8x32xf32>
    %122 = vector.extract_strided_slice %15 {offsets = [0, 24], sizes = [8, 8], strides = [1, 1]} : vector<8x32xf32> to vector<8x8xf32>
    %123 = arith.truncf %122 : vector<8x8xf32> to vector<8x8xbf16>
    %124 = vector.extract_strided_slice %16 {offsets = [0, 24], sizes = [8, 8], strides = [1, 1]} : vector<8x32xf32> to vector<8x8xf32>
    %125 = arith.truncf %124 : vector<8x8xf32> to vector<8x8xbf16>
    %126 = vector.extract_strided_slice %17 {offsets = [0, 24], sizes = [8, 8], strides = [1, 1]} : vector<8x32xf32> to vector<8x8xf32>
    %127 = arith.truncf %126 : vector<8x8xf32> to vector<8x8xbf16>
    %cst_45 = arith.constant dense<0.000000e+00> : vector<8x8xf32>
    %128 = tpu.matmul %123, %125, %cst_45 {dimension_numbers = #tpu.dot_dimension_numbers<[1], [1], [0], [0], [0, 0, 1, 0], [], []>} : vector<8x8xbf16>, vector<8x8xbf16>, vector<8x8xf32> -> vector<8x8xf32>
    %cst_46 = arith.constant 0.353553385 : f32
    %129 = vector.broadcast %cst_46 : f32 to vector<8x8xf32>
    %130 = arith.mulf %128, %129 : vector<8x8xf32>
    %131 = arith.addf %130, %8 : vector<8x8xf32>
    %cst_47 = arith.constant dense<0xFF800000> : vector<8xf32>
    %132 = vector.multi_reduction <maximumf>, %131, %cst_47 [1] : vector<8x8xf32> to vector<8xf32>
    %133 = vector.shape_cast %132 : vector<8xf32> to vector<8x1xf32>
    %cst_48 = arith.constant 0xFF800000 : f32
    %134 = vector.broadcast %cst_48 : f32 to vector<8x1xf32>
    %135 = arith.cmpf oeq, %133, %134 : vector<8x1xf32>
    %cst_49 = arith.constant 0.000000e+00 : f32
    %136 = vector.broadcast %cst_49 : f32 to vector<8x1xf32>
    %137 = arith.select %135, %136, %133 : vector<8x1xi1>, vector<8x1xf32>
    %138 = vector.broadcast %137 : vector<8x1xf32> to vector<8x8xf32>
    %139 = arith.subf %131, %138 : vector<8x8xf32>
    %140 = math.exp %139 : vector<8x8xf32>
    %cst_50 = arith.constant dense<0.000000e+00> : vector<8xf32>
    %141 = vector.multi_reduction <add>, %140, %cst_50 [1] : vector<8x8xf32> to vector<8xf32>
    %142 = vector.shape_cast %141 : vector<8xf32> to vector<8x1xf32>
    %cst_51 = arith.constant 0.000000e+00 : f32
    %143 = vector.broadcast %cst_51 : f32 to vector<8x1xf32>
    %144 = arith.cmpf oeq, %142, %143 : vector<8x1xf32>
    %cst_52 = arith.constant 1.000000e+00 : f32
    %145 = vector.broadcast %cst_52 : f32 to vector<8x1xf32>
    %146 = arith.select %144, %145, %142 : vector<8x1xi1>, vector<8x1xf32>
    %147 = tpu.reciprocal %146 {approx = true} : vector<8x1xf32> -> vector<8x1xf32>
    %148 = vector.broadcast %147 : vector<8x1xf32> to vector<8x8xf32>
    %149 = arith.mulf %140, %148 : vector<8x8xf32>
    %150 = arith.truncf %149 : vector<8x8xf32> to vector<8x8xbf16>
    %cst_53 = arith.constant dense<0.000000e+00> : vector<8x8xf32>
    %151 = tpu.matmul %150, %127, %cst_53 {dimension_numbers = #tpu.dot_dimension_numbers<[1], [0], [0], [1], [0, 0, 1, 1], [], []>} : vector<8x8xbf16>, vector<8x8xbf16>, vector<8x8xf32> -> vector<8x8xf32>
    %152 = arith.truncf %151 : vector<8x8xf32> to vector<8x8xbf16>
    %153 = vector.extract_strided_slice %18 {offsets = [24, 0], sizes = [8, 32], strides = [1, 1]} : vector<32x32xbf16> to vector<8x32xbf16>
    %cst_54 = arith.constant dense<0.000000e+00> : vector<8x32xf32>
    %154 = tpu.matmul %152, %153, %cst_54 {dimension_numbers = #tpu.dot_dimension_numbers<[1], [0], [0], [1], [0, 0, 1, 1], [], []>} : vector<8x8xbf16>, vector<8x32xbf16>, vector<8x32xf32> -> vector<8x32xf32>
    %155 = arith.addf %121, %154 : vector<8x32xf32>
    %c0_55 = arith.constant 0 : index
    %c0_56 = arith.constant 0 : index
    %156 = vector.load %arg7[%c0_55, %c0_56] : memref<1x32xf32, #tpu.memory_space<vmem>>, vector<1x32xf32>
    %157 = vector.broadcast %156 : vector<1x32xf32> to vector<8x32xf32>
    %158 = arith.addf %155, %157 : vector<8x32xf32>
    %159 = arith.addf %2, %158 : vector<8x32xf32>
    %c0_57 = arith.constant 0 : index
    %c0_58 = arith.constant 0 : index
    %160 = vector.load %arg8[%c0_57, %c0_58] : memref<1x32xf32, #tpu.memory_space<vmem>>, vector<1x32xf32>
    %c0_59 = arith.constant 0 : index
    %c0_60 = arith.constant 0 : index
    %161 = vector.load %arg9[%c0_59, %c0_60] : memref<1x32xf32, #tpu.memory_space<vmem>>, vector<1x32xf32>
    %cst_61 = arith.constant dense<0.000000e+00> : vector<8xf32>
    %162 = vector.multi_reduction <add>, %159, %cst_61 [1] : vector<8x32xf32> to vector<8xf32>
    %163 = vector.shape_cast %162 : vector<8xf32> to vector<8x1xf32>
    %cst_62 = arith.constant 3.200000e+01 : f32
    %164 = vector.broadcast %cst_62 : f32 to vector<8x1xf32>
    %165 = arith.divf %163, %164 : vector<8x1xf32>
    %166 = vector.broadcast %165 : vector<8x1xf32> to vector<8x32xf32>
    %167 = arith.subf %159, %166 : vector<8x32xf32>
    %168 = arith.mulf %167, %167 : vector<8x32xf32>
    %cst_63 = arith.constant dense<0.000000e+00> : vector<8xf32>
    %169 = vector.multi_reduction <add>, %168, %cst_63 [1] : vector<8x32xf32> to vector<8xf32>
    %170 = vector.shape_cast %169 : vector<8xf32> to vector<8x1xf32>
    %cst_64 = arith.constant 3.200000e+01 : f32
    %171 = vector.broadcast %cst_64 : f32 to vector<8x1xf32>
    %172 = arith.divf %170, %171 : vector<8x1xf32>
    %173 = vector.broadcast %165 : vector<8x1xf32> to vector<8x32xf32>
    %174 = arith.subf %159, %173 : vector<8x32xf32>
    %cst_65 = arith.constant 9.99999974E-6 : f32
    %175 = vector.broadcast %cst_65 : f32 to vector<8x1xf32>
    %176 = arith.addf %172, %175 : vector<8x1xf32>
    %177 = math.rsqrt %176 : vector<8x1xf32>
    %178 = vector.broadcast %177 : vector<8x1xf32> to vector<8x32xf32>
    %179 = arith.mulf %174, %178 : vector<8x32xf32>
    %180 = vector.broadcast %160 : vector<1x32xf32> to vector<8x32xf32>
    %181 = arith.mulf %179, %180 : vector<8x32xf32>
    %182 = vector.broadcast %161 : vector<1x32xf32> to vector<8x32xf32>
    %183 = arith.addf %181, %182 : vector<8x32xf32>
    %184 = arith.truncf %183 : vector<8x32xf32> to vector<8x32xbf16>
    %c0_66 = arith.constant 0 : index
    %c0_67 = arith.constant 0 : index
    %185 = vector.load %arg10[%c0_66, %c0_67] : memref<32x128xbf16, #tpu.memory_space<vmem>>, vector<32x128xbf16>
    %cst_68 = arith.constant dense<0.000000e+00> : vector<8x128xf32>
    %186 = tpu.matmul %184, %185, %cst_68 {dimension_numbers = #tpu.dot_dimension_numbers<[1], [0], [0], [1], [0, 0, 1, 1], [], []>} : vector<8x32xbf16>, vector<32x128xbf16>, vector<8x128xf32> -> vector<8x128xf32>
    %c0_69 = arith.constant 0 : index
    %c0_70 = arith.constant 0 : index
    %187 = vector.load %arg11[%c0_69, %c0_70] : memref<1x128xf32, #tpu.memory_space<vmem>>, vector<1x128xf32>
    %188 = vector.broadcast %187 : vector<1x128xf32> to vector<8x128xf32>
    %189 = arith.addf %186, %188 : vector<8x128xf32>
    %cst_71 = arith.constant 0.000000e+00 : f32
    %190 = vector.broadcast %cst_71 : f32 to vector<8x128xf32>
    %191 = arith.maximumf %189, %190 : vector<8x128xf32>
    %192 = arith.truncf %191 : vector<8x128xf32> to vector<8x128xbf16>
    %c0_72 = arith.constant 0 : index
    %c0_73 = arith.constant 0 : index
    %193 = vector.load %arg12[%c0_72, %c0_73] : memref<128x32xbf16, #tpu.memory_space<vmem>>, vector<128x32xbf16>
    %cst_74 = arith.constant dense<0.000000e+00> : vector<8x32xf32>
    %194 = tpu.matmul %192, %193, %cst_74 {dimension_numbers = #tpu.dot_dimension_numbers<[1], [0], [0], [1], [0, 0, 1, 1], [], []>} : vector<8x128xbf16>, vector<128x32xbf16>, vector<8x32xf32> -> vector<8x32xf32>
    %c0_75 = arith.constant 0 : index
    %c0_76 = arith.constant 0 : index
    %195 = vector.load %arg13[%c0_75, %c0_76] : memref<1x32xf32, #tpu.memory_space<vmem>>, vector<1x32xf32>
    %196 = vector.broadcast %195 : vector<1x32xf32> to vector<8x32xf32>
    %197 = arith.addf %194, %196 : vector<8x32xf32>
    %198 = arith.addf %183, %197 : vector<8x32xf32>
    %c0_77 = arith.constant 0 : index
    %c0_78 = arith.constant 0 : index
    %199 = vector.load %arg14[%c0_77, %c0_78] : memref<1x32xf32, #tpu.memory_space<vmem>>, vector<1x32xf32>
    %c0_79 = arith.constant 0 : index
    %c0_80 = arith.constant 0 : index
    %200 = vector.load %arg15[%c0_79, %c0_80] : memref<1x32xf32, #tpu.memory_space<vmem>>, vector<1x32xf32>
    %cst_81 = arith.constant dense<0.000000e+00> : vector<8xf32>
    %201 = vector.multi_reduction <add>, %198, %cst_81 [1] : vector<8x32xf32> to vector<8xf32>
    %202 = vector.shape_cast %201 : vector<8xf32> to vector<8x1xf32>
    %cst_82 = arith.constant 3.200000e+01 : f32
    %203 = vector.broadcast %cst_82 : f32 to vector<8x1xf32>
    %204 = arith.divf %202, %203 : vector<8x1xf32>
    %205 = vector.broadcast %204 : vector<8x1xf32> to vector<8x32xf32>
    %206 = arith.subf %198, %205 : vector<8x32xf32>
    %207 = arith.mulf %206, %206 : vector<8x32xf32>
    %cst_83 = arith.constant dense<0.000000e+00> : vector<8xf32>
    %208 = vector.multi_reduction <add>, %207, %cst_83 [1] : vector<8x32xf32> to vector<8xf32>
    %209 = vector.shape_cast %208 : vector<8xf32> to vector<8x1xf32>
    %cst_84 = arith.constant 3.200000e+01 : f32
    %210 = vector.broadcast %cst_84 : f32 to vector<8x1xf32>
    %211 = arith.divf %209, %210 : vector<8x1xf32>
    %212 = vector.broadcast %204 : vector<8x1xf32> to vector<8x32xf32>
    %213 = arith.subf %198, %212 : vector<8x32xf32>
    %cst_85 = arith.constant 9.99999974E-6 : f32
    %214 = vector.broadcast %cst_85 : f32 to vector<8x1xf32>
    %215 = arith.addf %211, %214 : vector<8x1xf32>
    %216 = math.rsqrt %215 : vector<8x1xf32>
    %217 = vector.broadcast %216 : vector<8x1xf32> to vector<8x32xf32>
    %218 = arith.mulf %213, %217 : vector<8x32xf32>
    %219 = vector.broadcast %199 : vector<1x32xf32> to vector<8x32xf32>
    %220 = arith.mulf %218, %219 : vector<8x32xf32>
    %221 = vector.broadcast %200 : vector<1x32xf32> to vector<8x32xf32>
    %222 = arith.addf %220, %221 : vector<8x32xf32>
    %223 = arith.truncf %222 : vector<8x32xf32> to vector<8x32xbf16>
    %c0_86 = arith.constant 0 : index
    %c0_87 = arith.constant 0 : index
    %c0_88 = arith.constant 0 : index
    %224 = vector.load %arg16[%c0_86, %c0_87, %c0_88] : memref<1x8x32xbf16, #tpu.memory_space<vmem>>, vector<1x8x32xbf16>
    %225 = vector.shape_cast %224 : vector<1x8x32xbf16> to vector<8x32xbf16>
    %226 = vector.shape_cast %223 : vector<8x32xbf16> to vector<1x8x32xbf16>
    tpu.vector_store %arg16[%c0_86, %c0_87, %c0_88], %226 {strides = array<i32>} : memref<1x8x32xbf16, #tpu.memory_space<vmem>>, vector<1x8x32xbf16>,
    return
  }
  func.func @transform_0(%arg0: i32) -> (i32, i32, i32) {
    %c0_i32 = arith.constant 0 : i32
    %c0_i32_0 = arith.constant 0 : i32
    %c0_i32_1 = arith.constant 0 : i32
    return %arg0, %c0_i32, %c0_i32_0 : i32, i32, i32
  }
  func.func @transform_1(%arg0: i32) -> (i32, i32, i32) {
    %c0_i32 = arith.constant 0 : i32
    %c0_i32_0 = arith.constant 0 : i32
    %c0_i32_1 = arith.constant 0 : i32
    %c0_i32_2 = arith.constant 0 : i32
    return %c0_i32, %c0_i32_0, %c0_i32_1 : i32, i32, i32
  }
  func.func @transform_2(%arg0: i32) -> (i32, i32, i32) {
    %c0_i32 = arith.constant 0 : i32
    %c0_i32_0 = arith.constant 0 : i32
    %c0_i32_1 = arith.constant 0 : i32
    return %arg0, %c0_i32, %c0_i32_0 : i32, i32, i32
  }
  func.func @transform_3(%arg0: i32) -> (i32, i32) {
    %c0_i32 = arith.constant 0 : i32
    %c0_i32_0 = arith.constant 0 : i32
    %c0_i32_1 = arith.constant 0 : i32
    return %c0_i32, %c0_i32_0 : i32, i32
  }
  func.func @transform_4(%arg0: i32) -> (i32, i32) {
    %c0_i32 = arith.constant 0 : i32
    %c0_i32_0 = arith.constant 0 : i32
    %c0_i32_1 = arith.constant 0 : i32
    return %c0_i32, %c0_i32_0 : i32, i32
  }
  func.func @transform_5(%arg0: i32) -> (i32, i32) {
    %c0_i32 = arith.constant 0 : i32
    %c0_i32_0 = arith.constant 0 : i32
    %c0_i32_1 = arith.constant 0 : i32
    return %c0_i32, %c0_i32_0 : i32, i32
  }
  func.func @transform_6(%arg0: i32) -> (i32, i32) {
    %c0_i32 = arith.constant 0 : i32
    %c0_i32_0 = arith.constant 0 : i32
    %c0_i32_1 = arith.constant 0 : i32
    return %c0_i32, %c0_i32_0 : i32, i32
  }
  func.func @transform_7(%arg0: i32) -> (i32, i32) {
    %c0_i32 = arith.constant 0 : i32
    %c0_i32_0 = arith.constant 0 : i32
    %c0_i32_1 = arith.constant 0 : i32
    return %c0_i32, %c0_i32_0 : i32, i32
  }
  func.func @transform_8(%arg0: i32) -> (i32, i32) {
    %c0_i32 = arith.constant 0 : i32
    %c0_i32_0 = arith.constant 0 : i32
    %c0_i32_1 = arith.constant 0 : i32
    return %c0_i32, %c0_i32_0 : i32, i32
  }
  func.func @transform_9(%arg0: i32) -> (i32, i32) {
    %c0_i32 = arith.constant 0 : i32
    %c0_i32_0 = arith.constant 0 : i32
    %c0_i32_1 = arith.constant 0 : i32
    return %c0_i32, %c0_i32_0 : i32, i32
  }
  func.func @transform_10(%arg0: i32) -> (i32, i32) {
    %c0_i32 = arith.constant 0 : i32
    %c0_i32_0 = arith.constant 0 : i32
    %c0_i32_1 = arith.constant 0 : i32
    return %c0_i32, %c0_i32_0 : i32, i32
  }
  func.func @transform_11(%arg0: i32) -> (i32, i32) {
    %c0_i32 = arith.constant 0 : i32
    %c0_i32_0 = arith.constant 0 : i32
    %c0_i32_1 = arith.constant 0 : i32
    return %c0_i32, %c0_i32_0 : i32, i32
  }
  func.func @transform_12(%arg0: i32) -> (i32, i32) {
    %c0_i32 = arith.constant 0 : i32
    %c0_i32_0 = arith.constant 0 : i32
    %c0_i32_1 = arith.constant 0 : i32
    return %c0_i32, %c0_i32_0 : i32, i32
  }
  func.func @transform_13(%arg0: i32) -> (i32, i32) {
    %c0_i32 = arith.constant 0 : i32
    %c0_i32_0 = arith.constant 0 : i32
    %c0_i32_1 = arith.constant 0 : i32
    return %c0_i32, %c0_i32_0 : i32, i32
  }
  func.func @transform_14(%arg0: i32) -> (i32, i32) {
    %c0_i32 = arith.constant 0 : i32
    %c0_i32_0 = arith.constant 0 : i32
    %c0_i32_1 = arith.constant 0 : i32
    return %c0_i32, %c0_i32_0 : i32, i32
  }
  func.func @transform_15(%arg0: i32) -> (i32, i32, i32) {
    %c0_i32 = arith.constant 0 : i32
    %c0_i32_0 = arith.constant 0 : i32
    %c0_i32_1 = arith.constant 0 : i32
    return %arg0, %c0_i32, %c0_i32_0 : i32, i32, i32
  }
}

module attributes {stable_mosaic.version = 11 : i64} {
  func.func @_decoder_layer_kernel(%arg0: i32, %arg1: memref<1x8x32xbf16, #tpu.memory_space<vmem>>, %arg2: memref<1x8x32xbf16, #tpu.memory_space<vmem>>, %arg3: memref<1x1x8xf32, #tpu.memory_space<vmem>>, %arg4: memref<32x96xbf16, #tpu.memory_space<vmem>>, %arg5: memref<1x96xf32, #tpu.memory_space<vmem>>, %arg6: memref<32x32xbf16, #tpu.memory_space<vmem>>, %arg7: memref<1x32xf32, #tpu.memory_space<vmem>>, %arg8: memref<1x32xf32, #tpu.memory_space<vmem>>, %arg9: memref<1x32xf32, #tpu.memory_space<vmem>>, %arg10: memref<32x32xbf16, #tpu.memory_space<vmem>>, %arg11: memref<1x32xf32, #tpu.memory_space<vmem>>, %arg12: memref<32x64xbf16, #tpu.memory_space<vmem>>, %arg13: memref<1x64xf32, #tpu.memory_space<vmem>>, %arg14: memref<32x32xbf16, #tpu.memory_space<vmem>>, %arg15: memref<1x32xf32, #tpu.memory_space<vmem>>, %arg16: memref<1x32xf32, #tpu.memory_space<vmem>>, %arg17: memref<1x32xf32, #tpu.memory_space<vmem>>, %arg18: memref<32x128xbf16, #tpu.memory_space<vmem>>, %arg19: memref<1x128xf32, #tpu.memory_space<vmem>>, %arg20: memref<128x32xbf16, #tpu.memory_space<vmem>>, %arg21: memref<1x32xf32, #tpu.memory_space<vmem>>, %arg22: memref<1x32xf32, #tpu.memory_space<vmem>>, %arg23: memref<1x32xf32, #tpu.memory_space<vmem>>, %arg24: memref<1x8x32xbf16, #tpu.memory_space<vmem>>) attributes {dimension_semantics = [#tpu.dimension_semantics<parallel>], iteration_bounds = array<i64: 2>, scalar_prefetch = 0 : i64, scratch_operands = 0 : i64, tpu.core_type = #tpu.core_type<tc>, window_params = [{transform_indices = @transform_0, window_bounds = array<i64: 1, 8, 32>}, {transform_indices = @transform_1, window_bounds = array<i64: 1, 8, 32>}, {transform_indices = @transform_2, window_bounds = array<i64: 1, 1, 8>}, {pipeline_mode = #tpu.pipeline_mode<synchronous>, transform_indices = @transform_3, window_bounds = array<i64: 32, 96>}, {pipeline_mode = #tpu.pipeline_mode<synchronous>, transform_indices = @transform_4, window_bounds = array<i64: 1, 96>}, {pipeline_mode = #tpu.pipeline_mode<synchronous>, transform_indices = @transform_5, window_bounds = array<i64: 32, 32>}, {pipeline_mode = #tpu.pipeline_mode<synchronous>, transform_indices = @transform_6, window_bounds = array<i64: 1, 32>}, {pipeline_mode = #tpu.pipeline_mode<synchronous>, transform_indices = @transform_7, window_bounds = array<i64: 1, 32>}, {pipeline_mode = #tpu.pipeline_mode<synchronous>, transform_indices = @transform_8, window_bounds = array<i64: 1, 32>}, {pipeline_mode = #tpu.pipeline_mode<synchronous>, transform_indices = @transform_9, window_bounds = array<i64: 32, 32>}, {pipeline_mode = #tpu.pipeline_mode<synchronous>, transform_indices = @transform_10, window_bounds = array<i64: 1, 32>}, {pipeline_mode = #tpu.pipeline_mode<synchronous>, transform_indices = @transform_11, window_bounds = array<i64: 32, 64>}, {pipeline_mode = #tpu.pipeline_mode<synchronous>, transform_indices = @transform_12, window_bounds = array<i64: 1, 64>}, {pipeline_mode = #tpu.pipeline_mode<synchronous>, transform_indices = @transform_13, window_bounds = array<i64: 32, 32>}, {pipeline_mode = #tpu.pipeline_mode<synchronous>, transform_indices = @transform_14, window_bounds = array<i64: 1, 32>}, {pipeline_mode = #tpu.pipeline_mode<synchronous>, transform_indices = @transform_15, window_bounds = array<i64: 1, 32>}, {pipeline_mode = #tpu.pipeline_mode<synchronous>, transform_indices = @transform_16, window_bounds = array<i64: 1, 32>}, {pipeline_mode = #tpu.pipeline_mode<synchronous>, transform_indices = @transform_17, window_bounds = array<i64: 32, 128>}, {pipeline_mode = #tpu.pipeline_mode<synchronous>, transform_indices = @transform_18, window_bounds = array<i64: 1, 128>}, {pipeline_mode = #tpu.pipeline_mode<synchronous>, transform_indices = @transform_19, window_bounds = array<i64: 128, 32>}, {pipeline_mode = #tpu.pipeline_mode<synchronous>, transform_indices = @transform_20, window_bounds = array<i64: 1, 32>}, {pipeline_mode = #tpu.pipeline_mode<synchronous>, transform_indices = @transform_21, window_bounds = array<i64: 1, 32>}, {pipeline_mode = #tpu.pipeline_mode<synchronous>, transform_indices = @transform_22, window_bounds = array<i64: 1, 32>}, {transform_indices = @transform_23, window_bounds = array<i64: 1, 8, 32>}]} {
    %c0 = arith.constant 0 : index
    %c0_0 = arith.constant 0 : index
    %c0_1 = arith.constant 0 : index
    %0 = vector.load %arg1[%c0, %c0_0, %c0_1] : memref<1x8x32xbf16, #tpu.memory_space<vmem>>, vector<1x8x32xbf16>
    %1 = vector.shape_cast %0 : vector<1x8x32xbf16> to vector<8x32xbf16>
    %2 = arith.extf %1 : vector<8x32xbf16> to vector<8x32xf32>
    %c0_2 = arith.constant 0 : index
    %c0_3 = arith.constant 0 : index
    %c0_4 = arith.constant 0 : index
    %3 = vector.load %arg3[%c0_2, %c0_3, %c0_4] : memref<1x1x8xf32, #tpu.memory_space<vmem>>, vector<1x1x8xf32>
    %4 = vector.shape_cast %3 : vector<1x1x8xf32> to vector<1x8xf32>
    %5 = arith.truncf %2 : vector<8x32xf32> to vector<8x32xbf16>
    %c0_5 = arith.constant 0 : index
    %c0_6 = arith.constant 0 : index
    %6 = vector.load %arg4[%c0_5, %c0_6] : memref<32x96xbf16, #tpu.memory_space<vmem>>, vector<32x96xbf16>
    %cst = arith.constant dense<0.000000e+00> : vector<8x96xf32>
    %7 = tpu.matmul %5, %6, %cst {dimension_numbers = #tpu.dot_dimension_numbers<[1], [0], [0], [1], [0, 0, 1, 1], [], []>} : vector<8x32xbf16>, vector<32x96xbf16>, vector<8x96xf32> -> vector<8x96xf32>
    %c0_7 = arith.constant 0 : index
    %c0_8 = arith.constant 0 : index
    %8 = vector.load %arg5[%c0_7, %c0_8] : memref<1x96xf32, #tpu.memory_space<vmem>>, vector<1x96xf32>
    %9 = vector.broadcast %8 : vector<1x96xf32> to vector<8x96xf32>
    %10 = arith.addf %7, %9 : vector<8x96xf32>
    %11 = vector.extract_strided_slice %10 {offsets = [0, 0], sizes = [8, 32], strides = [1, 1]} : vector<8x96xf32> to vector<8x32xf32>
    %12 = vector.extract_strided_slice %10 {offsets = [0, 32], sizes = [8, 32], strides = [1, 1]} : vector<8x96xf32> to vector<8x32xf32>
    %13 = vector.extract_strided_slice %10 {offsets = [0, 64], sizes = [8, 32], strides = [1, 1]} : vector<8x96xf32> to vector<8x32xf32>
    %c0_9 = arith.constant 0 : index
    %c0_10 = arith.constant 0 : index
    %14 = vector.load %arg6[%c0_9, %c0_10] : memref<32x32xbf16, #tpu.memory_space<vmem>>, vector<32x32xbf16>
    %cst_11 = arith.constant 0.000000e+00 : f32
    %15 = vector.broadcast %cst_11 : f32 to vector<8x32xf32>
    %16 = vector.extract_strided_slice %11 {offsets = [0, 0], sizes = [8, 8], strides = [1, 1]} : vector<8x32xf32> to vector<8x8xf32>
    %17 = arith.truncf %16 : vector<8x8xf32> to vector<8x8xbf16>
    %18 = vector.extract_strided_slice %12 {offsets = [0, 0], sizes = [8, 8], strides = [1, 1]} : vector<8x32xf32> to vector<8x8xf32>
    %19 = arith.truncf %18 : vector<8x8xf32> to vector<8x8xbf16>
    %20 = vector.extract_strided_slice %13 {offsets = [0, 0], sizes = [8, 8], strides = [1, 1]} : vector<8x32xf32> to vector<8x8xf32>
    %21 = arith.truncf %20 : vector<8x8xf32> to vector<8x8xbf16>
    %cst_12 = arith.constant dense<0.000000e+00> : vector<8x8xf32>
    %22 = tpu.matmul %17, %19, %cst_12 {dimension_numbers = #tpu.dot_dimension_numbers<[1], [1], [0], [0], [0, 0, 1, 0], [], []>} : vector<8x8xbf16>, vector<8x8xbf16>, vector<8x8xf32> -> vector<8x8xf32>
    %cst_13 = arith.constant 0.353553385 : f32
    %23 = vector.broadcast %cst_13 : f32 to vector<8x8xf32>
    %24 = arith.mulf %22, %23 : vector<8x8xf32>
    %25 = vector.broadcast %4 : vector<1x8xf32> to vector<8x8xf32>
    %26 = arith.addf %24, %25 : vector<8x8xf32>
    %cst_14 = arith.constant dense<0xFF800000> : vector<8xf32>
    %27 = vector.multi_reduction <maximumf>, %26, %cst_14 [1] : vector<8x8xf32> to vector<8xf32>
    %28 = vector.shape_cast %27 : vector<8xf32> to vector<8x1xf32>
    %cst_15 = arith.constant 0xFF800000 : f32
    %29 = vector.broadcast %cst_15 : f32 to vector<8x1xf32>
    %30 = arith.cmpf oeq, %28, %29 : vector<8x1xf32>
    %cst_16 = arith.constant 0.000000e+00 : f32
    %31 = vector.broadcast %cst_16 : f32 to vector<8x1xf32>
    %32 = arith.select %30, %31, %28 : vector<8x1xi1>, vector<8x1xf32>
    %33 = vector.broadcast %32 : vector<8x1xf32> to vector<8x8xf32>
    %34 = arith.subf %26, %33 : vector<8x8xf32>
    %35 = math.exp %34 : vector<8x8xf32>
    %cst_17 = arith.constant dense<0.000000e+00> : vector<8xf32>
    %36 = vector.multi_reduction <add>, %35, %cst_17 [1] : vector<8x8xf32> to vector<8xf32>
    %37 = vector.shape_cast %36 : vector<8xf32> to vector<8x1xf32>
    %cst_18 = arith.constant 0.000000e+00 : f32
    %38 = vector.broadcast %cst_18 : f32 to vector<8x1xf32>
    %39 = arith.cmpf oeq, %37, %38 : vector<8x1xf32>
    %cst_19 = arith.constant 1.000000e+00 : f32
    %40 = vector.broadcast %cst_19 : f32 to vector<8x1xf32>
    %41 = arith.select %39, %40, %37 : vector<8x1xi1>, vector<8x1xf32>
    %42 = tpu.reciprocal %41 {approx = true} : vector<8x1xf32> -> vector<8x1xf32>
    %43 = vector.broadcast %42 : vector<8x1xf32> to vector<8x8xf32>
    %44 = arith.mulf %35, %43 : vector<8x8xf32>
    %45 = arith.truncf %44 : vector<8x8xf32> to vector<8x8xbf16>
    %cst_20 = arith.constant dense<0.000000e+00> : vector<8x8xf32>
    %46 = tpu.matmul %45, %21, %cst_20 {dimension_numbers = #tpu.dot_dimension_numbers<[1], [0], [0], [1], [0, 0, 1, 1], [], []>} : vector<8x8xbf16>, vector<8x8xbf16>, vector<8x8xf32> -> vector<8x8xf32>
    %47 = arith.truncf %46 : vector<8x8xf32> to vector<8x8xbf16>
    %48 = vector.extract_strided_slice %14 {offsets = [0, 0], sizes = [8, 32], strides = [1, 1]} : vector<32x32xbf16> to vector<8x32xbf16>
    %cst_21 = arith.constant dense<0.000000e+00> : vector<8x32xf32>
    %49 = tpu.matmul %47, %48, %cst_21 {dimension_numbers = #tpu.dot_dimension_numbers<[1], [0], [0], [1], [0, 0, 1, 1], [], []>} : vector<8x8xbf16>, vector<8x32xbf16>, vector<8x32xf32> -> vector<8x32xf32>
    %50 = arith.addf %15, %49 : vector<8x32xf32>
    %51 = vector.extract_strided_slice %11 {offsets = [0, 8], sizes = [8, 8], strides = [1, 1]} : vector<8x32xf32> to vector<8x8xf32>
    %52 = arith.truncf %51 : vector<8x8xf32> to vector<8x8xbf16>
    %53 = vector.extract_strided_slice %12 {offsets = [0, 8], sizes = [8, 8], strides = [1, 1]} : vector<8x32xf32> to vector<8x8xf32>
    %54 = arith.truncf %53 : vector<8x8xf32> to vector<8x8xbf16>
    %55 = vector.extract_strided_slice %13 {offsets = [0, 8], sizes = [8, 8], strides = [1, 1]} : vector<8x32xf32> to vector<8x8xf32>
    %56 = arith.truncf %55 : vector<8x8xf32> to vector<8x8xbf16>
    %cst_22 = arith.constant dense<0.000000e+00> : vector<8x8xf32>
    %57 = tpu.matmul %52, %54, %cst_22 {dimension_numbers = #tpu.dot_dimension_numbers<[1], [1], [0], [0], [0, 0, 1, 0], [], []>} : vector<8x8xbf16>, vector<8x8xbf16>, vector<8x8xf32> -> vector<8x8xf32>
    %cst_23 = arith.constant 0.353553385 : f32
    %58 = vector.broadcast %cst_23 : f32 to vector<8x8xf32>
    %59 = arith.mulf %57, %58 : vector<8x8xf32>
    %60 = vector.broadcast %4 : vector<1x8xf32> to vector<8x8xf32>
    %61 = arith.addf %59, %60 : vector<8x8xf32>
    %cst_24 = arith.constant dense<0xFF800000> : vector<8xf32>
    %62 = vector.multi_reduction <maximumf>, %61, %cst_24 [1] : vector<8x8xf32> to vector<8xf32>
    %63 = vector.shape_cast %62 : vector<8xf32> to vector<8x1xf32>
    %cst_25 = arith.constant 0xFF800000 : f32
    %64 = vector.broadcast %cst_25 : f32 to vector<8x1xf32>
    %65 = arith.cmpf oeq, %63, %64 : vector<8x1xf32>
    %cst_26 = arith.constant 0.000000e+00 : f32
    %66 = vector.broadcast %cst_26 : f32 to vector<8x1xf32>
    %67 = arith.select %65, %66, %63 : vector<8x1xi1>, vector<8x1xf32>
    %68 = vector.broadcast %67 : vector<8x1xf32> to vector<8x8xf32>
    %69 = arith.subf %61, %68 : vector<8x8xf32>
    %70 = math.exp %69 : vector<8x8xf32>
    %cst_27 = arith.constant dense<0.000000e+00> : vector<8xf32>
    %71 = vector.multi_reduction <add>, %70, %cst_27 [1] : vector<8x8xf32> to vector<8xf32>
    %72 = vector.shape_cast %71 : vector<8xf32> to vector<8x1xf32>
    %cst_28 = arith.constant 0.000000e+00 : f32
    %73 = vector.broadcast %cst_28 : f32 to vector<8x1xf32>
    %74 = arith.cmpf oeq, %72, %73 : vector<8x1xf32>
    %cst_29 = arith.constant 1.000000e+00 : f32
    %75 = vector.broadcast %cst_29 : f32 to vector<8x1xf32>
    %76 = arith.select %74, %75, %72 : vector<8x1xi1>, vector<8x1xf32>
    %77 = tpu.reciprocal %76 {approx = true} : vector<8x1xf32> -> vector<8x1xf32>
    %78 = vector.broadcast %77 : vector<8x1xf32> to vector<8x8xf32>
    %79 = arith.mulf %70, %78 : vector<8x8xf32>
    %80 = arith.truncf %79 : vector<8x8xf32> to vector<8x8xbf16>
    %cst_30 = arith.constant dense<0.000000e+00> : vector<8x8xf32>
    %81 = tpu.matmul %80, %56, %cst_30 {dimension_numbers = #tpu.dot_dimension_numbers<[1], [0], [0], [1], [0, 0, 1, 1], [], []>} : vector<8x8xbf16>, vector<8x8xbf16>, vector<8x8xf32> -> vector<8x8xf32>
    %82 = arith.truncf %81 : vector<8x8xf32> to vector<8x8xbf16>
    %83 = vector.extract_strided_slice %14 {offsets = [8, 0], sizes = [8, 32], strides = [1, 1]} : vector<32x32xbf16> to vector<8x32xbf16>
    %cst_31 = arith.constant dense<0.000000e+00> : vector<8x32xf32>
    %84 = tpu.matmul %82, %83, %cst_31 {dimension_numbers = #tpu.dot_dimension_numbers<[1], [0], [0], [1], [0, 0, 1, 1], [], []>} : vector<8x8xbf16>, vector<8x32xbf16>, vector<8x32xf32> -> vector<8x32xf32>
    %85 = arith.addf %50, %84 : vector<8x32xf32>
    %86 = vector.extract_strided_slice %11 {offsets = [0, 16], sizes = [8, 8], strides = [1, 1]} : vector<8x32xf32> to vector<8x8xf32>
    %87 = arith.truncf %86 : vector<8x8xf32> to vector<8x8xbf16>
    %88 = vector.extract_strided_slice %12 {offsets = [0, 16], sizes = [8, 8], strides = [1, 1]} : vector<8x32xf32> to vector<8x8xf32>
    %89 = arith.truncf %88 : vector<8x8xf32> to vector<8x8xbf16>
    %90 = vector.extract_strided_slice %13 {offsets = [0, 16], sizes = [8, 8], strides = [1, 1]} : vector<8x32xf32> to vector<8x8xf32>
    %91 = arith.truncf %90 : vector<8x8xf32> to vector<8x8xbf16>
    %cst_32 = arith.constant dense<0.000000e+00> : vector<8x8xf32>
    %92 = tpu.matmul %87, %89, %cst_32 {dimension_numbers = #tpu.dot_dimension_numbers<[1], [1], [0], [0], [0, 0, 1, 0], [], []>} : vector<8x8xbf16>, vector<8x8xbf16>, vector<8x8xf32> -> vector<8x8xf32>
    %cst_33 = arith.constant 0.353553385 : f32
    %93 = vector.broadcast %cst_33 : f32 to vector<8x8xf32>
    %94 = arith.mulf %92, %93 : vector<8x8xf32>
    %95 = vector.broadcast %4 : vector<1x8xf32> to vector<8x8xf32>
    %96 = arith.addf %94, %95 : vector<8x8xf32>
    %cst_34 = arith.constant dense<0xFF800000> : vector<8xf32>
    %97 = vector.multi_reduction <maximumf>, %96, %cst_34 [1] : vector<8x8xf32> to vector<8xf32>
    %98 = vector.shape_cast %97 : vector<8xf32> to vector<8x1xf32>
    %cst_35 = arith.constant 0xFF800000 : f32
    %99 = vector.broadcast %cst_35 : f32 to vector<8x1xf32>
    %100 = arith.cmpf oeq, %98, %99 : vector<8x1xf32>
    %cst_36 = arith.constant 0.000000e+00 : f32
    %101 = vector.broadcast %cst_36 : f32 to vector<8x1xf32>
    %102 = arith.select %100, %101, %98 : vector<8x1xi1>, vector<8x1xf32>
    %103 = vector.broadcast %102 : vector<8x1xf32> to vector<8x8xf32>
    %104 = arith.subf %96, %103 : vector<8x8xf32>
    %105 = math.exp %104 : vector<8x8xf32>
    %cst_37 = arith.constant dense<0.000000e+00> : vector<8xf32>
    %106 = vector.multi_reduction <add>, %105, %cst_37 [1] : vector<8x8xf32> to vector<8xf32>
    %107 = vector.shape_cast %106 : vector<8xf32> to vector<8x1xf32>
    %cst_38 = arith.constant 0.000000e+00 : f32
    %108 = vector.broadcast %cst_38 : f32 to vector<8x1xf32>
    %109 = arith.cmpf oeq, %107, %108 : vector<8x1xf32>
    %cst_39 = arith.constant 1.000000e+00 : f32
    %110 = vector.broadcast %cst_39 : f32 to vector<8x1xf32>
    %111 = arith.select %109, %110, %107 : vector<8x1xi1>, vector<8x1xf32>
    %112 = tpu.reciprocal %111 {approx = true} : vector<8x1xf32> -> vector<8x1xf32>
    %113 = vector.broadcast %112 : vector<8x1xf32> to vector<8x8xf32>
    %114 = arith.mulf %105, %113 : vector<8x8xf32>
    %115 = arith.truncf %114 : vector<8x8xf32> to vector<8x8xbf16>
    %cst_40 = arith.constant dense<0.000000e+00> : vector<8x8xf32>
    %116 = tpu.matmul %115, %91, %cst_40 {dimension_numbers = #tpu.dot_dimension_numbers<[1], [0], [0], [1], [0, 0, 1, 1], [], []>} : vector<8x8xbf16>, vector<8x8xbf16>, vector<8x8xf32> -> vector<8x8xf32>
    %117 = arith.truncf %116 : vector<8x8xf32> to vector<8x8xbf16>
    %118 = vector.extract_strided_slice %14 {offsets = [16, 0], sizes = [8, 32], strides = [1, 1]} : vector<32x32xbf16> to vector<8x32xbf16>
    %cst_41 = arith.constant dense<0.000000e+00> : vector<8x32xf32>
    %119 = tpu.matmul %117, %118, %cst_41 {dimension_numbers = #tpu.dot_dimension_numbers<[1], [0], [0], [1], [0, 0, 1, 1], [], []>} : vector<8x8xbf16>, vector<8x32xbf16>, vector<8x32xf32> -> vector<8x32xf32>
    %120 = arith.addf %85, %119 : vector<8x32xf32>
    %121 = vector.extract_strided_slice %11 {offsets = [0, 24], sizes = [8, 8], strides = [1, 1]} : vector<8x32xf32> to vector<8x8xf32>
    %122 = arith.truncf %121 : vector<8x8xf32> to vector<8x8xbf16>
    %123 = vector.extract_strided_slice %12 {offsets = [0, 24], sizes = [8, 8], strides = [1, 1]} : vector<8x32xf32> to vector<8x8xf32>
    %124 = arith.truncf %123 : vector<8x8xf32> to vector<8x8xbf16>
    %125 = vector.extract_strided_slice %13 {offsets = [0, 24], sizes = [8, 8], strides = [1, 1]} : vector<8x32xf32> to vector<8x8xf32>
    %126 = arith.truncf %125 : vector<8x8xf32> to vector<8x8xbf16>
    %cst_42 = arith.constant dense<0.000000e+00> : vector<8x8xf32>
    %127 = tpu.matmul %122, %124, %cst_42 {dimension_numbers = #tpu.dot_dimension_numbers<[1], [1], [0], [0], [0, 0, 1, 0], [], []>} : vector<8x8xbf16>, vector<8x8xbf16>, vector<8x8xf32> -> vector<8x8xf32>
    %cst_43 = arith.constant 0.353553385 : f32
    %128 = vector.broadcast %cst_43 : f32 to vector<8x8xf32>
    %129 = arith.mulf %127, %128 : vector<8x8xf32>
    %130 = vector.broadcast %4 : vector<1x8xf32> to vector<8x8xf32>
    %131 = arith.addf %129, %130 : vector<8x8xf32>
    %cst_44 = arith.constant dense<0xFF800000> : vector<8xf32>
    %132 = vector.multi_reduction <maximumf>, %131, %cst_44 [1] : vector<8x8xf32> to vector<8xf32>
    %133 = vector.shape_cast %132 : vector<8xf32> to vector<8x1xf32>
    %cst_45 = arith.constant 0xFF800000 : f32
    %134 = vector.broadcast %cst_45 : f32 to vector<8x1xf32>
    %135 = arith.cmpf oeq, %133, %134 : vector<8x1xf32>
    %cst_46 = arith.constant 0.000000e+00 : f32
    %136 = vector.broadcast %cst_46 : f32 to vector<8x1xf32>
    %137 = arith.select %135, %136, %133 : vector<8x1xi1>, vector<8x1xf32>
    %138 = vector.broadcast %137 : vector<8x1xf32> to vector<8x8xf32>
    %139 = arith.subf %131, %138 : vector<8x8xf32>
    %140 = math.exp %139 : vector<8x8xf32>
    %cst_47 = arith.constant dense<0.000000e+00> : vector<8xf32>
    %141 = vector.multi_reduction <add>, %140, %cst_47 [1] : vector<8x8xf32> to vector<8xf32>
    %142 = vector.shape_cast %141 : vector<8xf32> to vector<8x1xf32>
    %cst_48 = arith.constant 0.000000e+00 : f32
    %143 = vector.broadcast %cst_48 : f32 to vector<8x1xf32>
    %144 = arith.cmpf oeq, %142, %143 : vector<8x1xf32>
    %cst_49 = arith.constant 1.000000e+00 : f32
    %145 = vector.broadcast %cst_49 : f32 to vector<8x1xf32>
    %146 = arith.select %144, %145, %142 : vector<8x1xi1>, vector<8x1xf32>
    %147 = tpu.reciprocal %146 {approx = true} : vector<8x1xf32> -> vector<8x1xf32>
    %148 = vector.broadcast %147 : vector<8x1xf32> to vector<8x8xf32>
    %149 = arith.mulf %140, %148 : vector<8x8xf32>
    %150 = arith.truncf %149 : vector<8x8xf32> to vector<8x8xbf16>
    %cst_50 = arith.constant dense<0.000000e+00> : vector<8x8xf32>
    %151 = tpu.matmul %150, %126, %cst_50 {dimension_numbers = #tpu.dot_dimension_numbers<[1], [0], [0], [1], [0, 0, 1, 1], [], []>} : vector<8x8xbf16>, vector<8x8xbf16>, vector<8x8xf32> -> vector<8x8xf32>
    %152 = arith.truncf %151 : vector<8x8xf32> to vector<8x8xbf16>
    %153 = vector.extract_strided_slice %14 {offsets = [24, 0], sizes = [8, 32], strides = [1, 1]} : vector<32x32xbf16> to vector<8x32xbf16>
    %cst_51 = arith.constant dense<0.000000e+00> : vector<8x32xf32>
    %154 = tpu.matmul %152, %153, %cst_51 {dimension_numbers = #tpu.dot_dimension_numbers<[1], [0], [0], [1], [0, 0, 1, 1], [], []>} : vector<8x8xbf16>, vector<8x32xbf16>, vector<8x32xf32> -> vector<8x32xf32>
    %155 = arith.addf %120, %154 : vector<8x32xf32>
    %c0_52 = arith.constant 0 : index
    %c0_53 = arith.constant 0 : index
    %156 = vector.load %arg7[%c0_52, %c0_53] : memref<1x32xf32, #tpu.memory_space<vmem>>, vector<1x32xf32>
    %157 = vector.broadcast %156 : vector<1x32xf32> to vector<8x32xf32>
    %158 = arith.addf %155, %157 : vector<8x32xf32>
    %159 = arith.addf %2, %158 : vector<8x32xf32>
    %c0_54 = arith.constant 0 : index
    %c0_55 = arith.constant 0 : index
    %160 = vector.load %arg8[%c0_54, %c0_55] : memref<1x32xf32, #tpu.memory_space<vmem>>, vector<1x32xf32>
    %c0_56 = arith.constant 0 : index
    %c0_57 = arith.constant 0 : index
    %161 = vector.load %arg9[%c0_56, %c0_57] : memref<1x32xf32, #tpu.memory_space<vmem>>, vector<1x32xf32>
    %cst_58 = arith.constant dense<0.000000e+00> : vector<8xf32>
    %162 = vector.multi_reduction <add>, %159, %cst_58 [1] : vector<8x32xf32> to vector<8xf32>
    %163 = vector.shape_cast %162 : vector<8xf32> to vector<8x1xf32>
    %cst_59 = arith.constant 3.200000e+01 : f32
    %164 = vector.broadcast %cst_59 : f32 to vector<8x1xf32>
    %165 = arith.divf %163, %164 : vector<8x1xf32>
    %166 = vector.broadcast %165 : vector<8x1xf32> to vector<8x32xf32>
    %167 = arith.subf %159, %166 : vector<8x32xf32>
    %168 = arith.mulf %167, %167 : vector<8x32xf32>
    %cst_60 = arith.constant dense<0.000000e+00> : vector<8xf32>
    %169 = vector.multi_reduction <add>, %168, %cst_60 [1] : vector<8x32xf32> to vector<8xf32>
    %170 = vector.shape_cast %169 : vector<8xf32> to vector<8x1xf32>
    %cst_61 = arith.constant 3.200000e+01 : f32
    %171 = vector.broadcast %cst_61 : f32 to vector<8x1xf32>
    %172 = arith.divf %170, %171 : vector<8x1xf32>
    %173 = vector.broadcast %165 : vector<8x1xf32> to vector<8x32xf32>
    %174 = arith.subf %159, %173 : vector<8x32xf32>
    %cst_62 = arith.constant 9.99999974E-6 : f32
    %175 = vector.broadcast %cst_62 : f32 to vector<8x1xf32>
    %176 = arith.addf %172, %175 : vector<8x1xf32>
    %177 = math.rsqrt %176 : vector<8x1xf32>
    %178 = vector.broadcast %177 : vector<8x1xf32> to vector<8x32xf32>
    %179 = arith.mulf %174, %178 : vector<8x32xf32>
    %180 = vector.broadcast %160 : vector<1x32xf32> to vector<8x32xf32>
    %181 = arith.mulf %179, %180 : vector<8x32xf32>
    %182 = vector.broadcast %161 : vector<1x32xf32> to vector<8x32xf32>
    %183 = arith.addf %181, %182 : vector<8x32xf32>
    %184 = arith.truncf %183 : vector<8x32xf32> to vector<8x32xbf16>
    %c0_63 = arith.constant 0 : index
    %c0_64 = arith.constant 0 : index
    %185 = vector.load %arg10[%c0_63, %c0_64] : memref<32x32xbf16, #tpu.memory_space<vmem>>, vector<32x32xbf16>
    %cst_65 = arith.constant dense<0.000000e+00> : vector<8x32xf32>
    %186 = tpu.matmul %184, %185, %cst_65 {dimension_numbers = #tpu.dot_dimension_numbers<[1], [0], [0], [1], [0, 0, 1, 1], [], []>} : vector<8x32xbf16>, vector<32x32xbf16>, vector<8x32xf32> -> vector<8x32xf32>
    %c0_66 = arith.constant 0 : index
    %c0_67 = arith.constant 0 : index
    %187 = vector.load %arg11[%c0_66, %c0_67] : memref<1x32xf32, #tpu.memory_space<vmem>>, vector<1x32xf32>
    %188 = vector.broadcast %187 : vector<1x32xf32> to vector<8x32xf32>
    %189 = arith.addf %186, %188 : vector<8x32xf32>
    %c0_68 = arith.constant 0 : index
    %c0_69 = arith.constant 0 : index
    %c0_70 = arith.constant 0 : index
    %190 = vector.load %arg2[%c0_68, %c0_69, %c0_70] : memref<1x8x32xbf16, #tpu.memory_space<vmem>>, vector<1x8x32xbf16>
    %191 = vector.shape_cast %190 : vector<1x8x32xbf16> to vector<8x32xbf16>
    %c0_71 = arith.constant 0 : index
    %c0_72 = arith.constant 0 : index
    %192 = vector.load %arg12[%c0_71, %c0_72] : memref<32x64xbf16, #tpu.memory_space<vmem>>, vector<32x64xbf16>
    %cst_73 = arith.constant dense<0.000000e+00> : vector<8x64xf32>
    %193 = tpu.matmul %191, %192, %cst_73 {dimension_numbers = #tpu.dot_dimension_numbers<[1], [0], [0], [1], [0, 0, 1, 1], [], []>} : vector<8x32xbf16>, vector<32x64xbf16>, vector<8x64xf32> -> vector<8x64xf32>
    %c0_74 = arith.constant 0 : index
    %c0_75 = arith.constant 0 : index
    %194 = vector.load %arg13[%c0_74, %c0_75] : memref<1x64xf32, #tpu.memory_space<vmem>>, vector<1x64xf32>
    %195 = vector.broadcast %194 : vector<1x64xf32> to vector<8x64xf32>
    %196 = arith.addf %193, %195 : vector<8x64xf32>
    %197 = vector.extract_strided_slice %196 {offsets = [0, 0], sizes = [8, 32], strides = [1, 1]} : vector<8x64xf32> to vector<8x32xf32>
    %198 = vector.extract_strided_slice %196 {offsets = [0, 32], sizes = [8, 32], strides = [1, 1]} : vector<8x64xf32> to vector<8x32xf32>
    %c0_76 = arith.constant 0 : index
    %c0_77 = arith.constant 0 : index
    %199 = vector.load %arg14[%c0_76, %c0_77] : memref<32x32xbf16, #tpu.memory_space<vmem>>, vector<32x32xbf16>
    %cst_78 = arith.constant 0.000000e+00 : f32
    %200 = vector.broadcast %cst_78 : f32 to vector<8x32xf32>
    %201 = vector.extract_strided_slice %189 {offsets = [0, 0], sizes = [8, 8], strides = [1, 1]} : vector<8x32xf32> to vector<8x8xf32>
    %202 = arith.truncf %201 : vector<8x8xf32> to vector<8x8xbf16>
    %203 = vector.extract_strided_slice %197 {offsets = [0, 0], sizes = [8, 8], strides = [1, 1]} : vector<8x32xf32> to vector<8x8xf32>
    %204 = arith.truncf %203 : vector<8x8xf32> to vector<8x8xbf16>
    %205 = vector.extract_strided_slice %198 {offsets = [0, 0], sizes = [8, 8], strides = [1, 1]} : vector<8x32xf32> to vector<8x8xf32>
    %206 = arith.truncf %205 : vector<8x8xf32> to vector<8x8xbf16>
    %cst_79 = arith.constant dense<0.000000e+00> : vector<8x8xf32>
    %207 = tpu.matmul %202, %204, %cst_79 {dimension_numbers = #tpu.dot_dimension_numbers<[1], [1], [0], [0], [0, 0, 1, 0], [], []>} : vector<8x8xbf16>, vector<8x8xbf16>, vector<8x8xf32> -> vector<8x8xf32>
    %cst_80 = arith.constant 0.353553385 : f32
    %208 = vector.broadcast %cst_80 : f32 to vector<8x8xf32>
    %209 = arith.mulf %207, %208 : vector<8x8xf32>
    %cst_81 = arith.constant dense<0xFF800000> : vector<8xf32>
    %210 = vector.multi_reduction <maximumf>, %209, %cst_81 [1] : vector<8x8xf32> to vector<8xf32>
    %211 = vector.shape_cast %210 : vector<8xf32> to vector<8x1xf32>
    %cst_82 = arith.constant 0xFF800000 : f32
    %212 = vector.broadcast %cst_82 : f32 to vector<8x1xf32>
    %213 = arith.cmpf oeq, %211, %212 : vector<8x1xf32>
    %cst_83 = arith.constant 0.000000e+00 : f32
    %214 = vector.broadcast %cst_83 : f32 to vector<8x1xf32>
    %215 = arith.select %213, %214, %211 : vector<8x1xi1>, vector<8x1xf32>
    %216 = vector.broadcast %215 : vector<8x1xf32> to vector<8x8xf32>
    %217 = arith.subf %209, %216 : vector<8x8xf32>
    %218 = math.exp %217 : vector<8x8xf32>
    %cst_84 = arith.constant dense<0.000000e+00> : vector<8xf32>
    %219 = vector.multi_reduction <add>, %218, %cst_84 [1] : vector<8x8xf32> to vector<8xf32>
    %220 = vector.shape_cast %219 : vector<8xf32> to vector<8x1xf32>
    %cst_85 = arith.constant 0.000000e+00 : f32
    %221 = vector.broadcast %cst_85 : f32 to vector<8x1xf32>
    %222 = arith.cmpf oeq, %220, %221 : vector<8x1xf32>
    %cst_86 = arith.constant 1.000000e+00 : f32
    %223 = vector.broadcast %cst_86 : f32 to vector<8x1xf32>
    %224 = arith.select %222, %223, %220 : vector<8x1xi1>, vector<8x1xf32>
    %225 = tpu.reciprocal %224 {approx = true} : vector<8x1xf32> -> vector<8x1xf32>
    %226 = vector.broadcast %225 : vector<8x1xf32> to vector<8x8xf32>
    %227 = arith.mulf %218, %226 : vector<8x8xf32>
    %228 = arith.truncf %227 : vector<8x8xf32> to vector<8x8xbf16>
    %cst_87 = arith.constant dense<0.000000e+00> : vector<8x8xf32>
    %229 = tpu.matmul %228, %206, %cst_87 {dimension_numbers = #tpu.dot_dimension_numbers<[1], [0], [0], [1], [0, 0, 1, 1], [], []>} : vector<8x8xbf16>, vector<8x8xbf16>, vector<8x8xf32> -> vector<8x8xf32>
    %230 = arith.truncf %229 : vector<8x8xf32> to vector<8x8xbf16>
    %231 = vector.extract_strided_slice %199 {offsets = [0, 0], sizes = [8, 32], strides = [1, 1]} : vector<32x32xbf16> to vector<8x32xbf16>
    %cst_88 = arith.constant dense<0.000000e+00> : vector<8x32xf32>
    %232 = tpu.matmul %230, %231, %cst_88 {dimension_numbers = #tpu.dot_dimension_numbers<[1], [0], [0], [1], [0, 0, 1, 1], [], []>} : vector<8x8xbf16>, vector<8x32xbf16>, vector<8x32xf32> -> vector<8x32xf32>
    %233 = arith.addf %200, %232 : vector<8x32xf32>
    %234 = vector.extract_strided_slice %189 {offsets = [0, 8], sizes = [8, 8], strides = [1, 1]} : vector<8x32xf32> to vector<8x8xf32>
    %235 = arith.truncf %234 : vector<8x8xf32> to vector<8x8xbf16>
    %236 = vector.extract_strided_slice %197 {offsets = [0, 8], sizes = [8, 8], strides = [1, 1]} : vector<8x32xf32> to vector<8x8xf32>
    %237 = arith.truncf %236 : vector<8x8xf32> to vector<8x8xbf16>
    %238 = vector.extract_strided_slice %198 {offsets = [0, 8], sizes = [8, 8], strides = [1, 1]} : vector<8x32xf32> to vector<8x8xf32>
    %239 = arith.truncf %238 : vector<8x8xf32> to vector<8x8xbf16>
    %cst_89 = arith.constant dense<0.000000e+00> : vector<8x8xf32>
    %240 = tpu.matmul %235, %237, %cst_89 {dimension_numbers = #tpu.dot_dimension_numbers<[1], [1], [0], [0], [0, 0, 1, 0], [], []>} : vector<8x8xbf16>, vector<8x8xbf16>, vector<8x8xf32> -> vector<8x8xf32>
    %cst_90 = arith.constant 0.353553385 : f32
    %241 = vector.broadcast %cst_90 : f32 to vector<8x8xf32>
    %242 = arith.mulf %240, %241 : vector<8x8xf32>
    %cst_91 = arith.constant dense<0xFF800000> : vector<8xf32>
    %243 = vector.multi_reduction <maximumf>, %242, %cst_91 [1] : vector<8x8xf32> to vector<8xf32>
    %244 = vector.shape_cast %243 : vector<8xf32> to vector<8x1xf32>
    %cst_92 = arith.constant 0xFF800000 : f32
    %245 = vector.broadcast %cst_92 : f32 to vector<8x1xf32>
    %246 = arith.cmpf oeq, %244, %245 : vector<8x1xf32>
    %cst_93 = arith.constant 0.000000e+00 : f32
    %247 = vector.broadcast %cst_93 : f32 to vector<8x1xf32>
    %248 = arith.select %246, %247, %244 : vector<8x1xi1>, vector<8x1xf32>
    %249 = vector.broadcast %248 : vector<8x1xf32> to vector<8x8xf32>
    %250 = arith.subf %242, %249 : vector<8x8xf32>
    %251 = math.exp %250 : vector<8x8xf32>
    %cst_94 = arith.constant dense<0.000000e+00> : vector<8xf32>
    %252 = vector.multi_reduction <add>, %251, %cst_94 [1] : vector<8x8xf32> to vector<8xf32>
    %253 = vector.shape_cast %252 : vector<8xf32> to vector<8x1xf32>
    %cst_95 = arith.constant 0.000000e+00 : f32
    %254 = vector.broadcast %cst_95 : f32 to vector<8x1xf32>
    %255 = arith.cmpf oeq, %253, %254 : vector<8x1xf32>
    %cst_96 = arith.constant 1.000000e+00 : f32
    %256 = vector.broadcast %cst_96 : f32 to vector<8x1xf32>
    %257 = arith.select %255, %256, %253 : vector<8x1xi1>, vector<8x1xf32>
    %258 = tpu.reciprocal %257 {approx = true} : vector<8x1xf32> -> vector<8x1xf32>
    %259 = vector.broadcast %258 : vector<8x1xf32> to vector<8x8xf32>
    %260 = arith.mulf %251, %259 : vector<8x8xf32>
    %261 = arith.truncf %260 : vector<8x8xf32> to vector<8x8xbf16>
    %cst_97 = arith.constant dense<0.000000e+00> : vector<8x8xf32>
    %262 = tpu.matmul %261, %239, %cst_97 {dimension_numbers = #tpu.dot_dimension_numbers<[1], [0], [0], [1], [0, 0, 1, 1], [], []>} : vector<8x8xbf16>, vector<8x8xbf16>, vector<8x8xf32> -> vector<8x8xf32>
    %263 = arith.truncf %262 : vector<8x8xf32> to vector<8x8xbf16>
    %264 = vector.extract_strided_slice %199 {offsets = [8, 0], sizes = [8, 32], strides = [1, 1]} : vector<32x32xbf16> to vector<8x32xbf16>
    %cst_98 = arith.constant dense<0.000000e+00> : vector<8x32xf32>
    %265 = tpu.matmul %263, %264, %cst_98 {dimension_numbers = #tpu.dot_dimension_numbers<[1], [0], [0], [1], [0, 0, 1, 1], [], []>} : vector<8x8xbf16>, vector<8x32xbf16>, vector<8x32xf32> -> vector<8x32xf32>
    %266 = arith.addf %233, %265 : vector<8x32xf32>
    %267 = vector.extract_strided_slice %189 {offsets = [0, 16], sizes = [8, 8], strides = [1, 1]} : vector<8x32xf32> to vector<8x8xf32>
    %268 = arith.truncf %267 : vector<8x8xf32> to vector<8x8xbf16>
    %269 = vector.extract_strided_slice %197 {offsets = [0, 16], sizes = [8, 8], strides = [1, 1]} : vector<8x32xf32> to vector<8x8xf32>
    %270 = arith.truncf %269 : vector<8x8xf32> to vector<8x8xbf16>
    %271 = vector.extract_strided_slice %198 {offsets = [0, 16], sizes = [8, 8], strides = [1, 1]} : vector<8x32xf32> to vector<8x8xf32>
    %272 = arith.truncf %271 : vector<8x8xf32> to vector<8x8xbf16>
    %cst_99 = arith.constant dense<0.000000e+00> : vector<8x8xf32>
    %273 = tpu.matmul %268, %270, %cst_99 {dimension_numbers = #tpu.dot_dimension_numbers<[1], [1], [0], [0], [0, 0, 1, 0], [], []>} : vector<8x8xbf16>, vector<8x8xbf16>, vector<8x8xf32> -> vector<8x8xf32>
    %cst_100 = arith.constant 0.353553385 : f32
    %274 = vector.broadcast %cst_100 : f32 to vector<8x8xf32>
    %275 = arith.mulf %273, %274 : vector<8x8xf32>
    %cst_101 = arith.constant dense<0xFF800000> : vector<8xf32>
    %276 = vector.multi_reduction <maximumf>, %275, %cst_101 [1] : vector<8x8xf32> to vector<8xf32>
    %277 = vector.shape_cast %276 : vector<8xf32> to vector<8x1xf32>
    %cst_102 = arith.constant 0xFF800000 : f32
    %278 = vector.broadcast %cst_102 : f32 to vector<8x1xf32>
    %279 = arith.cmpf oeq, %277, %278 : vector<8x1xf32>
    %cst_103 = arith.constant 0.000000e+00 : f32
    %280 = vector.broadcast %cst_103 : f32 to vector<8x1xf32>
    %281 = arith.select %279, %280, %277 : vector<8x1xi1>, vector<8x1xf32>
    %282 = vector.broadcast %281 : vector<8x1xf32> to vector<8x8xf32>
    %283 = arith.subf %275, %282 : vector<8x8xf32>
    %284 = math.exp %283 : vector<8x8xf32>
    %cst_104 = arith.constant dense<0.000000e+00> : vector<8xf32>
    %285 = vector.multi_reduction <add>, %284, %cst_104 [1] : vector<8x8xf32> to vector<8xf32>
    %286 = vector.shape_cast %285 : vector<8xf32> to vector<8x1xf32>
    %cst_105 = arith.constant 0.000000e+00 : f32
    %287 = vector.broadcast %cst_105 : f32 to vector<8x1xf32>
    %288 = arith.cmpf oeq, %286, %287 : vector<8x1xf32>
    %cst_106 = arith.constant 1.000000e+00 : f32
    %289 = vector.broadcast %cst_106 : f32 to vector<8x1xf32>
    %290 = arith.select %288, %289, %286 : vector<8x1xi1>, vector<8x1xf32>
    %291 = tpu.reciprocal %290 {approx = true} : vector<8x1xf32> -> vector<8x1xf32>
    %292 = vector.broadcast %291 : vector<8x1xf32> to vector<8x8xf32>
    %293 = arith.mulf %284, %292 : vector<8x8xf32>
    %294 = arith.truncf %293 : vector<8x8xf32> to vector<8x8xbf16>
    %cst_107 = arith.constant dense<0.000000e+00> : vector<8x8xf32>
    %295 = tpu.matmul %294, %272, %cst_107 {dimension_numbers = #tpu.dot_dimension_numbers<[1], [0], [0], [1], [0, 0, 1, 1], [], []>} : vector<8x8xbf16>, vector<8x8xbf16>, vector<8x8xf32> -> vector<8x8xf32>
    %296 = arith.truncf %295 : vector<8x8xf32> to vector<8x8xbf16>
    %297 = vector.extract_strided_slice %199 {offsets = [16, 0], sizes = [8, 32], strides = [1, 1]} : vector<32x32xbf16> to vector<8x32xbf16>
    %cst_108 = arith.constant dense<0.000000e+00> : vector<8x32xf32>
    %298 = tpu.matmul %296, %297, %cst_108 {dimension_numbers = #tpu.dot_dimension_numbers<[1], [0], [0], [1], [0, 0, 1, 1], [], []>} : vector<8x8xbf16>, vector<8x32xbf16>, vector<8x32xf32> -> vector<8x32xf32>
    %299 = arith.addf %266, %298 : vector<8x32xf32>
    %300 = vector.extract_strided_slice %189 {offsets = [0, 24], sizes = [8, 8], strides = [1, 1]} : vector<8x32xf32> to vector<8x8xf32>
    %301 = arith.truncf %300 : vector<8x8xf32> to vector<8x8xbf16>
    %302 = vector.extract_strided_slice %197 {offsets = [0, 24], sizes = [8, 8], strides = [1, 1]} : vector<8x32xf32> to vector<8x8xf32>
    %303 = arith.truncf %302 : vector<8x8xf32> to vector<8x8xbf16>
    %304 = vector.extract_strided_slice %198 {offsets = [0, 24], sizes = [8, 8], strides = [1, 1]} : vector<8x32xf32> to vector<8x8xf32>
    %305 = arith.truncf %304 : vector<8x8xf32> to vector<8x8xbf16>
    %cst_109 = arith.constant dense<0.000000e+00> : vector<8x8xf32>
    %306 = tpu.matmul %301, %303, %cst_109 {dimension_numbers = #tpu.dot_dimension_numbers<[1], [1], [0], [0], [0, 0, 1, 0], [], []>} : vector<8x8xbf16>, vector<8x8xbf16>, vector<8x8xf32> -> vector<8x8xf32>
    %cst_110 = arith.constant 0.353553385 : f32
    %307 = vector.broadcast %cst_110 : f32 to vector<8x8xf32>
    %308 = arith.mulf %306, %307 : vector<8x8xf32>
    %cst_111 = arith.constant dense<0xFF800000> : vector<8xf32>
    %309 = vector.multi_reduction <maximumf>, %308, %cst_111 [1] : vector<8x8xf32> to vector<8xf32>
    %310 = vector.shape_cast %309 : vector<8xf32> to vector<8x1xf32>
    %cst_112 = arith.constant 0xFF800000 : f32
    %311 = vector.broadcast %cst_112 : f32 to vector<8x1xf32>
    %312 = arith.cmpf oeq, %310, %311 : vector<8x1xf32>
    %cst_113 = arith.constant 0.000000e+00 : f32
    %313 = vector.broadcast %cst_113 : f32 to vector<8x1xf32>
    %314 = arith.select %312, %313, %310 : vector<8x1xi1>, vector<8x1xf32>
    %315 = vector.broadcast %314 : vector<8x1xf32> to vector<8x8xf32>
    %316 = arith.subf %308, %315 : vector<8x8xf32>
    %317 = math.exp %316 : vector<8x8xf32>
    %cst_114 = arith.constant dense<0.000000e+00> : vector<8xf32>
    %318 = vector.multi_reduction <add>, %317, %cst_114 [1] : vector<8x8xf32> to vector<8xf32>
    %319 = vector.shape_cast %318 : vector<8xf32> to vector<8x1xf32>
    %cst_115 = arith.constant 0.000000e+00 : f32
    %320 = vector.broadcast %cst_115 : f32 to vector<8x1xf32>
    %321 = arith.cmpf oeq, %319, %320 : vector<8x1xf32>
    %cst_116 = arith.constant 1.000000e+00 : f32
    %322 = vector.broadcast %cst_116 : f32 to vector<8x1xf32>
    %323 = arith.select %321, %322, %319 : vector<8x1xi1>, vector<8x1xf32>
    %324 = tpu.reciprocal %323 {approx = true} : vector<8x1xf32> -> vector<8x1xf32>
    %325 = vector.broadcast %324 : vector<8x1xf32> to vector<8x8xf32>
    %326 = arith.mulf %317, %325 : vector<8x8xf32>
    %327 = arith.truncf %326 : vector<8x8xf32> to vector<8x8xbf16>
    %cst_117 = arith.constant dense<0.000000e+00> : vector<8x8xf32>
    %328 = tpu.matmul %327, %305, %cst_117 {dimension_numbers = #tpu.dot_dimension_numbers<[1], [0], [0], [1], [0, 0, 1, 1], [], []>} : vector<8x8xbf16>, vector<8x8xbf16>, vector<8x8xf32> -> vector<8x8xf32>
    %329 = arith.truncf %328 : vector<8x8xf32> to vector<8x8xbf16>
    %330 = vector.extract_strided_slice %199 {offsets = [24, 0], sizes = [8, 32], strides = [1, 1]} : vector<32x32xbf16> to vector<8x32xbf16>
    %cst_118 = arith.constant dense<0.000000e+00> : vector<8x32xf32>
    %331 = tpu.matmul %329, %330, %cst_118 {dimension_numbers = #tpu.dot_dimension_numbers<[1], [0], [0], [1], [0, 0, 1, 1], [], []>} : vector<8x8xbf16>, vector<8x32xbf16>, vector<8x32xf32> -> vector<8x32xf32>
    %332 = arith.addf %299, %331 : vector<8x32xf32>
    %c0_119 = arith.constant 0 : index
    %c0_120 = arith.constant 0 : index
    %333 = vector.load %arg15[%c0_119, %c0_120] : memref<1x32xf32, #tpu.memory_space<vmem>>, vector<1x32xf32>
    %334 = vector.broadcast %333 : vector<1x32xf32> to vector<8x32xf32>
    %335 = arith.addf %332, %334 : vector<8x32xf32>
    %336 = arith.addf %183, %335 : vector<8x32xf32>
    %c0_121 = arith.constant 0 : index
    %c0_122 = arith.constant 0 : index
    %337 = vector.load %arg16[%c0_121, %c0_122] : memref<1x32xf32, #tpu.memory_space<vmem>>, vector<1x32xf32>
    %c0_123 = arith.constant 0 : index
    %c0_124 = arith.constant 0 : index
    %338 = vector.load %arg17[%c0_123, %c0_124] : memref<1x32xf32, #tpu.memory_space<vmem>>, vector<1x32xf32>
    %cst_125 = arith.constant dense<0.000000e+00> : vector<8xf32>
    %339 = vector.multi_reduction <add>, %336, %cst_125 [1] : vector<8x32xf32> to vector<8xf32>
    %340 = vector.shape_cast %339 : vector<8xf32> to vector<8x1xf32>
    %cst_126 = arith.constant 3.200000e+01 : f32
    %341 = vector.broadcast %cst_126 : f32 to vector<8x1xf32>
    %342 = arith.divf %340, %341 : vector<8x1xf32>
    %343 = vector.broadcast %342 : vector<8x1xf32> to vector<8x32xf32>
    %344 = arith.subf %336, %343 : vector<8x32xf32>
    %345 = arith.mulf %344, %344 : vector<8x32xf32>
    %cst_127 = arith.constant dense<0.000000e+00> : vector<8xf32>
    %346 = vector.multi_reduction <add>, %345, %cst_127 [1] : vector<8x32xf32> to vector<8xf32>
    %347 = vector.shape_cast %346 : vector<8xf32> to vector<8x1xf32>
    %cst_128 = arith.constant 3.200000e+01 : f32
    %348 = vector.broadcast %cst_128 : f32 to vector<8x1xf32>
    %349 = arith.divf %347, %348 : vector<8x1xf32>
    %350 = vector.broadcast %342 : vector<8x1xf32> to vector<8x32xf32>
    %351 = arith.subf %336, %350 : vector<8x32xf32>
    %cst_129 = arith.constant 9.99999974E-6 : f32
    %352 = vector.broadcast %cst_129 : f32 to vector<8x1xf32>
    %353 = arith.addf %349, %352 : vector<8x1xf32>
    %354 = math.rsqrt %353 : vector<8x1xf32>
    %355 = vector.broadcast %354 : vector<8x1xf32> to vector<8x32xf32>
    %356 = arith.mulf %351, %355 : vector<8x32xf32>
    %357 = vector.broadcast %337 : vector<1x32xf32> to vector<8x32xf32>
    %358 = arith.mulf %356, %357 : vector<8x32xf32>
    %359 = vector.broadcast %338 : vector<1x32xf32> to vector<8x32xf32>
    %360 = arith.addf %358, %359 : vector<8x32xf32>
    %361 = arith.truncf %360 : vector<8x32xf32> to vector<8x32xbf16>
    %c0_130 = arith.constant 0 : index
    %c0_131 = arith.constant 0 : index
    %362 = vector.load %arg18[%c0_130, %c0_131] : memref<32x128xbf16, #tpu.memory_space<vmem>>, vector<32x128xbf16>
    %cst_132 = arith.constant dense<0.000000e+00> : vector<8x128xf32>
    %363 = tpu.matmul %361, %362, %cst_132 {dimension_numbers = #tpu.dot_dimension_numbers<[1], [0], [0], [1], [0, 0, 1, 1], [], []>} : vector<8x32xbf16>, vector<32x128xbf16>, vector<8x128xf32> -> vector<8x128xf32>
    %c0_133 = arith.constant 0 : index
    %c0_134 = arith.constant 0 : index
    %364 = vector.load %arg19[%c0_133, %c0_134] : memref<1x128xf32, #tpu.memory_space<vmem>>, vector<1x128xf32>
    %365 = vector.broadcast %364 : vector<1x128xf32> to vector<8x128xf32>
    %366 = arith.addf %363, %365 : vector<8x128xf32>
    %cst_135 = arith.constant 0.000000e+00 : f32
    %367 = vector.broadcast %cst_135 : f32 to vector<8x128xf32>
    %368 = arith.maximumf %366, %367 : vector<8x128xf32>
    %369 = arith.truncf %368 : vector<8x128xf32> to vector<8x128xbf16>
    %c0_136 = arith.constant 0 : index
    %c0_137 = arith.constant 0 : index
    %370 = vector.load %arg20[%c0_136, %c0_137] : memref<128x32xbf16, #tpu.memory_space<vmem>>, vector<128x32xbf16>
    %cst_138 = arith.constant dense<0.000000e+00> : vector<8x32xf32>
    %371 = tpu.matmul %369, %370, %cst_138 {dimension_numbers = #tpu.dot_dimension_numbers<[1], [0], [0], [1], [0, 0, 1, 1], [], []>} : vector<8x128xbf16>, vector<128x32xbf16>, vector<8x32xf32> -> vector<8x32xf32>
    %c0_139 = arith.constant 0 : index
    %c0_140 = arith.constant 0 : index
    %372 = vector.load %arg21[%c0_139, %c0_140] : memref<1x32xf32, #tpu.memory_space<vmem>>, vector<1x32xf32>
    %373 = vector.broadcast %372 : vector<1x32xf32> to vector<8x32xf32>
    %374 = arith.addf %371, %373 : vector<8x32xf32>
    %375 = arith.addf %360, %374 : vector<8x32xf32>
    %c0_141 = arith.constant 0 : index
    %c0_142 = arith.constant 0 : index
    %376 = vector.load %arg22[%c0_141, %c0_142] : memref<1x32xf32, #tpu.memory_space<vmem>>, vector<1x32xf32>
    %c0_143 = arith.constant 0 : index
    %c0_144 = arith.constant 0 : index
    %377 = vector.load %arg23[%c0_143, %c0_144] : memref<1x32xf32, #tpu.memory_space<vmem>>, vector<1x32xf32>
    %cst_145 = arith.constant dense<0.000000e+00> : vector<8xf32>
    %378 = vector.multi_reduction <add>, %375, %cst_145 [1] : vector<8x32xf32> to vector<8xf32>
    %379 = vector.shape_cast %378 : vector<8xf32> to vector<8x1xf32>
    %cst_146 = arith.constant 3.200000e+01 : f32
    %380 = vector.broadcast %cst_146 : f32 to vector<8x1xf32>
    %381 = arith.divf %379, %380 : vector<8x1xf32>
    %382 = vector.broadcast %381 : vector<8x1xf32> to vector<8x32xf32>
    %383 = arith.subf %375, %382 : vector<8x32xf32>
    %384 = arith.mulf %383, %383 : vector<8x32xf32>
    %cst_147 = arith.constant dense<0.000000e+00> : vector<8xf32>
    %385 = vector.multi_reduction <add>, %384, %cst_147 [1] : vector<8x32xf32> to vector<8xf32>
    %386 = vector.shape_cast %385 : vector<8xf32> to vector<8x1xf32>
    %cst_148 = arith.constant 3.200000e+01 : f32
    %387 = vector.broadcast %cst_148 : f32 to vector<8x1xf32>
    %388 = arith.divf %386, %387 : vector<8x1xf32>
    %389 = vector.broadcast %381 : vector<8x1xf32> to vector<8x32xf32>
    %390 = arith.subf %375, %389 : vector<8x32xf32>
    %cst_149 = arith.constant 9.99999974E-6 : f32
    %391 = vector.broadcast %cst_149 : f32 to vector<8x1xf32>
    %392 = arith.addf %388, %391 : vector<8x1xf32>
    %393 = math.rsqrt %392 : vector<8x1xf32>
    %394 = vector.broadcast %393 : vector<8x1xf32> to vector<8x32xf32>
    %395 = arith.mulf %390, %394 : vector<8x32xf32>
    %396 = vector.broadcast %376 : vector<1x32xf32> to vector<8x32xf32>
    %397 = arith.mulf %395, %396 : vector<8x32xf32>
    %398 = vector.broadcast %377 : vector<1x32xf32> to vector<8x32xf32>
    %399 = arith.addf %397, %398 : vector<8x32xf32>
    %400 = arith.truncf %399 : vector<8x32xf32> to vector<8x32xbf16>
    %c0_150 = arith.constant 0 : index
    %c0_151 = arith.constant 0 : index
    %c0_152 = arith.constant 0 : index
    %401 = vector.load %arg24[%c0_150, %c0_151, %c0_152] : memref<1x8x32xbf16, #tpu.memory_space<vmem>>, vector<1x8x32xbf16>
    %402 = vector.shape_cast %401 : vector<1x8x32xbf16> to vector<8x32xbf16>
    %403 = vector.shape_cast %400 : vector<8x32xbf16> to vector<1x8x32xbf16>
    tpu.vector_store %arg24[%c0_150, %c0_151, %c0_152], %403 {strides = array<i32>} : memref<1x8x32xbf16, #tpu.memory_space<vmem>>, vector<1x8x32xbf16>,
    return
  }
  func.func @transform_0(%arg0: i32) -> (i32, i32, i32) {
    %c0_i32 = arith.constant 0 : i32
    %c0_i32_0 = arith.constant 0 : i32
    %c0_i32_1 = arith.constant 0 : i32
    return %arg0, %c0_i32, %c0_i32_0 : i32, i32, i32
  }
  func.func @transform_1(%arg0: i32) -> (i32, i32, i32) {
    %c0_i32 = arith.constant 0 : i32
    %c0_i32_0 = arith.constant 0 : i32
    %c0_i32_1 = arith.constant 0 : i32
    return %arg0, %c0_i32, %c0_i32_0 : i32, i32, i32
  }
  func.func @transform_2(%arg0: i32) -> (i32, i32, i32) {
    %c0_i32 = arith.constant 0 : i32
    %c0_i32_0 = arith.constant 0 : i32
    %c0_i32_1 = arith.constant 0 : i32
    return %arg0, %c0_i32, %c0_i32_0 : i32, i32, i32
  }
  func.func @transform_3(%arg0: i32) -> (i32, i32) {
    %c0_i32 = arith.constant 0 : i32
    %c0_i32_0 = arith.constant 0 : i32
    %c0_i32_1 = arith.constant 0 : i32
    return %c0_i32, %c0_i32_0 : i32, i32
  }
  func.func @transform_4(%arg0: i32) -> (i32, i32) {
    %c0_i32 = arith.constant 0 : i32
    %c0_i32_0 = arith.constant 0 : i32
    %c0_i32_1 = arith.constant 0 : i32
    return %c0_i32, %c0_i32_0 : i32, i32
  }
  func.func @transform_5(%arg0: i32) -> (i32, i32) {
    %c0_i32 = arith.constant 0 : i32
    %c0_i32_0 = arith.constant 0 : i32
    %c0_i32_1 = arith.constant 0 : i32
    return %c0_i32, %c0_i32_0 : i32, i32
  }
  func.func @transform_6(%arg0: i32) -> (i32, i32) {
    %c0_i32 = arith.constant 0 : i32
    %c0_i32_0 = arith.constant 0 : i32
    %c0_i32_1 = arith.constant 0 : i32
    return %c0_i32, %c0_i32_0 : i32, i32
  }
  func.func @transform_7(%arg0: i32) -> (i32, i32) {
    %c0_i32 = arith.constant 0 : i32
    %c0_i32_0 = arith.constant 0 : i32
    %c0_i32_1 = arith.constant 0 : i32
    return %c0_i32, %c0_i32_0 : i32, i32
  }
  func.func @transform_8(%arg0: i32) -> (i32, i32) {
    %c0_i32 = arith.constant 0 : i32
    %c0_i32_0 = arith.constant 0 : i32
    %c0_i32_1 = arith.constant 0 : i32
    return %c0_i32, %c0_i32_0 : i32, i32
  }
  func.func @transform_9(%arg0: i32) -> (i32, i32) {
    %c0_i32 = arith.constant 0 : i32
    %c0_i32_0 = arith.constant 0 : i32
    %c0_i32_1 = arith.constant 0 : i32
    return %c0_i32, %c0_i32_0 : i32, i32
  }
  func.func @transform_10(%arg0: i32) -> (i32, i32) {
    %c0_i32 = arith.constant 0 : i32
    %c0_i32_0 = arith.constant 0 : i32
    %c0_i32_1 = arith.constant 0 : i32
    return %c0_i32, %c0_i32_0 : i32, i32
  }
  func.func @transform_11(%arg0: i32) -> (i32, i32) {
    %c0_i32 = arith.constant 0 : i32
    %c0_i32_0 = arith.constant 0 : i32
    %c0_i32_1 = arith.constant 0 : i32
    return %c0_i32, %c0_i32_0 : i32, i32
  }
  func.func @transform_12(%arg0: i32) -> (i32, i32) {
    %c0_i32 = arith.constant 0 : i32
    %c0_i32_0 = arith.constant 0 : i32
    %c0_i32_1 = arith.constant 0 : i32
    return %c0_i32, %c0_i32_0 : i32, i32
  }
  func.func @transform_13(%arg0: i32) -> (i32, i32) {
    %c0_i32 = arith.constant 0 : i32
    %c0_i32_0 = arith.constant 0 : i32
    %c0_i32_1 = arith.constant 0 : i32
    return %c0_i32, %c0_i32_0 : i32, i32
  }
  func.func @transform_14(%arg0: i32) -> (i32, i32) {
    %c0_i32 = arith.constant 0 : i32
    %c0_i32_0 = arith.constant 0 : i32
    %c0_i32_1 = arith.constant 0 : i32
    return %c0_i32, %c0_i32_0 : i32, i32
  }
  func.func @transform_15(%arg0: i32) -> (i32, i32) {
    %c0_i32 = arith.constant 0 : i32
    %c0_i32_0 = arith.constant 0 : i32
    %c0_i32_1 = arith.constant 0 : i32
    return %c0_i32, %c0_i32_0 : i32, i32
  }
  func.func @transform_16(%arg0: i32) -> (i32, i32) {
    %c0_i32 = arith.constant 0 : i32
    %c0_i32_0 = arith.constant 0 : i32
    %c0_i32_1 = arith.constant 0 : i32
    return %c0_i32, %c0_i32_0 : i32, i32
  }
  func.func @transform_17(%arg0: i32) -> (i32, i32) {
    %c0_i32 = arith.constant 0 : i32
    %c0_i32_0 = arith.constant 0 : i32
    %c0_i32_1 = arith.constant 0 : i32
    return %c0_i32, %c0_i32_0 : i32, i32
  }
  func.func @transform_18(%arg0: i32) -> (i32, i32) {
    %c0_i32 = arith.constant 0 : i32
    %c0_i32_0 = arith.constant 0 : i32
    %c0_i32_1 = arith.constant 0 : i32
    return %c0_i32, %c0_i32_0 : i32, i32
  }
  func.func @transform_19(%arg0: i32) -> (i32, i32) {
    %c0_i32 = arith.constant 0 : i32
    %c0_i32_0 = arith.constant 0 : i32
    %c0_i32_1 = arith.constant 0 : i32
    return %c0_i32, %c0_i32_0 : i32, i32
  }
  func.func @transform_20(%arg0: i32) -> (i32, i32) {
    %c0_i32 = arith.constant 0 : i32
    %c0_i32_0 = arith.constant 0 : i32
    %c0_i32_1 = arith.constant 0 : i32
    return %c0_i32, %c0_i32_0 : i32, i32
  }
  func.func @transform_21(%arg0: i32) -> (i32, i32) {
    %c0_i32 = arith.constant 0 : i32
    %c0_i32_0 = arith.constant 0 : i32
    %c0_i32_1 = arith.constant 0 : i32
    return %c0_i32, %c0_i32_0 : i32, i32
  }
  func.func @transform_22(%arg0: i32) -> (i32, i32) {
    %c0_i32 = arith.constant 0 : i32
    %c0_i32_0 = arith.constant 0 : i32
    %c0_i32_1 = arith.constant 0 : i32
    return %c0_i32, %c0_i32_0 : i32, i32
  }
  func.func @transform_23(%arg0: i32) -> (i32, i32, i32) {
    %c0_i32 = arith.constant 0 : i32
    %c0_i32_0 = arith.constant 0 : i32
    %c0_i32_1 = arith.constant 0 : i32
    return %arg0, %c0_i32, %c0_i32_0 : i32, i32, i32
  }
}

module attributes {stable_mosaic.version = 11 : i64} {
  func.func @_decoder_layer_kernel(%arg0: i32, %arg1: memref<1x8x32xbf16, #tpu.memory_space<vmem>>, %arg2: memref<1x8x32xbf16, #tpu.memory_space<vmem>>, %arg3: memref<1x1x8xf32, #tpu.memory_space<vmem>>, %arg4: memref<32x96xbf16, #tpu.memory_space<vmem>>, %arg5: memref<1x96xf32, #tpu.memory_space<vmem>>, %arg6: memref<32x32xbf16, #tpu.memory_space<vmem>>, %arg7: memref<1x32xf32, #tpu.memory_space<vmem>>, %arg8: memref<1x32xf32, #tpu.memory_space<vmem>>, %arg9: memref<1x32xf32, #tpu.memory_space<vmem>>, %arg10: memref<32x32xbf16, #tpu.memory_space<vmem>>, %arg11: memref<1x32xf32, #tpu.memory_space<vmem>>, %arg12: memref<32x64xbf16, #tpu.memory_space<vmem>>, %arg13: memref<1x64xf32, #tpu.memory_space<vmem>>, %arg14: memref<32x32xbf16, #tpu.memory_space<vmem>>, %arg15: memref<1x32xf32, #tpu.memory_space<vmem>>, %arg16: memref<1x32xf32, #tpu.memory_space<vmem>>, %arg17: memref<1x32xf32, #tpu.memory_space<vmem>>, %arg18: memref<32x128xbf16, #tpu.memory_space<vmem>>, %arg19: memref<1x128xf32, #tpu.memory_space<vmem>>, %arg20: memref<128x32xbf16, #tpu.memory_space<vmem>>, %arg21: memref<1x32xf32, #tpu.memory_space<vmem>>, %arg22: memref<1x32xf32, #tpu.memory_space<vmem>>, %arg23: memref<1x32xf32, #tpu.memory_space<vmem>>, %arg24: memref<1x8x32xbf16, #tpu.memory_space<vmem>>) attributes {dimension_semantics = [#tpu.dimension_semantics<parallel>], iteration_bounds = array<i64: 2>, scalar_prefetch = 0 : i64, scratch_operands = 0 : i64, tpu.core_type = #tpu.core_type<tc>, window_params = [{transform_indices = @transform_0, window_bounds = array<i64: 1, 8, 32>}, {transform_indices = @transform_1, window_bounds = array<i64: 1, 8, 32>}, {transform_indices = @transform_2, window_bounds = array<i64: 1, 1, 8>}, {pipeline_mode = #tpu.pipeline_mode<synchronous>, transform_indices = @transform_3, window_bounds = array<i64: 32, 96>}, {pipeline_mode = #tpu.pipeline_mode<synchronous>, transform_indices = @transform_4, window_bounds = array<i64: 1, 96>}, {pipeline_mode = #tpu.pipeline_mode<synchronous>, transform_indices = @transform_5, window_bounds = array<i64: 32, 32>}, {pipeline_mode = #tpu.pipeline_mode<synchronous>, transform_indices = @transform_6, window_bounds = array<i64: 1, 32>}, {pipeline_mode = #tpu.pipeline_mode<synchronous>, transform_indices = @transform_7, window_bounds = array<i64: 1, 32>}, {pipeline_mode = #tpu.pipeline_mode<synchronous>, transform_indices = @transform_8, window_bounds = array<i64: 1, 32>}, {pipeline_mode = #tpu.pipeline_mode<synchronous>, transform_indices = @transform_9, window_bounds = array<i64: 32, 32>}, {pipeline_mode = #tpu.pipeline_mode<synchronous>, transform_indices = @transform_10, window_bounds = array<i64: 1, 32>}, {pipeline_mode = #tpu.pipeline_mode<synchronous>, transform_indices = @transform_11, window_bounds = array<i64: 32, 64>}, {pipeline_mode = #tpu.pipeline_mode<synchronous>, transform_indices = @transform_12, window_bounds = array<i64: 1, 64>}, {pipeline_mode = #tpu.pipeline_mode<synchronous>, transform_indices = @transform_13, window_bounds = array<i64: 32, 32>}, {pipeline_mode = #tpu.pipeline_mode<synchronous>, transform_indices = @transform_14, window_bounds = array<i64: 1, 32>}, {pipeline_mode = #tpu.pipeline_mode<synchronous>, transform_indices = @transform_15, window_bounds = array<i64: 1, 32>}, {pipeline_mode = #tpu.pipeline_mode<synchronous>, transform_indices = @transform_16, window_bounds = array<i64: 1, 32>}, {pipeline_mode = #tpu.pipeline_mode<synchronous>, transform_indices = @transform_17, window_bounds = array<i64: 32, 128>}, {pipeline_mode = #tpu.pipeline_mode<synchronous>, transform_indices = @transform_18, window_bounds = array<i64: 1, 128>}, {pipeline_mode = #tpu.pipeline_mode<synchronous>, transform_indices = @transform_19, window_bounds = array<i64: 128, 32>}, {pipeline_mode = #tpu.pipeline_mode<synchronous>, transform_indices = @transform_20, window_bounds = array<i64: 1, 32>}, {pipeline_mode = #tpu.pipeline_mode<synchronous>, transform_indices = @transform_21, window_bounds = array<i64: 1, 32>}, {pipeline_mode = #tpu.pipeline_mode<synchronous>, transform_indices = @transform_22, window_bounds = array<i64: 1, 32>}, {transform_indices = @transform_23, window_bounds = array<i64: 1, 8, 32>}]} {
    %c0 = arith.constant 0 : index
    %c0_0 = arith.constant 0 : index
    %c0_1 = arith.constant 0 : index
    %0 = vector.load %arg1[%c0, %c0_0, %c0_1] : memref<1x8x32xbf16, #tpu.memory_space<vmem>>, vector<1x8x32xbf16>
    %1 = vector.shape_cast %0 : vector<1x8x32xbf16> to vector<8x32xbf16>
    %2 = arith.extf %1 : vector<8x32xbf16> to vector<8x32xf32>
    %c0_2 = arith.constant 0 : index
    %c0_3 = arith.constant 0 : index
    %c0_4 = arith.constant 0 : index
    %3 = vector.load %arg3[%c0_2, %c0_3, %c0_4] : memref<1x1x8xf32, #tpu.memory_space<vmem>>, vector<1x1x8xf32>
    %4 = vector.shape_cast %3 : vector<1x1x8xf32> to vector<1x8xf32>
    %5 = arith.truncf %2 : vector<8x32xf32> to vector<8x32xbf16>
    %c0_5 = arith.constant 0 : index
    %c0_6 = arith.constant 0 : index
    %6 = vector.load %arg4[%c0_5, %c0_6] : memref<32x96xbf16, #tpu.memory_space<vmem>>, vector<32x96xbf16>
    %cst = arith.constant dense<0.000000e+00> : vector<8x96xf32>
    %7 = tpu.matmul %5, %6, %cst {dimension_numbers = #tpu.dot_dimension_numbers<[1], [0], [0], [1], [0, 0, 1, 1], [], []>} : vector<8x32xbf16>, vector<32x96xbf16>, vector<8x96xf32> -> vector<8x96xf32>
    %c0_7 = arith.constant 0 : index
    %c0_8 = arith.constant 0 : index
    %8 = vector.load %arg5[%c0_7, %c0_8] : memref<1x96xf32, #tpu.memory_space<vmem>>, vector<1x96xf32>
    %9 = vector.broadcast %8 : vector<1x96xf32> to vector<8x96xf32>
    %10 = arith.addf %7, %9 : vector<8x96xf32>
    %11 = vector.extract_strided_slice %10 {offsets = [0, 0], sizes = [8, 32], strides = [1, 1]} : vector<8x96xf32> to vector<8x32xf32>
    %12 = vector.extract_strided_slice %10 {offsets = [0, 32], sizes = [8, 32], strides = [1, 1]} : vector<8x96xf32> to vector<8x32xf32>
    %13 = vector.extract_strided_slice %10 {offsets = [0, 64], sizes = [8, 32], strides = [1, 1]} : vector<8x96xf32> to vector<8x32xf32>
    %c0_9 = arith.constant 0 : index
    %c0_10 = arith.constant 0 : index
    %14 = vector.load %arg6[%c0_9, %c0_10] : memref<32x32xbf16, #tpu.memory_space<vmem>>, vector<32x32xbf16>
    %cst_11 = arith.constant 0.000000e+00 : f32
    %15 = vector.broadcast %cst_11 : f32 to vector<8x32xf32>
    %16 = vector.extract_strided_slice %11 {offsets = [0, 0], sizes = [8, 8], strides = [1, 1]} : vector<8x32xf32> to vector<8x8xf32>
    %17 = arith.truncf %16 : vector<8x8xf32> to vector<8x8xbf16>
    %18 = vector.extract_strided_slice %12 {offsets = [0, 0], sizes = [8, 8], strides = [1, 1]} : vector<8x32xf32> to vector<8x8xf32>
    %19 = arith.truncf %18 : vector<8x8xf32> to vector<8x8xbf16>
    %20 = vector.extract_strided_slice %13 {offsets = [0, 0], sizes = [8, 8], strides = [1, 1]} : vector<8x32xf32> to vector<8x8xf32>
    %21 = arith.truncf %20 : vector<8x8xf32> to vector<8x8xbf16>
    %cst_12 = arith.constant dense<0.000000e+00> : vector<8x8xf32>
    %22 = tpu.matmul %17, %19, %cst_12 {dimension_numbers = #tpu.dot_dimension_numbers<[1], [1], [0], [0], [0, 0, 1, 0], [], []>} : vector<8x8xbf16>, vector<8x8xbf16>, vector<8x8xf32> -> vector<8x8xf32>
    %cst_13 = arith.constant 0.353553385 : f32
    %23 = vector.broadcast %cst_13 : f32 to vector<8x8xf32>
    %24 = arith.mulf %22, %23 : vector<8x8xf32>
    %25 = vector.broadcast %4 : vector<1x8xf32> to vector<8x8xf32>
    %26 = arith.addf %24, %25 : vector<8x8xf32>
    %cst_14 = arith.constant dense<0xFF800000> : vector<8xf32>
    %27 = vector.multi_reduction <maximumf>, %26, %cst_14 [1] : vector<8x8xf32> to vector<8xf32>
    %28 = vector.shape_cast %27 : vector<8xf32> to vector<8x1xf32>
    %cst_15 = arith.constant 0xFF800000 : f32
    %29 = vector.broadcast %cst_15 : f32 to vector<8x1xf32>
    %30 = arith.cmpf oeq, %28, %29 : vector<8x1xf32>
    %cst_16 = arith.constant 0.000000e+00 : f32
    %31 = vector.broadcast %cst_16 : f32 to vector<8x1xf32>
    %32 = arith.select %30, %31, %28 : vector<8x1xi1>, vector<8x1xf32>
    %33 = vector.broadcast %32 : vector<8x1xf32> to vector<8x8xf32>
    %34 = arith.subf %26, %33 : vector<8x8xf32>
    %35 = math.exp %34 : vector<8x8xf32>
    %cst_17 = arith.constant dense<0.000000e+00> : vector<8xf32>
    %36 = vector.multi_reduction <add>, %35, %cst_17 [1] : vector<8x8xf32> to vector<8xf32>
    %37 = vector.shape_cast %36 : vector<8xf32> to vector<8x1xf32>
    %cst_18 = arith.constant 0.000000e+00 : f32
    %38 = vector.broadcast %cst_18 : f32 to vector<8x1xf32>
    %39 = arith.cmpf oeq, %37, %38 : vector<8x1xf32>
    %cst_19 = arith.constant 1.000000e+00 : f32
    %40 = vector.broadcast %cst_19 : f32 to vector<8x1xf32>
    %41 = arith.select %39, %40, %37 : vector<8x1xi1>, vector<8x1xf32>
    %42 = tpu.reciprocal %41 {approx = true} : vector<8x1xf32> -> vector<8x1xf32>
    %43 = vector.broadcast %42 : vector<8x1xf32> to vector<8x8xf32>
    %44 = arith.mulf %35, %43 : vector<8x8xf32>
    %45 = arith.truncf %44 : vector<8x8xf32> to vector<8x8xbf16>
    %cst_20 = arith.constant dense<0.000000e+00> : vector<8x8xf32>
    %46 = tpu.matmul %45, %21, %cst_20 {dimension_numbers = #tpu.dot_dimension_numbers<[1], [0], [0], [1], [0, 0, 1, 1], [], []>} : vector<8x8xbf16>, vector<8x8xbf16>, vector<8x8xf32> -> vector<8x8xf32>
    %47 = arith.truncf %46 : vector<8x8xf32> to vector<8x8xbf16>
    %48 = vector.extract_strided_slice %14 {offsets = [0, 0], sizes = [8, 32], strides = [1, 1]} : vector<32x32xbf16> to vector<8x32xbf16>
    %cst_21 = arith.constant dense<0.000000e+00> : vector<8x32xf32>
    %49 = tpu.matmul %47, %48, %cst_21 {dimension_numbers = #tpu.dot_dimension_numbers<[1], [0], [0], [1], [0, 0, 1, 1], [], []>} : vector<8x8xbf16>, vector<8x32xbf16>, vector<8x32xf32> -> vector<8x32xf32>
    %50 = arith.addf %15, %49 : vector<8x32xf32>
    %51 = vector.extract_strided_slice %11 {offsets = [0, 8], sizes = [8, 8], strides = [1, 1]} : vector<8x32xf32> to vector<8x8xf32>
    %52 = arith.truncf %51 : vector<8x8xf32> to vector<8x8xbf16>
    %53 = vector.extract_strided_slice %12 {offsets = [0, 8], sizes = [8, 8], strides = [1, 1]} : vector<8x32xf32> to vector<8x8xf32>
    %54 = arith.truncf %53 : vector<8x8xf32> to vector<8x8xbf16>
    %55 = vector.extract_strided_slice %13 {offsets = [0, 8], sizes = [8, 8], strides = [1, 1]} : vector<8x32xf32> to vector<8x8xf32>
    %56 = arith.truncf %55 : vector<8x8xf32> to vector<8x8xbf16>
    %cst_22 = arith.constant dense<0.000000e+00> : vector<8x8xf32>
    %57 = tpu.matmul %52, %54, %cst_22 {dimension_numbers = #tpu.dot_dimension_numbers<[1], [1], [0], [0], [0, 0, 1, 0], [], []>} : vector<8x8xbf16>, vector<8x8xbf16>, vector<8x8xf32> -> vector<8x8xf32>
    %cst_23 = arith.constant 0.353553385 : f32
    %58 = vector.broadcast %cst_23 : f32 to vector<8x8xf32>
    %59 = arith.mulf %57, %58 : vector<8x8xf32>
    %60 = vector.broadcast %4 : vector<1x8xf32> to vector<8x8xf32>
    %61 = arith.addf %59, %60 : vector<8x8xf32>
    %cst_24 = arith.constant dense<0xFF800000> : vector<8xf32>
    %62 = vector.multi_reduction <maximumf>, %61, %cst_24 [1] : vector<8x8xf32> to vector<8xf32>
    %63 = vector.shape_cast %62 : vector<8xf32> to vector<8x1xf32>
    %cst_25 = arith.constant 0xFF800000 : f32
    %64 = vector.broadcast %cst_25 : f32 to vector<8x1xf32>
    %65 = arith.cmpf oeq, %63, %64 : vector<8x1xf32>
    %cst_26 = arith.constant 0.000000e+00 : f32
    %66 = vector.broadcast %cst_26 : f32 to vector<8x1xf32>
    %67 = arith.select %65, %66, %63 : vector<8x1xi1>, vector<8x1xf32>
    %68 = vector.broadcast %67 : vector<8x1xf32> to vector<8x8xf32>
    %69 = arith.subf %61, %68 : vector<8x8xf32>
    %70 = math.exp %69 : vector<8x8xf32>
    %cst_27 = arith.constant dense<0.000000e+00> : vector<8xf32>
    %71 = vector.multi_reduction <add>, %70, %cst_27 [1] : vector<8x8xf32> to vector<8xf32>
    %72 = vector.shape_cast %71 : vector<8xf32> to vector<8x1xf32>
    %cst_28 = arith.constant 0.000000e+00 : f32
    %73 = vector.broadcast %cst_28 : f32 to vector<8x1xf32>
    %74 = arith.cmpf oeq, %72, %73 : vector<8x1xf32>
    %cst_29 = arith.constant 1.000000e+00 : f32
    %75 = vector.broadcast %cst_29 : f32 to vector<8x1xf32>
    %76 = arith.select %74, %75, %72 : vector<8x1xi1>, vector<8x1xf32>
    %77 = tpu.reciprocal %76 {approx = true} : vector<8x1xf32> -> vector<8x1xf32>
    %78 = vector.broadcast %77 : vector<8x1xf32> to vector<8x8xf32>
    %79 = arith.mulf %70, %78 : vector<8x8xf32>
    %80 = arith.truncf %79 : vector<8x8xf32> to vector<8x8xbf16>
    %cst_30 = arith.constant dense<0.000000e+00> : vector<8x8xf32>
    %81 = tpu.matmul %80, %56, %cst_30 {dimension_numbers = #tpu.dot_dimension_numbers<[1], [0], [0], [1], [0, 0, 1, 1], [], []>} : vector<8x8xbf16>, vector<8x8xbf16>, vector<8x8xf32> -> vector<8x8xf32>
    %82 = arith.truncf %81 : vector<8x8xf32> to vector<8x8xbf16>
    %83 = vector.extract_strided_slice %14 {offsets = [8, 0], sizes = [8, 32], strides = [1, 1]} : vector<32x32xbf16> to vector<8x32xbf16>
    %cst_31 = arith.constant dense<0.000000e+00> : vector<8x32xf32>
    %84 = tpu.matmul %82, %83, %cst_31 {dimension_numbers = #tpu.dot_dimension_numbers<[1], [0], [0], [1], [0, 0, 1, 1], [], []>} : vector<8x8xbf16>, vector<8x32xbf16>, vector<8x32xf32> -> vector<8x32xf32>
    %85 = arith.addf %50, %84 : vector<8x32xf32>
    %86 = vector.extract_strided_slice %11 {offsets = [0, 16], sizes = [8, 8], strides = [1, 1]} : vector<8x32xf32> to vector<8x8xf32>
    %87 = arith.truncf %86 : vector<8x8xf32> to vector<8x8xbf16>
    %88 = vector.extract_strided_slice %12 {offsets = [0, 16], sizes = [8, 8], strides = [1, 1]} : vector<8x32xf32> to vector<8x8xf32>
    %89 = arith.truncf %88 : vector<8x8xf32> to vector<8x8xbf16>
    %90 = vector.extract_strided_slice %13 {offsets = [0, 16], sizes = [8, 8], strides = [1, 1]} : vector<8x32xf32> to vector<8x8xf32>
    %91 = arith.truncf %90 : vector<8x8xf32> to vector<8x8xbf16>
    %cst_32 = arith.constant dense<0.000000e+00> : vector<8x8xf32>
    %92 = tpu.matmul %87, %89, %cst_32 {dimension_numbers = #tpu.dot_dimension_numbers<[1], [1], [0], [0], [0, 0, 1, 0], [], []>} : vector<8x8xbf16>, vector<8x8xbf16>, vector<8x8xf32> -> vector<8x8xf32>
    %cst_33 = arith.constant 0.353553385 : f32
    %93 = vector.broadcast %cst_33 : f32 to vector<8x8xf32>
    %94 = arith.mulf %92, %93 : vector<8x8xf32>
    %95 = vector.broadcast %4 : vector<1x8xf32> to vector<8x8xf32>
    %96 = arith.addf %94, %95 : vector<8x8xf32>
    %cst_34 = arith.constant dense<0xFF800000> : vector<8xf32>
    %97 = vector.multi_reduction <maximumf>, %96, %cst_34 [1] : vector<8x8xf32> to vector<8xf32>
    %98 = vector.shape_cast %97 : vector<8xf32> to vector<8x1xf32>
    %cst_35 = arith.constant 0xFF800000 : f32
    %99 = vector.broadcast %cst_35 : f32 to vector<8x1xf32>
    %100 = arith.cmpf oeq, %98, %99 : vector<8x1xf32>
    %cst_36 = arith.constant 0.000000e+00 : f32
    %101 = vector.broadcast %cst_36 : f32 to vector<8x1xf32>
    %102 = arith.select %100, %101, %98 : vector<8x1xi1>, vector<8x1xf32>
    %103 = vector.broadcast %102 : vector<8x1xf32> to vector<8x8xf32>
    %104 = arith.subf %96, %103 : vector<8x8xf32>
    %105 = math.exp %104 : vector<8x8xf32>
    %cst_37 = arith.constant dense<0.000000e+00> : vector<8xf32>
    %106 = vector.multi_reduction <add>, %105, %cst_37 [1] : vector<8x8xf32> to vector<8xf32>
    %107 = vector.shape_cast %106 : vector<8xf32> to vector<8x1xf32>
    %cst_38 = arith.constant 0.000000e+00 : f32
    %108 = vector.broadcast %cst_38 : f32 to vector<8x1xf32>
    %109 = arith.cmpf oeq, %107, %108 : vector<8x1xf32>
    %cst_39 = arith.constant 1.000000e+00 : f32
    %110 = vector.broadcast %cst_39 : f32 to vector<8x1xf32>
    %111 = arith.select %109, %110, %107 : vector<8x1xi1>, vector<8x1xf32>
    %112 = tpu.reciprocal %111 {approx = true} : vector<8x1xf32> -> vector<8x1xf32>
    %113 = vector.broadcast %112 : vector<8x1xf32> to vector<8x8xf32>
    %114 = arith.mulf %105, %113 : vector<8x8xf32>
    %115 = arith.truncf %114 : vector<8x8xf32> to vector<8x8xbf16>
    %cst_40 = arith.constant dense<0.000000e+00> : vector<8x8xf32>
    %116 = tpu.matmul %115, %91, %cst_40 {dimension_numbers = #tpu.dot_dimension_numbers<[1], [0], [0], [1], [0, 0, 1, 1], [], []>} : vector<8x8xbf16>, vector<8x8xbf16>, vector<8x8xf32> -> vector<8x8xf32>
    %117 = arith.truncf %116 : vector<8x8xf32> to vector<8x8xbf16>
    %118 = vector.extract_strided_slice %14 {offsets = [16, 0], sizes = [8, 32], strides = [1, 1]} : vector<32x32xbf16> to vector<8x32xbf16>
    %cst_41 = arith.constant dense<0.000000e+00> : vector<8x32xf32>
    %119 = tpu.matmul %117, %118, %cst_41 {dimension_numbers = #tpu.dot_dimension_numbers<[1], [0], [0], [1], [0, 0, 1, 1], [], []>} : vector<8x8xbf16>, vector<8x32xbf16>, vector<8x32xf32> -> vector<8x32xf32>
    %120 = arith.addf %85, %119 : vector<8x32xf32>
    %121 = vector.extract_strided_slice %11 {offsets = [0, 24], sizes = [8, 8], strides = [1, 1]} : vector<8x32xf32> to vector<8x8xf32>
    %122 = arith.truncf %121 : vector<8x8xf32> to vector<8x8xbf16>
    %123 = vector.extract_strided_slice %12 {offsets = [0, 24], sizes = [8, 8], strides = [1, 1]} : vector<8x32xf32> to vector<8x8xf32>
    %124 = arith.truncf %123 : vector<8x8xf32> to vector<8x8xbf16>
    %125 = vector.extract_strided_slice %13 {offsets = [0, 24], sizes = [8, 8], strides = [1, 1]} : vector<8x32xf32> to vector<8x8xf32>
    %126 = arith.truncf %125 : vector<8x8xf32> to vector<8x8xbf16>
    %cst_42 = arith.constant dense<0.000000e+00> : vector<8x8xf32>
    %127 = tpu.matmul %122, %124, %cst_42 {dimension_numbers = #tpu.dot_dimension_numbers<[1], [1], [0], [0], [0, 0, 1, 0], [], []>} : vector<8x8xbf16>, vector<8x8xbf16>, vector<8x8xf32> -> vector<8x8xf32>
    %cst_43 = arith.constant 0.353553385 : f32
    %128 = vector.broadcast %cst_43 : f32 to vector<8x8xf32>
    %129 = arith.mulf %127, %128 : vector<8x8xf32>
    %130 = vector.broadcast %4 : vector<1x8xf32> to vector<8x8xf32>
    %131 = arith.addf %129, %130 : vector<8x8xf32>
    %cst_44 = arith.constant dense<0xFF800000> : vector<8xf32>
    %132 = vector.multi_reduction <maximumf>, %131, %cst_44 [1] : vector<8x8xf32> to vector<8xf32>
    %133 = vector.shape_cast %132 : vector<8xf32> to vector<8x1xf32>
    %cst_45 = arith.constant 0xFF800000 : f32
    %134 = vector.broadcast %cst_45 : f32 to vector<8x1xf32>
    %135 = arith.cmpf oeq, %133, %134 : vector<8x1xf32>
    %cst_46 = arith.constant 0.000000e+00 : f32
    %136 = vector.broadcast %cst_46 : f32 to vector<8x1xf32>
    %137 = arith.select %135, %136, %133 : vector<8x1xi1>, vector<8x1xf32>
    %138 = vector.broadcast %137 : vector<8x1xf32> to vector<8x8xf32>
    %139 = arith.subf %131, %138 : vector<8x8xf32>
    %140 = math.exp %139 : vector<8x8xf32>
    %cst_47 = arith.constant dense<0.000000e+00> : vector<8xf32>
    %141 = vector.multi_reduction <add>, %140, %cst_47 [1] : vector<8x8xf32> to vector<8xf32>
    %142 = vector.shape_cast %141 : vector<8xf32> to vector<8x1xf32>
    %cst_48 = arith.constant 0.000000e+00 : f32
    %143 = vector.broadcast %cst_48 : f32 to vector<8x1xf32>
    %144 = arith.cmpf oeq, %142, %143 : vector<8x1xf32>
    %cst_49 = arith.constant 1.000000e+00 : f32
    %145 = vector.broadcast %cst_49 : f32 to vector<8x1xf32>
    %146 = arith.select %144, %145, %142 : vector<8x1xi1>, vector<8x1xf32>
    %147 = tpu.reciprocal %146 {approx = true} : vector<8x1xf32> -> vector<8x1xf32>
    %148 = vector.broadcast %147 : vector<8x1xf32> to vector<8x8xf32>
    %149 = arith.mulf %140, %148 : vector<8x8xf32>
    %150 = arith.truncf %149 : vector<8x8xf32> to vector<8x8xbf16>
    %cst_50 = arith.constant dense<0.000000e+00> : vector<8x8xf32>
    %151 = tpu.matmul %150, %126, %cst_50 {dimension_numbers = #tpu.dot_dimension_numbers<[1], [0], [0], [1], [0, 0, 1, 1], [], []>} : vector<8x8xbf16>, vector<8x8xbf16>, vector<8x8xf32> -> vector<8x8xf32>
    %152 = arith.truncf %151 : vector<8x8xf32> to vector<8x8xbf16>
    %153 = vector.extract_strided_slice %14 {offsets = [24, 0], sizes = [8, 32], strides = [1, 1]} : vector<32x32xbf16> to vector<8x32xbf16>
    %cst_51 = arith.constant dense<0.000000e+00> : vector<8x32xf32>
    %154 = tpu.matmul %152, %153, %cst_51 {dimension_numbers = #tpu.dot_dimension_numbers<[1], [0], [0], [1], [0, 0, 1, 1], [], []>} : vector<8x8xbf16>, vector<8x32xbf16>, vector<8x32xf32> -> vector<8x32xf32>
    %155 = arith.addf %120, %154 : vector<8x32xf32>
    %c0_52 = arith.constant 0 : index
    %c0_53 = arith.constant 0 : index
    %156 = vector.load %arg7[%c0_52, %c0_53] : memref<1x32xf32, #tpu.memory_space<vmem>>, vector<1x32xf32>
    %157 = vector.broadcast %156 : vector<1x32xf32> to vector<8x32xf32>
    %158 = arith.addf %155, %157 : vector<8x32xf32>
    %159 = arith.addf %2, %158 : vector<8x32xf32>
    %c0_54 = arith.constant 0 : index
    %c0_55 = arith.constant 0 : index
    %160 = vector.load %arg8[%c0_54, %c0_55] : memref<1x32xf32, #tpu.memory_space<vmem>>, vector<1x32xf32>
    %c0_56 = arith.constant 0 : index
    %c0_57 = arith.constant 0 : index
    %161 = vector.load %arg9[%c0_56, %c0_57] : memref<1x32xf32, #tpu.memory_space<vmem>>, vector<1x32xf32>
    %cst_58 = arith.constant dense<0.000000e+00> : vector<8xf32>
    %162 = vector.multi_reduction <add>, %159, %cst_58 [1] : vector<8x32xf32> to vector<8xf32>
    %163 = vector.shape_cast %162 : vector<8xf32> to vector<8x1xf32>
    %cst_59 = arith.constant 3.200000e+01 : f32
    %164 = vector.broadcast %cst_59 : f32 to vector<8x1xf32>
    %165 = arith.divf %163, %164 : vector<8x1xf32>
    %166 = vector.broadcast %165 : vector<8x1xf32> to vector<8x32xf32>
    %167 = arith.subf %159, %166 : vector<8x32xf32>
    %168 = arith.mulf %167, %167 : vector<8x32xf32>
    %cst_60 = arith.constant dense<0.000000e+00> : vector<8xf32>
    %169 = vector.multi_reduction <add>, %168, %cst_60 [1] : vector<8x32xf32> to vector<8xf32>
    %170 = vector.shape_cast %169 : vector<8xf32> to vector<8x1xf32>
    %cst_61 = arith.constant 3.200000e+01 : f32
    %171 = vector.broadcast %cst_61 : f32 to vector<8x1xf32>
    %172 = arith.divf %170, %171 : vector<8x1xf32>
    %173 = vector.broadcast %165 : vector<8x1xf32> to vector<8x32xf32>
    %174 = arith.subf %159, %173 : vector<8x32xf32>
    %cst_62 = arith.constant 9.99999974E-6 : f32
    %175 = vector.broadcast %cst_62 : f32 to vector<8x1xf32>
    %176 = arith.addf %172, %175 : vector<8x1xf32>
    %177 = math.rsqrt %176 : vector<8x1xf32>
    %178 = vector.broadcast %177 : vector<8x1xf32> to vector<8x32xf32>
    %179 = arith.mulf %174, %178 : vector<8x32xf32>
    %180 = vector.broadcast %160 : vector<1x32xf32> to vector<8x32xf32>
    %181 = arith.mulf %179, %180 : vector<8x32xf32>
    %182 = vector.broadcast %161 : vector<1x32xf32> to vector<8x32xf32>
    %183 = arith.addf %181, %182 : vector<8x32xf32>
    %184 = arith.truncf %183 : vector<8x32xf32> to vector<8x32xbf16>
    %c0_63 = arith.constant 0 : index
    %c0_64 = arith.constant 0 : index
    %185 = vector.load %arg10[%c0_63, %c0_64] : memref<32x32xbf16, #tpu.memory_space<vmem>>, vector<32x32xbf16>
    %cst_65 = arith.constant dense<0.000000e+00> : vector<8x32xf32>
    %186 = tpu.matmul %184, %185, %cst_65 {dimension_numbers = #tpu.dot_dimension_numbers<[1], [0], [0], [1], [0, 0, 1, 1], [], []>} : vector<8x32xbf16>, vector<32x32xbf16>, vector<8x32xf32> -> vector<8x32xf32>
    %c0_66 = arith.constant 0 : index
    %c0_67 = arith.constant 0 : index
    %187 = vector.load %arg11[%c0_66, %c0_67] : memref<1x32xf32, #tpu.memory_space<vmem>>, vector<1x32xf32>
    %188 = vector.broadcast %187 : vector<1x32xf32> to vector<8x32xf32>
    %189 = arith.addf %186, %188 : vector<8x32xf32>
    %c0_68 = arith.constant 0 : index
    %c0_69 = arith.constant 0 : index
    %c0_70 = arith.constant 0 : index
    %190 = vector.load %arg2[%c0_68, %c0_69, %c0_70] : memref<1x8x32xbf16, #tpu.memory_space<vmem>>, vector<1x8x32xbf16>
    %191 = vector.shape_cast %190 : vector<1x8x32xbf16> to vector<8x32xbf16>
    %c0_71 = arith.constant 0 : index
    %c0_72 = arith.constant 0 : index
    %192 = vector.load %arg12[%c0_71, %c0_72] : memref<32x64xbf16, #tpu.memory_space<vmem>>, vector<32x64xbf16>
    %cst_73 = arith.constant dense<0.000000e+00> : vector<8x64xf32>
    %193 = tpu.matmul %191, %192, %cst_73 {dimension_numbers = #tpu.dot_dimension_numbers<[1], [0], [0], [1], [0, 0, 1, 1], [], []>} : vector<8x32xbf16>, vector<32x64xbf16>, vector<8x64xf32> -> vector<8x64xf32>
    %c0_74 = arith.constant 0 : index
    %c0_75 = arith.constant 0 : index
    %194 = vector.load %arg13[%c0_74, %c0_75] : memref<1x64xf32, #tpu.memory_space<vmem>>, vector<1x64xf32>
    %195 = vector.broadcast %194 : vector<1x64xf32> to vector<8x64xf32>
    %196 = arith.addf %193, %195 : vector<8x64xf32>
    %197 = vector.extract_strided_slice %196 {offsets = [0, 0], sizes = [8, 32], strides = [1, 1]} : vector<8x64xf32> to vector<8x32xf32>
    %198 = vector.extract_strided_slice %196 {offsets = [0, 32], sizes = [8, 32], strides = [1, 1]} : vector<8x64xf32> to vector<8x32xf32>
    %c0_76 = arith.constant 0 : index
    %c0_77 = arith.constant 0 : index
    %199 = vector.load %arg14[%c0_76, %c0_77] : memref<32x32xbf16, #tpu.memory_space<vmem>>, vector<32x32xbf16>
    %cst_78 = arith.constant 0.000000e+00 : f32
    %200 = vector.broadcast %cst_78 : f32 to vector<8x32xf32>
    %201 = vector.extract_strided_slice %189 {offsets = [0, 0], sizes = [8, 8], strides = [1, 1]} : vector<8x32xf32> to vector<8x8xf32>
    %202 = arith.truncf %201 : vector<8x8xf32> to vector<8x8xbf16>
    %203 = vector.extract_strided_slice %197 {offsets = [0, 0], sizes = [8, 8], strides = [1, 1]} : vector<8x32xf32> to vector<8x8xf32>
    %204 = arith.truncf %203 : vector<8x8xf32> to vector<8x8xbf16>
    %205 = vector.extract_strided_slice %198 {offsets = [0, 0], sizes = [8, 8], strides = [1, 1]} : vector<8x32xf32> to vector<8x8xf32>
    %206 = arith.truncf %205 : vector<8x8xf32> to vector<8x8xbf16>
    %cst_79 = arith.constant dense<0.000000e+00> : vector<8x8xf32>
    %207 = tpu.matmul %202, %204, %cst_79 {dimension_numbers = #tpu.dot_dimension_numbers<[1], [1], [0], [0], [0, 0, 1, 0], [], []>} : vector<8x8xbf16>, vector<8x8xbf16>, vector<8x8xf32> -> vector<8x8xf32>
    %cst_80 = arith.constant 0.353553385 : f32
    %208 = vector.broadcast %cst_80 : f32 to vector<8x8xf32>
    %209 = arith.mulf %207, %208 : vector<8x8xf32>
    %cst_81 = arith.constant dense<0xFF800000> : vector<8xf32>
    %210 = vector.multi_reduction <maximumf>, %209, %cst_81 [1] : vector<8x8xf32> to vector<8xf32>
    %211 = vector.shape_cast %210 : vector<8xf32> to vector<8x1xf32>
    %cst_82 = arith.constant 0xFF800000 : f32
    %212 = vector.broadcast %cst_82 : f32 to vector<8x1xf32>
    %213 = arith.cmpf oeq, %211, %212 : vector<8x1xf32>
    %cst_83 = arith.constant 0.000000e+00 : f32
    %214 = vector.broadcast %cst_83 : f32 to vector<8x1xf32>
    %215 = arith.select %213, %214, %211 : vector<8x1xi1>, vector<8x1xf32>
    %216 = vector.broadcast %215 : vector<8x1xf32> to vector<8x8xf32>
    %217 = arith.subf %209, %216 : vector<8x8xf32>
    %218 = math.exp %217 : vector<8x8xf32>
    %cst_84 = arith.constant dense<0.000000e+00> : vector<8xf32>
    %219 = vector.multi_reduction <add>, %218, %cst_84 [1] : vector<8x8xf32> to vector<8xf32>
    %220 = vector.shape_cast %219 : vector<8xf32> to vector<8x1xf32>
    %cst_85 = arith.constant 0.000000e+00 : f32
    %221 = vector.broadcast %cst_85 : f32 to vector<8x1xf32>
    %222 = arith.cmpf oeq, %220, %221 : vector<8x1xf32>
    %cst_86 = arith.constant 1.000000e+00 : f32
    %223 = vector.broadcast %cst_86 : f32 to vector<8x1xf32>
    %224 = arith.select %222, %223, %220 : vector<8x1xi1>, vector<8x1xf32>
    %225 = tpu.reciprocal %224 {approx = true} : vector<8x1xf32> -> vector<8x1xf32>
    %226 = vector.broadcast %225 : vector<8x1xf32> to vector<8x8xf32>
    %227 = arith.mulf %218, %226 : vector<8x8xf32>
    %228 = arith.truncf %227 : vector<8x8xf32> to vector<8x8xbf16>
    %cst_87 = arith.constant dense<0.000000e+00> : vector<8x8xf32>
    %229 = tpu.matmul %228, %206, %cst_87 {dimension_numbers = #tpu.dot_dimension_numbers<[1], [0], [0], [1], [0, 0, 1, 1], [], []>} : vector<8x8xbf16>, vector<8x8xbf16>, vector<8x8xf32> -> vector<8x8xf32>
    %230 = arith.truncf %229 : vector<8x8xf32> to vector<8x8xbf16>
    %231 = vector.extract_strided_slice %199 {offsets = [0, 0], sizes = [8, 32], strides = [1, 1]} : vector<32x32xbf16> to vector<8x32xbf16>
    %cst_88 = arith.constant dense<0.000000e+00> : vector<8x32xf32>
    %232 = tpu.matmul %230, %231, %cst_88 {dimension_numbers = #tpu.dot_dimension_numbers<[1], [0], [0], [1], [0, 0, 1, 1], [], []>} : vector<8x8xbf16>, vector<8x32xbf16>, vector<8x32xf32> -> vector<8x32xf32>
    %233 = arith.addf %200, %232 : vector<8x32xf32>
    %234 = vector.extract_strided_slice %189 {offsets = [0, 8], sizes = [8, 8], strides = [1, 1]} : vector<8x32xf32> to vector<8x8xf32>
    %235 = arith.truncf %234 : vector<8x8xf32> to vector<8x8xbf16>
    %236 = vector.extract_strided_slice %197 {offsets = [0, 8], sizes = [8, 8], strides = [1, 1]} : vector<8x32xf32> to vector<8x8xf32>
    %237 = arith.truncf %236 : vector<8x8xf32> to vector<8x8xbf16>
    %238 = vector.extract_strided_slice %198 {offsets = [0, 8], sizes = [8, 8], strides = [1, 1]} : vector<8x32xf32> to vector<8x8xf32>
    %239 = arith.truncf %238 : vector<8x8xf32> to vector<8x8xbf16>
    %cst_89 = arith.constant dense<0.000000e+00> : vector<8x8xf32>
    %240 = tpu.matmul %235, %237, %cst_89 {dimension_numbers = #tpu.dot_dimension_numbers<[1], [1], [0], [0], [0, 0, 1, 0], [], []>} : vector<8x8xbf16>, vector<8x8xbf16>, vector<8x8xf32> -> vector<8x8xf32>
    %cst_90 = arith.constant 0.353553385 : f32
    %241 = vector.broadcast %cst_90 : f32 to vector<8x8xf32>
    %242 = arith.mulf %240, %241 : vector<8x8xf32>
    %cst_91 = arith.constant dense<0xFF800000> : vector<8xf32>
    %243 = vector.multi_reduction <maximumf>, %242, %cst_91 [1] : vector<8x8xf32> to vector<8xf32>
    %244 = vector.shape_cast %243 : vector<8xf32> to vector<8x1xf32>
    %cst_92 = arith.constant 0xFF800000 : f32
    %245 = vector.broadcast %cst_92 : f32 to vector<8x1xf32>
    %246 = arith.cmpf oeq, %244, %245 : vector<8x1xf32>
    %cst_93 = arith.constant 0.000000e+00 : f32
    %247 = vector.broadcast %cst_93 : f32 to vector<8x1xf32>
    %248 = arith.select %246, %247, %244 : vector<8x1xi1>, vector<8x1xf32>
    %249 = vector.broadcast %248 : vector<8x1xf32> to vector<8x8xf32>
    %250 = arith.subf %242, %249 : vector<8x8xf32>
    %251 = math.exp %250 : vector<8x8xf32>
    %cst_94 = arith.constant dense<0.000000e+00> : vector<8xf32>
    %252 = vector.multi_reduction <add>, %251, %cst_94 [1] : vector<8x8xf32> to vector<8xf32>
    %253 = vector.shape_cast %252 : vector<8xf32> to vector<8x1xf32>
    %cst_95 = arith.constant 0.000000e+00 : f32
    %254 = vector.broadcast %cst_95 : f32 to vector<8x1xf32>
    %255 = arith.cmpf oeq, %253, %254 : vector<8x1xf32>
    %cst_96 = arith.constant 1.000000e+00 : f32
    %256 = vector.broadcast %cst_96 : f32 to vector<8x1xf32>
    %257 = arith.select %255, %256, %253 : vector<8x1xi1>, vector<8x1xf32>
    %258 = tpu.reciprocal %257 {approx = true} : vector<8x1xf32> -> vector<8x1xf32>
    %259 = vector.broadcast %258 : vector<8x1xf32> to vector<8x8xf32>
    %260 = arith.mulf %251, %259 : vector<8x8xf32>
    %261 = arith.truncf %260 : vector<8x8xf32> to vector<8x8xbf16>
    %cst_97 = arith.constant dense<0.000000e+00> : vector<8x8xf32>
    %262 = tpu.matmul %261, %239, %cst_97 {dimension_numbers = #tpu.dot_dimension_numbers<[1], [0], [0], [1], [0, 0, 1, 1], [], []>} : vector<8x8xbf16>, vector<8x8xbf16>, vector<8x8xf32> -> vector<8x8xf32>
    %263 = arith.truncf %262 : vector<8x8xf32> to vector<8x8xbf16>
    %264 = vector.extract_strided_slice %199 {offsets = [8, 0], sizes = [8, 32], strides = [1, 1]} : vector<32x32xbf16> to vector<8x32xbf16>
    %cst_98 = arith.constant dense<0.000000e+00> : vector<8x32xf32>
    %265 = tpu.matmul %263, %264, %cst_98 {dimension_numbers = #tpu.dot_dimension_numbers<[1], [0], [0], [1], [0, 0, 1, 1], [], []>} : vector<8x8xbf16>, vector<8x32xbf16>, vector<8x32xf32> -> vector<8x32xf32>
    %266 = arith.addf %233, %265 : vector<8x32xf32>
    %267 = vector.extract_strided_slice %189 {offsets = [0, 16], sizes = [8, 8], strides = [1, 1]} : vector<8x32xf32> to vector<8x8xf32>
    %268 = arith.truncf %267 : vector<8x8xf32> to vector<8x8xbf16>
    %269 = vector.extract_strided_slice %197 {offsets = [0, 16], sizes = [8, 8], strides = [1, 1]} : vector<8x32xf32> to vector<8x8xf32>
    %270 = arith.truncf %269 : vector<8x8xf32> to vector<8x8xbf16>
    %271 = vector.extract_strided_slice %198 {offsets = [0, 16], sizes = [8, 8], strides = [1, 1]} : vector<8x32xf32> to vector<8x8xf32>
    %272 = arith.truncf %271 : vector<8x8xf32> to vector<8x8xbf16>
    %cst_99 = arith.constant dense<0.000000e+00> : vector<8x8xf32>
    %273 = tpu.matmul %268, %270, %cst_99 {dimension_numbers = #tpu.dot_dimension_numbers<[1], [1], [0], [0], [0, 0, 1, 0], [], []>} : vector<8x8xbf16>, vector<8x8xbf16>, vector<8x8xf32> -> vector<8x8xf32>
    %cst_100 = arith.constant 0.353553385 : f32
    %274 = vector.broadcast %cst_100 : f32 to vector<8x8xf32>
    %275 = arith.mulf %273, %274 : vector<8x8xf32>
    %cst_101 = arith.constant dense<0xFF800000> : vector<8xf32>
    %276 = vector.multi_reduction <maximumf>, %275, %cst_101 [1] : vector<8x8xf32> to vector<8xf32>
    %277 = vector.shape_cast %276 : vector<8xf32> to vector<8x1xf32>
    %cst_102 = arith.constant 0xFF800000 : f32
    %278 = vector.broadcast %cst_102 : f32 to vector<8x1xf32>
    %279 = arith.cmpf oeq, %277, %278 : vector<8x1xf32>
    %cst_103 = arith.constant 0.000000e+00 : f32
    %280 = vector.broadcast %cst_103 : f32 to vector<8x1xf32>
    %281 = arith.select %279, %280, %277 : vector<8x1xi1>, vector<8x1xf32>
    %282 = vector.broadcast %281 : vector<8x1xf32> to vector<8x8xf32>
    %283 = arith.subf %275, %282 : vector<8x8xf32>
    %284 = math.exp %283 : vector<8x8xf32>
    %cst_104 = arith.constant dense<0.000000e+00> : vector<8xf32>
    %285 = vector.multi_reduction <add>, %284, %cst_104 [1] : vector<8x8xf32> to vector<8xf32>
    %286 = vector.shape_cast %285 : vector<8xf32> to vector<8x1xf32>
    %cst_105 = arith.constant 0.000000e+00 : f32
    %287 = vector.broadcast %cst_105 : f32 to vector<8x1xf32>
    %288 = arith.cmpf oeq, %286, %287 : vector<8x1xf32>
    %cst_106 = arith.constant 1.000000e+00 : f32
    %289 = vector.broadcast %cst_106 : f32 to vector<8x1xf32>
    %290 = arith.select %288, %289, %286 : vector<8x1xi1>, vector<8x1xf32>
    %291 = tpu.reciprocal %290 {approx = true} : vector<8x1xf32> -> vector<8x1xf32>
    %292 = vector.broadcast %291 : vector<8x1xf32> to vector<8x8xf32>
    %293 = arith.mulf %284, %292 : vector<8x8xf32>
    %294 = arith.truncf %293 : vector<8x8xf32> to vector<8x8xbf16>
    %cst_107 = arith.constant dense<0.000000e+00> : vector<8x8xf32>
    %295 = tpu.matmul %294, %272, %cst_107 {dimension_numbers = #tpu.dot_dimension_numbers<[1], [0], [0], [1], [0, 0, 1, 1], [], []>} : vector<8x8xbf16>, vector<8x8xbf16>, vector<8x8xf32> -> vector<8x8xf32>
    %296 = arith.truncf %295 : vector<8x8xf32> to vector<8x8xbf16>
    %297 = vector.extract_strided_slice %199 {offsets = [16, 0], sizes = [8, 32], strides = [1, 1]} : vector<32x32xbf16> to vector<8x32xbf16>
    %cst_108 = arith.constant dense<0.000000e+00> : vector<8x32xf32>
    %298 = tpu.matmul %296, %297, %cst_108 {dimension_numbers = #tpu.dot_dimension_numbers<[1], [0], [0], [1], [0, 0, 1, 1], [], []>} : vector<8x8xbf16>, vector<8x32xbf16>, vector<8x32xf32> -> vector<8x32xf32>
    %299 = arith.addf %266, %298 : vector<8x32xf32>
    %300 = vector.extract_strided_slice %189 {offsets = [0, 24], sizes = [8, 8], strides = [1, 1]} : vector<8x32xf32> to vector<8x8xf32>
    %301 = arith.truncf %300 : vector<8x8xf32> to vector<8x8xbf16>
    %302 = vector.extract_strided_slice %197 {offsets = [0, 24], sizes = [8, 8], strides = [1, 1]} : vector<8x32xf32> to vector<8x8xf32>
    %303 = arith.truncf %302 : vector<8x8xf32> to vector<8x8xbf16>
    %304 = vector.extract_strided_slice %198 {offsets = [0, 24], sizes = [8, 8], strides = [1, 1]} : vector<8x32xf32> to vector<8x8xf32>
    %305 = arith.truncf %304 : vector<8x8xf32> to vector<8x8xbf16>
    %cst_109 = arith.constant dense<0.000000e+00> : vector<8x8xf32>
    %306 = tpu.matmul %301, %303, %cst_109 {dimension_numbers = #tpu.dot_dimension_numbers<[1], [1], [0], [0], [0, 0, 1, 0], [], []>} : vector<8x8xbf16>, vector<8x8xbf16>, vector<8x8xf32> -> vector<8x8xf32>
    %cst_110 = arith.constant 0.353553385 : f32
    %307 = vector.broadcast %cst_110 : f32 to vector<8x8xf32>
    %308 = arith.mulf %306, %307 : vector<8x8xf32>
    %cst_111 = arith.constant dense<0xFF800000> : vector<8xf32>
    %309 = vector.multi_reduction <maximumf>, %308, %cst_111 [1] : vector<8x8xf32> to vector<8xf32>
    %310 = vector.shape_cast %309 : vector<8xf32> to vector<8x1xf32>
    %cst_112 = arith.constant 0xFF800000 : f32
    %311 = vector.broadcast %cst_112 : f32 to vector<8x1xf32>
    %312 = arith.cmpf oeq, %310, %311 : vector<8x1xf32>
    %cst_113 = arith.constant 0.000000e+00 : f32
    %313 = vector.broadcast %cst_113 : f32 to vector<8x1xf32>
    %314 = arith.select %312, %313, %310 : vector<8x1xi1>, vector<8x1xf32>
    %315 = vector.broadcast %314 : vector<8x1xf32> to vector<8x8xf32>
    %316 = arith.subf %308, %315 : vector<8x8xf32>
    %317 = math.exp %316 : vector<8x8xf32>
    %cst_114 = arith.constant dense<0.000000e+00> : vector<8xf32>
    %318 = vector.multi_reduction <add>, %317, %cst_114 [1] : vector<8x8xf32> to vector<8xf32>
    %319 = vector.shape_cast %318 : vector<8xf32> to vector<8x1xf32>
    %cst_115 = arith.constant 0.000000e+00 : f32
    %320 = vector.broadcast %cst_115 : f32 to vector<8x1xf32>
    %321 = arith.cmpf oeq, %319, %320 : vector<8x1xf32>
    %cst_116 = arith.constant 1.000000e+00 : f32
    %322 = vector.broadcast %cst_116 : f32 to vector<8x1xf32>
    %323 = arith.select %321, %322, %319 : vector<8x1xi1>, vector<8x1xf32>
    %324 = tpu.reciprocal %323 {approx = true} : vector<8x1xf32> -> vector<8x1xf32>
    %325 = vector.broadcast %324 : vector<8x1xf32> to vector<8x8xf32>
    %326 = arith.mulf %317, %325 : vector<8x8xf32>
    %327 = arith.truncf %326 : vector<8x8xf32> to vector<8x8xbf16>
    %cst_117 = arith.constant dense<0.000000e+00> : vector<8x8xf32>
    %328 = tpu.matmul %327, %305, %cst_117 {dimension_numbers = #tpu.dot_dimension_numbers<[1], [0], [0], [1], [0, 0, 1, 1], [], []>} : vector<8x8xbf16>, vector<8x8xbf16>, vector<8x8xf32> -> vector<8x8xf32>
    %329 = arith.truncf %328 : vector<8x8xf32> to vector<8x8xbf16>
    %330 = vector.extract_strided_slice %199 {offsets = [24, 0], sizes = [8, 32], strides = [1, 1]} : vector<32x32xbf16> to vector<8x32xbf16>
    %cst_118 = arith.constant dense<0.000000e+00> : vector<8x32xf32>
    %331 = tpu.matmul %329, %330, %cst_118 {dimension_numbers = #tpu.dot_dimension_numbers<[1], [0], [0], [1], [0, 0, 1, 1], [], []>} : vector<8x8xbf16>, vector<8x32xbf16>, vector<8x32xf32> -> vector<8x32xf32>
    %332 = arith.addf %299, %331 : vector<8x32xf32>
    %c0_119 = arith.constant 0 : index
    %c0_120 = arith.constant 0 : index
    %333 = vector.load %arg15[%c0_119, %c0_120] : memref<1x32xf32, #tpu.memory_space<vmem>>, vector<1x32xf32>
    %334 = vector.broadcast %333 : vector<1x32xf32> to vector<8x32xf32>
    %335 = arith.addf %332, %334 : vector<8x32xf32>
    %336 = arith.addf %183, %335 : vector<8x32xf32>
    %c0_121 = arith.constant 0 : index
    %c0_122 = arith.constant 0 : index
    %337 = vector.load %arg16[%c0_121, %c0_122] : memref<1x32xf32, #tpu.memory_space<vmem>>, vector<1x32xf32>
    %c0_123 = arith.constant 0 : index
    %c0_124 = arith.constant 0 : index
    %338 = vector.load %arg17[%c0_123, %c0_124] : memref<1x32xf32, #tpu.memory_space<vmem>>, vector<1x32xf32>
    %cst_125 = arith.constant dense<0.000000e+00> : vector<8xf32>
    %339 = vector.multi_reduction <add>, %336, %cst_125 [1] : vector<8x32xf32> to vector<8xf32>
    %340 = vector.shape_cast %339 : vector<8xf32> to vector<8x1xf32>
    %cst_126 = arith.constant 3.200000e+01 : f32
    %341 = vector.broadcast %cst_126 : f32 to vector<8x1xf32>
    %342 = arith.divf %340, %341 : vector<8x1xf32>
    %343 = vector.broadcast %342 : vector<8x1xf32> to vector<8x32xf32>
    %344 = arith.subf %336, %343 : vector<8x32xf32>
    %345 = arith.mulf %344, %344 : vector<8x32xf32>
    %cst_127 = arith.constant dense<0.000000e+00> : vector<8xf32>
    %346 = vector.multi_reduction <add>, %345, %cst_127 [1] : vector<8x32xf32> to vector<8xf32>
    %347 = vector.shape_cast %346 : vector<8xf32> to vector<8x1xf32>
    %cst_128 = arith.constant 3.200000e+01 : f32
    %348 = vector.broadcast %cst_128 : f32 to vector<8x1xf32>
    %349 = arith.divf %347, %348 : vector<8x1xf32>
    %350 = vector.broadcast %342 : vector<8x1xf32> to vector<8x32xf32>
    %351 = arith.subf %336, %350 : vector<8x32xf32>
    %cst_129 = arith.constant 9.99999974E-6 : f32
    %352 = vector.broadcast %cst_129 : f32 to vector<8x1xf32>
    %353 = arith.addf %349, %352 : vector<8x1xf32>
    %354 = math.rsqrt %353 : vector<8x1xf32>
    %355 = vector.broadcast %354 : vector<8x1xf32> to vector<8x32xf32>
    %356 = arith.mulf %351, %355 : vector<8x32xf32>
    %357 = vector.broadcast %337 : vector<1x32xf32> to vector<8x32xf32>
    %358 = arith.mulf %356, %357 : vector<8x32xf32>
    %359 = vector.broadcast %338 : vector<1x32xf32> to vector<8x32xf32>
    %360 = arith.addf %358, %359 : vector<8x32xf32>
    %361 = arith.truncf %360 : vector<8x32xf32> to vector<8x32xbf16>
    %c0_130 = arith.constant 0 : index
    %c0_131 = arith.constant 0 : index
    %362 = vector.load %arg18[%c0_130, %c0_131] : memref<32x128xbf16, #tpu.memory_space<vmem>>, vector<32x128xbf16>
    %cst_132 = arith.constant dense<0.000000e+00> : vector<8x128xf32>
    %363 = tpu.matmul %361, %362, %cst_132 {dimension_numbers = #tpu.dot_dimension_numbers<[1], [0], [0], [1], [0, 0, 1, 1], [], []>} : vector<8x32xbf16>, vector<32x128xbf16>, vector<8x128xf32> -> vector<8x128xf32>
    %c0_133 = arith.constant 0 : index
    %c0_134 = arith.constant 0 : index
    %364 = vector.load %arg19[%c0_133, %c0_134] : memref<1x128xf32, #tpu.memory_space<vmem>>, vector<1x128xf32>
    %365 = vector.broadcast %364 : vector<1x128xf32> to vector<8x128xf32>
    %366 = arith.addf %363, %365 : vector<8x128xf32>
    %cst_135 = arith.constant 0.000000e+00 : f32
    %367 = vector.broadcast %cst_135 : f32 to vector<8x128xf32>
    %368 = arith.maximumf %366, %367 : vector<8x128xf32>
    %369 = arith.truncf %368 : vector<8x128xf32> to vector<8x128xbf16>
    %c0_136 = arith.constant 0 : index
    %c0_137 = arith.constant 0 : index
    %370 = vector.load %arg20[%c0_136, %c0_137] : memref<128x32xbf16, #tpu.memory_space<vmem>>, vector<128x32xbf16>
    %cst_138 = arith.constant dense<0.000000e+00> : vector<8x32xf32>
    %371 = tpu.matmul %369, %370, %cst_138 {dimension_numbers = #tpu.dot_dimension_numbers<[1], [0], [0], [1], [0, 0, 1, 1], [], []>} : vector<8x128xbf16>, vector<128x32xbf16>, vector<8x32xf32> -> vector<8x32xf32>
    %c0_139 = arith.constant 0 : index
    %c0_140 = arith.constant 0 : index
    %372 = vector.load %arg21[%c0_139, %c0_140] : memref<1x32xf32, #tpu.memory_space<vmem>>, vector<1x32xf32>
    %373 = vector.broadcast %372 : vector<1x32xf32> to vector<8x32xf32>
    %374 = arith.addf %371, %373 : vector<8x32xf32>
    %375 = arith.addf %360, %374 : vector<8x32xf32>
    %c0_141 = arith.constant 0 : index
    %c0_142 = arith.constant 0 : index
    %376 = vector.load %arg22[%c0_141, %c0_142] : memref<1x32xf32, #tpu.memory_space<vmem>>, vector<1x32xf32>
    %c0_143 = arith.constant 0 : index
    %c0_144 = arith.constant 0 : index
    %377 = vector.load %arg23[%c0_143, %c0_144] : memref<1x32xf32, #tpu.memory_space<vmem>>, vector<1x32xf32>
    %cst_145 = arith.constant dense<0.000000e+00> : vector<8xf32>
    %378 = vector.multi_reduction <add>, %375, %cst_145 [1] : vector<8x32xf32> to vector<8xf32>
    %379 = vector.shape_cast %378 : vector<8xf32> to vector<8x1xf32>
    %cst_146 = arith.constant 3.200000e+01 : f32
    %380 = vector.broadcast %cst_146 : f32 to vector<8x1xf32>
    %381 = arith.divf %379, %380 : vector<8x1xf32>
    %382 = vector.broadcast %381 : vector<8x1xf32> to vector<8x32xf32>
    %383 = arith.subf %375, %382 : vector<8x32xf32>
    %384 = arith.mulf %383, %383 : vector<8x32xf32>
    %cst_147 = arith.constant dense<0.000000e+00> : vector<8xf32>
    %385 = vector.multi_reduction <add>, %384, %cst_147 [1] : vector<8x32xf32> to vector<8xf32>
    %386 = vector.shape_cast %385 : vector<8xf32> to vector<8x1xf32>
    %cst_148 = arith.constant 3.200000e+01 : f32
    %387 = vector.broadcast %cst_148 : f32 to vector<8x1xf32>
    %388 = arith.divf %386, %387 : vector<8x1xf32>
    %389 = vector.broadcast %381 : vector<8x1xf32> to vector<8x32xf32>
    %390 = arith.subf %375, %389 : vector<8x32xf32>
    %cst_149 = arith.constant 9.99999974E-6 : f32
    %391 = vector.broadcast %cst_149 : f32 to vector<8x1xf32>
    %392 = arith.addf %388, %391 : vector<8x1xf32>
    %393 = math.rsqrt %392 : vector<8x1xf32>
    %394 = vector.broadcast %393 : vector<8x1xf32> to vector<8x32xf32>
    %395 = arith.mulf %390, %394 : vector<8x32xf32>
    %396 = vector.broadcast %376 : vector<1x32xf32> to vector<8x32xf32>
    %397 = arith.mulf %395, %396 : vector<8x32xf32>
    %398 = vector.broadcast %377 : vector<1x32xf32> to vector<8x32xf32>
    %399 = arith.addf %397, %398 : vector<8x32xf32>
    %400 = arith.truncf %399 : vector<8x32xf32> to vector<8x32xbf16>
    %c0_150 = arith.constant 0 : index
    %c0_151 = arith.constant 0 : index
    %c0_152 = arith.constant 0 : index
    %401 = vector.load %arg24[%c0_150, %c0_151, %c0_152] : memref<1x8x32xbf16, #tpu.memory_space<vmem>>, vector<1x8x32xbf16>
    %402 = vector.shape_cast %401 : vector<1x8x32xbf16> to vector<8x32xbf16>
    %403 = vector.shape_cast %400 : vector<8x32xbf16> to vector<1x8x32xbf16>
    tpu.vector_store %arg24[%c0_150, %c0_151, %c0_152], %403 {strides = array<i32>} : memref<1x8x32xbf16, #tpu.memory_space<vmem>>, vector<1x8x32xbf16>,
    return
  }
  func.func @transform_0(%arg0: i32) -> (i32, i32, i32) {
    %c0_i32 = arith.constant 0 : i32
    %c0_i32_0 = arith.constant 0 : i32
    %c0_i32_1 = arith.constant 0 : i32
    return %arg0, %c0_i32, %c0_i32_0 : i32, i32, i32
  }
  func.func @transform_1(%arg0: i32) -> (i32, i32, i32) {
    %c0_i32 = arith.constant 0 : i32
    %c0_i32_0 = arith.constant 0 : i32
    %c0_i32_1 = arith.constant 0 : i32
    return %arg0, %c0_i32, %c0_i32_0 : i32, i32, i32
  }
  func.func @transform_2(%arg0: i32) -> (i32, i32, i32) {
    %c0_i32 = arith.constant 0 : i32
    %c0_i32_0 = arith.constant 0 : i32
    %c0_i32_1 = arith.constant 0 : i32
    return %arg0, %c0_i32, %c0_i32_0 : i32, i32, i32
  }
  func.func @transform_3(%arg0: i32) -> (i32, i32) {
    %c0_i32 = arith.constant 0 : i32
    %c0_i32_0 = arith.constant 0 : i32
    %c0_i32_1 = arith.constant 0 : i32
    return %c0_i32, %c0_i32_0 : i32, i32
  }
  func.func @transform_4(%arg0: i32) -> (i32, i32) {
    %c0_i32 = arith.constant 0 : i32
    %c0_i32_0 = arith.constant 0 : i32
    %c0_i32_1 = arith.constant 0 : i32
    return %c0_i32, %c0_i32_0 : i32, i32
  }
  func.func @transform_5(%arg0: i32) -> (i32, i32) {
    %c0_i32 = arith.constant 0 : i32
    %c0_i32_0 = arith.constant 0 : i32
    %c0_i32_1 = arith.constant 0 : i32
    return %c0_i32, %c0_i32_0 : i32, i32
  }
  func.func @transform_6(%arg0: i32) -> (i32, i32) {
    %c0_i32 = arith.constant 0 : i32
    %c0_i32_0 = arith.constant 0 : i32
    %c0_i32_1 = arith.constant 0 : i32
    return %c0_i32, %c0_i32_0 : i32, i32
  }
  func.func @transform_7(%arg0: i32) -> (i32, i32) {
    %c0_i32 = arith.constant 0 : i32
    %c0_i32_0 = arith.constant 0 : i32
    %c0_i32_1 = arith.constant 0 : i32
    return %c0_i32, %c0_i32_0 : i32, i32
  }
  func.func @transform_8(%arg0: i32) -> (i32, i32) {
    %c0_i32 = arith.constant 0 : i32
    %c0_i32_0 = arith.constant 0 : i32
    %c0_i32_1 = arith.constant 0 : i32
    return %c0_i32, %c0_i32_0 : i32, i32
  }
  func.func @transform_9(%arg0: i32) -> (i32, i32) {
    %c0_i32 = arith.constant 0 : i32
    %c0_i32_0 = arith.constant 0 : i32
    %c0_i32_1 = arith.constant 0 : i32
    return %c0_i32, %c0_i32_0 : i32, i32
  }
  func.func @transform_10(%arg0: i32) -> (i32, i32) {
    %c0_i32 = arith.constant 0 : i32
    %c0_i32_0 = arith.constant 0 : i32
    %c0_i32_1 = arith.constant 0 : i32
    return %c0_i32, %c0_i32_0 : i32, i32
  }
  func.func @transform_11(%arg0: i32) -> (i32, i32) {
    %c0_i32 = arith.constant 0 : i32
    %c0_i32_0 = arith.constant 0 : i32
    %c0_i32_1 = arith.constant 0 : i32
    return %c0_i32, %c0_i32_0 : i32, i32
  }
  func.func @transform_12(%arg0: i32) -> (i32, i32) {
    %c0_i32 = arith.constant 0 : i32
    %c0_i32_0 = arith.constant 0 : i32
    %c0_i32_1 = arith.constant 0 : i32
    return %c0_i32, %c0_i32_0 : i32, i32
  }
  func.func @transform_13(%arg0: i32) -> (i32, i32) {
    %c0_i32 = arith.constant 0 : i32
    %c0_i32_0 = arith.constant 0 : i32
    %c0_i32_1 = arith.constant 0 : i32
    return %c0_i32, %c0_i32_0 : i32, i32
  }
  func.func @transform_14(%arg0: i32) -> (i32, i32) {
    %c0_i32 = arith.constant 0 : i32
    %c0_i32_0 = arith.constant 0 : i32
    %c0_i32_1 = arith.constant 0 : i32
    return %c0_i32, %c0_i32_0 : i32, i32
  }
  func.func @transform_15(%arg0: i32) -> (i32, i32) {
    %c0_i32 = arith.constant 0 : i32
    %c0_i32_0 = arith.constant 0 : i32
    %c0_i32_1 = arith.constant 0 : i32
    return %c0_i32, %c0_i32_0 : i32, i32
  }
  func.func @transform_16(%arg0: i32) -> (i32, i32) {
    %c0_i32 = arith.constant 0 : i32
    %c0_i32_0 = arith.constant 0 : i32
    %c0_i32_1 = arith.constant 0 : i32
    return %c0_i32, %c0_i32_0 : i32, i32
  }
  func.func @transform_17(%arg0: i32) -> (i32, i32) {
    %c0_i32 = arith.constant 0 : i32
    %c0_i32_0 = arith.constant 0 : i32
    %c0_i32_1 = arith.constant 0 : i32
    return %c0_i32, %c0_i32_0 : i32, i32
  }
  func.func @transform_18(%arg0: i32) -> (i32, i32) {
    %c0_i32 = arith.constant 0 : i32
    %c0_i32_0 = arith.constant 0 : i32
    %c0_i32_1 = arith.constant 0 : i32
    return %c0_i32, %c0_i32_0 : i32, i32
  }
  func.func @transform_19(%arg0: i32) -> (i32, i32) {
    %c0_i32 = arith.constant 0 : i32
    %c0_i32_0 = arith.constant 0 : i32
    %c0_i32_1 = arith.constant 0 : i32
    return %c0_i32, %c0_i32_0 : i32, i32
  }
  func.func @transform_20(%arg0: i32) -> (i32, i32) {
    %c0_i32 = arith.constant 0 : i32
    %c0_i32_0 = arith.constant 0 : i32
    %c0_i32_1 = arith.constant 0 : i32
    return %c0_i32, %c0_i32_0 : i32, i32
  }
  func.func @transform_21(%arg0: i32) -> (i32, i32) {
    %c0_i32 = arith.constant 0 : i32
    %c0_i32_0 = arith.constant 0 : i32
    %c0_i32_1 = arith.constant 0 : i32
    return %c0_i32, %c0_i32_0 : i32, i32
  }
  func.func @transform_22(%arg0: i32) -> (i32, i32) {
    %c0_i32 = arith.constant 0 : i32
    %c0_i32_0 = arith.constant 0 : i32
    %c0_i32_1 = arith.constant 0 : i32
    return %c0_i32, %c0_i32_0 : i32, i32
  }
  func.func @transform_23(%arg0: i32) -> (i32, i32, i32) {
    %c0_i32 = arith.constant 0 : i32
    %c0_i32_0 = arith.constant 0 : i32
    %c0_i32_1 = arith.constant 0 : i32
    return %arg0, %c0_i32, %c0_i32_0 : i32, i32, i32
  }
}

module attributes {stable_mosaic.version = 11 : i64} {
  func.func @_ln_linear_kernel(%arg0: i32, %arg1: i32, %arg2: memref<1x8x32xbf16, #tpu.memory_space<vmem>>, %arg3: memref<1x32xf32, #tpu.memory_space<vmem>>, %arg4: memref<1x32xf32, #tpu.memory_space<vmem>>, %arg5: memref<32x17xbf16, #tpu.memory_space<vmem>>, %arg6: memref<1x17xf32, #tpu.memory_space<vmem>>, %arg7: memref<1x8x17xf32, #tpu.memory_space<vmem>>) attributes {dimension_semantics = [#tpu.dimension_semantics<parallel>, #tpu.dimension_semantics<parallel>], iteration_bounds = array<i64: 2, 1>, scalar_prefetch = 0 : i64, scratch_operands = 0 : i64, tpu.core_type = #tpu.core_type<tc>, window_params = [{transform_indices = @transform_0, window_bounds = array<i64: 1, 8, 32>}, {pipeline_mode = #tpu.pipeline_mode<synchronous>, transform_indices = @transform_1, window_bounds = array<i64: 1, 32>}, {pipeline_mode = #tpu.pipeline_mode<synchronous>, transform_indices = @transform_2, window_bounds = array<i64: 1, 32>}, {transform_indices = @transform_3, window_bounds = array<i64: 32, 17>}, {transform_indices = @transform_4, window_bounds = array<i64: 1, 17>}, {transform_indices = @transform_5, window_bounds = array<i64: 1, 8, 17>}]} {
    %c0 = arith.constant 0 : index
    %c0_0 = arith.constant 0 : index
    %c0_1 = arith.constant 0 : index
    %0 = vector.load %arg2[%c0, %c0_0, %c0_1] : memref<1x8x32xbf16, #tpu.memory_space<vmem>>, vector<1x8x32xbf16>
    %1 = vector.shape_cast %0 : vector<1x8x32xbf16> to vector<8x32xbf16>
    %2 = arith.extf %1 : vector<8x32xbf16> to vector<8x32xf32>
    %c0_2 = arith.constant 0 : index
    %c0_3 = arith.constant 0 : index
    %3 = vector.load %arg3[%c0_2, %c0_3] : memref<1x32xf32, #tpu.memory_space<vmem>>, vector<1x32xf32>
    %c0_4 = arith.constant 0 : index
    %c0_5 = arith.constant 0 : index
    %4 = vector.load %arg4[%c0_4, %c0_5] : memref<1x32xf32, #tpu.memory_space<vmem>>, vector<1x32xf32>
    %cst = arith.constant dense<0.000000e+00> : vector<8xf32>
    %5 = vector.multi_reduction <add>, %2, %cst [1] : vector<8x32xf32> to vector<8xf32>
    %6 = vector.shape_cast %5 : vector<8xf32> to vector<8x1xf32>
    %cst_6 = arith.constant 3.200000e+01 : f32
    %7 = vector.broadcast %cst_6 : f32 to vector<8x1xf32>
    %8 = arith.divf %6, %7 : vector<8x1xf32>
    %9 = vector.broadcast %8 : vector<8x1xf32> to vector<8x32xf32>
    %10 = arith.subf %2, %9 : vector<8x32xf32>
    %11 = arith.mulf %10, %10 : vector<8x32xf32>
    %cst_7 = arith.constant dense<0.000000e+00> : vector<8xf32>
    %12 = vector.multi_reduction <add>, %11, %cst_7 [1] : vector<8x32xf32> to vector<8xf32>
    %13 = vector.shape_cast %12 : vector<8xf32> to vector<8x1xf32>
    %cst_8 = arith.constant 3.200000e+01 : f32
    %14 = vector.broadcast %cst_8 : f32 to vector<8x1xf32>
    %15 = arith.divf %13, %14 : vector<8x1xf32>
    %16 = vector.broadcast %8 : vector<8x1xf32> to vector<8x32xf32>
    %17 = arith.subf %2, %16 : vector<8x32xf32>
    %cst_9 = arith.constant 9.99999974E-6 : f32
    %18 = vector.broadcast %cst_9 : f32 to vector<8x1xf32>
    %19 = arith.addf %15, %18 : vector<8x1xf32>
    %20 = math.rsqrt %19 : vector<8x1xf32>
    %21 = vector.broadcast %20 : vector<8x1xf32> to vector<8x32xf32>
    %22 = arith.mulf %17, %21 : vector<8x32xf32>
    %23 = vector.broadcast %3 : vector<1x32xf32> to vector<8x32xf32>
    %24 = arith.mulf %22, %23 : vector<8x32xf32>
    %25 = vector.broadcast %4 : vector<1x32xf32> to vector<8x32xf32>
    %26 = arith.addf %24, %25 : vector<8x32xf32>
    %27 = arith.truncf %26 : vector<8x32xf32> to vector<8x32xbf16>
    %c0_10 = arith.constant 0 : index
    %c0_11 = arith.constant 0 : index
    %28 = vector.load %arg5[%c0_10, %c0_11] : memref<32x17xbf16, #tpu.memory_space<vmem>>, vector<32x17xbf16>
    %cst_12 = arith.constant dense<0.000000e+00> : vector<8x17xf32>
    %29 = tpu.matmul %27, %28, %cst_12 {dimension_numbers = #tpu.dot_dimension_numbers<[1], [0], [0], [1], [0, 0, 1, 1], [], []>} : vector<8x32xbf16>, vector<32x17xbf16>, vector<8x17xf32> -> vector<8x17xf32>
    %c0_13 = arith.constant 0 : index
    %c0_14 = arith.constant 0 : index
    %30 = vector.load %arg6[%c0_13, %c0_14] : memref<1x17xf32, #tpu.memory_space<vmem>>, vector<1x17xf32>
    %31 = vector.broadcast %30 : vector<1x17xf32> to vector<8x17xf32>
    %32 = arith.addf %29, %31 : vector<8x17xf32>
    %c0_15 = arith.constant 0 : index
    %c0_16 = arith.constant 0 : index
    %c0_17 = arith.constant 0 : index
    %33 = vector.load %arg7[%c0_15, %c0_16, %c0_17] : memref<1x8x17xf32, #tpu.memory_space<vmem>>, vector<1x8x17xf32>
    %34 = vector.shape_cast %33 : vector<1x8x17xf32> to vector<8x17xf32>
    %35 = vector.shape_cast %32 : vector<8x17xf32> to vector<1x8x17xf32>
    tpu.vector_store %arg7[%c0_15, %c0_16, %c0_17], %35 {strides = array<i32>} : memref<1x8x17xf32, #tpu.memory_space<vmem>>, vector<1x8x17xf32>,
    return
  }
  func.func @transform_0(%arg0: i32, %arg1: i32) -> (i32, i32, i32) {
    %c0_i32 = arith.constant 0 : i32
    %c0_i32_0 = arith.constant 0 : i32
    %c0_i32_1 = arith.constant 0 : i32
    return %arg0, %c0_i32, %c0_i32_0 : i32, i32, i32
  }
  func.func @transform_1(%arg0: i32, %arg1: i32) -> (i32, i32) {
    %c0_i32 = arith.constant 0 : i32
    %c0_i32_0 = arith.constant 0 : i32
    %c0_i32_1 = arith.constant 0 : i32
    return %c0_i32, %c0_i32_0 : i32, i32
  }
  func.func @transform_2(%arg0: i32, %arg1: i32) -> (i32, i32) {
    %c0_i32 = arith.constant 0 : i32
    %c0_i32_0 = arith.constant 0 : i32
    %c0_i32_1 = arith.constant 0 : i32
    return %c0_i32, %c0_i32_0 : i32, i32
  }
  func.func @transform_3(%arg0: i32, %arg1: i32) -> (i32, i32) {
    %c0_i32 = arith.constant 0 : i32
    %c0_i32_0 = arith.constant 0 : i32
    return %c0_i32, %arg1 : i32, i32
  }
  func.func @transform_4(%arg0: i32, %arg1: i32) -> (i32, i32) {
    %c0_i32 = arith.constant 0 : i32
    %c0_i32_0 = arith.constant 0 : i32
    return %c0_i32, %arg1 : i32, i32
  }
  func.func @transform_5(%arg0: i32, %arg1: i32) -> (i32, i32, i32) {
    %c0_i32 = arith.constant 0 : i32
    %c0_i32_0 = arith.constant 0 : i32
    return %arg0, %c0_i32, %arg1 : i32, i32, i32
  }
}

</mosaic_0001>

<llo_original>
// kernel: seq2seq_trans_forward.8
$region0: #{seq2seq_trans_forward.8}
  #allocation0 [shape = 'u32[]', space=smem, size = 0x4, offset = 0x4, fixed_abs, tag = 'smem constant byte address 0x4 - core index']
  #allocation1 [shape = 'u32[144,128]{1,0:T(1,128)}', space=vmem, size = 0x12000, scoped, tag = 'internal scratch']
  %s0 = inlined_call_operand.vmem [shape: bf16[2,8,32], index: 0, kind: input, shape index: {}]
  %s1 = inlined_call_operand.vmem [shape: f32[1,32], index: 1, kind: input, shape index: {}]
  %s2 = inlined_call_operand.vmem [shape: f32[1,32], index: 2, kind: input, shape index: {}]
  %s3 = inlined_call_operand.vmem [shape: bf16[2,8,32], index: 3, kind: output, shape index: {}]
  %s4 = sld [smem:[#allocation0]]
  $region45: #{seq2seq_trans_forward.8} parent=0
    _
  %s6 = ssub.s32 1, %s4
  %s7 = scalar_select 0, %s6, %s4
  loop: start=0, step=1, limit=4
  $region2: #{seq2seq_trans_forward.8} parent=0 // loop_pre_header
    _
  $region3: #{seq2seq_trans_forward.8} parent=0 // loop_header
    %s9 = sphi 0, %s13
    %p10 = scmp.ge.s32.totalorder %s9, 4
    %s19 = sphi 0, %s21
    %s22 = sphi 0, %s19
    %s23 = sphi 0, %s22
    %s39 = sphi 0, %s23
    %s43 = sphi 0, %s43
    %s45 = sphi 0, %s43
    %s46 = sphi 0, %s45
    %s60 = sphi 0, %s46
    %s64 = sphi 0, %s64
    %s66 = sphi 0, %s64
    %s67 = sphi 0, %s66
    %s81 = sphi 0, %s67
    %s87 = sphi 0, %s89
    %s90 = sphi 0, %s87
    %s91 = sphi 0, %s90
    %s107 = sphi 0, %s91
  $region4: #{seq2seq_trans_forward.8} parent=0 // loop_header_branch
    %12 = sbr.rel (%p10) target = $region8
  $region5: #{seq2seq_trans_forward.8} parent=0 // loop_body
    %s14 = ssub.s32 %s9, 1
    %s15 = ssub.s32 %s9, 2
    %s16 = sadd.s32 %s9, 1
    %s17 = ssub.s32 %s9, %s16
    %p18 = scmp.eq.s32.totalorder %s17, 0
    %s20 = sadd.s32 %s19, 1
    %s21 = scalar_select %p18, %s19, %s20
    %p24 = pneg %p18
    %p25 = scmp.eq.s32.totalorder %s9, 1
    %p26 = por %p24, %p25
    %p27 = scmp.ne.s32.totalorder %s19, %s22
    %p28 = scmp.eq.s32.totalorder %s9, 0
    %p29 = por %p27, %p28
    %p30 = scmp.ne.s32.totalorder %s19, %s22
    %p31 = scmp.eq.s32.totalorder %s14, 1
    %p32 = por %p30, %p31
    %p33 = scmp.ne.s32.totalorder %s22, %s23
    %p34 = scmp.eq.s32.totalorder %s14, 0
    %p35 = por %p33, %p34
    %p36 = scmp.ne.s32.totalorder %s22, %s23
    %p37 = scmp.eq.s32.totalorder %s15, 1
    %p38 = por %p36, %p37
    %p40 = scmp.ne.s32.totalorder %s23, %s39
    %p41 = scmp.eq.s32.totalorder %s15, 0
    %p42 = por %p40, %p41
    %s44 = sadd.s32 %s43, 1
    %p47 = scmp.eq.s32.totalorder %s9, 1
    %p48 = scmp.ne.s32.totalorder %s43, %s45
    %p49 = scmp.eq.s32.totalorder %s9, 0
    %p50 = por %p48, %p49
    %p51 = scmp.ne.s32.totalorder %s43, %s45
    %p52 = scmp.eq.s32.totalorder %s14, 1
    %p53 = por %p51, %p52
    %p54 = scmp.ne.s32.totalorder %s45, %s46
    %p55 = scmp.eq.s32.totalorder %s14, 0
    %p56 = por %p54, %p55
    %p57 = scmp.ne.s32.totalorder %s45, %s46
    %p58 = scmp.eq.s32.totalorder %s15, 1
    %p59 = por %p57, %p58
    %p61 = scmp.ne.s32.totalorder %s46, %s60
    %p62 = scmp.eq.s32.totalorder %s15, 0
    %p63 = por %p61, %p62
    %s65 = sadd.s32 %s64, 1
    %p68 = scmp.eq.s32.totalorder %s9, 1
    %p69 = scmp.ne.s32.totalorder %s64, %s66
    %p70 = scmp.eq.s32.totalorder %s9, 0
    %p71 = por %p69, %p70
    %p72 = scmp.ne.s32.totalorder %s64, %s66
    %p73 = scmp.eq.s32.totalorder %s14, 1
    %p74 = por %p72, %p73
    %p75 = scmp.ne.s32.totalorder %s66, %s67
    %p76 = scmp.eq.s32.totalorder %s14, 0
    %p77 = por %p75, %p76
    %p78 = scmp.ne.s32.totalorder %s66, %s67
    %p79 = scmp.eq.s32.totalorder %s15, 1
    %p80 = por %p78, %p79
    %p82 = scmp.ne.s32.totalorder %s67, %s81
    %p83 = scmp.eq.s32.totalorder %s15, 0
    %p84 = por %p82, %p83
    %s85 = ssub.s32 %s9, %s16
    %p86 = scmp.eq.s32.totalorder %s85, 0
    %s88 = sadd.s32 %s87, 1
    %s89 = scalar_select %p86, %s87, %s88
    %p92 = pneg %p86
    %p93 = scmp.eq.s32.totalorder %s9, 1
    %p94 = por %p92, %p93
    %p95 = scmp.ne.s32.totalorder %s87, %s90
    %p96 = scmp.eq.s32.totalorder %s9, 0
    %p97 = por %p95, %p96
    %p98 = scmp.ne.s32.totalorder %s87, %s90
    %p99 = scmp.eq.s32.totalorder %s14, 1
    %p100 = por %p98, %p99
    %p101 = scmp.ne.s32.totalorder %s90, %s91
    %p102 = scmp.eq.s32.totalorder %s14, 0
    %p103 = por %p101, %p102
    %p104 = scmp.ne.s32.totalorder %s90, %s91
    %p105 = scmp.eq.s32.totalorder %s15, 1
    %p106 = por %p104, %p105
    %p108 = scmp.ne.s32.totalorder %s91, %s107
    %p109 = scmp.eq.s32.totalorder %s15, 0
    %p110 = por %p108, %p109
    %p111 = scmp.le.s32.totalorder 1, %s9
    %p112 = scmp.lt.s32.totalorder %s9, 3
    %p113 = pnand %p111, %p112
    %p114 = pneg %p113
    // Predicated region
    $region9: #{seq2seq_trans_forward.8} parent=5 // pred_check
      _
    $region10: #{seq2seq_trans_forward.8} parent=5 // pred_check_branch
      %116 = sbr.rel (%p113) target = $region12
    $region11: #{seq2seq_trans_forward.8} parent=5 // pred_region
      %s117 = ssub.s32 %s9, 1
      // Predicated region
      $region13: #{seq2seq_trans_forward.8} parent=11 // pred_check
        %p118 = pneg %p56
      $region14: #{seq2seq_trans_forward.8} parent=11 // pred_check_branch
        %120 = sbr.rel (%p118) target = $region16
      $region15: #{seq2seq_trans_forward.8} parent=11 // pred_region
        _
      $region16: #{seq2seq_trans_forward.8} parent=11 // pred_fallthru
        _
      // Predicated region
      $region17: #{seq2seq_trans_forward.8} parent=11 // pred_check
        %p121 = pneg %p77
      $region18: #{seq2seq_trans_forward.8} parent=11 // pred_check_branch
        %123 = sbr.rel (%p121) target = $region20
      $region19: #{seq2seq_trans_forward.8} parent=11 // pred_region
        _
      $region20: #{seq2seq_trans_forward.8} parent=11 // pred_fallthru
        _
    $region12: #{seq2seq_trans_forward.8} parent=5 // pred_fallthru
      _
    %p124 = scmp.lt.s32.totalorder %s9, 2
    // Predicated region
    $region21: #{seq2seq_trans_forward.8} parent=5 // pred_check
      %p125 = pneg %p124
    $region22: #{seq2seq_trans_forward.8} parent=5 // pred_check_branch
      %127 = sbr.rel (%p125) target = $region24
    $region23: #{seq2seq_trans_forward.8} parent=5 // pred_region
      // Predicated region
      $region25: #{seq2seq_trans_forward.8} parent=23 // pred_check
        %p128 = pneg %p29
      $region26: #{seq2seq_trans_forward.8} parent=23 // pred_check_branch
        %130 = sbr.rel (%p128) target = $region28
      $region27: #{seq2seq_trans_forward.8} parent=23 // pred_region
        %p131 = scmp.lt.s32.totalorder %s9, 1
        %s132 = scalar_select %p131, %s9, 1
        %s133 = smul.addr %s132, 4
        %s134 = scalar_lea.vmem %s0, %s133
      $region28: #{seq2seq_trans_forward.8} parent=23 // pred_fallthru
        _
    $region24: #{seq2seq_trans_forward.8} parent=5 // pred_fallthru
      _
    %p135 = scmp.le.s32.totalorder 1, %s9
    %p136 = scmp.lt.s32.totalorder %s9, 3
    %p137 = pnand %p135, %p136
    %p138 = pneg %p137
    // Predicated region
    $region29: #{seq2seq_trans_forward.8} parent=5 // pred_check
      _
    $region30: #{seq2seq_trans_forward.8} parent=5 // pred_check_branch
      %140 = sbr.rel (%p137) target = $region32
    $region31: #{seq2seq_trans_forward.8} parent=5 // pred_region
      %s141 = ssub.s32 %s9, 1
      %p142 = scmp.lt.s32.totalorder %s14, 1
      %s143 = scalar_select %p142, %s14, 1
      %s144 = smul.addr %s143, 4
      %s145 = scalar_lea.vmem %s0, %s144
      %p146 = pneg %p35
      %p147 = pneg %p32
      %p148 = pneg %p56
      %p149 = pneg %p53
      %p150 = pneg %p77
      %p151 = pneg %p74
      %p152 = pneg %p103
      %p153 = pneg %p100
      %p154 = scmp.lt.s32.totalorder %s14, 1
      %s155 = scalar_select %p154, %s14, 1
      %s156 = smul.addr %s155, 4
      %s157 = scalar_lea.vmem %s3, %s156
      %p158 = scmp.lt.s32.totalorder %s14, 1
      %s159 = scalar_select %p158, %s14, 1
      %s160 = smul.addr %s159, 4
      %s161 = scalar_lea.vmem %s0, %s160
      %p162 = scmp.lt.s32.totalorder %s14, 1
      %s163 = scalar_select %p162, %s14, 1
      %s164 = smul.addr %s163, 4
      %s165 = scalar_lea.vmem %s3, %s164
      %v166 = vld [vmem:[%s161] sm:$0xf]
      %v167 = vunpack.c.l.bf16 %v166
      %v168 = vld [vmem:[%s1] sm:$0x1]
      %v169 = vld [vmem:[%s2] sm:$0x1]
      %vm170 = vcmask 261120
      %v171 = vsel %vm170, %v167, 0.0
      %172 = vadd.xlane.f32.xlu0 %v171
      %v173 = vpop.xlane.xlu0 %172
      %v174 = vrcp.pop 32.0
      %v175 = vmul.f32 %v173, %v174
      %v176 = vsub.f32 %v167, %v175
      %v177 = vmul.f32 %v176, %v176
      %v178 = vsel %vm170, %v177, 0.0
      %179 = vadd.xlane.f32.xlu0 %v178
      %v180 = vpop.xlane.xlu0 %179
      %v181 = vmul.f32 %v180, %v174
      %v182 = vadd.f32 %v181, 1e-05
      %v183 = vrsqrt.pop %v182
      %v184 = vmul.f32 %v176, %v183
      %v186 = vlaneseq
      %v187 = vshrl.u32 %v186, 7
      %v188 = vsub.s32 0, %v187
      %v189 = vrot.slane %v168, %v188
      %v191 = vmul.f32 %v184, %v189
      %v193 = vlaneseq
      %v194 = vshrl.u32 %v193, 7
      %v195 = vsub.s32 0, %v194
      %v196 = vrot.slane %v169, %v195
      %v198 = vadd.f32 %v191, %v196
      %v199 = vpack.c.bf16 %v198, %v198
      %vm200 = vcmask 257024
      %201 = vst.msk [vmem:[%s165] sm:$0xf] %vm200, %v199
      %p202 = scmp.lt.s32.totalorder %s14, 1
      %s203 = scalar_select %p202, %s14, 1
      %s204 = smul.addr %s203, 4
      %s205 = scalar_lea.vmem %s3, %s204
      // Predicated region
      $region33: #{seq2seq_trans_forward.8} parent=31 // pred_check
        %p206 = pneg %p100
      $region34: #{seq2seq_trans_forward.8} parent=31 // pred_check_branch
        %208 = sbr.rel (%p206) target = $region36
      $region35: #{seq2seq_trans_forward.8} parent=31 // pred_region
        _
      $region36: #{seq2seq_trans_forward.8} parent=31 // pred_fallthru
        _
    $region32: #{seq2seq_trans_forward.8} parent=5 // pred_fallthru
      _
    %p209 = scmp.le.s32.totalorder 2, %s9
    // Predicated region
    $region37: #{seq2seq_trans_forward.8} parent=5 // pred_check
      %p210 = pneg %p209
    $region38: #{seq2seq_trans_forward.8} parent=5 // pred_check_branch
      %212 = sbr.rel (%p210) target = $region40
    $region39: #{seq2seq_trans_forward.8} parent=5 // pred_region
      %s213 = ssub.s32 %s9, 2
      // Predicated region
      $region41: #{seq2seq_trans_forward.8} parent=39 // pred_check
        %p214 = pneg %p106
      $region42: #{seq2seq_trans_forward.8} parent=39 // pred_check_branch
        %216 = sbr.rel (%p214) target = $region44
      $region43: #{seq2seq_trans_forward.8} parent=39 // pred_region
        %p217 = scmp.lt.s32.totalorder %s15, 1
        %s218 = scalar_select %p217, %s15, 1
        %s219 = smul.addr %s218, 4
        %s220 = scalar_lea.vmem %s3, %s219
      $region44: #{seq2seq_trans_forward.8} parent=39 // pred_fallthru
        _
    $region40: #{seq2seq_trans_forward.8} parent=5 // pred_fallthru
      _
  $region6: #{seq2seq_trans_forward.8} parent=0 // loop_footer
    %s13 = sadd.s32 1, %s9
  $region7: #{seq2seq_trans_forward.8} parent=0 // loop_footer_branch
    %8 = sbr.rel target = $region3
  $region8: #{seq2seq_trans_forward.8} parent=0 // loop_exit
    _

// kernel: seq2seq_trans_forward.6
$region0: #{seq2seq_trans_forward.6}
  #allocation0 [shape = 'u32[]', space=smem, size = 0x4, offset = 0x4, fixed_abs, tag = 'smem constant byte address 0x4 - core index']
  #allocation1 [shape = 'u32[144,128]{1,0:T(1,128)}', space=vmem, size = 0x12000, scoped, tag = 'internal scratch']
  %s0 = inlined_call_operand.vmem [shape: bf16[2,8,32], index: 0, kind: input, shape index: {}]
  %s1 = inlined_call_operand.vmem [shape: f32[1,8,8], index: 1, kind: input, shape index: {}]
  %s2 = inlined_call_operand.vmem [shape: f32[2,1,8], index: 2, kind: input, shape index: {}]
  %s3 = inlined_call_operand.vmem [shape: bf16[32,96], index: 3, kind: input, shape index: {}]
  %s4 = inlined_call_operand.vmem [shape: f32[1,96], index: 4, kind: input, shape index: {}]
  %s5 = inlined_call_operand.vmem [shape: bf16[32,32], index: 5, kind: input, shape index: {}]
  %s6 = inlined_call_operand.vmem [shape: f32[1,32], index: 6, kind: input, shape index: {}]
  %s7 = inlined_call_operand.vmem [shape: f32[1,32], index: 7, kind: input, shape index: {}]
  %s8 = inlined_call_operand.vmem [shape: f32[1,32], index: 8, kind: input, shape index: {}]
  %s9 = inlined_call_operand.vmem [shape: bf16[32,128], index: 9, kind: input, shape index: {}]
  %s10 = inlined_call_operand.vmem [shape: f32[1,128], index: 10, kind: input, shape index: {}]
  %s11 = inlined_call_operand.vmem [shape: bf16[128,32], index: 11, kind: input, shape index: {}]
  %s12 = inlined_call_operand.vmem [shape: f32[1,32], index: 12, kind: input, shape index: {}]
  %s13 = inlined_call_operand.vmem [shape: f32[1,32], index: 13, kind: input, shape index: {}]
  %s14 = inlined_call_operand.vmem [shape: f32[1,32], index: 14, kind: input, shape index: {}]
  %s15 = inlined_call_operand.vmem [shape: bf16[2,8,32], index: 15, kind: output, shape index: {}]
  %s16 = sld [smem:[#allocation0]]
  $region93: #{seq2seq_trans_forward.6} parent=0
    _
  %s18 = ssub.s32 1, %s16
  %s19 = scalar_select 0, %s18, %s16
  loop: start=0, step=1, limit=4
  $region2: #{seq2seq_trans_forward.6} parent=0 // loop_pre_header
    _
  $region3: #{seq2seq_trans_forward.6} parent=0 // loop_header
    %s21 = sphi 0, %s25
    %p22 = scmp.ge.s32.totalorder %s21, 4
    %s31 = sphi 0, %s33
    %s34 = sphi 0, %s31
    %s35 = sphi 0, %s34
    %s51 = sphi 0, %s35
    %s55 = sphi 0, %s55
    %s57 = sphi 0, %s55
    %s58 = sphi 0, %s57
    %s72 = sphi 0, %s58
    %s78 = sphi 0, %s80
    %s81 = sphi 0, %s78
    %s82 = sphi 0, %s81
    %s98 = sphi 0, %s82
    %s102 = sphi 0, %s102
    %s104 = sphi 0, %s102
    %s105 = sphi 0, %s104
    %s119 = sphi 0, %s105
    %s123 = sphi 0, %s123
    %s125 = sphi 0, %s123
    %s126 = sphi 0, %s125
    %s140 = sphi 0, %s126
    %s144 = sphi 0, %s144
    %s146 = sphi 0, %s144
    %s147 = sphi 0, %s146
    %s161 = sphi 0, %s147
    %s165 = sphi 0, %s165
    %s167 = sphi 0, %s165
    %s168 = sphi 0, %s167
    %s182 = sphi 0, %s168
    %s186 = sphi 0, %s186
    %s188 = sphi 0, %s186
    %s189 = sphi 0, %s188
    %s203 = sphi 0, %s189
    %s207 = sphi 0, %s207
    %s209 = sphi 0, %s207
    %s210 = sphi 0, %s209
    %s224 = sphi 0, %s210
    %s228 = sphi 0, %s228
    %s230 = sphi 0, %s228
    %s231 = sphi 0, %s230
    %s245 = sphi 0, %s231
    %s249 = sphi 0, %s249
    %s251 = sphi 0, %s249
    %s252 = sphi 0, %s251
    %s266 = sphi 0, %s252
    %s270 = sphi 0, %s270
    %s272 = sphi 0, %s270
    %s273 = sphi 0, %s272
    %s287 = sphi 0, %s273
    %s291 = sphi 0, %s291
    %s293 = sphi 0, %s291
    %s294 = sphi 0, %s293
    %s308 = sphi 0, %s294
    %s312 = sphi 0, %s312
    %s314 = sphi 0, %s312
    %s315 = sphi 0, %s314
    %s329 = sphi 0, %s315
    %s333 = sphi 0, %s333
    %s335 = sphi 0, %s333
    %s336 = sphi 0, %s335
    %s350 = sphi 0, %s336
    %s356 = sphi 0, %s358
    %s359 = sphi 0, %s356
    %s360 = sphi 0, %s359
    %s376 = sphi 0, %s360
  $region4: #{seq2seq_trans_forward.6} parent=0 // loop_header_branch
    %24 = sbr.rel (%p22) target = $region8
  $region5: #{seq2seq_trans_forward.6} parent=0 // loop_body
    %s26 = ssub.s32 %s21, 1
    %s27 = ssub.s32 %s21, 2
    %s28 = sadd.s32 %s21, 1
    %s29 = ssub.s32 %s21, %s28
    %p30 = scmp.eq.s32.totalorder %s29, 0
    %s32 = sadd.s32 %s31, 1
    %s33 = scalar_select %p30, %s31, %s32
    %p36 = pneg %p30
    %p37 = scmp.eq.s32.totalorder %s21, 1
    %p38 = por %p36, %p37
    %p39 = scmp.ne.s32.totalorder %s31, %s34
    %p40 = scmp.eq.s32.totalorder %s21, 0
    %p41 = por %p39, %p40
    %p42 = scmp.ne.s32.totalorder %s31, %s34
    %p43 = scmp.eq.s32.totalorder %s26, 1
    %p44 = por %p42, %p43
    %p45 = scmp.ne.s32.totalorder %s34, %s35
    %p46 = scmp.eq.s32.totalorder %s26, 0
    %p47 = por %p45, %p46
    %p48 = scmp.ne.s32.totalorder %s34, %s35
    %p49 = scmp.eq.s32.totalorder %s27, 1
    %p50 = por %p48, %p49
    %p52 = scmp.ne.s32.totalorder %s35, %s51
    %p53 = scmp.eq.s32.totalorder %s27, 0
    %p54 = por %p52, %p53
    %s56 = sadd.s32 %s55, 1
    %p59 = scmp.eq.s32.totalorder %s21, 1
    %p60 = scmp.ne.s32.totalorder %s55, %s57
    %p61 = scmp.eq.s32.totalorder %s21, 0
    %p62 = por %p60, %p61
    %p63 = scmp.ne.s32.totalorder %s55, %s57
    %p64 = scmp.eq.s32.totalorder %s26, 1
    %p65 = por %p63, %p64
    %p66 = scmp.ne.s32.totalorder %s57, %s58
    %p67 = scmp.eq.s32.totalorder %s26, 0
    %p68 = por %p66, %p67
    %p69 = scmp.ne.s32.totalorder %s57, %s58
    %p70 = scmp.eq.s32.totalorder %s27, 1
    %p71 = por %p69, %p70
    %p73 = scmp.ne.s32.totalorder %s58, %s72
    %p74 = scmp.eq.s32.totalorder %s27, 0
    %p75 = por %p73, %p74
    %s76 = ssub.s32 %s21, %s28
    %p77 = scmp.eq.s32.totalorder %s76, 0
    %s79 = sadd.s32 %s78, 1
    %s80 = scalar_select %p77, %s78, %s79
    %p83 = pneg %p77
    %p84 = scmp.eq.s32.totalorder %s21, 1
    %p85 = por %p83, %p84
    %p86 = scmp.ne.s32.totalorder %s78, %s81
    %p87 = scmp.eq.s32.totalorder %s21, 0
    %p88 = por %p86, %p87
    %p89 = scmp.ne.s32.totalorder %s78, %s81
    %p90 = scmp.eq.s32.totalorder %s26, 1
    %p91 = por %p89, %p90
    %p92 = scmp.ne.s32.totalorder %s81, %s82
    %p93 = scmp.eq.s32.totalorder %s26, 0
    %p94 = por %p92, %p93
    %p95 = scmp.ne.s32.totalorder %s81, %s82
    %p96 = scmp.eq.s32.totalorder %s27, 1
    %p97 = por %p95, %p96
    %p99 = scmp.ne.s32.totalorder %s82, %s98
    %p100 = scmp.eq.s32.totalorder %s27, 0
    %p101 = por %p99, %p100
    %s103 = sadd.s32 %s102, 1
    %p106 = scmp.eq.s32.totalorder %s21, 1
    %p107 = scmp.ne.s32.totalorder %s102, %s104
    %p108 = scmp.eq.s32.totalorder %s21, 0
    %p109 = por %p107, %p108
    %p110 = scmp.ne.s32.totalorder %s102, %s104
    %p111 = scmp.eq.s32.totalorder %s26, 1
    %p112 = por %p110, %p111
    %p113 = scmp.ne.s32.totalorder %s104, %s105
    %p114 = scmp.eq.s32.totalorder %s26, 0
    %p115 = por %p113, %p114
    %p116 = scmp.ne.s32.totalorder %s104, %s105
    %p117 = scmp.eq.s32.totalorder %s27, 1
    %p118 = por %p116, %p117
    %p120 = scmp.ne.s32.totalorder %s105, %s119
    %p121 = scmp.eq.s32.totalorder %s27, 0
    %p122 = por %p120, %p121
    %s124 = sadd.s32 %s123, 1
    %p127 = scmp.eq.s32.totalorder %s21, 1
    %p128 = scmp.ne.s32.totalorder %s123, %s125
    %p129 = scmp.eq.s32.totalorder %s21, 0
    %p130 = por %p128, %p129
    %p131 = scmp.ne.s32.totalorder %s123, %s125
    %p132 = scmp.eq.s32.totalorder %s26, 1
    %p133 = por %p131, %p132
    %p134 = scmp.ne.s32.totalorder %s125, %s126
    %p135 = scmp.eq.s32.totalorder %s26, 0
    %p136 = por %p134, %p135
    %p137 = scmp.ne.s32.totalorder %s125, %s126
    %p138 = scmp.eq.s32.totalorder %s27, 1
    %p139 = por %p137, %p138
    %p141 = scmp.ne.s32.totalorder %s126, %s140
    %p142 = scmp.eq.s32.totalorder %s27, 0
    %p143 = por %p141, %p142
    %s145 = sadd.s32 %s144, 1
    %p148 = scmp.eq.s32.totalorder %s21, 1
    %p149 = scmp.ne.s32.totalorder %s144, %s146
    %p150 = scmp.eq.s32.totalorder %s21, 0
    %p151 = por %p149, %p150
    %p152 = scmp.ne.s32.totalorder %s144, %s146
    %p153 = scmp.eq.s32.totalorder %s26, 1
    %p154 = por %p152, %p153
    %p155 = scmp.ne.s32.totalorder %s146, %s147
    %p156 = scmp.eq.s32.totalorder %s26, 0
    %p157 = por %p155, %p156
    %p158 = scmp.ne.s32.totalorder %s146, %s147
    %p159 = scmp.eq.s32.totalorder %s27, 1
    %p160 = por %p158, %p159
    %p162 = scmp.ne.s32.totalorder %s147, %s161
    %p163 = scmp.eq.s32.totalorder %s27, 0
    %p164 = por %p162, %p163
    %s166 = sadd.s32 %s165, 1
    %p169 = scmp.eq.s32.totalorder %s21, 1
    %p170 = scmp.ne.s32.totalorder %s165, %s167
    %p171 = scmp.eq.s32.totalorder %s21, 0
    %p172 = por %p170, %p171
    %p173 = scmp.ne.s32.totalorder %s165, %s167
    %p174 = scmp.eq.s32.totalorder %s26, 1
    %p175 = por %p173, %p174
    %p176 = scmp.ne.s32.totalorder %s167, %s168
    %p177 = scmp.eq.s32.totalorder %s26, 0
    %p178 = por %p176, %p177
    %p179 = scmp.ne.s32.totalorder %s167, %s168
    %p180 = scmp.eq.s32.totalorder %s27, 1
    %p181 = por %p179, %p180
    %p183 = scmp.ne.s32.totalorder %s168, %s182
    %p184 = scmp.eq.s32.totalorder %s27, 0
    %p185 = por %p183, %p184
    %s187 = sadd.s32 %s186, 1
    %p190 = scmp.eq.s32.totalorder %s21, 1
    %p191 = scmp.ne.s32.totalorder %s186, %s188
    %p192 = scmp.eq.s32.totalorder %s21, 0
    %p193 = por %p191, %p192
    %p194 = scmp.ne.s32.totalorder %s186, %s188
    %p195 = scmp.eq.s32.totalorder %s26, 1
    %p196 = por %p194, %p195
    %p197 = scmp.ne.s32.totalorder %s188, %s189
    %p198 = scmp.eq.s32.totalorder %s26, 0
    %p199 = por %p197, %p198
    %p200 = scmp.ne.s32.totalorder %s188, %s189
    %p201 = scmp.eq.s32.totalorder %s27, 1
    %p202 = por %p200, %p201
    %p204 = scmp.ne.s32.totalorder %s189, %s203
    %p205 = scmp.eq.s32.totalorder %s27, 0
    %p206 = por %p204, %p205
    %s208 = sadd.s32 %s207, 1
    %p211 = scmp.eq.s32.totalorder %s21, 1
    %p212 = scmp.ne.s32.totalorder %s207, %s209
    %p213 = scmp.eq.s32.totalorder %s21, 0
    %p214 = por %p212, %p213
    %p215 = scmp.ne.s32.totalorder %s207, %s209
    %p216 = scmp.eq.s32.totalorder %s26, 1
    %p217 = por %p215, %p216
    %p218 = scmp.ne.s32.totalorder %s209, %s210
    %p219 = scmp.eq.s32.totalorder %s26, 0
    %p220 = por %p218, %p219
    %p221 = scmp.ne.s32.totalorder %s209, %s210
    %p222 = scmp.eq.s32.totalorder %s27, 1
    %p223 = por %p221, %p222
    %p225 = scmp.ne.s32.totalorder %s210, %s224
    %p226 = scmp.eq.s32.totalorder %s27, 0
    %p227 = por %p225, %p226
    %s229 = sadd.s32 %s228, 1
    %p232 = scmp.eq.s32.totalorder %s21, 1
    %p233 = scmp.ne.s32.totalorder %s228, %s230
    %p234 = scmp.eq.s32.totalorder %s21, 0
    %p235 = por %p233, %p234
    %p236 = scmp.ne.s32.totalorder %s228, %s230
    %p237 = scmp.eq.s32.totalorder %s26, 1
    %p238 = por %p236, %p237
    %p239 = scmp.ne.s32.totalorder %s230, %s231
    %p240 = scmp.eq.s32.totalorder %s26, 0
    %p241 = por %p239, %p240
    %p242 = scmp.ne.s32.totalorder %s230, %s231
    %p243 = scmp.eq.s32.totalorder %s27, 1
    %p244 = por %p242, %p243
    %p246 = scmp.ne.s32.totalorder %s231, %s245
    %p247 = scmp.eq.s32.totalorder %s27, 0
    %p248 = por %p246, %p247
    %s250 = sadd.s32 %s249, 1
    %p253 = scmp.eq.s32.totalorder %s21, 1
    %p254 = scmp.ne.s32.totalorder %s249, %s251
    %p255 = scmp.eq.s32.totalorder %s21, 0
    %p256 = por %p254, %p255
    %p257 = scmp.ne.s32.totalorder %s249, %s251
    %p258 = scmp.eq.s32.totalorder %s26, 1
    %p259 = por %p257, %p258
    %p260 = scmp.ne.s32.totalorder %s251, %s252
    %p261 = scmp.eq.s32.totalorder %s26, 0
    %p262 = por %p260, %p261
    %p263 = scmp.ne.s32.totalorder %s251, %s252
    %p264 = scmp.eq.s32.totalorder %s27, 1
    %p265 = por %p263, %p264
    %p267 = scmp.ne.s32.totalorder %s252, %s266
    %p268 = scmp.eq.s32.totalorder %s27, 0
    %p269 = por %p267, %p268
    %s271 = sadd.s32 %s270, 1
    %p274 = scmp.eq.s32.totalorder %s21, 1
    %p275 = scmp.ne.s32.totalorder %s270, %s272
    %p276 = scmp.eq.s32.totalorder %s21, 0
    %p277 = por %p275, %p276
    %p278 = scmp.ne.s32.totalorder %s270, %s272
    %p279 = scmp.eq.s32.totalorder %s26, 1
    %p280 = por %p278, %p279
    %p281 = scmp.ne.s32.totalorder %s272, %s273
    %p282 = scmp.eq.s32.totalorder %s26, 0
    %p283 = por %p281, %p282
    %p284 = scmp.ne.s32.totalorder %s272, %s273
    %p285 = scmp.eq.s32.totalorder %s27, 1
    %p286 = por %p284, %p285
    %p288 = scmp.ne.s32.totalorder %s273, %s287
    %p289 = scmp.eq.s32.totalorder %s27, 0
    %p290 = por %p288, %p289
    %s292 = sadd.s32 %s291, 1
    %p295 = scmp.eq.s32.totalorder %s21, 1
    %p296 = scmp.ne.s32.totalorder %s291, %s293
    %p297 = scmp.eq.s32.totalorder %s21, 0
    %p298 = por %p296, %p297
    %p299 = scmp.ne.s32.totalorder %s291, %s293
    %p300 = scmp.eq.s32.totalorder %s26, 1
    %p301 = por %p299, %p300
    %p302 = scmp.ne.s32.totalorder %s293, %s294
    %p303 = scmp.eq.s32.totalorder %s26, 0
    %p304 = por %p302, %p303
    %p305 = scmp.ne.s32.totalorder %s293, %s294
    %p306 = scmp.eq.s32.totalorder %s27, 1
    %p307 = por %p305, %p306
    %p309 = scmp.ne.s32.totalorder %s294, %s308
    %p310 = scmp.eq.s32.totalorder %s27, 0
    %p311 = por %p309, %p310
    %s313 = sadd.s32 %s312, 1
    %p316 = scmp.eq.s32.totalorder %s21, 1
    %p317 = scmp.ne.s32.totalorder %s312, %s314
    %p318 = scmp.eq.s32.totalorder %s21, 0
    %p319 = por %p317, %p318
    %p320 = scmp.ne.s32.totalorder %s312, %s314
    %p321 = scmp.eq.s32.totalorder %s26, 1
    %p322 = por %p320, %p321
    %p323 = scmp.ne.s32.totalorder %s314, %s315
    %p324 = scmp.eq.s32.totalorder %s26, 0
    %p325 = por %p323, %p324
    %p326 = scmp.ne.s32.totalorder %s314, %s315
    %p327 = scmp.eq.s32.totalorder %s27, 1
    %p328 = por %p326, %p327
    %p330 = scmp.ne.s32.totalorder %s315, %s329
    %p331 = scmp.eq.s32.totalorder %s27, 0
    %p332 = por %p330, %p331
    %s334 = sadd.s32 %s333, 1
    %p337 = scmp.eq.s32.totalorder %s21, 1
    %p338 = scmp.ne.s32.totalorder %s333, %s335
    %p339 = scmp.eq.s32.totalorder %s21, 0
    %p340 = por %p338, %p339
    %p341 = scmp.ne.s32.totalorder %s333, %s335
    %p342 = scmp.eq.s32.totalorder %s26, 1
    %p343 = por %p341, %p342
    %p344 = scmp.ne.s32.totalorder %s335, %s336
    %p345 = scmp.eq.s32.totalorder %s26, 0
    %p346 = por %p344, %p345
    %p347 = scmp.ne.s32.totalorder %s335, %s336
    %p348 = scmp.eq.s32.totalorder %s27, 1
    %p349 = por %p347, %p348
    %p351 = scmp.ne.s32.totalorder %s336, %s350
    %p352 = scmp.eq.s32.totalorder %s27, 0
    %p353 = por %p351, %p352
    %s354 = ssub.s32 %s21, %s28
    %p355 = scmp.eq.s32.totalorder %s354, 0
    %s357 = sadd.s32 %s356, 1
    %s358 = scalar_select %p355, %s356, %s357
    %p361 = pneg %p355
    %p362 = scmp.eq.s32.totalorder %s21, 1
    %p363 = por %p361, %p362
    %p364 = scmp.ne.s32.totalorder %s356, %s359
    %p365 = scmp.eq.s32.totalorder %s21, 0
    %p366 = por %p364, %p365
    %p367 = scmp.ne.s32.totalorder %s356, %s359
    %p368 = scmp.eq.s32.totalorder %s26, 1
    %p369 = por %p367, %p368
    %p370 = scmp.ne.s32.totalorder %s359, %s360
    %p371 = scmp.eq.s32.totalorder %s26, 0
    %p372 = por %p370, %p371
    %p373 = scmp.ne.s32.totalorder %s359, %s360
    %p374 = scmp.eq.s32.totalorder %s27, 1
    %p375 = por %p373, %p374
    %p377 = scmp.ne.s32.totalorder %s360, %s376
    %p378 = scmp.eq.s32.totalorder %s27, 0
    %p379 = por %p377, %p378
    %p380 = scmp.le.s32.totalorder 1, %s21
    %p381 = scmp.lt.s32.totalorder %s21, 3
    %p382 = pnand %p380, %p381
    %p383 = pneg %p382
    // Predicated region
    $region9: #{seq2seq_trans_forward.6} parent=5 // pred_check
      _
    $region10: #{seq2seq_trans_forward.6} parent=5 // pred_check_branch
      %385 = sbr.rel (%p382) target = $region12
    $region11: #{seq2seq_trans_forward.6} parent=5 // pred_region
      %s386 = ssub.s32 %s21, 1
      // Predicated region
      $region13: #{seq2seq_trans_forward.6} parent=11 // pred_check
        %p387 = pneg %p68
      $region14: #{seq2seq_trans_forward.6} parent=11 // pred_check_branch
        %389 = sbr.rel (%p387) target = $region16
      $region15: #{seq2seq_trans_forward.6} parent=11 // pred_region
        _
      $region16: #{seq2seq_trans_forward.6} parent=11 // pred_fallthru
        _
      // Predicated region
      $region17: #{seq2seq_trans_forward.6} parent=11 // pred_check
        %p390 = pneg %p115
      $region18: #{seq2seq_trans_forward.6} parent=11 // pred_check_branch
        %392 = sbr.rel (%p390) target = $region20
      $region19: #{seq2seq_trans_forward.6} parent=11 // pred_region
        _
      $region20: #{seq2seq_trans_forward.6} parent=11 // pred_fallthru
        _
      // Predicated region
      $region21: #{seq2seq_trans_forward.6} parent=11 // pred_check
        %p393 = pneg %p136
      $region22: #{seq2seq_trans_forward.6} parent=11 // pred_check_branch
        %395 = sbr.rel (%p393) target = $region24
      $region23: #{seq2seq_trans_forward.6} parent=11 // pred_region
        _
      $region24: #{seq2seq_trans_forward.6} parent=11 // pred_fallthru
        _
      // Predicated region
      $region25: #{seq2seq_trans_forward.6} parent=11 // pred_check
        %p396 = pneg %p157
      $region26: #{seq2seq_trans_forward.6} parent=11 // pred_check_branch
        %398 = sbr.rel (%p396) target = $region28
      $region27: #{seq2seq_trans_forward.6} parent=11 // pred_region
        _
      $region28: #{seq2seq_trans_forward.6} parent=11 // pred_fallthru
        _
      // Predicated region
      $region29: #{seq2seq_trans_forward.6} parent=11 // pred_check
        %p399 = pneg %p178
      $region30: #{seq2seq_trans_forward.6} parent=11 // pred_check_branch
        %401 = sbr.rel (%p399) target = $region32
      $region31: #{seq2seq_trans_forward.6} parent=11 // pred_region
        _
      $region32: #{seq2seq_trans_forward.6} parent=11 // pred_fallthru
        _
      // Predicated region
      $region33: #{seq2seq_trans_forward.6} parent=11 // pred_check
        %p402 = pneg %p199
      $region34: #{seq2seq_trans_forward.6} parent=11 // pred_check_branch
        %404 = sbr.rel (%p402) target = $region36
      $region35: #{seq2seq_trans_forward.6} parent=11 // pred_region
        _
      $region36: #{seq2seq_trans_forward.6} parent=11 // pred_fallthru
        _
      // Predicated region
      $region37: #{seq2seq_trans_forward.6} parent=11 // pred_check
        %p405 = pneg %p220
      $region38: #{seq2seq_trans_forward.6} parent=11 // pred_check_branch
        %407 = sbr.rel (%p405) target = $region40
      $region39: #{seq2seq_trans_forward.6} parent=11 // pred_region
        _
      $region40: #{seq2seq_trans_forward.6} parent=11 // pred_fallthru
        _
      // Predicated region
      $region41: #{seq2seq_trans_forward.6} parent=11 // pred_check
        %p408 = pneg %p241
      $region42: #{seq2seq_trans_forward.6} parent=11 // pred_check_branch
        %410 = sbr.rel (%p408) target = $region44
      $region43: #{seq2seq_trans_forward.6} parent=11 // pred_region
        _
      $region44: #{seq2seq_trans_forward.6} parent=11 // pred_fallthru
        _
      // Predicated region
      $region45: #{seq2seq_trans_forward.6} parent=11 // pred_check
        %p411 = pneg %p262
      $region46: #{seq2seq_trans_forward.6} parent=11 // pred_check_branch
        %413 = sbr.rel (%p411) target = $region48
      $region47: #{seq2seq_trans_forward.6} parent=11 // pred_region
        _
      $region48: #{seq2seq_trans_forward.6} parent=11 // pred_fallthru
        _
      // Predicated region
      $region49: #{seq2seq_trans_forward.6} parent=11 // pred_check
        %p414 = pneg %p283
      $region50: #{seq2seq_trans_forward.6} parent=11 // pred_check_branch
        %416 = sbr.rel (%p414) target = $region52
      $region51: #{seq2seq_trans_forward.6} parent=11 // pred_region
        _
      $region52: #{seq2seq_trans_forward.6} parent=11 // pred_fallthru
        _
      // Predicated region
      $region53: #{seq2seq_trans_forward.6} parent=11 // pred_check
        %p417 = pneg %p304
      $region54: #{seq2seq_trans_forward.6} parent=11 // pred_check_branch
        %419 = sbr.rel (%p417) target = $region56
      $region55: #{seq2seq_trans_forward.6} parent=11 // pred_region
        _
      $region56: #{seq2seq_trans_forward.6} parent=11 // pred_fallthru
        _
      // Predicated region
      $region57: #{seq2seq_trans_forward.6} parent=11 // pred_check
        %p420 = pneg %p325
      $region58: #{seq2seq_trans_forward.6} parent=11 // pred_check_branch
        %422 = sbr.rel (%p420) target = $region60
      $region59: #{seq2seq_trans_forward.6} parent=11 // pred_region
        _
      $region60: #{seq2seq_trans_forward.6} parent=11 // pred_fallthru
        _
      // Predicated region
      $region61: #{seq2seq_trans_forward.6} parent=11 // pred_check
        %p423 = pneg %p346
      $region62: #{seq2seq_trans_forward.6} parent=11 // pred_check_branch
        %425 = sbr.rel (%p423) target = $region64
      $region63: #{seq2seq_trans_forward.6} parent=11 // pred_region
        _
      $region64: #{seq2seq_trans_forward.6} parent=11 // pred_fallthru
        _
    $region12: #{seq2seq_trans_forward.6} parent=5 // pred_fallthru
      _
    %p426 = scmp.lt.s32.totalorder %s21, 2
    // Predicated region
    $region65: #{seq2seq_trans_forward.6} parent=5 // pred_check
      %p427 = pneg %p426
    $region66: #{seq2seq_trans_forward.6} parent=5 // pred_check_branch
      %429 = sbr.rel (%p427) target = $region68
    $region67: #{seq2seq_trans_forward.6} parent=5 // pred_region
      // Predicated region
      $region69: #{seq2seq_trans_forward.6} parent=67 // pred_check
        %p430 = pneg %p41
      $region70: #{seq2seq_trans_forward.6} parent=67 // pred_check_branch
        %432 = sbr.rel (%p430) target = $region72
      $region71: #{seq2seq_trans_forward.6} parent=67 // pred_region
        %p433 = scmp.lt.s32.totalorder %s21, 1
        %s434 = scalar_select %p433, %s21, 1
        %s435 = smul.addr %s434, 4
        %s436 = scalar_lea.vmem %s0, %s435
      $region72: #{seq2seq_trans_forward.6} parent=67 // pred_fallthru
        _
      // Predicated region
      $region73: #{seq2seq_trans_forward.6} parent=67 // pred_check
        %p437 = pneg %p88
      $region74: #{seq2seq_trans_forward.6} parent=67 // pred_check_branch
        %439 = sbr.rel (%p437) target = $region76
      $region75: #{seq2seq_trans_forward.6} parent=67 // pred_region
        %p440 = scmp.lt.s32.totalorder %s21, 1
        %s441 = scalar_select %p440, %s21, 1
        %s442 = scalar_lea.vmem %s2, %s441
      $region76: #{seq2seq_trans_forward.6} parent=67 // pred_fallthru
        _
    $region68: #{seq2seq_trans_forward.6} parent=5 // pred_fallthru
      _
    %p443 = scmp.le.s32.totalorder 1, %s21
    %p444 = scmp.lt.s32.totalorder %s21, 3
    %p445 = pnand %p443, %p444
    %p446 = pneg %p445
    // Predicated region
    $region77: #{seq2seq_trans_forward.6} parent=5 // pred_check
      _
    $region78: #{seq2seq_trans_forward.6} parent=5 // pred_check_branch
      %448 = sbr.rel (%p445) target = $region80
    $region79: #{seq2seq_trans_forward.6} parent=5 // pred_region
      %s449 = ssub.s32 %s21, 1
      %p450 = scmp.lt.s32.totalorder %s26, 1
      %s451 = scalar_select %p450, %s26, 1
      %s452 = smul.addr %s451, 4
      %s453 = scalar_lea.vmem %s0, %s452
      %p454 = pneg %p47
      %p455 = pneg %p44
      %p456 = pneg %p68
      %p457 = pneg %p65
      %p458 = scmp.lt.s32.totalorder %s26, 1
      %s459 = scalar_select %p458, %s26, 1
      %s460 = scalar_lea.vmem %s2, %s459
      %p461 = pneg %p94
      %p462 = pneg %p91
      %p463 = pneg %p115
      %p464 = pneg %p112
      %p465 = pneg %p136
      %p466 = pneg %p133
      %p467 = pneg %p157
      %p468 = pneg %p154
      %p469 = pneg %p178
      %p470 = pneg %p175
      %p471 = pneg %p199
      %p472 = pneg %p196
      %p473 = pneg %p220
      %p474 = pneg %p217
      %p475 = pneg %p241
      %p476 = pneg %p238
      %p477 = pneg %p262
      %p478 = pneg %p259
      %p479 = pneg %p283
      %p480 = pneg %p280
      %p481 = pneg %p304
      %p482 = pneg %p301
      %p483 = pneg %p325
      %p484 = pneg %p322
      %p485 = pneg %p346
      %p486 = pneg %p343
      %p487 = pneg %p372
      %p488 = pneg %p369
      %p489 = scmp.lt.s32.totalorder %s26, 1
      %s490 = scalar_select %p489, %s26, 1
      %s491 = smul.addr %s490, 4
      %s492 = scalar_lea.vmem %s15, %s491
      %p493 = scmp.lt.s32.totalorder %s26, 1
      %s494 = scalar_select %p493, %s26, 1
      %s495 = smul.addr %s494, 4
      %s496 = scalar_lea.vmem %s0, %s495
      %p497 = scmp.lt.s32.totalorder %s26, 1
      %s498 = scalar_select %p497, %s26, 1
      %s499 = scalar_lea.vmem %s2, %s498
      %p500 = scmp.lt.s32.totalorder %s26, 1
      %s501 = scalar_select %p500, %s26, 1
      %s502 = smul.addr %s501, 4
      %s503 = scalar_lea.vmem %s15, %s502
      %v505 = vld [vmem:[%s496] sm:$0xf]
      %v506 = vunpack.c.l.bf16 %v505
      %v507 = vld [vmem:[%s1] sm:$0xff]
      %v508 = vld [vmem:[%s499] sm:$0x1]
      %v510 = vlaneseq
      %v511 = vshrl.u32 %v510, 7
      %v512 = vsub.s32 0, %v511
      %v513 = vrot.slane %v508, %v512
      %v515 = vadd.f32 %v507, %v513
      %v516 = vld [vmem:[%s3] sm:$0xf]
      %v517 = vld [vmem:[%s3 + $0x4] sm:$0xf]
      %v518 = vld [vmem:[%s3 + $0x8] sm:$0xf]
      %v519 = vld [vmem:[%s3 + $0xc] sm:$0xf]
      %v520 = vld [vmem:[%s4] sm:$0x1]
      %v522 = vlaneseq
      %v523 = vshrl.u32 %v522, 7
      %v524 = vsub.s32 0, %v523
      %v525 = vrot.slane %v520, %v524
      %v531 = vunpack.c.l.b16 %v516
      %v532 = vunpack.c.l.b16 %v517
      %v533 = vunpack.c.l.b16 %v518
      %v534 = vunpack.c.l.b16 %v519
      %v535 = vpack.c.b16 %v532, %v531
      %v536 = vpack.c.b16 %v534, %v533
      %vm539 = vcmask 261120
      %v541 = vsel %vm539, %v505, 0
      %543 = vmatprep.subr.bf16.mxu0 0
      %544 = vmatpush1.bf16.msra.mxu0 0
      %545 = vmatprep.subr.bf16.mxu0 0
      %546 = vmatpush1.bf16.msra.mxu0 0
      %547 = vmatprep.subr.bf16.mxu0 0
      %548 = vmatpush1.bf16.msra.mxu0 0
      %549 = vmatprep.subr.bf16.mxu0 0
      %550 = vmatpush1.bf16.msra.mxu0 0
      %551 = vmatprep.subr.bf16.mxu0 0
      %552 = vmatpush1.bf16.msra.mxu0 0
      %553 = vmatprep.subr.bf16.mxu0 0
      %554 = vmatpush1.bf16.msra.mxu0 0
      %555 = vmatprep.subr.bf16.mxu0 0
      %556 = vmatpush1.bf16.msra.mxu0 %v536
      %557 = vmatprep.subr.bf16.mxu0 0
      %558 = vmatpush1.bf16.msra.mxu0 %v535
      %559 = vmatprep.subr.bf16.mxu0 0
      %560 = vmatpush2.bf16.msra.mxu0 0
      %561 = vmatprep.subr.bf16.mxu0 0
      %562 = vmatpush2.bf16.msra.mxu0 0
      %563 = vmatprep.subr.bf16.mxu0 0
      %564 = vmatpush2.bf16.msra.mxu0 0
      %565 = vmatprep.subr.bf16.mxu0 0
      %566 = vmatpush2.bf16.msra.mxu0 0
      %567 = vmatprep.subr.bf16.mxu0 0
      %568 = vmatpush2.bf16.msra.mxu0 0
      %569 = vmatprep.subr.bf16.mxu0 0
      %570 = vmatpush2.bf16.msra.mxu0 0
      %571 = vmatprep.subr.bf16.mxu0 0
      %572 = vmatpush2.bf16.msra.mxu0 0
      %573 = vmatprep.subr.bf16.mxu0 0
      %574 = vmatpush2.bf16.msra.mxu0 0
      %575 = vmatprep.mubr.bf16.mxu0 0
      %576 = vmatmul.mubr.bf16.gmra.mxu0 %v541
      %v577 = vpop.f32.mrf.mxu0
      %v578 = vadd.f32 %v525, %v577
      %v579 = vpop.f32.mrf.mxu0
      %v580 = vpop.f32.mrf.mxu0
      %v581 = vpop.f32.mrf.mxu0
      %582 = vdwg.mxu0
      %v583 = vld [vmem:[%s5] sm:$0xf]
      %v584 = vld [vmem:[%s5 + $0x4] sm:$0xf]
      %v585 = vld [vmem:[%s5 + $0x8] sm:$0xf]
      %v586 = vld [vmem:[%s5 + $0xc] sm:$0xf]
      %v587 = vpack.c.bf16 %v578, %v578
      %589 = vrot.lane.b32.xlu0 %v587, 96
      %v590 = vpop.permute.xlu0 %589
      %vm591 = vcmask 64512
      %v593 = vsel %vm591, %v587, 0
      %v596 = vsel %vm591, %v590, 0
      %598 = vmatprep.subr.bf16.mxu0 0
      %599 = vmatpush1.bf16.xpose.msra.mxu0 0
      %600 = vmatprep.subr.bf16.mxu0 0
      %601 = vmatpush1.bf16.xpose.msra.mxu0 0
      %602 = vmatprep.subr.bf16.mxu0 0
      %603 = vmatpush1.bf16.xpose.msra.mxu0 0
      %604 = vmatprep.subr.bf16.mxu0 0
      %605 = vmatpush1.bf16.xpose.msra.mxu0 0
      %606 = vmatprep.subr.bf16.mxu0 0
      %607 = vmatpush1.bf16.xpose.msra.mxu0 0
      %608 = vmatprep.subr.bf16.mxu0 0
      %609 = vmatpush1.bf16.xpose.msra.mxu0 0
      %610 = vmatprep.subr.bf16.mxu0 0
      %611 = vmatpush1.bf16.xpose.msra.mxu0 0
      %612 = vmatprep.subr.bf16.mxu0 0
      %613 = vmatpush1.bf16.xpose.msra.mxu0 %v596
      %614 = vmatprep.subr.bf16.mxu0 0
      %615 = vmatpush2.bf16.xpose.msra.mxu0 0
      %616 = vmatprep.subr.bf16.mxu0 0
      %617 = vmatpush2.bf16.xpose.msra.mxu0 0
      %618 = vmatprep.subr.bf16.mxu0 0
      %619 = vmatpush2.bf16.xpose.msra.mxu0 0
      %620 = vmatprep.subr.bf16.mxu0 0
      %621 = vmatpush2.bf16.xpose.msra.mxu0 0
      %622 = vmatprep.subr.bf16.mxu0 0
      %623 = vmatpush2.bf16.xpose.msra.mxu0 0
      %624 = vmatprep.subr.bf16.mxu0 0
      %625 = vmatpush2.bf16.xpose.msra.mxu0 0
      %626 = vmatprep.subr.bf16.mxu0 0
      %627 = vmatpush2.bf16.xpose.msra.mxu0 0
      %628 = vmatprep.subr.bf16.mxu0 0
      %629 = vmatpush2.bf16.xpose.msra.mxu0 0
      %630 = vmatprep.mubr.bf16.mxu0 0
      %631 = vmatmul.mubr.bf16.gmra.mxu0 %v593
      %v632 = vpop.f32.mrf.mxu0
      %v633 = vadd.f32 0.0, %v632
      %v634 = vpop.f32.mrf.mxu0
      %v635 = vpop.f32.mrf.mxu0
      %v636 = vpop.f32.mrf.mxu0
      %637 = vdwg.mxu0
      %v638 = vmul.f32 %v633, 0.35355338
      %v639 = vadd.f32 %v638, %v515
      %v640 = vsel %vm591, %v639, -inf
      %641 = vmax.xlane.f32.xlu0 %v640
      %v642 = vpop.xlane.xlu0 %641
      %vm643 = vcmp.eq.f32.partialorder %v642, -inf
      %v644 = vsel %vm643, 0.0, %v642
      %v645 = vsub.f32 %v639, %v644
      %v646 = vmul.f32 %v645, 1.442695
      %v647 = vpow.pop %v646
      %v648 = vsel %vm591, %v647, 0.0
      %649 = vadd.xlane.f32.xlu0 %v648
      %v650 = vpop.xlane.xlu0 %649
      %vm651 = vcmp.eq.f32.partialorder %v650, 0.0
      %v652 = vsel %vm651, 1.0, %v650
      %v653 = vrcp.pop %v652
      %v654 = vmul.f32 %v647, %v653
      %v655 = vpack.c.bf16 %v654, %v654
      %656 = vrot.lane.b32.xlu0 %v587, 64
      %v657 = vpop.permute.xlu0 %656
      %v659 = vsel %vm591, %v655, 0
      %vm661 = vcmask 1043456
      %v663 = vsel %vm661, %v657, 0
      %665 = vmatprep.subr.bf16.mxu0 0
      %666 = vmatpush1.bf16.msra.mxu0 0
      %667 = vmatprep.subr.bf16.mxu0 0
      %668 = vmatpush1.bf16.msra.mxu0 0
      %669 = vmatprep.subr.bf16.mxu0 0
      %670 = vmatpush1.bf16.msra.mxu0 0
      %671 = vmatprep.subr.bf16.mxu0 0
      %672 = vmatpush1.bf16.msra.mxu0 0
      %673 = vmatprep.subr.bf16.mxu0 0
      %674 = vmatpush1.bf16.msra.mxu0 0
      %675 = vmatprep.subr.bf16.mxu0 0
      %676 = vmatpush1.bf16.msra.mxu0 0
      %677 = vmatprep.subr.bf16.mxu0 0
      %678 = vmatpush1.bf16.msra.mxu0 0
      %679 = vmatprep.subr.bf16.mxu0 0
      %680 = vmatpush1.bf16.msra.mxu0 %v663
      %681 = vmatprep.subr.bf16.mxu0 0
      %682 = vmatpush2.bf16.msra.mxu0 0
      %683 = vmatprep.subr.bf16.mxu0 0
      %684 = vmatpush2.bf16.msra.mxu0 0
      %685 = vmatprep.subr.bf16.mxu0 0
      %686 = vmatpush2.bf16.msra.mxu0 0
      %687 = vmatprep.subr.bf16.mxu0 0
      %688 = vmatpush2.bf16.msra.mxu0 0
      %689 = vmatprep.subr.bf16.mxu0 0
      %690 = vmatpush2.bf16.msra.mxu0 0
      %691 = vmatprep.subr.bf16.mxu0 0
      %692 = vmatpush2.bf16.msra.mxu0 0
      %693 = vmatprep.subr.bf16.mxu0 0
      %694 = vmatpush2.bf16.msra.mxu0 0
      %695 = vmatprep.subr.bf16.mxu0 0
      %696 = vmatpush2.bf16.msra.mxu0 0
      %697 = vmatprep.mubr.bf16.mxu0 0
      %698 = vmatmul.mubr.bf16.gmra.mxu0 %v659
      %v699 = vpop.f32.mrf.mxu0
      %v700 = vadd.f32 0.0, %v699
      %v701 = vpop.f32.mrf.mxu0
      %v702 = vpop.f32.mrf.mxu0
      %v703 = vpop.f32.mrf.mxu0
      %704 = vdwg.mxu0
      %v705 = vpack.c.bf16 %v700, %v700
      %706 = vrot.lane.b32.xlu0 %v587, 120
      %v707 = vpop.permute.xlu0 %706
      %708 = vrot.lane.b32.xlu0 %v587, 88
      %v709 = vpop.permute.xlu0 %708
      %v711 = vsel %vm591, %v707, 0
      %v714 = vsel %vm591, %v709, 0
      %716 = vmatprep.subr.bf16.mxu0 0
      %717 = vmatpush1.bf16.xpose.msra.mxu0 0
      %718 = vmatprep.subr.bf16.mxu0 0
      %719 = vmatpush1.bf16.xpose.msra.mxu0 0
      %720 = vmatprep.subr.bf16.mxu0 0
      %721 = vmatpush1.bf16.xpose.msra.mxu0 0
      %722 = vmatprep.subr.bf16.mxu0 0
      %723 = vmatpush1.bf16.xpose.msra.mxu0 0
      %724 = vmatprep.subr.bf16.mxu0 0
      %725 = vmatpush1.bf16.xpose.msra.mxu0 0
      %726 = vmatprep.subr.bf16.mxu0 0
      %727 = vmatpush1.bf16.xpose.msra.mxu0 0
      %728 = vmatprep.subr.bf16.mxu0 0
      %729 = vmatpush1.bf16.xpose.msra.mxu0 0
      %730 = vmatprep.subr.bf16.mxu0 0
      %731 = vmatpush1.bf16.xpose.msra.mxu0 %v714
      %732 = vmatprep.subr.bf16.mxu0 0
      %733 = vmatpush2.bf16.xpose.msra.mxu0 0
      %734 = vmatprep.subr.bf16.mxu0 0
      %735 = vmatpush2.bf16.xpose.msra.mxu0 0
      %736 = vmatprep.subr.bf16.mxu0 0
      %737 = vmatpush2.bf16.xpose.msra.mxu0 0
      %738 = vmatprep.subr.bf16.mxu0 0
      %739 = vmatpush2.bf16.xpose.msra.mxu0 0
      %740 = vmatprep.subr.bf16.mxu0 0
      %741 = vmatpush2.bf16.xpose.msra.mxu0 0
      %742 = vmatprep.subr.bf16.mxu0 0
      %743 = vmatpush2.bf16.xpose.msra.mxu0 0
      %744 = vmatprep.subr.bf16.mxu0 0
      %745 = vmatpush2.bf16.xpose.msra.mxu0 0
      %746 = vmatprep.subr.bf16.mxu0 0
      %747 = vmatpush2.bf16.xpose.msra.mxu0 0
      %748 = vmatprep.mubr.bf16.mxu0 0
      %749 = vmatmul.mubr.bf16.gmra.mxu0 %v711
      %v750 = vpop.f32.mrf.mxu0
      %v751 = vadd.f32 0.0, %v750
      %v752 = vpop.f32.mrf.mxu0
      %v753 = vpop.f32.mrf.mxu0
      %v754 = vpop.f32.mrf.mxu0
      %755 = vdwg.mxu0
      %v756 = vmul.f32 %v751, 0.35355338
      %v757 = vadd.f32 %v756, %v515
      %v758 = vsel %vm591, %v757, -inf
      %759 = vmax.xlane.f32.xlu0 %v758
      %v760 = vpop.xlane.xlu0 %759
      %vm761 = vcmp.eq.f32.partialorder %v760, -inf
      %v762 = vsel %vm761, 0.0, %v760
      %v763 = vsub.f32 %v757, %v762
      %v764 = vmul.f32 %v763, 1.442695
      %v765 = vpow.pop %v764
      %v766 = vsel %vm591, %v765, 0.0
      %767 = vadd.xlane.f32.xlu0 %v766
      %v768 = vpop.xlane.xlu0 %767
      %vm769 = vcmp.eq.f32.partialorder %v768, 0.0
      %v770 = vsel %vm769, 1.0, %v768
      %v771 = vrcp.pop %v770
      %v772 = vmul.f32 %v765, %v771
      %v773 = vpack.c.bf16 %v772, %v772
      %774 = vrot.lane.b32.xlu0 %v587, 56
      %v775 = vpop.permute.xlu0 %774
      %v777 = vsel %vm591, %v773, 0
      %v780 = vsel %vm661, %v775, 0
      %782 = vmatprep.subr.bf16.mxu0 0
      %783 = vmatpush1.bf16.msra.mxu0 0
      %784 = vmatprep.subr.bf16.mxu0 0
      %785 = vmatpush1.bf16.msra.mxu0 0
      %786 = vmatprep.subr.bf16.mxu0 0
      %787 = vmatpush1.bf16.msra.mxu0 0
      %788 = vmatprep.subr.bf16.mxu0 0
      %789 = vmatpush1.bf16.msra.mxu0 0
      %790 = vmatprep.subr.bf16.mxu0 0
      %791 = vmatpush1.bf16.msra.mxu0 0
      %792 = vmatprep.subr.bf16.mxu0 0
      %793 = vmatpush1.bf16.msra.mxu0 0
      %794 = vmatprep.subr.bf16.mxu0 0
      %795 = vmatpush1.bf16.msra.mxu0 0
      %796 = vmatprep.subr.bf16.mxu0 0
      %797 = vmatpush1.bf16.msra.mxu0 %v780
      %798 = vmatprep.subr.bf16.mxu0 0
      %799 = vmatpush2.bf16.msra.mxu0 0
      %800 = vmatprep.subr.bf16.mxu0 0
      %801 = vmatpush2.bf16.msra.mxu0 0
      %802 = vmatprep.subr.bf16.mxu0 0
      %803 = vmatpush2.bf16.msra.mxu0 0
      %804 = vmatprep.subr.bf16.mxu0 0
      %805 = vmatpush2.bf16.msra.mxu0 0
      %806 = vmatprep.subr.bf16.mxu0 0
      %807 = vmatpush2.bf16.msra.mxu0 0
      %808 = vmatprep.subr.bf16.mxu0 0
      %809 = vmatpush2.bf16.msra.mxu0 0
      %810 = vmatprep.subr.bf16.mxu0 0
      %811 = vmatpush2.bf16.msra.mxu0 0
      %812 = vmatprep.subr.bf16.mxu0 0
      %813 = vmatpush2.bf16.msra.mxu0 0
      %814 = vmatprep.mubr.bf16.mxu0 0
      %815 = vmatmul.mubr.bf16.gmra.mxu0 %v777
      %v816 = vpop.f32.mrf.mxu0
      %v817 = vadd.f32 0.0, %v816
      %v818 = vpop.f32.mrf.mxu0
      %v819 = vpop.f32.mrf.mxu0
      %v820 = vpop.f32.mrf.mxu0
      %821 = vdwg.mxu0
      %v822 = vpack.c.bf16 %v817, %v817
      %v824 = vsel %vm591, %v822, 0
      %v827 = vsel %vm661, %v584, 0
      %829 = vmatprep.subr.bf16.mxu0 0
      %830 = vmatpush1.bf16.msra.mxu0 0
      %831 = vmatprep.subr.bf16.mxu0 0
      %832 = vmatpush1.bf16.msra.mxu0 0
      %833 = vmatprep.subr.bf16.mxu0 0
      %834 = vmatpush1.bf16.msra.mxu0 0
      %835 = vmatprep.subr.bf16.mxu0 0
      %836 = vmatpush1.bf16.msra.mxu0 0
      %837 = vmatprep.subr.bf16.mxu0 0
      %838 = vmatpush1.bf16.msra.mxu0 0
      %839 = vmatprep.subr.bf16.mxu0 0
      %840 = vmatpush1.bf16.msra.mxu0 0
      %841 = vmatprep.subr.bf16.mxu0 0
      %842 = vmatpush1.bf16.msra.mxu0 0
      %843 = vmatprep.subr.bf16.mxu0 0
      %844 = vmatpush1.bf16.msra.mxu0 %v827
      %845 = vmatprep.subr.bf16.mxu0 0
      %846 = vmatpush2.bf16.msra.mxu0 0
      %847 = vmatprep.subr.bf16.mxu0 0
      %848 = vmatpush2.bf16.msra.mxu0 0
      %849 = vmatprep.subr.bf16.mxu0 0
      %850 = vmatpush2.bf16.msra.mxu0 0
      %851 = vmatprep.subr.bf16.mxu0 0
      %852 = vmatpush2.bf16.msra.mxu0 0
      %853 = vmatprep.subr.bf16.mxu0 0
      %854 = vmatpush2.bf16.msra.mxu0 0
      %855 = vmatprep.subr.bf16.mxu0 0
      %856 = vmatpush2.bf16.msra.mxu0 0
      %857 = vmatprep.subr.bf16.mxu0 0
      %858 = vmatpush2.bf16.msra.mxu0 0
      %859 = vmatprep.subr.bf16.mxu0 0
      %860 = vmatpush2.bf16.msra.mxu0 0
      %861 = vmatprep.mubr.bf16.mxu0 0
      %862 = vmatmul.mubr.bf16.gmra.mxu0 %v824
      %v863 = vpop.f32.mrf.mxu0
      %v864 = vadd.f32 0.0, %v863
      %v865 = vpop.f32.mrf.mxu0
      %v866 = vpop.f32.mrf.mxu0
      %v867 = vpop.f32.mrf.mxu0
      %868 = vdwg.mxu0
      %v870 = vsel %vm591, %v705, 0
      %v873 = vsel %vm661, %v583, 0
      %875 = vmatprep.subr.bf16.mxu0 0
      %876 = vmatpush1.bf16.msra.mxu0 0
      %877 = vmatprep.subr.bf16.mxu0 0
      %878 = vmatpush1.bf16.msra.mxu0 0
      %879 = vmatprep.subr.bf16.mxu0 0
      %880 = vmatpush1.bf16.msra.mxu0 0
      %881 = vmatprep.subr.bf16.mxu0 0
      %882 = vmatpush1.bf16.msra.mxu0 0
      %883 = vmatprep.subr.bf16.mxu0 0
      %884 = vmatpush1.bf16.msra.mxu0 0
      %885 = vmatprep.subr.bf16.mxu0 0
      %886 = vmatpush1.bf16.msra.mxu0 0
      %887 = vmatprep.subr.bf16.mxu0 0
      %888 = vmatpush1.bf16.msra.mxu0 0
      %889 = vmatprep.subr.bf16.mxu0 0
      %890 = vmatpush1.bf16.msra.mxu0 %v873
      %891 = vmatprep.subr.bf16.mxu0 0
      %892 = vmatpush2.bf16.msra.mxu0 0
      %893 = vmatprep.subr.bf16.mxu0 0
      %894 = vmatpush2.bf16.msra.mxu0 0
      %895 = vmatprep.subr.bf16.mxu0 0
      %896 = vmatpush2.bf16.msra.mxu0 0
      %897 = vmatprep.subr.bf16.mxu0 0
      %898 = vmatpush2.bf16.msra.mxu0 0
      %899 = vmatprep.subr.bf16.mxu0 0
      %900 = vmatpush2.bf16.msra.mxu0 0
      %901 = vmatprep.subr.bf16.mxu0 0
      %902 = vmatpush2.bf16.msra.mxu0 0
      %903 = vmatprep.subr.bf16.mxu0 0
      %904 = vmatpush2.bf16.msra.mxu0 0
      %905 = vmatprep.subr.bf16.mxu0 0
      %906 = vmatpush2.bf16.msra.mxu0 0
      %907 = vmatprep.mubr.bf16.mxu0 0
      %908 = vmatmul.mubr.bf16.gmra.mxu0 %v870
      %v909 = vpop.f32.mrf.mxu0
      %v910 = vadd.f32 %v864, %v909
      %v911 = vpop.f32.mrf.mxu0
      %v912 = vpop.f32.mrf.mxu0
      %v913 = vpop.f32.mrf.mxu0
      %914 = vdwg.mxu0
      %915 = vrot.lane.b32.xlu0 %v587, 112
      %v916 = vpop.permute.xlu0 %915
      %917 = vrot.lane.b32.xlu0 %v587, 80
      %v918 = vpop.permute.xlu0 %917
      %v920 = vsel %vm591, %v916, 0
      %v923 = vsel %vm591, %v918, 0
      %925 = vmatprep.subr.bf16.mxu0 0
      %926 = vmatpush1.bf16.xpose.msra.mxu0 0
      %927 = vmatprep.subr.bf16.mxu0 0
      %928 = vmatpush1.bf16.xpose.msra.mxu0 0
      %929 = vmatprep.subr.bf16.mxu0 0
      %930 = vmatpush1.bf16.xpose.msra.mxu0 0
      %931 = vmatprep.subr.bf16.mxu0 0
      %932 = vmatpush1.bf16.xpose.msra.mxu0 0
      %933 = vmatprep.subr.bf16.mxu0 0
      %934 = vmatpush1.bf16.xpose.msra.mxu0 0
      %935 = vmatprep.subr.bf16.mxu0 0
      %936 = vmatpush1.bf16.xpose.msra.mxu0 0
      %937 = vmatprep.subr.bf16.mxu0 0
      %938 = vmatpush1.bf16.xpose.msra.mxu0 0
      %939 = vmatprep.subr.bf16.mxu0 0
      %940 = vmatpush1.bf16.xpose.msra.mxu0 %v923
      %941 = vmatprep.subr.bf16.mxu0 0
      %942 = vmatpush2.bf16.xpose.msra.mxu0 0
      %943 = vmatprep.subr.bf16.mxu0 0
      %944 = vmatpush2.bf16.xpose.msra.mxu0 0
      %945 = vmatprep.subr.bf16.mxu0 0
      %946 = vmatpush2.bf16.xpose.msra.mxu0 0
      %947 = vmatprep.subr.bf16.mxu0 0
      %948 = vmatpush2.bf16.xpose.msra.mxu0 0
      %949 = vmatprep.subr.bf16.mxu0 0
      %950 = vmatpush2.bf16.xpose.msra.mxu0 0
      %951 = vmatprep.subr.bf16.mxu0 0
      %952 = vmatpush2.bf16.xpose.msra.mxu0 0
      %953 = vmatprep.subr.bf16.mxu0 0
      %954 = vmatpush2.bf16.xpose.msra.mxu0 0
      %955 = vmatprep.subr.bf16.mxu0 0
      %956 = vmatpush2.bf16.xpose.msra.mxu0 0
      %957 = vmatprep.mubr.bf16.mxu0 0
      %958 = vmatmul.mubr.bf16.gmra.mxu0 %v920
      %v959 = vpop.f32.mrf.mxu0
      %v960 = vadd.f32 0.0, %v959
      %v961 = vpop.f32.mrf.mxu0
      %v962 = vpop.f32.mrf.mxu0
      %v963 = vpop.f32.mrf.mxu0
      %964 = vdwg.mxu0
      %v965 = vmul.f32 %v960, 0.35355338
      %v966 = vadd.f32 %v965, %v515
      %v967 = vsel %vm591, %v966, -inf
      %968 = vmax.xlane.f32.xlu0 %v967
      %v969 = vpop.xlane.xlu0 %968
      %vm970 = vcmp.eq.f32.partialorder %v969, -inf
      %v971 = vsel %vm970, 0.0, %v969
      %v972 = vsub.f32 %v966, %v971
      %v973 = vmul.f32 %v972, 1.442695
      %v974 = vpow.pop %v973
      %v975 = vsel %vm591, %v974, 0.0
      %976 = vadd.xlane.f32.xlu0 %v975
      %v977 = vpop.xlane.xlu0 %976
      %vm978 = vcmp.eq.f32.partialorder %v977, 0.0
      %v979 = vsel %vm978, 1.0, %v977
      %v980 = vrcp.pop %v979
      %v981 = vmul.f32 %v974, %v980
      %v982 = vpack.c.bf16 %v981, %v981
      %983 = vrot.lane.b32.xlu0 %v587, 48
      %v984 = vpop.permute.xlu0 %983
      %v986 = vsel %vm591, %v982, 0
      %v989 = vsel %vm661, %v984, 0
      %991 = vmatprep.subr.bf16.mxu0 0
      %992 = vmatpush1.bf16.msra.mxu0 0
      %993 = vmatprep.subr.bf16.mxu0 0
      %994 = vmatpush1.bf16.msra.mxu0 0
      %995 = vmatprep.subr.bf16.mxu0 0
      %996 = vmatpush1.bf16.msra.mxu0 0
      %997 = vmatprep.subr.bf16.mxu0 0
      %998 = vmatpush1.bf16.msra.mxu0 0
      %999 = vmatprep.subr.bf16.mxu0 0
      %1000 = vmatpush1.bf16.msra.mxu0 0
      %1001 = vmatprep.subr.bf16.mxu0 0
      %1002 = vmatpush1.bf16.msra.mxu0 0
      %1003 = vmatprep.subr.bf16.mxu0 0
      %1004 = vmatpush1.bf16.msra.mxu0 0
      %1005 = vmatprep.subr.bf16.mxu0 0
      %1006 = vmatpush1.bf16.msra.mxu0 %v989
      %1007 = vmatprep.subr.bf16.mxu0 0
      %1008 = vmatpush2.bf16.msra.mxu0 0
      %1009 = vmatprep.subr.bf16.mxu0 0
      %1010 = vmatpush2.bf16.msra.mxu0 0
      %1011 = vmatprep.subr.bf16.mxu0 0
      %1012 = vmatpush2.bf16.msra.mxu0 0
      %1013 = vmatprep.subr.bf16.mxu0 0
      %1014 = vmatpush2.bf16.msra.mxu0 0
      %1015 = vmatprep.subr.bf16.mxu0 0
      %1016 = vmatpush2.bf16.msra.mxu0 0
      %1017 = vmatprep.subr.bf16.mxu0 0
      %1018 = vmatpush2.bf16.msra.mxu0 0
      %1019 = vmatprep.subr.bf16.mxu0 0
      %1020 = vmatpush2.bf16.msra.mxu0 0
      %1021 = vmatprep.subr.bf16.mxu0 0
      %1022 = vmatpush2.bf16.msra.mxu0 0
      %1023 = vmatprep.mubr.bf16.mxu0 0
      %1024 = vmatmul.mubr.bf16.gmra.mxu0 %v986
      %v1025 = vpop.f32.mrf.mxu0
      %v1026 = vadd.f32 0.0, %v1025
      %v1027 = vpop.f32.mrf.mxu0
      %v1028 = vpop.f32.mrf.mxu0
      %v1029 = vpop.f32.mrf.mxu0
      %1030 = vdwg.mxu0
      %v1031 = vpack.c.bf16 %v1026, %v1026
      %v1033 = vsel %vm591, %v1031, 0
      %v1036 = vsel %vm661, %v585, 0
      %1038 = vmatprep.subr.bf16.mxu0 0
      %1039 = vmatpush1.bf16.msra.mxu0 0
      %1040 = vmatprep.subr.bf16.mxu0 0
      %1041 = vmatpush1.bf16.msra.mxu0 0
      %1042 = vmatprep.subr.bf16.mxu0 0
      %1043 = vmatpush1.bf16.msra.mxu0 0
      %1044 = vmatprep.subr.bf16.mxu0 0
      %1045 = vmatpush1.bf16.msra.mxu0 0
      %1046 = vmatprep.subr.bf16.mxu0 0
      %1047 = vmatpush1.bf16.msra.mxu0 0
      %1048 = vmatprep.subr.bf16.mxu0 0
      %1049 = vmatpush1.bf16.msra.mxu0 0
      %1050 = vmatprep.subr.bf16.mxu0 0
      %1051 = vmatpush1.bf16.msra.mxu0 0
      %1052 = vmatprep.subr.bf16.mxu0 0
      %1053 = vmatpush1.bf16.msra.mxu0 %v1036
      %1054 = vmatprep.subr.bf16.mxu0 0
      %1055 = vmatpush2.bf16.msra.mxu0 0
      %1056 = vmatprep.subr.bf16.mxu0 0
      %1057 = vmatpush2.bf16.msra.mxu0 0
      %1058 = vmatprep.subr.bf16.mxu0 0
      %1059 = vmatpush2.bf16.msra.mxu0 0
      %1060 = vmatprep.subr.bf16.mxu0 0
      %1061 = vmatpush2.bf16.msra.mxu0 0
      %1062 = vmatprep.subr.bf16.mxu0 0
      %1063 = vmatpush2.bf16.msra.mxu0 0
      %1064 = vmatprep.subr.bf16.mxu0 0
      %1065 = vmatpush2.bf16.msra.mxu0 0
      %1066 = vmatprep.subr.bf16.mxu0 0
      %1067 = vmatpush2.bf16.msra.mxu0 0
      %1068 = vmatprep.subr.bf16.mxu0 0
      %1069 = vmatpush2.bf16.msra.mxu0 0
      %1070 = vmatprep.mubr.bf16.mxu0 0
      %1071 = vmatmul.mubr.bf16.gmra.mxu0 %v1033
      %v1072 = vpop.f32.mrf.mxu0
      %v1073 = vadd.f32 0.0, %v1072
      %v1074 = vpop.f32.mrf.mxu0
      %v1075 = vpop.f32.mrf.mxu0
      %v1076 = vpop.f32.mrf.mxu0
      %1077 = vdwg.mxu0
      %v1078 = vadd.f32 %v910, %v1073
      %1079 = vrot.lane.b32.xlu0 %v587, 104
      %v1080 = vpop.permute.xlu0 %1079
      %1081 = vrot.lane.b32.xlu0 %v587, 72
      %v1082 = vpop.permute.xlu0 %1081
      %v1084 = vsel %vm591, %v1080, 0
      %v1087 = vsel %vm591, %v1082, 0
      %1089 = vmatprep.subr.bf16.mxu0 0
      %1090 = vmatpush1.bf16.xpose.msra.mxu0 0
      %1091 = vmatprep.subr.bf16.mxu0 0
      %1092 = vmatpush1.bf16.xpose.msra.mxu0 0
      %1093 = vmatprep.subr.bf16.mxu0 0
      %1094 = vmatpush1.bf16.xpose.msra.mxu0 0
      %1095 = vmatprep.subr.bf16.mxu0 0
      %1096 = vmatpush1.bf16.xpose.msra.mxu0 0
      %1097 = vmatprep.subr.bf16.mxu0 0
      %1098 = vmatpush1.bf16.xpose.msra.mxu0 0
      %1099 = vmatprep.subr.bf16.mxu0 0
      %1100 = vmatpush1.bf16.xpose.msra.mxu0 0
      %1101 = vmatprep.subr.bf16.mxu0 0
      %1102 = vmatpush1.bf16.xpose.msra.mxu0 0
      %1103 = vmatprep.subr.bf16.mxu0 0
      %1104 = vmatpush1.bf16.xpose.msra.mxu0 %v1087
      %1105 = vmatprep.subr.bf16.mxu0 0
      %1106 = vmatpush2.bf16.xpose.msra.mxu0 0
      %1107 = vmatprep.subr.bf16.mxu0 0
      %1108 = vmatpush2.bf16.xpose.msra.mxu0 0
      %1109 = vmatprep.subr.bf16.mxu0 0
      %1110 = vmatpush2.bf16.xpose.msra.mxu0 0
      %1111 = vmatprep.subr.bf16.mxu0 0
      %1112 = vmatpush2.bf16.xpose.msra.mxu0 0
      %1113 = vmatprep.subr.bf16.mxu0 0
      %1114 = vmatpush2.bf16.xpose.msra.mxu0 0
      %1115 = vmatprep.subr.bf16.mxu0 0
      %1116 = vmatpush2.bf16.xpose.msra.mxu0 0
      %1117 = vmatprep.subr.bf16.mxu0 0
      %1118 = vmatpush2.bf16.xpose.msra.mxu0 0
      %1119 = vmatprep.subr.bf16.mxu0 0
      %1120 = vmatpush2.bf16.xpose.msra.mxu0 0
      %1121 = vmatprep.mubr.bf16.mxu0 0
      %1122 = vmatmul.mubr.bf16.gmra.mxu0 %v1084
      %v1123 = vpop.f32.mrf.mxu0
      %v1124 = vadd.f32 0.0, %v1123
      %v1125 = vpop.f32.mrf.mxu0
      %v1126 = vpop.f32.mrf.mxu0
      %v1127 = vpop.f32.mrf.mxu0
      %1128 = vdwg.mxu0
      %v1129 = vmul.f32 %v1124, 0.35355338
      %v1130 = vadd.f32 %v1129, %v515
      %v1131 = vsel %vm591, %v1130, -inf
      %1132 = vmax.xlane.f32.xlu0 %v1131
      %v1133 = vpop.xlane.xlu0 %1132
      %vm1134 = vcmp.eq.f32.partialorder %v1133, -inf
      %v1135 = vsel %vm1134, 0.0, %v1133
      %v1136 = vsub.f32 %v1130, %v1135
      %v1137 = vmul.f32 %v1136, 1.442695
      %v1138 = vpow.pop %v1137
      %v1139 = vsel %vm591, %v1138, 0.0
      %1140 = vadd.xlane.f32.xlu0 %v1139
      %v1141 = vpop.xlane.xlu0 %1140
      %vm1142 = vcmp.eq.f32.partialorder %v1141, 0.0
      %v1143 = vsel %vm1142, 1.0, %v1141
      %v1144 = vrcp.pop %v1143
      %v1145 = vmul.f32 %v1138, %v1144
      %v1146 = vpack.c.bf16 %v1145, %v1145
      %1147 = vrot.lane.b32.xlu0 %v587, 40
      %v1148 = vpop.permute.xlu0 %1147
      %v1150 = vsel %vm591, %v1146, 0
      %v1153 = vsel %vm661, %v1148, 0
      %1155 = vmatprep.subr.bf16.mxu0 0
      %1156 = vmatpush1.bf16.msra.mxu0 0
      %1157 = vmatprep.subr.bf16.mxu0 0
      %1158 = vmatpush1.bf16.msra.mxu0 0
      %1159 = vmatprep.subr.bf16.mxu0 0
      %1160 = vmatpush1.bf16.msra.mxu0 0
      %1161 = vmatprep.subr.bf16.mxu0 0
      %1162 = vmatpush1.bf16.msra.mxu0 0
      %1163 = vmatprep.subr.bf16.mxu0 0
      %1164 = vmatpush1.bf16.msra.mxu0 0
      %1165 = vmatprep.subr.bf16.mxu0 0
      %1166 = vmatpush1.bf16.msra.mxu0 0
      %1167 = vmatprep.subr.bf16.mxu0 0
      %1168 = vmatpush1.bf16.msra.mxu0 0
      %1169 = vmatprep.subr.bf16.mxu0 0
      %1170 = vmatpush1.bf16.msra.mxu0 %v1153
      %1171 = vmatprep.subr.bf16.mxu0 0
      %1172 = vmatpush2.bf16.msra.mxu0 0
      %1173 = vmatprep.subr.bf16.mxu0 0
      %1174 = vmatpush2.bf16.msra.mxu0 0
      %1175 = vmatprep.subr.bf16.mxu0 0
      %1176 = vmatpush2.bf16.msra.mxu0 0
      %1177 = vmatprep.subr.bf16.mxu0 0
      %1178 = vmatpush2.bf16.msra.mxu0 0
      %1179 = vmatprep.subr.bf16.mxu0 0
      %1180 = vmatpush2.bf16.msra.mxu0 0
      %1181 = vmatprep.subr.bf16.mxu0 0
      %1182 = vmatpush2.bf16.msra.mxu0 0
      %1183 = vmatprep.subr.bf16.mxu0 0
      %1184 = vmatpush2.bf16.msra.mxu0 0
      %1185 = vmatprep.subr.bf16.mxu0 0
      %1186 = vmatpush2.bf16.msra.mxu0 0
      %1187 = vmatprep.mubr.bf16.mxu0 0
      %1188 = vmatmul.mubr.bf16.gmra.mxu0 %v1150
      %v1189 = vpop.f32.mrf.mxu0
      %v1190 = vadd.f32 0.0, %v1189
      %v1191 = vpop.f32.mrf.mxu0
      %v1192 = vpop.f32.mrf.mxu0
      %v1193 = vpop.f32.mrf.mxu0
      %1194 = vdwg.mxu0
      %v1195 = vpack.c.bf16 %v1190, %v1190
      %v1197 = vsel %vm591, %v1195, 0
      %v1200 = vsel %vm661, %v586, 0
      %1202 = vmatprep.subr.bf16.mxu0 0
      %1203 = vmatpush1.bf16.msra.mxu0 0
      %1204 = vmatprep.subr.bf16.mxu0 0
      %1205 = vmatpush1.bf16.msra.mxu0 0
      %1206 = vmatprep.subr.bf16.mxu0 0
      %1207 = vmatpush1.bf16.msra.mxu0 0
      %1208 = vmatprep.subr.bf16.mxu0 0
      %1209 = vmatpush1.bf16.msra.mxu0 0
      %1210 = vmatprep.subr.bf16.mxu0 0
      %1211 = vmatpush1.bf16.msra.mxu0 0
      %1212 = vmatprep.subr.bf16.mxu0 0
      %1213 = vmatpush1.bf16.msra.mxu0 0
      %1214 = vmatprep.subr.bf16.mxu0 0
      %1215 = vmatpush1.bf16.msra.mxu0 0
      %1216 = vmatprep.subr.bf16.mxu0 0
      %1217 = vmatpush1.bf16.msra.mxu0 %v1200
      %1218 = vmatprep.subr.bf16.mxu0 0
      %1219 = vmatpush2.bf16.msra.mxu0 0
      %1220 = vmatprep.subr.bf16.mxu0 0
      %1221 = vmatpush2.bf16.msra.mxu0 0
      %1222 = vmatprep.subr.bf16.mxu0 0
      %1223 = vmatpush2.bf16.msra.mxu0 0
      %1224 = vmatprep.subr.bf16.mxu0 0
      %1225 = vmatpush2.bf16.msra.mxu0 0
      %1226 = vmatprep.subr.bf16.mxu0 0
      %1227 = vmatpush2.bf16.msra.mxu0 0
      %1228 = vmatprep.subr.bf16.mxu0 0
      %1229 = vmatpush2.bf16.msra.mxu0 0
      %1230 = vmatprep.subr.bf16.mxu0 0
      %1231 = vmatpush2.bf16.msra.mxu0 0
      %1232 = vmatprep.subr.bf16.mxu0 0
      %1233 = vmatpush2.bf16.msra.mxu0 0
      %1234 = vmatprep.mubr.bf16.mxu0 0
      %1235 = vmatmul.mubr.bf16.gmra.mxu0 %v1197
      %v1236 = vpop.f32.mrf.mxu0
      %v1237 = vadd.f32 0.0, %v1236
      %v1238 = vpop.f32.mrf.mxu0
      %v1239 = vpop.f32.mrf.mxu0
      %v1240 = vpop.f32.mrf.mxu0
      %1241 = vdwg.mxu0
      %v1242 = vadd.f32 %v1078, %v1237
      %v1243 = vld [vmem:[%s6] sm:$0x1]
      %v1245 = vlaneseq
      %v1246 = vshrl.u32 %v1245, 7
      %v1247 = vsub.s32 0, %v1246
      %v1248 = vrot.slane %v1243, %v1247
      %v1250 = vadd.f32 %v1242, %v1248
      %v1251 = vadd.f32 %v506, %v1250
      %v1252 = vld [vmem:[%s7] sm:$0x1]
      %v1253 = vld [vmem:[%s8] sm:$0x1]
      %v1254 = vsel %vm539, %v1251, 0.0
      %1255 = vadd.xlane.f32.xlu0 %v1254
      %v1256 = vpop.xlane.xlu0 %1255
      %v1257 = vrcp.pop 32.0
      %v1258 = vmul.f32 %v1256, %v1257
      %v1259 = vsub.f32 %v1251, %v1258
      %v1260 = vmul.f32 %v1259, %v1259
      %v1261 = vsel %vm539, %v1260, 0.0
      %1262 = vadd.xlane.f32.xlu0 %v1261
      %v1263 = vpop.xlane.xlu0 %1262
      %v1264 = vmul.f32 %v1263, %v1257
      %v1265 = vadd.f32 %v1264, 1e-05
      %v1266 = vrsqrt.pop %v1265
      %v1267 = vmul.f32 %v1259, %v1266
      %v1269 = vlaneseq
      %v1270 = vshrl.u32 %v1269, 7
      %v1271 = vsub.s32 0, %v1270
      %v1272 = vrot.slane %v1252, %v1271
      %v1274 = vmul.f32 %v1267, %v1272
      %v1276 = vlaneseq
      %v1277 = vshrl.u32 %v1276, 7
      %v1278 = vsub.s32 0, %v1277
      %v1279 = vrot.slane %v1253, %v1278
      %v1281 = vadd.f32 %v1274, %v1279
      %v1282 = vpack.c.bf16 %v1281, %v1281
      %v1283 = vld [vmem:[%s9] sm:$0xf]
      %v1284 = vld [vmem:[%s9 + $0x4] sm:$0xf]
      %v1285 = vld [vmem:[%s9 + $0x8] sm:$0xf]
      %v1286 = vld [vmem:[%s9 + $0xc] sm:$0xf]
      %v1287 = vld [vmem:[%s10] sm:$0x1]
      %v1289 = vlaneseq
      %v1290 = vshrl.u32 %v1289, 7
      %v1291 = vsub.s32 0, %v1290
      %v1292 = vrot.slane %v1287, %v1291
      %v1298 = vunpack.c.l.b16 %v1283
      %v1299 = vunpack.c.l.b16 %v1284
      %v1300 = vunpack.c.l.b16 %v1285
      %v1301 = vunpack.c.l.b16 %v1286
      %v1302 = vpack.c.b16 %v1299, %v1298
      %v1303 = vpack.c.b16 %v1301, %v1300
      %v1307 = vsel %vm539, %v1282, 0
      %1309 = vmatprep.subr.bf16.mxu0 0
      %1310 = vmatpush1.bf16.msra.mxu0 0
      %1311 = vmatprep.subr.bf16.mxu0 0
      %1312 = vmatpush1.bf16.msra.mxu0 0
      %1313 = vmatprep.subr.bf16.mxu0 0
      %1314 = vmatpush1.bf16.msra.mxu0 0
      %1315 = vmatprep.subr.bf16.mxu0 0
      %1316 = vmatpush1.bf16.msra.mxu0 0
      %1317 = vmatprep.subr.bf16.mxu0 0
      %1318 = vmatpush1.bf16.msra.mxu0 0
      %1319 = vmatprep.subr.bf16.mxu0 0
      %1320 = vmatpush1.bf16.msra.mxu0 0
      %1321 = vmatprep.subr.bf16.mxu0 0
      %1322 = vmatpush1.bf16.msra.mxu0 %v1303
      %1323 = vmatprep.subr.bf16.mxu0 0
      %1324 = vmatpush1.bf16.msra.mxu0 %v1302
      %1325 = vmatprep.subr.bf16.mxu0 0
      %1326 = vmatpush2.bf16.msra.mxu0 0
      %1327 = vmatprep.subr.bf16.mxu0 0
      %1328 = vmatpush2.bf16.msra.mxu0 0
      %1329 = vmatprep.subr.bf16.mxu0 0
      %1330 = vmatpush2.bf16.msra.mxu0 0
      %1331 = vmatprep.subr.bf16.mxu0 0
      %1332 = vmatpush2.bf16.msra.mxu0 0
      %1333 = vmatprep.subr.bf16.mxu0 0
      %1334 = vmatpush2.bf16.msra.mxu0 0
      %1335 = vmatprep.subr.bf16.mxu0 0
      %1336 = vmatpush2.bf16.msra.mxu0 0
      %1337 = vmatprep.subr.bf16.mxu0 0
      %1338 = vmatpush2.bf16.msra.mxu0 0
      %1339 = vmatprep.subr.bf16.mxu0 0
      %1340 = vmatpush2.bf16.msra.mxu0 0
      %1341 = vmatprep.mubr.bf16.mxu0 0
      %1342 = vmatmul.mubr.bf16.gmra.mxu0 %v1307
      %v1343 = vpop.f32.mrf.mxu0
      %v1344 = vadd.f32 %v1292, %v1343
      %v1345 = vpop.f32.mrf.mxu0
      %v1346 = vpop.f32.mrf.mxu0
      %v1347 = vpop.f32.mrf.mxu0
      %1348 = vdwg.mxu0
      %v1349 = vmax.f32 %v1344, 0.0
      %v1350 = vpack.c.bf16 %v1349, %v1349
      %v1351 = vld [vmem:[%s11] sm:$0xf]
      %v1352 = vld [vmem:[%s11 + $0x4] sm:$0xf]
      %v1353 = vld [vmem:[%s11 + $0x8] sm:$0xf]
      %v1354 = vld [vmem:[%s11 + $0xc] sm:$0xf]
      %v1355 = vld [vmem:[%s11 + $0x10] sm:$0xf]
      %v1356 = vld [vmem:[%s11 + $0x14] sm:$0xf]
      %v1357 = vld [vmem:[%s11 + $0x18] sm:$0xf]
      %v1358 = vld [vmem:[%s11 + $0x1c] sm:$0xf]
      %v1359 = vld [vmem:[%s11 + $0x20] sm:$0xf]
      %v1360 = vld [vmem:[%s11 + $0x24] sm:$0xf]
      %v1361 = vld [vmem:[%s11 + $0x28] sm:$0xf]
      %v1362 = vld [vmem:[%s11 + $0x2c] sm:$0xf]
      %v1363 = vld [vmem:[%s11 + $0x30] sm:$0xf]
      %v1364 = vld [vmem:[%s11 + $0x34] sm:$0xf]
      %v1365 = vld [vmem:[%s11 + $0x38] sm:$0xf]
      %v1366 = vld [vmem:[%s11 + $0x3c] sm:$0xf]
      %v1367 = vld [vmem:[%s12] sm:$0x1]
      %v1369 = vlaneseq
      %v1370 = vshrl.u32 %v1369, 7
      %v1371 = vsub.s32 0, %v1370
      %v1372 = vrot.slane %v1367, %v1371
      %v1390 = vunpack.c.l.b16 %v1351
      %v1391 = vunpack.c.l.b16 %v1352
      %v1392 = vunpack.c.l.b16 %v1353
      %v1393 = vunpack.c.l.b16 %v1354
      %v1394 = vunpack.c.l.b16 %v1355
      %v1395 = vunpack.c.l.b16 %v1356
      %v1396 = vunpack.c.l.b16 %v1357
      %v1397 = vunpack.c.l.b16 %v1358
      %v1398 = vunpack.c.l.b16 %v1359
      %v1399 = vunpack.c.l.b16 %v1360
      %v1400 = vunpack.c.l.b16 %v1361
      %v1401 = vunpack.c.l.b16 %v1362
      %v1402 = vunpack.c.l.b16 %v1363
      %v1403 = vunpack.c.l.b16 %v1364
      %v1404 = vunpack.c.l.b16 %v1365
      %v1405 = vunpack.c.l.b16 %v1366
      %v1406 = vpack.c.b16 %v1391, %v1390
      %v1407 = vpack.c.b16 %v1393, %v1392
      %v1408 = vpack.c.b16 %v1395, %v1394
      %v1409 = vpack.c.b16 %v1397, %v1396
      %v1410 = vpack.c.b16 %v1399, %v1398
      %v1411 = vpack.c.b16 %v1401, %v1400
      %v1412 = vpack.c.b16 %v1403, %v1402
      %v1413 = vpack.c.b16 %v1405, %v1404
      %1422 = vmatprep.subr.bf16.mxu0 0
      %1423 = vmatpush1.bf16.msra.mxu0 %v1413
      %1424 = vmatprep.subr.bf16.mxu0 0
      %1425 = vmatpush1.bf16.msra.mxu0 %v1412
      %1426 = vmatprep.subr.bf16.mxu0 0
      %1427 = vmatpush1.bf16.msra.mxu0 %v1411
      %1428 = vmatprep.subr.bf16.mxu0 0
      %1429 = vmatpush1.bf16.msra.mxu0 %v1410
      %1430 = vmatprep.subr.bf16.mxu0 0
      %1431 = vmatpush1.bf16.msra.mxu0 %v1409
      %1432 = vmatprep.subr.bf16.mxu0 0
      %1433 = vmatpush1.bf16.msra.mxu0 %v1408
      %1434 = vmatprep.subr.bf16.mxu0 0
      %1435 = vmatpush1.bf16.msra.mxu0 %v1407
      %1436 = vmatprep.subr.bf16.mxu0 0
      %1437 = vmatpush1.bf16.msra.mxu0 %v1406
      %1438 = vmatprep.subr.bf16.mxu0 0
      %1439 = vmatpush2.bf16.msra.mxu0 0
      %1440 = vmatprep.subr.bf16.mxu0 0
      %1441 = vmatpush2.bf16.msra.mxu0 0
      %1442 = vmatprep.subr.bf16.mxu0 0
      %1443 = vmatpush2.bf16.msra.mxu0 0
      %1444 = vmatprep.subr.bf16.mxu0 0
      %1445 = vmatpush2.bf16.msra.mxu0 0
      %1446 = vmatprep.subr.bf16.mxu0 0
      %1447 = vmatpush2.bf16.msra.mxu0 0
      %1448 = vmatprep.subr.bf16.mxu0 0
      %1449 = vmatpush2.bf16.msra.mxu0 0
      %1450 = vmatprep.subr.bf16.mxu0 0
      %1451 = vmatpush2.bf16.msra.mxu0 0
      %1452 = vmatprep.subr.bf16.mxu0 0
      %1453 = vmatpush2.bf16.msra.mxu0 0
      %1454 = vmatprep.mubr.bf16.mxu0 0
      %1455 = vmatmul.mubr.bf16.gmra.mxu0 %v1350
      %v1456 = vpop.f32.mrf.mxu0
      %v1457 = vadd.f32 %v1372, %v1456
      %v1458 = vpop.f32.mrf.mxu0
      %v1459 = vpop.f32.mrf.mxu0
      %v1460 = vpop.f32.mrf.mxu0
      %1461 = vdwg.mxu0
      %v1462 = vadd.f32 %v1281, %v1457
      %v1463 = vld [vmem:[%s13] sm:$0x1]
      %v1464 = vld [vmem:[%s14] sm:$0x1]
      %v1465 = vsel %vm539, %v1462, 0.0
      %1466 = vadd.xlane.f32.xlu0 %v1465
      %v1467 = vpop.xlane.xlu0 %1466
      %v1468 = vmul.f32 %v1467, %v1257
      %v1469 = vsub.f32 %v1462, %v1468
      %v1470 = vmul.f32 %v1469, %v1469
      %v1471 = vsel %vm539, %v1470, 0.0
      %1472 = vadd.xlane.f32.xlu0 %v1471
      %v1473 = vpop.xlane.xlu0 %1472
      %v1474 = vmul.f32 %v1473, %v1257
      %v1475 = vadd.f32 %v1474, 1e-05
      %v1476 = vrsqrt.pop %v1475
      %v1477 = vmul.f32 %v1469, %v1476
      %v1479 = vlaneseq
      %v1480 = vshrl.u32 %v1479, 7
      %v1481 = vsub.s32 0, %v1480
      %v1482 = vrot.slane %v1463, %v1481
      %v1484 = vmul.f32 %v1477, %v1482
      %v1486 = vlaneseq
      %v1487 = vshrl.u32 %v1486, 7
      %v1488 = vsub.s32 0, %v1487
      %v1489 = vrot.slane %v1464, %v1488
      %v1491 = vadd.f32 %v1484, %v1489
      %v1492 = vpack.c.bf16 %v1491, %v1491
      %vm1493 = vcmask 257024
      %1494 = vst.msk [vmem:[%s503] sm:$0xf] %vm1493, %v1492
      %p1495 = scmp.lt.s32.totalorder %s26, 1
      %s1496 = scalar_select %p1495, %s26, 1
      %s1497 = smul.addr %s1496, 4
      %s1498 = scalar_lea.vmem %s15, %s1497
      // Predicated region
      $region81: #{seq2seq_trans_forward.6} parent=79 // pred_check
        %p1499 = pneg %p369
      $region82: #{seq2seq_trans_forward.6} parent=79 // pred_check_branch
        %1501 = sbr.rel (%p1499) target = $region84
      $region83: #{seq2seq_trans_forward.6} parent=79 // pred_region
        _
      $region84: #{seq2seq_trans_forward.6} parent=79 // pred_fallthru
        _
    $region80: #{seq2seq_trans_forward.6} parent=5 // pred_fallthru
      _
    %p1502 = scmp.le.s32.totalorder 2, %s21
    // Predicated region
    $region85: #{seq2seq_trans_forward.6} parent=5 // pred_check
      %p1503 = pneg %p1502
    $region86: #{seq2seq_trans_forward.6} parent=5 // pred_check_branch
      %1505 = sbr.rel (%p1503) target = $region88
    $region87: #{seq2seq_trans_forward.6} parent=5 // pred_region
      %s1506 = ssub.s32 %s21, 2
      // Predicated region
      $region89: #{seq2seq_trans_forward.6} parent=87 // pred_check
        %p1507 = pneg %p375
      $region90: #{seq2seq_trans_forward.6} parent=87 // pred_check_branch
        %1509 = sbr.rel (%p1507) target = $region92
      $region91: #{seq2seq_trans_forward.6} parent=87 // pred_region
        %p1510 = scmp.lt.s32.totalorder %s27, 1
        %s1511 = scalar_select %p1510, %s27, 1
        %s1512 = smul.addr %s1511, 4
        %s1513 = scalar_lea.vmem %s15, %s1512
      $region92: #{seq2seq_trans_forward.6} parent=87 // pred_fallthru
        _
    $region88: #{seq2seq_trans_forward.6} parent=5 // pred_fallthru
      _
  $region6: #{seq2seq_trans_forward.6} parent=0 // loop_footer
    %s25 = sadd.s32 1, %s21
  $region7: #{seq2seq_trans_forward.6} parent=0 // loop_footer_branch
    %20 = sbr.rel target = $region3
  $region8: #{seq2seq_trans_forward.6} parent=0 // loop_exit
    _

// kernel: seq2seq_trans_forward.9
$region0: #{seq2seq_trans_forward.9}
  #allocation0 [shape = 'u32[]', space=smem, size = 0x4, offset = 0x4, fixed_abs, tag = 'smem constant byte address 0x4 - core index']
  #allocation1 [shape = 'u32[144,128]{1,0:T(1,128)}', space=vmem, size = 0x12000, scoped, tag = 'internal scratch']
  %s0 = inlined_call_operand.vmem [shape: bf16[2,8,32], index: 0, kind: input, shape index: {}]
  %s1 = inlined_call_operand.vmem [shape: bf16[2,8,32], index: 1, kind: input, shape index: {}]
  %s2 = inlined_call_operand.vmem [shape: f32[2,1,8], index: 2, kind: input, shape index: {}]
  %s3 = inlined_call_operand.vmem [shape: bf16[32,96], index: 3, kind: input, shape index: {}]
  %s4 = inlined_call_operand.vmem [shape: f32[1,96], index: 4, kind: input, shape index: {}]
  %s5 = inlined_call_operand.vmem [shape: bf16[32,32], index: 5, kind: input, shape index: {}]
  %s6 = inlined_call_operand.vmem [shape: f32[1,32], index: 6, kind: input, shape index: {}]
  %s7 = inlined_call_operand.vmem [shape: f32[1,32], index: 7, kind: input, shape index: {}]
  %s8 = inlined_call_operand.vmem [shape: f32[1,32], index: 8, kind: input, shape index: {}]
  %s9 = inlined_call_operand.vmem [shape: bf16[32,32], index: 9, kind: input, shape index: {}]
  %s10 = inlined_call_operand.vmem [shape: f32[1,32], index: 10, kind: input, shape index: {}]
  %s11 = inlined_call_operand.vmem [shape: bf16[32,64], index: 11, kind: input, shape index: {}]
  %s12 = inlined_call_operand.vmem [shape: f32[1,64], index: 12, kind: input, shape index: {}]
  %s13 = inlined_call_operand.vmem [shape: bf16[32,32], index: 13, kind: input, shape index: {}]
  %s14 = inlined_call_operand.vmem [shape: f32[1,32], index: 14, kind: input, shape index: {}]
  %s15 = inlined_call_operand.vmem [shape: f32[1,32], index: 15, kind: input, shape index: {}]
  %s16 = inlined_call_operand.vmem [shape: f32[1,32], index: 16, kind: input, shape index: {}]
  %s17 = inlined_call_operand.vmem [shape: bf16[32,128], index: 17, kind: input, shape index: {}]
  %s18 = inlined_call_operand.vmem [shape: f32[1,128], index: 18, kind: input, shape index: {}]
  %s19 = inlined_call_operand.vmem [shape: bf16[128,32], index: 19, kind: input, shape index: {}]
  %s20 = inlined_call_operand.vmem [shape: f32[1,32], index: 20, kind: input, shape index: {}]
  %s21 = inlined_call_operand.vmem [shape: f32[1,32], index: 21, kind: input, shape index: {}]
  %s22 = inlined_call_operand.vmem [shape: f32[1,32], index: 22, kind: input, shape index: {}]
  %s23 = inlined_call_operand.vmem [shape: bf16[2,8,32], index: 23, kind: output, shape index: {}]
  %s24 = sld [smem:[#allocation0]]
  $region125: #{seq2seq_trans_forward.9} parent=0
    _
  %s26 = ssub.s32 1, %s24
  %s27 = scalar_select 0, %s26, %s24
  loop: start=0, step=1, limit=4
  $region2: #{seq2seq_trans_forward.9} parent=0 // loop_pre_header
    _
  $region3: #{seq2seq_trans_forward.9} parent=0 // loop_header
    %s29 = sphi 0, %s33
    %p30 = scmp.ge.s32.totalorder %s29, 4
    %s39 = sphi 0, %s41
    %s42 = sphi 0, %s39
    %s43 = sphi 0, %s42
    %s59 = sphi 0, %s43
    %s65 = sphi 0, %s67
    %s68 = sphi 0, %s65
    %s69 = sphi 0, %s68
    %s85 = sphi 0, %s69
    %s91 = sphi 0, %s93
    %s94 = sphi 0, %s91
    %s95 = sphi 0, %s94
    %s111 = sphi 0, %s95
    %s115 = sphi 0, %s115
    %s117 = sphi 0, %s115
    %s118 = sphi 0, %s117
    %s132 = sphi 0, %s118
    %s136 = sphi 0, %s136
    %s138 = sphi 0, %s136
    %s139 = sphi 0, %s138
    %s153 = sphi 0, %s139
    %s157 = sphi 0, %s157
    %s159 = sphi 0, %s157
    %s160 = sphi 0, %s159
    %s174 = sphi 0, %s160
    %s178 = sphi 0, %s178
    %s180 = sphi 0, %s178
    %s181 = sphi 0, %s180
    %s195 = sphi 0, %s181
    %s199 = sphi 0, %s199
    %s201 = sphi 0, %s199
    %s202 = sphi 0, %s201
    %s216 = sphi 0, %s202
    %s220 = sphi 0, %s220
    %s222 = sphi 0, %s220
    %s223 = sphi 0, %s222
    %s237 = sphi 0, %s223
    %s241 = sphi 0, %s241
    %s243 = sphi 0, %s241
    %s244 = sphi 0, %s243
    %s258 = sphi 0, %s244
    %s262 = sphi 0, %s262
    %s264 = sphi 0, %s262
    %s265 = sphi 0, %s264
    %s279 = sphi 0, %s265
    %s283 = sphi 0, %s283
    %s285 = sphi 0, %s283
    %s286 = sphi 0, %s285
    %s300 = sphi 0, %s286
    %s304 = sphi 0, %s304
    %s306 = sphi 0, %s304
    %s307 = sphi 0, %s306
    %s321 = sphi 0, %s307
    %s325 = sphi 0, %s325
    %s327 = sphi 0, %s325
    %s328 = sphi 0, %s327
    %s342 = sphi 0, %s328
    %s346 = sphi 0, %s346
    %s348 = sphi 0, %s346
    %s349 = sphi 0, %s348
    %s363 = sphi 0, %s349
    %s367 = sphi 0, %s367
    %s369 = sphi 0, %s367
    %s370 = sphi 0, %s369
    %s384 = sphi 0, %s370
    %s388 = sphi 0, %s388
    %s390 = sphi 0, %s388
    %s391 = sphi 0, %s390
    %s405 = sphi 0, %s391
    %s409 = sphi 0, %s409
    %s411 = sphi 0, %s409
    %s412 = sphi 0, %s411
    %s426 = sphi 0, %s412
    %s430 = sphi 0, %s430
    %s432 = sphi 0, %s430
    %s433 = sphi 0, %s432
    %s447 = sphi 0, %s433
    %s451 = sphi 0, %s451
    %s453 = sphi 0, %s451
    %s454 = sphi 0, %s453
    %s468 = sphi 0, %s454
    %s472 = sphi 0, %s472
    %s474 = sphi 0, %s472
    %s475 = sphi 0, %s474
    %s489 = sphi 0, %s475
    %s493 = sphi 0, %s493
    %s495 = sphi 0, %s493
    %s496 = sphi 0, %s495
    %s510 = sphi 0, %s496
    %s514 = sphi 0, %s514
    %s516 = sphi 0, %s514
    %s517 = sphi 0, %s516
    %s531 = sphi 0, %s517
    %s537 = sphi 0, %s539
    %s540 = sphi 0, %s537
    %s541 = sphi 0, %s540
    %s557 = sphi 0, %s541
  $region4: #{seq2seq_trans_forward.9} parent=0 // loop_header_branch
    %32 = sbr.rel (%p30) target = $region8
  $region5: #{seq2seq_trans_forward.9} parent=0 // loop_body
    %s34 = ssub.s32 %s29, 1
    %s35 = ssub.s32 %s29, 2
    %s36 = sadd.s32 %s29, 1
    %s37 = ssub.s32 %s29, %s36
    %p38 = scmp.eq.s32.totalorder %s37, 0
    %s40 = sadd.s32 %s39, 1
    %s41 = scalar_select %p38, %s39, %s40
    %p44 = pneg %p38
    %p45 = scmp.eq.s32.totalorder %s29, 1
    %p46 = por %p44, %p45
    %p47 = scmp.ne.s32.totalorder %s39, %s42
    %p48 = scmp.eq.s32.totalorder %s29, 0
    %p49 = por %p47, %p48
    %p50 = scmp.ne.s32.totalorder %s39, %s42
    %p51 = scmp.eq.s32.totalorder %s34, 1
    %p52 = por %p50, %p51
    %p53 = scmp.ne.s32.totalorder %s42, %s43
    %p54 = scmp.eq.s32.totalorder %s34, 0
    %p55 = por %p53, %p54
    %p56 = scmp.ne.s32.totalorder %s42, %s43
    %p57 = scmp.eq.s32.totalorder %s35, 1
    %p58 = por %p56, %p57
    %p60 = scmp.ne.s32.totalorder %s43, %s59
    %p61 = scmp.eq.s32.totalorder %s35, 0
    %p62 = por %p60, %p61
    %s63 = ssub.s32 %s29, %s36
    %p64 = scmp.eq.s32.totalorder %s63, 0
    %s66 = sadd.s32 %s65, 1
    %s67 = scalar_select %p64, %s65, %s66
    %p70 = pneg %p64
    %p71 = scmp.eq.s32.totalorder %s29, 1
    %p72 = por %p70, %p71
    %p73 = scmp.ne.s32.totalorder %s65, %s68
    %p74 = scmp.eq.s32.totalorder %s29, 0
    %p75 = por %p73, %p74
    %p76 = scmp.ne.s32.totalorder %s65, %s68
    %p77 = scmp.eq.s32.totalorder %s34, 1
    %p78 = por %p76, %p77
    %p79 = scmp.ne.s32.totalorder %s68, %s69
    %p80 = scmp.eq.s32.totalorder %s34, 0
    %p81 = por %p79, %p80
    %p82 = scmp.ne.s32.totalorder %s68, %s69
    %p83 = scmp.eq.s32.totalorder %s35, 1
    %p84 = por %p82, %p83
    %p86 = scmp.ne.s32.totalorder %s69, %s85
    %p87 = scmp.eq.s32.totalorder %s35, 0
    %p88 = por %p86, %p87
    %s89 = ssub.s32 %s29, %s36
    %p90 = scmp.eq.s32.totalorder %s89, 0
    %s92 = sadd.s32 %s91, 1
    %s93 = scalar_select %p90, %s91, %s92
    %p96 = pneg %p90
    %p97 = scmp.eq.s32.totalorder %s29, 1
    %p98 = por %p96, %p97
    %p99 = scmp.ne.s32.totalorder %s91, %s94
    %p100 = scmp.eq.s32.totalorder %s29, 0
    %p101 = por %p99, %p100
    %p102 = scmp.ne.s32.totalorder %s91, %s94
    %p103 = scmp.eq.s32.totalorder %s34, 1
    %p104 = por %p102, %p103
    %p105 = scmp.ne.s32.totalorder %s94, %s95
    %p106 = scmp.eq.s32.totalorder %s34, 0
    %p107 = por %p105, %p106
    %p108 = scmp.ne.s32.totalorder %s94, %s95
    %p109 = scmp.eq.s32.totalorder %s35, 1
    %p110 = por %p108, %p109
    %p112 = scmp.ne.s32.totalorder %s95, %s111
    %p113 = scmp.eq.s32.totalorder %s35, 0
    %p114 = por %p112, %p113
    %s116 = sadd.s32 %s115, 1
    %p119 = scmp.eq.s32.totalorder %s29, 1
    %p120 = scmp.ne.s32.totalorder %s115, %s117
    %p121 = scmp.eq.s32.totalorder %s29, 0
    %p122 = por %p120, %p121
    %p123 = scmp.ne.s32.totalorder %s115, %s117
    %p124 = scmp.eq.s32.totalorder %s34, 1
    %p125 = por %p123, %p124
    %p126 = scmp.ne.s32.totalorder %s117, %s118
    %p127 = scmp.eq.s32.totalorder %s34, 0
    %p128 = por %p126, %p127
    %p129 = scmp.ne.s32.totalorder %s117, %s118
    %p130 = scmp.eq.s32.totalorder %s35, 1
    %p131 = por %p129, %p130
    %p133 = scmp.ne.s32.totalorder %s118, %s132
    %p134 = scmp.eq.s32.totalorder %s35, 0
    %p135 = por %p133, %p134
    %s137 = sadd.s32 %s136, 1
    %p140 = scmp.eq.s32.totalorder %s29, 1
    %p141 = scmp.ne.s32.totalorder %s136, %s138
    %p142 = scmp.eq.s32.totalorder %s29, 0
    %p143 = por %p141, %p142
    %p144 = scmp.ne.s32.totalorder %s136, %s138
    %p145 = scmp.eq.s32.totalorder %s34, 1
    %p146 = por %p144, %p145
    %p147 = scmp.ne.s32.totalorder %s138, %s139
    %p148 = scmp.eq.s32.totalorder %s34, 0
    %p149 = por %p147, %p148
    %p150 = scmp.ne.s32.totalorder %s138, %s139
    %p151 = scmp.eq.s32.totalorder %s35, 1
    %p152 = por %p150, %p151
    %p154 = scmp.ne.s32.totalorder %s139, %s153
    %p155 = scmp.eq.s32.totalorder %s35, 0
    %p156 = por %p154, %p155
    %s158 = sadd.s32 %s157, 1
    %p161 = scmp.eq.s32.totalorder %s29, 1
    %p162 = scmp.ne.s32.totalorder %s157, %s159
    %p163 = scmp.eq.s32.totalorder %s29, 0
    %p164 = por %p162, %p163
    %p165 = scmp.ne.s32.totalorder %s157, %s159
    %p166 = scmp.eq.s32.totalorder %s34, 1
    %p167 = por %p165, %p166
    %p168 = scmp.ne.s32.totalorder %s159, %s160
    %p169 = scmp.eq.s32.totalorder %s34, 0
    %p170 = por %p168, %p169
    %p171 = scmp.ne.s32.totalorder %s159, %s160
    %p172 = scmp.eq.s32.totalorder %s35, 1
    %p173 = por %p171, %p172
    %p175 = scmp.ne.s32.totalorder %s160, %s174
    %p176 = scmp.eq.s32.totalorder %s35, 0
    %p177 = por %p175, %p176
    %s179 = sadd.s32 %s178, 1
    %p182 = scmp.eq.s32.totalorder %s29, 1
    %p183 = scmp.ne.s32.totalorder %s178, %s180
    %p184 = scmp.eq.s32.totalorder %s29, 0
    %p185 = por %p183, %p184
    %p186 = scmp.ne.s32.totalorder %s178, %s180
    %p187 = scmp.eq.s32.totalorder %s34, 1
    %p188 = por %p186, %p187
    %p189 = scmp.ne.s32.totalorder %s180, %s181
    %p190 = scmp.eq.s32.totalorder %s34, 0
    %p191 = por %p189, %p190
    %p192 = scmp.ne.s32.totalorder %s180, %s181
    %p193 = scmp.eq.s32.totalorder %s35, 1
    %p194 = por %p192, %p193
    %p196 = scmp.ne.s32.totalorder %s181, %s195
    %p197 = scmp.eq.s32.totalorder %s35, 0
    %p198 = por %p196, %p197
    %s200 = sadd.s32 %s199, 1
    %p203 = scmp.eq.s32.totalorder %s29, 1
    %p204 = scmp.ne.s32.totalorder %s199, %s201
    %p205 = scmp.eq.s32.totalorder %s29, 0
    %p206 = por %p204, %p205
    %p207 = scmp.ne.s32.totalorder %s199, %s201
    %p208 = scmp.eq.s32.totalorder %s34, 1
    %p209 = por %p207, %p208
    %p210 = scmp.ne.s32.totalorder %s201, %s202
    %p211 = scmp.eq.s32.totalorder %s34, 0
    %p212 = por %p210, %p211
    %p213 = scmp.ne.s32.totalorder %s201, %s202
    %p214 = scmp.eq.s32.totalorder %s35, 1
    %p215 = por %p213, %p214
    %p217 = scmp.ne.s32.totalorder %s202, %s216
    %p218 = scmp.eq.s32.totalorder %s35, 0
    %p219 = por %p217, %p218
    %s221 = sadd.s32 %s220, 1
    %p224 = scmp.eq.s32.totalorder %s29, 1
    %p225 = scmp.ne.s32.totalorder %s220, %s222
    %p226 = scmp.eq.s32.totalorder %s29, 0
    %p227 = por %p225, %p226
    %p228 = scmp.ne.s32.totalorder %s220, %s222
    %p229 = scmp.eq.s32.totalorder %s34, 1
    %p230 = por %p228, %p229
    %p231 = scmp.ne.s32.totalorder %s222, %s223
    %p232 = scmp.eq.s32.totalorder %s34, 0
    %p233 = por %p231, %p232
    %p234 = scmp.ne.s32.totalorder %s222, %s223
    %p235 = scmp.eq.s32.totalorder %s35, 1
    %p236 = por %p234, %p235
    %p238 = scmp.ne.s32.totalorder %s223, %s237
    %p239 = scmp.eq.s32.totalorder %s35, 0
    %p240 = por %p238, %p239
    %s242 = sadd.s32 %s241, 1
    %p245 = scmp.eq.s32.totalorder %s29, 1
    %p246 = scmp.ne.s32.totalorder %s241, %s243
    %p247 = scmp.eq.s32.totalorder %s29, 0
    %p248 = por %p246, %p247
    %p249 = scmp.ne.s32.totalorder %s241, %s243
    %p250 = scmp.eq.s32.totalorder %s34, 1
    %p251 = por %p249, %p250
    %p252 = scmp.ne.s32.totalorder %s243, %s244
    %p253 = scmp.eq.s32.totalorder %s34, 0
    %p254 = por %p252, %p253
    %p255 = scmp.ne.s32.totalorder %s243, %s244
    %p256 = scmp.eq.s32.totalorder %s35, 1
    %p257 = por %p255, %p256
    %p259 = scmp.ne.s32.totalorder %s244, %s258
    %p260 = scmp.eq.s32.totalorder %s35, 0
    %p261 = por %p259, %p260
    %s263 = sadd.s32 %s262, 1
    %p266 = scmp.eq.s32.totalorder %s29, 1
    %p267 = scmp.ne.s32.totalorder %s262, %s264
    %p268 = scmp.eq.s32.totalorder %s29, 0
    %p269 = por %p267, %p268
    %p270 = scmp.ne.s32.totalorder %s262, %s264
    %p271 = scmp.eq.s32.totalorder %s34, 1
    %p272 = por %p270, %p271
    %p273 = scmp.ne.s32.totalorder %s264, %s265
    %p274 = scmp.eq.s32.totalorder %s34, 0
    %p275 = por %p273, %p274
    %p276 = scmp.ne.s32.totalorder %s264, %s265
    %p277 = scmp.eq.s32.totalorder %s35, 1
    %p278 = por %p276, %p277
    %p280 = scmp.ne.s32.totalorder %s265, %s279
    %p281 = scmp.eq.s32.totalorder %s35, 0
    %p282 = por %p280, %p281
    %s284 = sadd.s32 %s283, 1
    %p287 = scmp.eq.s32.totalorder %s29, 1
    %p288 = scmp.ne.s32.totalorder %s283, %s285
    %p289 = scmp.eq.s32.totalorder %s29, 0
    %p290 = por %p288, %p289
    %p291 = scmp.ne.s32.totalorder %s283, %s285
    %p292 = scmp.eq.s32.totalorder %s34, 1
    %p293 = por %p291, %p292
    %p294 = scmp.ne.s32.totalorder %s285, %s286
    %p295 = scmp.eq.s32.totalorder %s34, 0
    %p296 = por %p294, %p295
    %p297 = scmp.ne.s32.totalorder %s285, %s286
    %p298 = scmp.eq.s32.totalorder %s35, 1
    %p299 = por %p297, %p298
    %p301 = scmp.ne.s32.totalorder %s286, %s300
    %p302 = scmp.eq.s32.totalorder %s35, 0
    %p303 = por %p301, %p302
    %s305 = sadd.s32 %s304, 1
    %p308 = scmp.eq.s32.totalorder %s29, 1
    %p309 = scmp.ne.s32.totalorder %s304, %s306
    %p310 = scmp.eq.s32.totalorder %s29, 0
    %p311 = por %p309, %p310
    %p312 = scmp.ne.s32.totalorder %s304, %s306
    %p313 = scmp.eq.s32.totalorder %s34, 1
    %p314 = por %p312, %p313
    %p315 = scmp.ne.s32.totalorder %s306, %s307
    %p316 = scmp.eq.s32.totalorder %s34, 0
    %p317 = por %p315, %p316
    %p318 = scmp.ne.s32.totalorder %s306, %s307
    %p319 = scmp.eq.s32.totalorder %s35, 1
    %p320 = por %p318, %p319
    %p322 = scmp.ne.s32.totalorder %s307, %s321
    %p323 = scmp.eq.s32.totalorder %s35, 0
    %p324 = por %p322, %p323
    %s326 = sadd.s32 %s325, 1
    %p329 = scmp.eq.s32.totalorder %s29, 1
    %p330 = scmp.ne.s32.totalorder %s325, %s327
    %p331 = scmp.eq.s32.totalorder %s29, 0
    %p332 = por %p330, %p331
    %p333 = scmp.ne.s32.totalorder %s325, %s327
    %p334 = scmp.eq.s32.totalorder %s34, 1
    %p335 = por %p333, %p334
    %p336 = scmp.ne.s32.totalorder %s327, %s328
    %p337 = scmp.eq.s32.totalorder %s34, 0
    %p338 = por %p336, %p337
    %p339 = scmp.ne.s32.totalorder %s327, %s328
    %p340 = scmp.eq.s32.totalorder %s35, 1
    %p341 = por %p339, %p340
    %p343 = scmp.ne.s32.totalorder %s328, %s342
    %p344 = scmp.eq.s32.totalorder %s35, 0
    %p345 = por %p343, %p344
    %s347 = sadd.s32 %s346, 1
    %p350 = scmp.eq.s32.totalorder %s29, 1
    %p351 = scmp.ne.s32.totalorder %s346, %s348
    %p352 = scmp.eq.s32.totalorder %s29, 0
    %p353 = por %p351, %p352
    %p354 = scmp.ne.s32.totalorder %s346, %s348
    %p355 = scmp.eq.s32.totalorder %s34, 1
    %p356 = por %p354, %p355
    %p357 = scmp.ne.s32.totalorder %s348, %s349
    %p358 = scmp.eq.s32.totalorder %s34, 0
    %p359 = por %p357, %p358
    %p360 = scmp.ne.s32.totalorder %s348, %s349
    %p361 = scmp.eq.s32.totalorder %s35, 1
    %p362 = por %p360, %p361
    %p364 = scmp.ne.s32.totalorder %s349, %s363
    %p365 = scmp.eq.s32.totalorder %s35, 0
    %p366 = por %p364, %p365
    %s368 = sadd.s32 %s367, 1
    %p371 = scmp.eq.s32.totalorder %s29, 1
    %p372 = scmp.ne.s32.totalorder %s367, %s369
    %p373 = scmp.eq.s32.totalorder %s29, 0
    %p374 = por %p372, %p373
    %p375 = scmp.ne.s32.totalorder %s367, %s369
    %p376 = scmp.eq.s32.totalorder %s34, 1
    %p377 = por %p375, %p376
    %p378 = scmp.ne.s32.totalorder %s369, %s370
    %p379 = scmp.eq.s32.totalorder %s34, 0
    %p380 = por %p378, %p379
    %p381 = scmp.ne.s32.totalorder %s369, %s370
    %p382 = scmp.eq.s32.totalorder %s35, 1
    %p383 = por %p381, %p382
    %p385 = scmp.ne.s32.totalorder %s370, %s384
    %p386 = scmp.eq.s32.totalorder %s35, 0
    %p387 = por %p385, %p386
    %s389 = sadd.s32 %s388, 1
    %p392 = scmp.eq.s32.totalorder %s29, 1
    %p393 = scmp.ne.s32.totalorder %s388, %s390
    %p394 = scmp.eq.s32.totalorder %s29, 0
    %p395 = por %p393, %p394
    %p396 = scmp.ne.s32.totalorder %s388, %s390
    %p397 = scmp.eq.s32.totalorder %s34, 1
    %p398 = por %p396, %p397
    %p399 = scmp.ne.s32.totalorder %s390, %s391
    %p400 = scmp.eq.s32.totalorder %s34, 0
    %p401 = por %p399, %p400
    %p402 = scmp.ne.s32.totalorder %s390, %s391
    %p403 = scmp.eq.s32.totalorder %s35, 1
    %p404 = por %p402, %p403
    %p406 = scmp.ne.s32.totalorder %s391, %s405
    %p407 = scmp.eq.s32.totalorder %s35, 0
    %p408 = por %p406, %p407
    %s410 = sadd.s32 %s409, 1
    %p413 = scmp.eq.s32.totalorder %s29, 1
    %p414 = scmp.ne.s32.totalorder %s409, %s411
    %p415 = scmp.eq.s32.totalorder %s29, 0
    %p416 = por %p414, %p415
    %p417 = scmp.ne.s32.totalorder %s409, %s411
    %p418 = scmp.eq.s32.totalorder %s34, 1
    %p419 = por %p417, %p418
    %p420 = scmp.ne.s32.totalorder %s411, %s412
    %p421 = scmp.eq.s32.totalorder %s34, 0
    %p422 = por %p420, %p421
    %p423 = scmp.ne.s32.totalorder %s411, %s412
    %p424 = scmp.eq.s32.totalorder %s35, 1
    %p425 = por %p423, %p424
    %p427 = scmp.ne.s32.totalorder %s412, %s426
    %p428 = scmp.eq.s32.totalorder %s35, 0
    %p429 = por %p427, %p428
    %s431 = sadd.s32 %s430, 1
    %p434 = scmp.eq.s32.totalorder %s29, 1
    %p435 = scmp.ne.s32.totalorder %s430, %s432
    %p436 = scmp.eq.s32.totalorder %s29, 0
    %p437 = por %p435, %p436
    %p438 = scmp.ne.s32.totalorder %s430, %s432
    %p439 = scmp.eq.s32.totalorder %s34, 1
    %p440 = por %p438, %p439
    %p441 = scmp.ne.s32.totalorder %s432, %s433
    %p442 = scmp.eq.s32.totalorder %s34, 0
    %p443 = por %p441, %p442
    %p444 = scmp.ne.s32.totalorder %s432, %s433
    %p445 = scmp.eq.s32.totalorder %s35, 1
    %p446 = por %p444, %p445
    %p448 = scmp.ne.s32.totalorder %s433, %s447
    %p449 = scmp.eq.s32.totalorder %s35, 0
    %p450 = por %p448, %p449
    %s452 = sadd.s32 %s451, 1
    %p455 = scmp.eq.s32.totalorder %s29, 1
    %p456 = scmp.ne.s32.totalorder %s451, %s453
    %p457 = scmp.eq.s32.totalorder %s29, 0
    %p458 = por %p456, %p457
    %p459 = scmp.ne.s32.totalorder %s451, %s453
    %p460 = scmp.eq.s32.totalorder %s34, 1
    %p461 = por %p459, %p460
    %p462 = scmp.ne.s32.totalorder %s453, %s454
    %p463 = scmp.eq.s32.totalorder %s34, 0
    %p464 = por %p462, %p463
    %p465 = scmp.ne.s32.totalorder %s453, %s454
    %p466 = scmp.eq.s32.totalorder %s35, 1
    %p467 = por %p465, %p466
    %p469 = scmp.ne.s32.totalorder %s454, %s468
    %p470 = scmp.eq.s32.totalorder %s35, 0
    %p471 = por %p469, %p470
    %s473 = sadd.s32 %s472, 1
    %p476 = scmp.eq.s32.totalorder %s29, 1
    %p477 = scmp.ne.s32.totalorder %s472, %s474
    %p478 = scmp.eq.s32.totalorder %s29, 0
    %p479 = por %p477, %p478
    %p480 = scmp.ne.s32.totalorder %s472, %s474
    %p481 = scmp.eq.s32.totalorder %s34, 1
    %p482 = por %p480, %p481
    %p483 = scmp.ne.s32.totalorder %s474, %s475
    %p484 = scmp.eq.s32.totalorder %s34, 0
    %p485 = por %p483, %p484
    %p486 = scmp.ne.s32.totalorder %s474, %s475
    %p487 = scmp.eq.s32.totalorder %s35, 1
    %p488 = por %p486, %p487
    %p490 = scmp.ne.s32.totalorder %s475, %s489
    %p491 = scmp.eq.s32.totalorder %s35, 0
    %p492 = por %p490, %p491
    %s494 = sadd.s32 %s493, 1
    %p497 = scmp.eq.s32.totalorder %s29, 1
    %p498 = scmp.ne.s32.totalorder %s493, %s495
    %p499 = scmp.eq.s32.totalorder %s29, 0
    %p500 = por %p498, %p499
    %p501 = scmp.ne.s32.totalorder %s493, %s495
    %p502 = scmp.eq.s32.totalorder %s34, 1
    %p503 = por %p501, %p502
    %p504 = scmp.ne.s32.totalorder %s495, %s496
    %p505 = scmp.eq.s32.totalorder %s34, 0
    %p506 = por %p504, %p505
    %p507 = scmp.ne.s32.totalorder %s495, %s496
    %p508 = scmp.eq.s32.totalorder %s35, 1
    %p509 = por %p507, %p508
    %p511 = scmp.ne.s32.totalorder %s496, %s510
    %p512 = scmp.eq.s32.totalorder %s35, 0
    %p513 = por %p511, %p512
    %s515 = sadd.s32 %s514, 1
    %p518 = scmp.eq.s32.totalorder %s29, 1
    %p519 = scmp.ne.s32.totalorder %s514, %s516
    %p520 = scmp.eq.s32.totalorder %s29, 0
    %p521 = por %p519, %p520
    %p522 = scmp.ne.s32.totalorder %s514, %s516
    %p523 = scmp.eq.s32.totalorder %s34, 1
    %p524 = por %p522, %p523
    %p525 = scmp.ne.s32.totalorder %s516, %s517
    %p526 = scmp.eq.s32.totalorder %s34, 0
    %p527 = por %p525, %p526
    %p528 = scmp.ne.s32.totalorder %s516, %s517
    %p529 = scmp.eq.s32.totalorder %s35, 1
    %p530 = por %p528, %p529
    %p532 = scmp.ne.s32.totalorder %s517, %s531
    %p533 = scmp.eq.s32.totalorder %s35, 0
    %p534 = por %p532, %p533
    %s535 = ssub.s32 %s29, %s36
    %p536 = scmp.eq.s32.totalorder %s535, 0
    %s538 = sadd.s32 %s537, 1
    %s539 = scalar_select %p536, %s537, %s538
    %p542 = pneg %p536
    %p543 = scmp.eq.s32.totalorder %s29, 1
    %p544 = por %p542, %p543
    %p545 = scmp.ne.s32.totalorder %s537, %s540
    %p546 = scmp.eq.s32.totalorder %s29, 0
    %p547 = por %p545, %p546
    %p548 = scmp.ne.s32.totalorder %s537, %s540
    %p549 = scmp.eq.s32.totalorder %s34, 1
    %p550 = por %p548, %p549
    %p551 = scmp.ne.s32.totalorder %s540, %s541
    %p552 = scmp.eq.s32.totalorder %s34, 0
    %p553 = por %p551, %p552
    %p554 = scmp.ne.s32.totalorder %s540, %s541
    %p555 = scmp.eq.s32.totalorder %s35, 1
    %p556 = por %p554, %p555
    %p558 = scmp.ne.s32.totalorder %s541, %s557
    %p559 = scmp.eq.s32.totalorder %s35, 0
    %p560 = por %p558, %p559
    %p561 = scmp.le.s32.totalorder 1, %s29
    %p562 = scmp.lt.s32.totalorder %s29, 3
    %p563 = pnand %p561, %p562
    %p564 = pneg %p563
    // Predicated region
    $region9: #{seq2seq_trans_forward.9} parent=5 // pred_check
      _
    $region10: #{seq2seq_trans_forward.9} parent=5 // pred_check_branch
      %566 = sbr.rel (%p563) target = $region12
    $region11: #{seq2seq_trans_forward.9} parent=5 // pred_region
      %s567 = ssub.s32 %s29, 1
      // Predicated region
      $region13: #{seq2seq_trans_forward.9} parent=11 // pred_check
        %p568 = pneg %p128
      $region14: #{seq2seq_trans_forward.9} parent=11 // pred_check_branch
        %570 = sbr.rel (%p568) target = $region16
      $region15: #{seq2seq_trans_forward.9} parent=11 // pred_region
        _
      $region16: #{seq2seq_trans_forward.9} parent=11 // pred_fallthru
        _
      // Predicated region
      $region17: #{seq2seq_trans_forward.9} parent=11 // pred_check
        %p571 = pneg %p149
      $region18: #{seq2seq_trans_forward.9} parent=11 // pred_check_branch
        %573 = sbr.rel (%p571) target = $region20
      $region19: #{seq2seq_trans_forward.9} parent=11 // pred_region
        _
      $region20: #{seq2seq_trans_forward.9} parent=11 // pred_fallthru
        _
      // Predicated region
      $region21: #{seq2seq_trans_forward.9} parent=11 // pred_check
        %p574 = pneg %p170
      $region22: #{seq2seq_trans_forward.9} parent=11 // pred_check_branch
        %576 = sbr.rel (%p574) target = $region24
      $region23: #{seq2seq_trans_forward.9} parent=11 // pred_region
        _
      $region24: #{seq2seq_trans_forward.9} parent=11 // pred_fallthru
        _
      // Predicated region
      $region25: #{seq2seq_trans_forward.9} parent=11 // pred_check
        %p577 = pneg %p191
      $region26: #{seq2seq_trans_forward.9} parent=11 // pred_check_branch
        %579 = sbr.rel (%p577) target = $region28
      $region27: #{seq2seq_trans_forward.9} parent=11 // pred_region
        _
      $region28: #{seq2seq_trans_forward.9} parent=11 // pred_fallthru
        _
      // Predicated region
      $region29: #{seq2seq_trans_forward.9} parent=11 // pred_check
        %p580 = pneg %p212
      $region30: #{seq2seq_trans_forward.9} parent=11 // pred_check_branch
        %582 = sbr.rel (%p580) target = $region32
      $region31: #{seq2seq_trans_forward.9} parent=11 // pred_region
        _
      $region32: #{seq2seq_trans_forward.9} parent=11 // pred_fallthru
        _
      // Predicated region
      $region33: #{seq2seq_trans_forward.9} parent=11 // pred_check
        %p583 = pneg %p233
      $region34: #{seq2seq_trans_forward.9} parent=11 // pred_check_branch
        %585 = sbr.rel (%p583) target = $region36
      $region35: #{seq2seq_trans_forward.9} parent=11 // pred_region
        _
      $region36: #{seq2seq_trans_forward.9} parent=11 // pred_fallthru
        _
      // Predicated region
      $region37: #{seq2seq_trans_forward.9} parent=11 // pred_check
        %p586 = pneg %p254
      $region38: #{seq2seq_trans_forward.9} parent=11 // pred_check_branch
        %588 = sbr.rel (%p586) target = $region40
      $region39: #{seq2seq_trans_forward.9} parent=11 // pred_region
        _
      $region40: #{seq2seq_trans_forward.9} parent=11 // pred_fallthru
        _
      // Predicated region
      $region41: #{seq2seq_trans_forward.9} parent=11 // pred_check
        %p589 = pneg %p275
      $region42: #{seq2seq_trans_forward.9} parent=11 // pred_check_branch
        %591 = sbr.rel (%p589) target = $region44
      $region43: #{seq2seq_trans_forward.9} parent=11 // pred_region
        _
      $region44: #{seq2seq_trans_forward.9} parent=11 // pred_fallthru
        _
      // Predicated region
      $region45: #{seq2seq_trans_forward.9} parent=11 // pred_check
        %p592 = pneg %p296
      $region46: #{seq2seq_trans_forward.9} parent=11 // pred_check_branch
        %594 = sbr.rel (%p592) target = $region48
      $region47: #{seq2seq_trans_forward.9} parent=11 // pred_region
        _
      $region48: #{seq2seq_trans_forward.9} parent=11 // pred_fallthru
        _
      // Predicated region
      $region49: #{seq2seq_trans_forward.9} parent=11 // pred_check
        %p595 = pneg %p317
      $region50: #{seq2seq_trans_forward.9} parent=11 // pred_check_branch
        %597 = sbr.rel (%p595) target = $region52
      $region51: #{seq2seq_trans_forward.9} parent=11 // pred_region
        _
      $region52: #{seq2seq_trans_forward.9} parent=11 // pred_fallthru
        _
      // Predicated region
      $region53: #{seq2seq_trans_forward.9} parent=11 // pred_check
        %p598 = pneg %p338
      $region54: #{seq2seq_trans_forward.9} parent=11 // pred_check_branch
        %600 = sbr.rel (%p598) target = $region56
      $region55: #{seq2seq_trans_forward.9} parent=11 // pred_region
        _
      $region56: #{seq2seq_trans_forward.9} parent=11 // pred_fallthru
        _
      // Predicated region
      $region57: #{seq2seq_trans_forward.9} parent=11 // pred_check
        %p601 = pneg %p359
      $region58: #{seq2seq_trans_forward.9} parent=11 // pred_check_branch
        %603 = sbr.rel (%p601) target = $region60
      $region59: #{seq2seq_trans_forward.9} parent=11 // pred_region
        _
      $region60: #{seq2seq_trans_forward.9} parent=11 // pred_fallthru
        _
      // Predicated region
      $region61: #{seq2seq_trans_forward.9} parent=11 // pred_check
        %p604 = pneg %p380
      $region62: #{seq2seq_trans_forward.9} parent=11 // pred_check_branch
        %606 = sbr.rel (%p604) target = $region64
      $region63: #{seq2seq_trans_forward.9} parent=11 // pred_region
        _
      $region64: #{seq2seq_trans_forward.9} parent=11 // pred_fallthru
        _
      // Predicated region
      $region65: #{seq2seq_trans_forward.9} parent=11 // pred_check
        %p607 = pneg %p401
      $region66: #{seq2seq_trans_forward.9} parent=11 // pred_check_branch
        %609 = sbr.rel (%p607) target = $region68
      $region67: #{seq2seq_trans_forward.9} parent=11 // pred_region
        _
      $region68: #{seq2seq_trans_forward.9} parent=11 // pred_fallthru
        _
      // Predicated region
      $region69: #{seq2seq_trans_forward.9} parent=11 // pred_check
        %p610 = pneg %p422
      $region70: #{seq2seq_trans_forward.9} parent=11 // pred_check_branch
        %612 = sbr.rel (%p610) target = $region72
      $region71: #{seq2seq_trans_forward.9} parent=11 // pred_region
        _
      $region72: #{seq2seq_trans_forward.9} parent=11 // pred_fallthru
        _
      // Predicated region
      $region73: #{seq2seq_trans_forward.9} parent=11 // pred_check
        %p613 = pneg %p443
      $region74: #{seq2seq_trans_forward.9} parent=11 // pred_check_branch
        %615 = sbr.rel (%p613) target = $region76
      $region75: #{seq2seq_trans_forward.9} parent=11 // pred_region
        _
      $region76: #{seq2seq_trans_forward.9} parent=11 // pred_fallthru
        _
      // Predicated region
      $region77: #{seq2seq_trans_forward.9} parent=11 // pred_check
        %p616 = pneg %p464
      $region78: #{seq2seq_trans_forward.9} parent=11 // pred_check_branch
        %618 = sbr.rel (%p616) target = $region80
      $region79: #{seq2seq_trans_forward.9} parent=11 // pred_region
        _
      $region80: #{seq2seq_trans_forward.9} parent=11 // pred_fallthru
        _
      // Predicated region
      $region81: #{seq2seq_trans_forward.9} parent=11 // pred_check
        %p619 = pneg %p485
      $region82: #{seq2seq_trans_forward.9} parent=11 // pred_check_branch
        %621 = sbr.rel (%p619) target = $region84
      $region83: #{seq2seq_trans_forward.9} parent=11 // pred_region
        _
      $region84: #{seq2seq_trans_forward.9} parent=11 // pred_fallthru
        _
      // Predicated region
      $region85: #{seq2seq_trans_forward.9} parent=11 // pred_check
        %p622 = pneg %p506
      $region86: #{seq2seq_trans_forward.9} parent=11 // pred_check_branch
        %624 = sbr.rel (%p622) target = $region88
      $region87: #{seq2seq_trans_forward.9} parent=11 // pred_region
        _
      $region88: #{seq2seq_trans_forward.9} parent=11 // pred_fallthru
        _
      // Predicated region
      $region89: #{seq2seq_trans_forward.9} parent=11 // pred_check
        %p625 = pneg %p527
      $region90: #{seq2seq_trans_forward.9} parent=11 // pred_check_branch
        %627 = sbr.rel (%p625) target = $region92
      $region91: #{seq2seq_trans_forward.9} parent=11 // pred_region
        _
      $region92: #{seq2seq_trans_forward.9} parent=11 // pred_fallthru
        _
    $region12: #{seq2seq_trans_forward.9} parent=5 // pred_fallthru
      _
    %p628 = scmp.lt.s32.totalorder %s29, 2
    // Predicated region
    $region93: #{seq2seq_trans_forward.9} parent=5 // pred_check
      %p629 = pneg %p628
    $region94: #{seq2seq_trans_forward.9} parent=5 // pred_check_branch
      %631 = sbr.rel (%p629) target = $region96
    $region95: #{seq2seq_trans_forward.9} parent=5 // pred_region
      // Predicated region
      $region97: #{seq2seq_trans_forward.9} parent=95 // pred_check
        %p632 = pneg %p49
      $region98: #{seq2seq_trans_forward.9} parent=95 // pred_check_branch
        %634 = sbr.rel (%p632) target = $region100
      $region99: #{seq2seq_trans_forward.9} parent=95 // pred_region
        %p635 = scmp.lt.s32.totalorder %s29, 1
        %s636 = scalar_select %p635, %s29, 1
        %s637 = smul.addr %s636, 4
        %s638 = scalar_lea.vmem %s0, %s637
      $region100: #{seq2seq_trans_forward.9} parent=95 // pred_fallthru
        _
      // Predicated region
      $region101: #{seq2seq_trans_forward.9} parent=95 // pred_check
        %p639 = pneg %p75
      $region102: #{seq2seq_trans_forward.9} parent=95 // pred_check_branch
        %641 = sbr.rel (%p639) target = $region104
      $region103: #{seq2seq_trans_forward.9} parent=95 // pred_region
        %p642 = scmp.lt.s32.totalorder %s29, 1
        %s643 = scalar_select %p642, %s29, 1
        %s644 = smul.addr %s643, 4
        %s645 = scalar_lea.vmem %s1, %s644
      $region104: #{seq2seq_trans_forward.9} parent=95 // pred_fallthru
        _
      // Predicated region
      $region105: #{seq2seq_trans_forward.9} parent=95 // pred_check
        %p646 = pneg %p101
      $region106: #{seq2seq_trans_forward.9} parent=95 // pred_check_branch
        %648 = sbr.rel (%p646) target = $region108
      $region107: #{seq2seq_trans_forward.9} parent=95 // pred_region
        %p649 = scmp.lt.s32.totalorder %s29, 1
        %s650 = scalar_select %p649, %s29, 1
        %s651 = scalar_lea.vmem %s2, %s650
      $region108: #{seq2seq_trans_forward.9} parent=95 // pred_fallthru
        _
    $region96: #{seq2seq_trans_forward.9} parent=5 // pred_fallthru
      _
    %p652 = scmp.le.s32.totalorder 1, %s29
    %p653 = scmp.lt.s32.totalorder %s29, 3
    %p654 = pnand %p652, %p653
    %p655 = pneg %p654
    // Predicated region
    $region109: #{seq2seq_trans_forward.9} parent=5 // pred_check
      _
    $region110: #{seq2seq_trans_forward.9} parent=5 // pred_check_branch
      %657 = sbr.rel (%p654) target = $region112
    $region111: #{seq2seq_trans_forward.9} parent=5 // pred_region
      %s658 = ssub.s32 %s29, 1
      %p659 = scmp.lt.s32.totalorder %s34, 1
      %s660 = scalar_select %p659, %s34, 1
      %s661 = smul.addr %s660, 4
      %s662 = scalar_lea.vmem %s0, %s661
      %p663 = pneg %p55
      %p664 = pneg %p52
      %p665 = scmp.lt.s32.totalorder %s34, 1
      %s666 = scalar_select %p665, %s34, 1
      %s667 = smul.addr %s666, 4
      %s668 = scalar_lea.vmem %s1, %s667
      %p669 = pneg %p81
      %p670 = pneg %p78
      %p671 = scmp.lt.s32.totalorder %s34, 1
      %s672 = scalar_select %p671, %s34, 1
      %s673 = scalar_lea.vmem %s2, %s672
      %p674 = pneg %p107
      %p675 = pneg %p104
      %p676 = pneg %p128
      %p677 = pneg %p125
      %p678 = pneg %p149
      %p679 = pneg %p146
      %p680 = pneg %p170
      %p681 = pneg %p167
      %p682 = pneg %p191
      %p683 = pneg %p188
      %p684 = pneg %p212
      %p685 = pneg %p209
      %p686 = pneg %p233
      %p687 = pneg %p230
      %p688 = pneg %p254
      %p689 = pneg %p251
      %p690 = pneg %p275
      %p691 = pneg %p272
      %p692 = pneg %p296
      %p693 = pneg %p293
      %p694 = pneg %p317
      %p695 = pneg %p314
      %p696 = pneg %p338
      %p697 = pneg %p335
      %p698 = pneg %p359
      %p699 = pneg %p356
      %p700 = pneg %p380
      %p701 = pneg %p377
      %p702 = pneg %p401
      %p703 = pneg %p398
      %p704 = pneg %p422
      %p705 = pneg %p419
      %p706 = pneg %p443
      %p707 = pneg %p440
      %p708 = pneg %p464
      %p709 = pneg %p461
      %p710 = pneg %p485
      %p711 = pneg %p482
      %p712 = pneg %p506
      %p713 = pneg %p503
      %p714 = pneg %p527
      %p715 = pneg %p524
      %p716 = pneg %p553
      %p717 = pneg %p550
      %p718 = scmp.lt.s32.totalorder %s34, 1
      %s719 = scalar_select %p718, %s34, 1
      %s720 = smul.addr %s719, 4
      %s721 = scalar_lea.vmem %s23, %s720
      %p722 = scmp.lt.s32.totalorder %s34, 1
      %s723 = scalar_select %p722, %s34, 1
      %s724 = smul.addr %s723, 4
      %s725 = scalar_lea.vmem %s0, %s724
      %p726 = scmp.lt.s32.totalorder %s34, 1
      %s727 = scalar_select %p726, %s34, 1
      %s728 = smul.addr %s727, 4
      %s729 = scalar_lea.vmem %s1, %s728
      %p730 = scmp.lt.s32.totalorder %s34, 1
      %s731 = scalar_select %p730, %s34, 1
      %s732 = scalar_lea.vmem %s2, %s731
      %p733 = scmp.lt.s32.totalorder %s34, 1
      %s734 = scalar_select %p733, %s34, 1
      %s735 = smul.addr %s734, 4
      %s736 = scalar_lea.vmem %s23, %s735
      %v738 = vld [vmem:[%s725] sm:$0xf]
      %v739 = vunpack.c.l.bf16 %v738
      %v740 = vld [vmem:[%s732] sm:$0x1]
      %v741 = vld [vmem:[%s3] sm:$0xf]
      %v742 = vld [vmem:[%s3 + $0x4] sm:$0xf]
      %v743 = vld [vmem:[%s3 + $0x8] sm:$0xf]
      %v744 = vld [vmem:[%s3 + $0xc] sm:$0xf]
      %v745 = vld [vmem:[%s4] sm:$0x1]
      %v747 = vlaneseq
      %v748 = vshrl.u32 %v747, 7
      %v749 = vsub.s32 0, %v748
      %v750 = vrot.slane %v745, %v749
      %v756 = vunpack.c.l.b16 %v741
      %v757 = vunpack.c.l.b16 %v742
      %v758 = vunpack.c.l.b16 %v743
      %v759 = vunpack.c.l.b16 %v744
      %v760 = vpack.c.b16 %v757, %v756
      %v761 = vpack.c.b16 %v759, %v758
      %vm764 = vcmask 261120
      %v766 = vsel %vm764, %v738, 0
      %768 = vmatprep.subr.bf16.mxu0 0
      %769 = vmatpush1.bf16.msra.mxu0 0
      %770 = vmatprep.subr.bf16.mxu0 0
      %771 = vmatpush1.bf16.msra.mxu0 0
      %772 = vmatprep.subr.bf16.mxu0 0
      %773 = vmatpush1.bf16.msra.mxu0 0
      %774 = vmatprep.subr.bf16.mxu0 0
      %775 = vmatpush1.bf16.msra.mxu0 0
      %776 = vmatprep.subr.bf16.mxu0 0
      %777 = vmatpush1.bf16.msra.mxu0 0
      %778 = vmatprep.subr.bf16.mxu0 0
      %779 = vmatpush1.bf16.msra.mxu0 0
      %780 = vmatprep.subr.bf16.mxu0 0
      %781 = vmatpush1.bf16.msra.mxu0 %v761
      %782 = vmatprep.subr.bf16.mxu0 0
      %783 = vmatpush1.bf16.msra.mxu0 %v760
      %784 = vmatprep.subr.bf16.mxu0 0
      %785 = vmatpush2.bf16.msra.mxu0 0
      %786 = vmatprep.subr.bf16.mxu0 0
      %787 = vmatpush2.bf16.msra.mxu0 0
      %788 = vmatprep.subr.bf16.mxu0 0
      %789 = vmatpush2.bf16.msra.mxu0 0
      %790 = vmatprep.subr.bf16.mxu0 0
      %791 = vmatpush2.bf16.msra.mxu0 0
      %792 = vmatprep.subr.bf16.mxu0 0
      %793 = vmatpush2.bf16.msra.mxu0 0
      %794 = vmatprep.subr.bf16.mxu0 0
      %795 = vmatpush2.bf16.msra.mxu0 0
      %796 = vmatprep.subr.bf16.mxu0 0
      %797 = vmatpush2.bf16.msra.mxu0 0
      %798 = vmatprep.subr.bf16.mxu0 0
      %799 = vmatpush2.bf16.msra.mxu0 0
      %800 = vmatprep.mubr.bf16.mxu0 0
      %801 = vmatmul.mubr.bf16.gmra.mxu0 %v766
      %v802 = vpop.f32.mrf.mxu0
      %v803 = vadd.f32 %v750, %v802
      %v804 = vpop.f32.mrf.mxu0
      %v805 = vpop.f32.mrf.mxu0
      %v806 = vpop.f32.mrf.mxu0
      %807 = vdwg.mxu0
      %v808 = vld [vmem:[%s5] sm:$0xf]
      %v809 = vld [vmem:[%s5 + $0x4] sm:$0xf]
      %v810 = vld [vmem:[%s5 + $0x8] sm:$0xf]
      %v811 = vld [vmem:[%s5 + $0xc] sm:$0xf]
      %v812 = vpack.c.bf16 %v803, %v803
      %814 = vrot.lane.b32.xlu0 %v812, 96
      %v815 = vpop.permute.xlu0 %814
      %vm816 = vcmask 64512
      %v818 = vsel %vm816, %v812, 0
      %v821 = vsel %vm816, %v815, 0
      %823 = vmatprep.subr.bf16.mxu0 0
      %824 = vmatpush1.bf16.xpose.msra.mxu0 0
      %825 = vmatprep.subr.bf16.mxu0 0
      %826 = vmatpush1.bf16.xpose.msra.mxu0 0
      %827 = vmatprep.subr.bf16.mxu0 0
      %828 = vmatpush1.bf16.xpose.msra.mxu0 0
      %829 = vmatprep.subr.bf16.mxu0 0
      %830 = vmatpush1.bf16.xpose.msra.mxu0 0
      %831 = vmatprep.subr.bf16.mxu0 0
      %832 = vmatpush1.bf16.xpose.msra.mxu0 0
      %833 = vmatprep.subr.bf16.mxu0 0
      %834 = vmatpush1.bf16.xpose.msra.mxu0 0
      %835 = vmatprep.subr.bf16.mxu0 0
      %836 = vmatpush1.bf16.xpose.msra.mxu0 0
      %837 = vmatprep.subr.bf16.mxu0 0
      %838 = vmatpush1.bf16.xpose.msra.mxu0 %v821
      %839 = vmatprep.subr.bf16.mxu0 0
      %840 = vmatpush2.bf16.xpose.msra.mxu0 0
      %841 = vmatprep.subr.bf16.mxu0 0
      %842 = vmatpush2.bf16.xpose.msra.mxu0 0
      %843 = vmatprep.subr.bf16.mxu0 0
      %844 = vmatpush2.bf16.xpose.msra.mxu0 0
      %845 = vmatprep.subr.bf16.mxu0 0
      %846 = vmatpush2.bf16.xpose.msra.mxu0 0
      %847 = vmatprep.subr.bf16.mxu0 0
      %848 = vmatpush2.bf16.xpose.msra.mxu0 0
      %849 = vmatprep.subr.bf16.mxu0 0
      %850 = vmatpush2.bf16.xpose.msra.mxu0 0
      %851 = vmatprep.subr.bf16.mxu0 0
      %852 = vmatpush2.bf16.xpose.msra.mxu0 0
      %853 = vmatprep.subr.bf16.mxu0 0
      %854 = vmatpush2.bf16.xpose.msra.mxu0 0
      %855 = vmatprep.mubr.bf16.mxu0 0
      %856 = vmatmul.mubr.bf16.gmra.mxu0 %v818
      %v857 = vpop.f32.mrf.mxu0
      %v858 = vadd.f32 0.0, %v857
      %v859 = vpop.f32.mrf.mxu0
      %v860 = vpop.f32.mrf.mxu0
      %v861 = vpop.f32.mrf.mxu0
      %862 = vdwg.mxu0
      %v863 = vmul.f32 %v858, 0.35355338
      %v865 = vlaneseq
      %v866 = vshrl.u32 %v865, 7
      %v867 = vsub.s32 0, %v866
      %v868 = vrot.slane %v740, %v867
      %v870 = vadd.f32 %v863, %v868
      %v871 = vsel %vm816, %v870, -inf
      %872 = vmax.xlane.f32.xlu0 %v871
      %v873 = vpop.xlane.xlu0 %872
      %vm874 = vcmp.eq.f32.partialorder %v873, -inf
      %v875 = vsel %vm874, 0.0, %v873
      %v876 = vsub.f32 %v870, %v875
      %v877 = vmul.f32 %v876, 1.442695
      %v878 = vpow.pop %v877
      %v879 = vsel %vm816, %v878, 0.0
      %880 = vadd.xlane.f32.xlu0 %v879
      %v881 = vpop.xlane.xlu0 %880
      %vm882 = vcmp.eq.f32.partialorder %v881, 0.0
      %v883 = vsel %vm882, 1.0, %v881
      %v884 = vrcp.pop %v883
      %v885 = vmul.f32 %v878, %v884
      %v886 = vpack.c.bf16 %v885, %v885
      %887 = vrot.lane.b32.xlu0 %v812, 64
      %v888 = vpop.permute.xlu0 %887
      %v890 = vsel %vm816, %v886, 0
      %vm892 = vcmask 1043456
      %v894 = vsel %vm892, %v888, 0
      %896 = vmatprep.subr.bf16.mxu0 0
      %897 = vmatpush1.bf16.msra.mxu0 0
      %898 = vmatprep.subr.bf16.mxu0 0
      %899 = vmatpush1.bf16.msra.mxu0 0
      %900 = vmatprep.subr.bf16.mxu0 0
      %901 = vmatpush1.bf16.msra.mxu0 0
      %902 = vmatprep.subr.bf16.mxu0 0
      %903 = vmatpush1.bf16.msra.mxu0 0
      %904 = vmatprep.subr.bf16.mxu0 0
      %905 = vmatpush1.bf16.msra.mxu0 0
      %906 = vmatprep.subr.bf16.mxu0 0
      %907 = vmatpush1.bf16.msra.mxu0 0
      %908 = vmatprep.subr.bf16.mxu0 0
      %909 = vmatpush1.bf16.msra.mxu0 0
      %910 = vmatprep.subr.bf16.mxu0 0
      %911 = vmatpush1.bf16.msra.mxu0 %v894
      %912 = vmatprep.subr.bf16.mxu0 0
      %913 = vmatpush2.bf16.msra.mxu0 0
      %914 = vmatprep.subr.bf16.mxu0 0
      %915 = vmatpush2.bf16.msra.mxu0 0
      %916 = vmatprep.subr.bf16.mxu0 0
      %917 = vmatpush2.bf16.msra.mxu0 0
      %918 = vmatprep.subr.bf16.mxu0 0
      %919 = vmatpush2.bf16.msra.mxu0 0
      %920 = vmatprep.subr.bf16.mxu0 0
      %921 = vmatpush2.bf16.msra.mxu0 0
      %922 = vmatprep.subr.bf16.mxu0 0
      %923 = vmatpush2.bf16.msra.mxu0 0
      %924 = vmatprep.subr.bf16.mxu0 0
      %925 = vmatpush2.bf16.msra.mxu0 0
      %926 = vmatprep.subr.bf16.mxu0 0
      %927 = vmatpush2.bf16.msra.mxu0 0
      %928 = vmatprep.mubr.bf16.mxu0 0
      %929 = vmatmul.mubr.bf16.gmra.mxu0 %v890
      %v930 = vpop.f32.mrf.mxu0
      %v931 = vadd.f32 0.0, %v930
      %v932 = vpop.f32.mrf.mxu0
      %v933 = vpop.f32.mrf.mxu0
      %v934 = vpop.f32.mrf.mxu0
      %935 = vdwg.mxu0
      %v936 = vpack.c.bf16 %v931, %v931
      %937 = vrot.lane.b32.xlu0 %v812, 120
      %v938 = vpop.permute.xlu0 %937
      %939 = vrot.lane.b32.xlu0 %v812, 88
      %v940 = vpop.permute.xlu0 %939
      %v942 = vsel %vm816, %v938, 0
      %v945 = vsel %vm816, %v940, 0
      %947 = vmatprep.subr.bf16.mxu0 0
      %948 = vmatpush1.bf16.xpose.msra.mxu0 0
      %949 = vmatprep.subr.bf16.mxu0 0
      %950 = vmatpush1.bf16.xpose.msra.mxu0 0
      %951 = vmatprep.subr.bf16.mxu0 0
      %952 = vmatpush1.bf16.xpose.msra.mxu0 0
      %953 = vmatprep.subr.bf16.mxu0 0
      %954 = vmatpush1.bf16.xpose.msra.mxu0 0
      %955 = vmatprep.subr.bf16.mxu0 0
      %956 = vmatpush1.bf16.xpose.msra.mxu0 0
      %957 = vmatprep.subr.bf16.mxu0 0
      %958 = vmatpush1.bf16.xpose.msra.mxu0 0
      %959 = vmatprep.subr.bf16.mxu0 0
      %960 = vmatpush1.bf16.xpose.msra.mxu0 0
      %961 = vmatprep.subr.bf16.mxu0 0
      %962 = vmatpush1.bf16.xpose.msra.mxu0 %v945
      %963 = vmatprep.subr.bf16.mxu0 0
      %964 = vmatpush2.bf16.xpose.msra.mxu0 0
      %965 = vmatprep.subr.bf16.mxu0 0
      %966 = vmatpush2.bf16.xpose.msra.mxu0 0
      %967 = vmatprep.subr.bf16.mxu0 0
      %968 = vmatpush2.bf16.xpose.msra.mxu0 0
      %969 = vmatprep.subr.bf16.mxu0 0
      %970 = vmatpush2.bf16.xpose.msra.mxu0 0
      %971 = vmatprep.subr.bf16.mxu0 0
      %972 = vmatpush2.bf16.xpose.msra.mxu0 0
      %973 = vmatprep.subr.bf16.mxu0 0
      %974 = vmatpush2.bf16.xpose.msra.mxu0 0
      %975 = vmatprep.subr.bf16.mxu0 0
      %976 = vmatpush2.bf16.xpose.msra.mxu0 0
      %977 = vmatprep.subr.bf16.mxu0 0
      %978 = vmatpush2.bf16.xpose.msra.mxu0 0
      %979 = vmatprep.mubr.bf16.mxu0 0
      %980 = vmatmul.mubr.bf16.gmra.mxu0 %v942
      %v981 = vpop.f32.mrf.mxu0
      %v982 = vadd.f32 0.0, %v981
      %v983 = vpop.f32.mrf.mxu0
      %v984 = vpop.f32.mrf.mxu0
      %v985 = vpop.f32.mrf.mxu0
      %986 = vdwg.mxu0
      %v987 = vmul.f32 %v982, 0.35355338
      %v988 = vadd.f32 %v987, %v868
      %v989 = vsel %vm816, %v988, -inf
      %990 = vmax.xlane.f32.xlu0 %v989
      %v991 = vpop.xlane.xlu0 %990
      %vm992 = vcmp.eq.f32.partialorder %v991, -inf
      %v993 = vsel %vm992, 0.0, %v991
      %v994 = vsub.f32 %v988, %v993
      %v995 = vmul.f32 %v994, 1.442695
      %v996 = vpow.pop %v995
      %v997 = vsel %vm816, %v996, 0.0
      %998 = vadd.xlane.f32.xlu0 %v997
      %v999 = vpop.xlane.xlu0 %998
      %vm1000 = vcmp.eq.f32.partialorder %v999, 0.0
      %v1001 = vsel %vm1000, 1.0, %v999
      %v1002 = vrcp.pop %v1001
      %v1003 = vmul.f32 %v996, %v1002
      %v1004 = vpack.c.bf16 %v1003, %v1003
      %1005 = vrot.lane.b32.xlu0 %v812, 56
      %v1006 = vpop.permute.xlu0 %1005
      %v1008 = vsel %vm816, %v1004, 0
      %v1011 = vsel %vm892, %v1006, 0
      %1013 = vmatprep.subr.bf16.mxu0 0
      %1014 = vmatpush1.bf16.msra.mxu0 0
      %1015 = vmatprep.subr.bf16.mxu0 0
      %1016 = vmatpush1.bf16.msra.mxu0 0
      %1017 = vmatprep.subr.bf16.mxu0 0
      %1018 = vmatpush1.bf16.msra.mxu0 0
      %1019 = vmatprep.subr.bf16.mxu0 0
      %1020 = vmatpush1.bf16.msra.mxu0 0
      %1021 = vmatprep.subr.bf16.mxu0 0
      %1022 = vmatpush1.bf16.msra.mxu0 0
      %1023 = vmatprep.subr.bf16.mxu0 0
      %1024 = vmatpush1.bf16.msra.mxu0 0
      %1025 = vmatprep.subr.bf16.mxu0 0
      %1026 = vmatpush1.bf16.msra.mxu0 0
      %1027 = vmatprep.subr.bf16.mxu0 0
      %1028 = vmatpush1.bf16.msra.mxu0 %v1011
      %1029 = vmatprep.subr.bf16.mxu0 0
      %1030 = vmatpush2.bf16.msra.mxu0 0
      %1031 = vmatprep.subr.bf16.mxu0 0
      %1032 = vmatpush2.bf16.msra.mxu0 0
      %1033 = vmatprep.subr.bf16.mxu0 0
      %1034 = vmatpush2.bf16.msra.mxu0 0
      %1035 = vmatprep.subr.bf16.mxu0 0
      %1036 = vmatpush2.bf16.msra.mxu0 0
      %1037 = vmatprep.subr.bf16.mxu0 0
      %1038 = vmatpush2.bf16.msra.mxu0 0
      %1039 = vmatprep.subr.bf16.mxu0 0
      %1040 = vmatpush2.bf16.msra.mxu0 0
      %1041 = vmatprep.subr.bf16.mxu0 0
      %1042 = vmatpush2.bf16.msra.mxu0 0
      %1043 = vmatprep.subr.bf16.mxu0 0
      %1044 = vmatpush2.bf16.msra.mxu0 0
      %1045 = vmatprep.mubr.bf16.mxu0 0
      %1046 = vmatmul.mubr.bf16.gmra.mxu0 %v1008
      %v1047 = vpop.f32.mrf.mxu0
      %v1048 = vadd.f32 0.0, %v1047
      %v1049 = vpop.f32.mrf.mxu0
      %v1050 = vpop.f32.mrf.mxu0
      %v1051 = vpop.f32.mrf.mxu0
      %1052 = vdwg.mxu0
      %v1053 = vpack.c.bf16 %v1048, %v1048
      %v1055 = vsel %vm816, %v1053, 0
      %v1058 = vsel %vm892, %v809, 0
      %1060 = vmatprep.subr.bf16.mxu0 0
      %1061 = vmatpush1.bf16.msra.mxu0 0
      %1062 = vmatprep.subr.bf16.mxu0 0
      %1063 = vmatpush1.bf16.msra.mxu0 0
      %1064 = vmatprep.subr.bf16.mxu0 0
      %1065 = vmatpush1.bf16.msra.mxu0 0
      %1066 = vmatprep.subr.bf16.mxu0 0
      %1067 = vmatpush1.bf16.msra.mxu0 0
      %1068 = vmatprep.subr.bf16.mxu0 0
      %1069 = vmatpush1.bf16.msra.mxu0 0
      %1070 = vmatprep.subr.bf16.mxu0 0
      %1071 = vmatpush1.bf16.msra.mxu0 0
      %1072 = vmatprep.subr.bf16.mxu0 0
      %1073 = vmatpush1.bf16.msra.mxu0 0
      %1074 = vmatprep.subr.bf16.mxu0 0
      %1075 = vmatpush1.bf16.msra.mxu0 %v1058
      %1076 = vmatprep.subr.bf16.mxu0 0
      %1077 = vmatpush2.bf16.msra.mxu0 0
      %1078 = vmatprep.subr.bf16.mxu0 0
      %1079 = vmatpush2.bf16.msra.mxu0 0
      %1080 = vmatprep.subr.bf16.mxu0 0
      %1081 = vmatpush2.bf16.msra.mxu0 0
      %1082 = vmatprep.subr.bf16.mxu0 0
      %1083 = vmatpush2.bf16.msra.mxu0 0
      %1084 = vmatprep.subr.bf16.mxu0 0
      %1085 = vmatpush2.bf16.msra.mxu0 0
      %1086 = vmatprep.subr.bf16.mxu0 0
      %1087 = vmatpush2.bf16.msra.mxu0 0
      %1088 = vmatprep.subr.bf16.mxu0 0
      %1089 = vmatpush2.bf16.msra.mxu0 0
      %1090 = vmatprep.subr.bf16.mxu0 0
      %1091 = vmatpush2.bf16.msra.mxu0 0
      %1092 = vmatprep.mubr.bf16.mxu0 0
      %1093 = vmatmul.mubr.bf16.gmra.mxu0 %v1055
      %v1094 = vpop.f32.mrf.mxu0
      %v1095 = vadd.f32 0.0, %v1094
      %v1096 = vpop.f32.mrf.mxu0
      %v1097 = vpop.f32.mrf.mxu0
      %v1098 = vpop.f32.mrf.mxu0
      %1099 = vdwg.mxu0
      %v1101 = vsel %vm816, %v936, 0
      %v1104 = vsel %vm892, %v808, 0
      %1106 = vmatprep.subr.bf16.mxu0 0
      %1107 = vmatpush1.bf16.msra.mxu0 0
      %1108 = vmatprep.subr.bf16.mxu0 0
      %1109 = vmatpush1.bf16.msra.mxu0 0
      %1110 = vmatprep.subr.bf16.mxu0 0
      %1111 = vmatpush1.bf16.msra.mxu0 0
      %1112 = vmatprep.subr.bf16.mxu0 0
      %1113 = vmatpush1.bf16.msra.mxu0 0
      %1114 = vmatprep.subr.bf16.mxu0 0
      %1115 = vmatpush1.bf16.msra.mxu0 0
      %1116 = vmatprep.subr.bf16.mxu0 0
      %1117 = vmatpush1.bf16.msra.mxu0 0
      %1118 = vmatprep.subr.bf16.mxu0 0
      %1119 = vmatpush1.bf16.msra.mxu0 0
      %1120 = vmatprep.subr.bf16.mxu0 0
      %1121 = vmatpush1.bf16.msra.mxu0 %v1104
      %1122 = vmatprep.subr.bf16.mxu0 0
      %1123 = vmatpush2.bf16.msra.mxu0 0
      %1124 = vmatprep.subr.bf16.mxu0 0
      %1125 = vmatpush2.bf16.msra.mxu0 0
      %1126 = vmatprep.subr.bf16.mxu0 0
      %1127 = vmatpush2.bf16.msra.mxu0 0
      %1128 = vmatprep.subr.bf16.mxu0 0
      %1129 = vmatpush2.bf16.msra.mxu0 0
      %1130 = vmatprep.subr.bf16.mxu0 0
      %1131 = vmatpush2.bf16.msra.mxu0 0
      %1132 = vmatprep.subr.bf16.mxu0 0
      %1133 = vmatpush2.bf16.msra.mxu0 0
      %1134 = vmatprep.subr.bf16.mxu0 0
      %1135 = vmatpush2.bf16.msra.mxu0 0
      %1136 = vmatprep.subr.bf16.mxu0 0
      %1137 = vmatpush2.bf16.msra.mxu0 0
      %1138 = vmatprep.mubr.bf16.mxu0 0
      %1139 = vmatmul.mubr.bf16.gmra.mxu0 %v1101
      %v1140 = vpop.f32.mrf.mxu0
      %v1141 = vadd.f32 %v1095, %v1140
      %v1142 = vpop.f32.mrf.mxu0
      %v1143 = vpop.f32.mrf.mxu0
      %v1144 = vpop.f32.mrf.mxu0
      %1145 = vdwg.mxu0
      %1146 = vrot.lane.b32.xlu0 %v812, 112
      %v1147 = vpop.permute.xlu0 %1146
      %1148 = vrot.lane.b32.xlu0 %v812, 80
      %v1149 = vpop.permute.xlu0 %1148
      %v1151 = vsel %vm816, %v1147, 0
      %v1154 = vsel %vm816, %v1149, 0
      %1156 = vmatprep.subr.bf16.mxu0 0
      %1157 = vmatpush1.bf16.xpose.msra.mxu0 0
      %1158 = vmatprep.subr.bf16.mxu0 0
      %1159 = vmatpush1.bf16.xpose.msra.mxu0 0
      %1160 = vmatprep.subr.bf16.mxu0 0
      %1161 = vmatpush1.bf16.xpose.msra.mxu0 0
      %1162 = vmatprep.subr.bf16.mxu0 0
      %1163 = vmatpush1.bf16.xpose.msra.mxu0 0
      %1164 = vmatprep.subr.bf16.mxu0 0
      %1165 = vmatpush1.bf16.xpose.msra.mxu0 0
      %1166 = vmatprep.subr.bf16.mxu0 0
      %1167 = vmatpush1.bf16.xpose.msra.mxu0 0
      %1168 = vmatprep.subr.bf16.mxu0 0
      %1169 = vmatpush1.bf16.xpose.msra.mxu0 0
      %1170 = vmatprep.subr.bf16.mxu0 0
      %1171 = vmatpush1.bf16.xpose.msra.mxu0 %v1154
      %1172 = vmatprep.subr.bf16.mxu0 0
      %1173 = vmatpush2.bf16.xpose.msra.mxu0 0
      %1174 = vmatprep.subr.bf16.mxu0 0
      %1175 = vmatpush2.bf16.xpose.msra.mxu0 0
      %1176 = vmatprep.subr.bf16.mxu0 0
      %1177 = vmatpush2.bf16.xpose.msra.mxu0 0
      %1178 = vmatprep.subr.bf16.mxu0 0
      %1179 = vmatpush2.bf16.xpose.msra.mxu0 0
      %1180 = vmatprep.subr.bf16.mxu0 0
      %1181 = vmatpush2.bf16.xpose.msra.mxu0 0
      %1182 = vmatprep.subr.bf16.mxu0 0
      %1183 = vmatpush2.bf16.xpose.msra.mxu0 0
      %1184 = vmatprep.subr.bf16.mxu0 0
      %1185 = vmatpush2.bf16.xpose.msra.mxu0 0
      %1186 = vmatprep.subr.bf16.mxu0 0
      %1187 = vmatpush2.bf16.xpose.msra.mxu0 0
      %1188 = vmatprep.mubr.bf16.mxu0 0
      %1189 = vmatmul.mubr.bf16.gmra.mxu0 %v1151
      %v1190 = vpop.f32.mrf.mxu0
      %v1191 = vadd.f32 0.0, %v1190
      %v1192 = vpop.f32.mrf.mxu0
      %v1193 = vpop.f32.mrf.mxu0
      %v1194 = vpop.f32.mrf.mxu0
      %1195 = vdwg.mxu0
      %v1196 = vmul.f32 %v1191, 0.35355338
      %v1197 = vadd.f32 %v1196, %v868
      %v1198 = vsel %vm816, %v1197, -inf
      %1199 = vmax.xlane.f32.xlu0 %v1198
      %v1200 = vpop.xlane.xlu0 %1199
      %vm1201 = vcmp.eq.f32.partialorder %v1200, -inf
      %v1202 = vsel %vm1201, 0.0, %v1200
      %v1203 = vsub.f32 %v1197, %v1202
      %v1204 = vmul.f32 %v1203, 1.442695
      %v1205 = vpow.pop %v1204
      %v1206 = vsel %vm816, %v1205, 0.0
      %1207 = vadd.xlane.f32.xlu0 %v1206
      %v1208 = vpop.xlane.xlu0 %1207
      %vm1209 = vcmp.eq.f32.partialorder %v1208, 0.0
      %v1210 = vsel %vm1209, 1.0, %v1208
      %v1211 = vrcp.pop %v1210
      %v1212 = vmul.f32 %v1205, %v1211
      %v1213 = vpack.c.bf16 %v1212, %v1212
      %1214 = vrot.lane.b32.xlu0 %v812, 48
      %v1215 = vpop.permute.xlu0 %1214
      %v1217 = vsel %vm816, %v1213, 0
      %v1220 = vsel %vm892, %v1215, 0
      %1222 = vmatprep.subr.bf16.mxu0 0
      %1223 = vmatpush1.bf16.msra.mxu0 0
      %1224 = vmatprep.subr.bf16.mxu0 0
      %1225 = vmatpush1.bf16.msra.mxu0 0
      %1226 = vmatprep.subr.bf16.mxu0 0
      %1227 = vmatpush1.bf16.msra.mxu0 0
      %1228 = vmatprep.subr.bf16.mxu0 0
      %1229 = vmatpush1.bf16.msra.mxu0 0
      %1230 = vmatprep.subr.bf16.mxu0 0
      %1231 = vmatpush1.bf16.msra.mxu0 0
      %1232 = vmatprep.subr.bf16.mxu0 0
      %1233 = vmatpush1.bf16.msra.mxu0 0
      %1234 = vmatprep.subr.bf16.mxu0 0
      %1235 = vmatpush1.bf16.msra.mxu0 0
      %1236 = vmatprep.subr.bf16.mxu0 0
      %1237 = vmatpush1.bf16.msra.mxu0 %v1220
      %1238 = vmatprep.subr.bf16.mxu0 0
      %1239 = vmatpush2.bf16.msra.mxu0 0
      %1240 = vmatprep.subr.bf16.mxu0 0
      %1241 = vmatpush2.bf16.msra.mxu0 0
      %1242 = vmatprep.subr.bf16.mxu0 0
      %1243 = vmatpush2.bf16.msra.mxu0 0
      %1244 = vmatprep.subr.bf16.mxu0 0
      %1245 = vmatpush2.bf16.msra.mxu0 0
      %1246 = vmatprep.subr.bf16.mxu0 0
      %1247 = vmatpush2.bf16.msra.mxu0 0
      %1248 = vmatprep.subr.bf16.mxu0 0
      %1249 = vmatpush2.bf16.msra.mxu0 0
      %1250 = vmatprep.subr.bf16.mxu0 0
      %1251 = vmatpush2.bf16.msra.mxu0 0
      %1252 = vmatprep.subr.bf16.mxu0 0
      %1253 = vmatpush2.bf16.msra.mxu0 0
      %1254 = vmatprep.mubr.bf16.mxu0 0
      %1255 = vmatmul.mubr.bf16.gmra.mxu0 %v1217
      %v1256 = vpop.f32.mrf.mxu0
      %v1257 = vadd.f32 0.0, %v1256
      %v1258 = vpop.f32.mrf.mxu0
      %v1259 = vpop.f32.mrf.mxu0
      %v1260 = vpop.f32.mrf.mxu0
      %1261 = vdwg.mxu0
      %v1262 = vpack.c.bf16 %v1257, %v1257
      %v1264 = vsel %vm816, %v1262, 0
      %v1267 = vsel %vm892, %v810, 0
      %1269 = vmatprep.subr.bf16.mxu0 0
      %1270 = vmatpush1.bf16.msra.mxu0 0
      %1271 = vmatprep.subr.bf16.mxu0 0
      %1272 = vmatpush1.bf16.msra.mxu0 0
      %1273 = vmatprep.subr.bf16.mxu0 0
      %1274 = vmatpush1.bf16.msra.mxu0 0
      %1275 = vmatprep.subr.bf16.mxu0 0
      %1276 = vmatpush1.bf16.msra.mxu0 0
      %1277 = vmatprep.subr.bf16.mxu0 0
      %1278 = vmatpush1.bf16.msra.mxu0 0
      %1279 = vmatprep.subr.bf16.mxu0 0
      %1280 = vmatpush1.bf16.msra.mxu0 0
      %1281 = vmatprep.subr.bf16.mxu0 0
      %1282 = vmatpush1.bf16.msra.mxu0 0
      %1283 = vmatprep.subr.bf16.mxu0 0
      %1284 = vmatpush1.bf16.msra.mxu0 %v1267
      %1285 = vmatprep.subr.bf16.mxu0 0
      %1286 = vmatpush2.bf16.msra.mxu0 0
      %1287 = vmatprep.subr.bf16.mxu0 0
      %1288 = vmatpush2.bf16.msra.mxu0 0
      %1289 = vmatprep.subr.bf16.mxu0 0
      %1290 = vmatpush2.bf16.msra.mxu0 0
      %1291 = vmatprep.subr.bf16.mxu0 0
      %1292 = vmatpush2.bf16.msra.mxu0 0
      %1293 = vmatprep.subr.bf16.mxu0 0
      %1294 = vmatpush2.bf16.msra.mxu0 0
      %1295 = vmatprep.subr.bf16.mxu0 0
      %1296 = vmatpush2.bf16.msra.mxu0 0
      %1297 = vmatprep.subr.bf16.mxu0 0
      %1298 = vmatpush2.bf16.msra.mxu0 0
      %1299 = vmatprep.subr.bf16.mxu0 0
      %1300 = vmatpush2.bf16.msra.mxu0 0
      %1301 = vmatprep.mubr.bf16.mxu0 0
      %1302 = vmatmul.mubr.bf16.gmra.mxu0 %v1264
      %v1303 = vpop.f32.mrf.mxu0
      %v1304 = vadd.f32 0.0, %v1303
      %v1305 = vpop.f32.mrf.mxu0
      %v1306 = vpop.f32.mrf.mxu0
      %v1307 = vpop.f32.mrf.mxu0
      %1308 = vdwg.mxu0
      %v1309 = vadd.f32 %v1141, %v1304
      %1310 = vrot.lane.b32.xlu0 %v812, 104
      %v1311 = vpop.permute.xlu0 %1310
      %1312 = vrot.lane.b32.xlu0 %v812, 72
      %v1313 = vpop.permute.xlu0 %1312
      %v1315 = vsel %vm816, %v1311, 0
      %v1318 = vsel %vm816, %v1313, 0
      %1320 = vmatprep.subr.bf16.mxu0 0
      %1321 = vmatpush1.bf16.xpose.msra.mxu0 0
      %1322 = vmatprep.subr.bf16.mxu0 0
      %1323 = vmatpush1.bf16.xpose.msra.mxu0 0
      %1324 = vmatprep.subr.bf16.mxu0 0
      %1325 = vmatpush1.bf16.xpose.msra.mxu0 0
      %1326 = vmatprep.subr.bf16.mxu0 0
      %1327 = vmatpush1.bf16.xpose.msra.mxu0 0
      %1328 = vmatprep.subr.bf16.mxu0 0
      %1329 = vmatpush1.bf16.xpose.msra.mxu0 0
      %1330 = vmatprep.subr.bf16.mxu0 0
      %1331 = vmatpush1.bf16.xpose.msra.mxu0 0
      %1332 = vmatprep.subr.bf16.mxu0 0
      %1333 = vmatpush1.bf16.xpose.msra.mxu0 0
      %1334 = vmatprep.subr.bf16.mxu0 0
      %1335 = vmatpush1.bf16.xpose.msra.mxu0 %v1318
      %1336 = vmatprep.subr.bf16.mxu0 0
      %1337 = vmatpush2.bf16.xpose.msra.mxu0 0
      %1338 = vmatprep.subr.bf16.mxu0 0
      %1339 = vmatpush2.bf16.xpose.msra.mxu0 0
      %1340 = vmatprep.subr.bf16.mxu0 0
      %1341 = vmatpush2.bf16.xpose.msra.mxu0 0
      %1342 = vmatprep.subr.bf16.mxu0 0
      %1343 = vmatpush2.bf16.xpose.msra.mxu0 0
      %1344 = vmatprep.subr.bf16.mxu0 0
      %1345 = vmatpush2.bf16.xpose.msra.mxu0 0
      %1346 = vmatprep.subr.bf16.mxu0 0
      %1347 = vmatpush2.bf16.xpose.msra.mxu0 0
      %1348 = vmatprep.subr.bf16.mxu0 0
      %1349 = vmatpush2.bf16.xpose.msra.mxu0 0
      %1350 = vmatprep.subr.bf16.mxu0 0
      %1351 = vmatpush2.bf16.xpose.msra.mxu0 0
      %1352 = vmatprep.mubr.bf16.mxu0 0
      %1353 = vmatmul.mubr.bf16.gmra.mxu0 %v1315
      %v1354 = vpop.f32.mrf.mxu0
      %v1355 = vadd.f32 0.0, %v1354
      %v1356 = vpop.f32.mrf.mxu0
      %v1357 = vpop.f32.mrf.mxu0
      %v1358 = vpop.f32.mrf.mxu0
      %1359 = vdwg.mxu0
      %v1360 = vmul.f32 %v1355, 0.35355338
      %v1361 = vadd.f32 %v1360, %v868
      %v1362 = vsel %vm816, %v1361, -inf
      %1363 = vmax.xlane.f32.xlu0 %v1362
      %v1364 = vpop.xlane.xlu0 %1363
      %vm1365 = vcmp.eq.f32.partialorder %v1364, -inf
      %v1366 = vsel %vm1365, 0.0, %v1364
      %v1367 = vsub.f32 %v1361, %v1366
      %v1368 = vmul.f32 %v1367, 1.442695
      %v1369 = vpow.pop %v1368
      %v1370 = vsel %vm816, %v1369, 0.0
      %1371 = vadd.xlane.f32.xlu0 %v1370
      %v1372 = vpop.xlane.xlu0 %1371
      %vm1373 = vcmp.eq.f32.partialorder %v1372, 0.0
      %v1374 = vsel %vm1373, 1.0, %v1372
      %v1375 = vrcp.pop %v1374
      %v1376 = vmul.f32 %v1369, %v1375
      %v1377 = vpack.c.bf16 %v1376, %v1376
      %1378 = vrot.lane.b32.xlu0 %v812, 40
      %v1379 = vpop.permute.xlu0 %1378
      %v1381 = vsel %vm816, %v1377, 0
      %v1384 = vsel %vm892, %v1379, 0
      %1386 = vmatprep.subr.bf16.mxu0 0
      %1387 = vmatpush1.bf16.msra.mxu0 0
      %1388 = vmatprep.subr.bf16.mxu0 0
      %1389 = vmatpush1.bf16.msra.mxu0 0
      %1390 = vmatprep.subr.bf16.mxu0 0
      %1391 = vmatpush1.bf16.msra.mxu0 0
      %1392 = vmatprep.subr.bf16.mxu0 0
      %1393 = vmatpush1.bf16.msra.mxu0 0
      %1394 = vmatprep.subr.bf16.mxu0 0
      %1395 = vmatpush1.bf16.msra.mxu0 0
      %1396 = vmatprep.subr.bf16.mxu0 0
      %1397 = vmatpush1.bf16.msra.mxu0 0
      %1398 = vmatprep.subr.bf16.mxu0 0
      %1399 = vmatpush1.bf16.msra.mxu0 0
      %1400 = vmatprep.subr.bf16.mxu0 0
      %1401 = vmatpush1.bf16.msra.mxu0 %v1384
      %1402 = vmatprep.subr.bf16.mxu0 0
      %1403 = vmatpush2.bf16.msra.mxu0 0
      %1404 = vmatprep.subr.bf16.mxu0 0
      %1405 = vmatpush2.bf16.msra.mxu0 0
      %1406 = vmatprep.subr.bf16.mxu0 0
      %1407 = vmatpush2.bf16.msra.mxu0 0
      %1408 = vmatprep.subr.bf16.mxu0 0
      %1409 = vmatpush2.bf16.msra.mxu0 0
      %1410 = vmatprep.subr.bf16.mxu0 0
      %1411 = vmatpush2.bf16.msra.mxu0 0
      %1412 = vmatprep.subr.bf16.mxu0 0
      %1413 = vmatpush2.bf16.msra.mxu0 0
      %1414 = vmatprep.subr.bf16.mxu0 0
      %1415 = vmatpush2.bf16.msra.mxu0 0
      %1416 = vmatprep.subr.bf16.mxu0 0
      %1417 = vmatpush2.bf16.msra.mxu0 0
      %1418 = vmatprep.mubr.bf16.mxu0 0
      %1419 = vmatmul.mubr.bf16.gmra.mxu0 %v1381
      %v1420 = vpop.f32.mrf.mxu0
      %v1421 = vadd.f32 0.0, %v1420
      %v1422 = vpop.f32.mrf.mxu0
      %v1423 = vpop.f32.mrf.mxu0
      %v1424 = vpop.f32.mrf.mxu0
      %1425 = vdwg.mxu0
      %v1426 = vpack.c.bf16 %v1421, %v1421
      %v1428 = vsel %vm816, %v1426, 0
      %v1431 = vsel %vm892, %v811, 0
      %1433 = vmatprep.subr.bf16.mxu0 0
      %1434 = vmatpush1.bf16.msra.mxu0 0
      %1435 = vmatprep.subr.bf16.mxu0 0
      %1436 = vmatpush1.bf16.msra.mxu0 0
      %1437 = vmatprep.subr.bf16.mxu0 0
      %1438 = vmatpush1.bf16.msra.mxu0 0
      %1439 = vmatprep.subr.bf16.mxu0 0
      %1440 = vmatpush1.bf16.msra.mxu0 0
      %1441 = vmatprep.subr.bf16.mxu0 0
      %1442 = vmatpush1.bf16.msra.mxu0 0
      %1443 = vmatprep.subr.bf16.mxu0 0
      %1444 = vmatpush1.bf16.msra.mxu0 0
      %1445 = vmatprep.subr.bf16.mxu0 0
      %1446 = vmatpush1.bf16.msra.mxu0 0
      %1447 = vmatprep.subr.bf16.mxu0 0
      %1448 = vmatpush1.bf16.msra.mxu0 %v1431
      %1449 = vmatprep.subr.bf16.mxu0 0
      %1450 = vmatpush2.bf16.msra.mxu0 0
      %1451 = vmatprep.subr.bf16.mxu0 0
      %1452 = vmatpush2.bf16.msra.mxu0 0
      %1453 = vmatprep.subr.bf16.mxu0 0
      %1454 = vmatpush2.bf16.msra.mxu0 0
      %1455 = vmatprep.subr.bf16.mxu0 0
      %1456 = vmatpush2.bf16.msra.mxu0 0
      %1457 = vmatprep.subr.bf16.mxu0 0
      %1458 = vmatpush2.bf16.msra.mxu0 0
      %1459 = vmatprep.subr.bf16.mxu0 0
      %1460 = vmatpush2.bf16.msra.mxu0 0
      %1461 = vmatprep.subr.bf16.mxu0 0
      %1462 = vmatpush2.bf16.msra.mxu0 0
      %1463 = vmatprep.subr.bf16.mxu0 0
      %1464 = vmatpush2.bf16.msra.mxu0 0
      %1465 = vmatprep.mubr.bf16.mxu0 0
      %1466 = vmatmul.mubr.bf16.gmra.mxu0 %v1428
      %v1467 = vpop.f32.mrf.mxu0
      %v1468 = vadd.f32 0.0, %v1467
      %v1469 = vpop.f32.mrf.mxu0
      %v1470 = vpop.f32.mrf.mxu0
      %v1471 = vpop.f32.mrf.mxu0
      %1472 = vdwg.mxu0
      %v1473 = vadd.f32 %v1309, %v1468
      %v1474 = vld [vmem:[%s6] sm:$0x1]
      %v1476 = vlaneseq
      %v1477 = vshrl.u32 %v1476, 7
      %v1478 = vsub.s32 0, %v1477
      %v1479 = vrot.slane %v1474, %v1478
      %v1481 = vadd.f32 %v1473, %v1479
      %v1482 = vadd.f32 %v739, %v1481
      %v1483 = vld [vmem:[%s7] sm:$0x1]
      %v1484 = vld [vmem:[%s8] sm:$0x1]
      %v1485 = vsel %vm764, %v1482, 0.0
      %1486 = vadd.xlane.f32.xlu0 %v1485
      %v1487 = vpop.xlane.xlu0 %1486
      %v1488 = vrcp.pop 32.0
      %v1489 = vmul.f32 %v1487, %v1488
      %v1490 = vsub.f32 %v1482, %v1489
      %v1491 = vmul.f32 %v1490, %v1490
      %v1492 = vsel %vm764, %v1491, 0.0
      %1493 = vadd.xlane.f32.xlu0 %v1492
      %v1494 = vpop.xlane.xlu0 %1493
      %v1495 = vmul.f32 %v1494, %v1488
      %v1496 = vadd.f32 %v1495, 1e-05
      %v1497 = vrsqrt.pop %v1496
      %v1498 = vmul.f32 %v1490, %v1497
      %v1500 = vlaneseq
      %v1501 = vshrl.u32 %v1500, 7
      %v1502 = vsub.s32 0, %v1501
      %v1503 = vrot.slane %v1483, %v1502
      %v1505 = vmul.f32 %v1498, %v1503
      %v1507 = vlaneseq
      %v1508 = vshrl.u32 %v1507, 7
      %v1509 = vsub.s32 0, %v1508
      %v1510 = vrot.slane %v1484, %v1509
      %v1512 = vadd.f32 %v1505, %v1510
      %v1513 = vpack.c.bf16 %v1512, %v1512
      %v1514 = vld [vmem:[%s9] sm:$0xf]
      %v1515 = vld [vmem:[%s9 + $0x4] sm:$0xf]
      %v1516 = vld [vmem:[%s9 + $0x8] sm:$0xf]
      %v1517 = vld [vmem:[%s9 + $0xc] sm:$0xf]
      %v1518 = vld [vmem:[%s10] sm:$0x1]
      %v1520 = vlaneseq
      %v1521 = vshrl.u32 %v1520, 7
      %v1522 = vsub.s32 0, %v1521
      %v1523 = vrot.slane %v1518, %v1522
      %v1529 = vunpack.c.l.b16 %v1514
      %v1530 = vunpack.c.l.b16 %v1515
      %v1531 = vunpack.c.l.b16 %v1516
      %v1532 = vunpack.c.l.b16 %v1517
      %v1533 = vpack.c.b16 %v1530, %v1529
      %v1534 = vpack.c.b16 %v1532, %v1531
      %v1538 = vsel %vm764, %v1513, 0
      %1540 = vmatprep.subr.bf16.mxu0 0
      %1541 = vmatpush1.bf16.msra.mxu0 0
      %1542 = vmatprep.subr.bf16.mxu0 0
      %1543 = vmatpush1.bf16.msra.mxu0 0
      %1544 = vmatprep.subr.bf16.mxu0 0
      %1545 = vmatpush1.bf16.msra.mxu0 0
      %1546 = vmatprep.subr.bf16.mxu0 0
      %1547 = vmatpush1.bf16.msra.mxu0 0
      %1548 = vmatprep.subr.bf16.mxu0 0
      %1549 = vmatpush1.bf16.msra.mxu0 0
      %1550 = vmatprep.subr.bf16.mxu0 0
      %1551 = vmatpush1.bf16.msra.mxu0 0
      %1552 = vmatprep.subr.bf16.mxu0 0
      %1553 = vmatpush1.bf16.msra.mxu0 %v1534
      %1554 = vmatprep.subr.bf16.mxu0 0
      %1555 = vmatpush1.bf16.msra.mxu0 %v1533
      %1556 = vmatprep.subr.bf16.mxu0 0
      %1557 = vmatpush2.bf16.msra.mxu0 0
      %1558 = vmatprep.subr.bf16.mxu0 0
      %1559 = vmatpush2.bf16.msra.mxu0 0
      %1560 = vmatprep.subr.bf16.mxu0 0
      %1561 = vmatpush2.bf16.msra.mxu0 0
      %1562 = vmatprep.subr.bf16.mxu0 0
      %1563 = vmatpush2.bf16.msra.mxu0 0
      %1564 = vmatprep.subr.bf16.mxu0 0
      %1565 = vmatpush2.bf16.msra.mxu0 0
      %1566 = vmatprep.subr.bf16.mxu0 0
      %1567 = vmatpush2.bf16.msra.mxu0 0
      %1568 = vmatprep.subr.bf16.mxu0 0
      %1569 = vmatpush2.bf16.msra.mxu0 0
      %1570 = vmatprep.subr.bf16.mxu0 0
      %1571 = vmatpush2.bf16.msra.mxu0 0
      %1572 = vmatprep.mubr.bf16.mxu0 0
      %1573 = vmatmul.mubr.bf16.gmra.mxu0 %v1538
      %v1574 = vpop.f32.mrf.mxu0
      %v1575 = vadd.f32 %v1523, %v1574
      %v1576 = vpop.f32.mrf.mxu0
      %v1577 = vpop.f32.mrf.mxu0
      %v1578 = vpop.f32.mrf.mxu0
      %1579 = vdwg.mxu0
      %v1580 = vld [vmem:[%s729] sm:$0xf]
      %v1581 = vld [vmem:[%s11] sm:$0xf]
      %v1582 = vld [vmem:[%s11 + $0x4] sm:$0xf]
      %v1583 = vld [vmem:[%s11 + $0x8] sm:$0xf]
      %v1584 = vld [vmem:[%s11 + $0xc] sm:$0xf]
      %v1585 = vld [vmem:[%s12] sm:$0x1]
      %v1587 = vlaneseq
      %v1588 = vshrl.u32 %v1587, 7
      %v1589 = vsub.s32 0, %v1588
      %v1590 = vrot.slane %v1585, %v1589
      %v1596 = vunpack.c.l.b16 %v1581
      %v1597 = vunpack.c.l.b16 %v1582
      %v1598 = vunpack.c.l.b16 %v1583
      %v1599 = vunpack.c.l.b16 %v1584
      %v1600 = vpack.c.b16 %v1597, %v1596
      %v1601 = vpack.c.b16 %v1599, %v1598
      %v1605 = vsel %vm764, %v1580, 0
      %1607 = vmatprep.subr.bf16.mxu0 0
      %1608 = vmatpush1.bf16.msra.mxu0 0
      %1609 = vmatprep.subr.bf16.mxu0 0
      %1610 = vmatpush1.bf16.msra.mxu0 0
      %1611 = vmatprep.subr.bf16.mxu0 0
      %1612 = vmatpush1.bf16.msra.mxu0 0
      %1613 = vmatprep.subr.bf16.mxu0 0
      %1614 = vmatpush1.bf16.msra.mxu0 0
      %1615 = vmatprep.subr.bf16.mxu0 0
      %1616 = vmatpush1.bf16.msra.mxu0 0
      %1617 = vmatprep.subr.bf16.mxu0 0
      %1618 = vmatpush1.bf16.msra.mxu0 0
      %1619 = vmatprep.subr.bf16.mxu0 0
      %1620 = vmatpush1.bf16.msra.mxu0 %v1601
      %1621 = vmatprep.subr.bf16.mxu0 0
      %1622 = vmatpush1.bf16.msra.mxu0 %v1600
      %1623 = vmatprep.subr.bf16.mxu0 0
      %1624 = vmatpush2.bf16.msra.mxu0 0
      %1625 = vmatprep.subr.bf16.mxu0 0
      %1626 = vmatpush2.bf16.msra.mxu0 0
      %1627 = vmatprep.subr.bf16.mxu0 0
      %1628 = vmatpush2.bf16.msra.mxu0 0
      %1629 = vmatprep.subr.bf16.mxu0 0
      %1630 = vmatpush2.bf16.msra.mxu0 0
      %1631 = vmatprep.subr.bf16.mxu0 0
      %1632 = vmatpush2.bf16.msra.mxu0 0
      %1633 = vmatprep.subr.bf16.mxu0 0
      %1634 = vmatpush2.bf16.msra.mxu0 0
      %1635 = vmatprep.subr.bf16.mxu0 0
      %1636 = vmatpush2.bf16.msra.mxu0 0
      %1637 = vmatprep.subr.bf16.mxu0 0
      %1638 = vmatpush2.bf16.msra.mxu0 0
      %1639 = vmatprep.mubr.bf16.mxu0 0
      %1640 = vmatmul.mubr.bf16.gmra.mxu0 %v1605
      %v1641 = vpop.f32.mrf.mxu0
      %v1642 = vadd.f32 %v1590, %v1641
      %v1643 = vpop.f32.mrf.mxu0
      %v1644 = vpop.f32.mrf.mxu0
      %v1645 = vpop.f32.mrf.mxu0
      %1646 = vdwg.mxu0
      %v1647 = vld [vmem:[%s13] sm:$0xf]
      %v1648 = vld [vmem:[%s13 + $0x4] sm:$0xf]
      %v1649 = vld [vmem:[%s13 + $0x8] sm:$0xf]
      %v1650 = vld [vmem:[%s13 + $0xc] sm:$0xf]
      %v1651 = vpack.c.bf16 %v1575, %v1575
      %v1652 = vpack.c.bf16 %v1642, %v1642
      %v1654 = vsel %vm816, %v1651, 0
      %v1657 = vsel %vm816, %v1652, 0
      %1659 = vmatprep.subr.bf16.mxu0 0
      %1660 = vmatpush1.bf16.xpose.msra.mxu0 0
      %1661 = vmatprep.subr.bf16.mxu0 0
      %1662 = vmatpush1.bf16.xpose.msra.mxu0 0
      %1663 = vmatprep.subr.bf16.mxu0 0
      %1664 = vmatpush1.bf16.xpose.msra.mxu0 0
      %1665 = vmatprep.subr.bf16.mxu0 0
      %1666 = vmatpush1.bf16.xpose.msra.mxu0 0
      %1667 = vmatprep.subr.bf16.mxu0 0
      %1668 = vmatpush1.bf16.xpose.msra.mxu0 0
      %1669 = vmatprep.subr.bf16.mxu0 0
      %1670 = vmatpush1.bf16.xpose.msra.mxu0 0
      %1671 = vmatprep.subr.bf16.mxu0 0
      %1672 = vmatpush1.bf16.xpose.msra.mxu0 0
      %1673 = vmatprep.subr.bf16.mxu0 0
      %1674 = vmatpush1.bf16.xpose.msra.mxu0 %v1657
      %1675 = vmatprep.subr.bf16.mxu0 0
      %1676 = vmatpush2.bf16.xpose.msra.mxu0 0
      %1677 = vmatprep.subr.bf16.mxu0 0
      %1678 = vmatpush2.bf16.xpose.msra.mxu0 0
      %1679 = vmatprep.subr.bf16.mxu0 0
      %1680 = vmatpush2.bf16.xpose.msra.mxu0 0
      %1681 = vmatprep.subr.bf16.mxu0 0
      %1682 = vmatpush2.bf16.xpose.msra.mxu0 0
      %1683 = vmatprep.subr.bf16.mxu0 0
      %1684 = vmatpush2.bf16.xpose.msra.mxu0 0
      %1685 = vmatprep.subr.bf16.mxu0 0
      %1686 = vmatpush2.bf16.xpose.msra.mxu0 0
      %1687 = vmatprep.subr.bf16.mxu0 0
      %1688 = vmatpush2.bf16.xpose.msra.mxu0 0
      %1689 = vmatprep.subr.bf16.mxu0 0
      %1690 = vmatpush2.bf16.xpose.msra.mxu0 0
      %1691 = vmatprep.mubr.bf16.mxu0 0
      %1692 = vmatmul.mubr.bf16.gmra.mxu0 %v1654
      %v1693 = vpop.f32.mrf.mxu0
      %v1694 = vadd.f32 0.0, %v1693
      %v1695 = vpop.f32.mrf.mxu0
      %v1696 = vpop.f32.mrf.mxu0
      %v1697 = vpop.f32.mrf.mxu0
      %1698 = vdwg.mxu0
      %v1699 = vmul.f32 %v1694, 0.35355338
      %v1700 = vsel %vm816, %v1699, -inf
      %1701 = vmax.xlane.f32.xlu0 %v1700
      %v1702 = vpop.xlane.xlu0 %1701
      %vm1703 = vcmp.eq.f32.partialorder %v1702, -inf
      %v1704 = vsel %vm1703, 0.0, %v1702
      %v1705 = vsub.f32 %v1699, %v1704
      %v1706 = vmul.f32 %v1705, 1.442695
      %v1707 = vpow.pop %v1706
      %v1708 = vsel %vm816, %v1707, 0.0
      %1709 = vadd.xlane.f32.xlu0 %v1708
      %v1710 = vpop.xlane.xlu0 %1709
      %vm1711 = vcmp.eq.f32.partialorder %v1710, 0.0
      %v1712 = vsel %vm1711, 1.0, %v1710
      %v1713 = vrcp.pop %v1712
      %v1714 = vmul.f32 %v1707, %v1713
      %v1715 = vpack.c.bf16 %v1714, %v1714
      %1717 = vrot.lane.b32.xlu0 %v1652, 96
      %v1718 = vpop.permute.xlu0 %1717
      %v1720 = vsel %vm816, %v1715, 0
      %v1723 = vsel %vm892, %v1718, 0
      %1725 = vmatprep.subr.bf16.mxu0 0
      %1726 = vmatpush1.bf16.msra.mxu0 0
      %1727 = vmatprep.subr.bf16.mxu0 0
      %1728 = vmatpush1.bf16.msra.mxu0 0
      %1729 = vmatprep.subr.bf16.mxu0 0
      %1730 = vmatpush1.bf16.msra.mxu0 0
      %1731 = vmatprep.subr.bf16.mxu0 0
      %1732 = vmatpush1.bf16.msra.mxu0 0
      %1733 = vmatprep.subr.bf16.mxu0 0
      %1734 = vmatpush1.bf16.msra.mxu0 0
      %1735 = vmatprep.subr.bf16.mxu0 0
      %1736 = vmatpush1.bf16.msra.mxu0 0
      %1737 = vmatprep.subr.bf16.mxu0 0
      %1738 = vmatpush1.bf16.msra.mxu0 0
      %1739 = vmatprep.subr.bf16.mxu0 0
      %1740 = vmatpush1.bf16.msra.mxu0 %v1723
      %1741 = vmatprep.subr.bf16.mxu0 0
      %1742 = vmatpush2.bf16.msra.mxu0 0
      %1743 = vmatprep.subr.bf16.mxu0 0
      %1744 = vmatpush2.bf16.msra.mxu0 0
      %1745 = vmatprep.subr.bf16.mxu0 0
      %1746 = vmatpush2.bf16.msra.mxu0 0
      %1747 = vmatprep.subr.bf16.mxu0 0
      %1748 = vmatpush2.bf16.msra.mxu0 0
      %1749 = vmatprep.subr.bf16.mxu0 0
      %1750 = vmatpush2.bf16.msra.mxu0 0
      %1751 = vmatprep.subr.bf16.mxu0 0
      %1752 = vmatpush2.bf16.msra.mxu0 0
      %1753 = vmatprep.subr.bf16.mxu0 0
      %1754 = vmatpush2.bf16.msra.mxu0 0
      %1755 = vmatprep.subr.bf16.mxu0 0
      %1756 = vmatpush2.bf16.msra.mxu0 0
      %1757 = vmatprep.mubr.bf16.mxu0 0
      %1758 = vmatmul.mubr.bf16.gmra.mxu0 %v1720
      %v1759 = vpop.f32.mrf.mxu0
      %v1760 = vadd.f32 0.0, %v1759
      %v1761 = vpop.f32.mrf.mxu0
      %v1762 = vpop.f32.mrf.mxu0
      %v1763 = vpop.f32.mrf.mxu0
      %1764 = vdwg.mxu0
      %v1765 = vpack.c.bf16 %v1760, %v1760
      %1767 = vrot.lane.b32.xlu0 %v1651, 120
      %v1768 = vpop.permute.xlu0 %1767
      %1769 = vrot.lane.b32.xlu0 %v1652, 120
      %v1770 = vpop.permute.xlu0 %1769
      %v1772 = vsel %vm816, %v1768, 0
      %v1775 = vsel %vm816, %v1770, 0
      %1777 = vmatprep.subr.bf16.mxu0 0
      %1778 = vmatpush1.bf16.xpose.msra.mxu0 0
      %1779 = vmatprep.subr.bf16.mxu0 0
      %1780 = vmatpush1.bf16.xpose.msra.mxu0 0
      %1781 = vmatprep.subr.bf16.mxu0 0
      %1782 = vmatpush1.bf16.xpose.msra.mxu0 0
      %1783 = vmatprep.subr.bf16.mxu0 0
      %1784 = vmatpush1.bf16.xpose.msra.mxu0 0
      %1785 = vmatprep.subr.bf16.mxu0 0
      %1786 = vmatpush1.bf16.xpose.msra.mxu0 0
      %1787 = vmatprep.subr.bf16.mxu0 0
      %1788 = vmatpush1.bf16.xpose.msra.mxu0 0
      %1789 = vmatprep.subr.bf16.mxu0 0
      %1790 = vmatpush1.bf16.xpose.msra.mxu0 0
      %1791 = vmatprep.subr.bf16.mxu0 0
      %1792 = vmatpush1.bf16.xpose.msra.mxu0 %v1775
      %1793 = vmatprep.subr.bf16.mxu0 0
      %1794 = vmatpush2.bf16.xpose.msra.mxu0 0
      %1795 = vmatprep.subr.bf16.mxu0 0
      %1796 = vmatpush2.bf16.xpose.msra.mxu0 0
      %1797 = vmatprep.subr.bf16.mxu0 0
      %1798 = vmatpush2.bf16.xpose.msra.mxu0 0
      %1799 = vmatprep.subr.bf16.mxu0 0
      %1800 = vmatpush2.bf16.xpose.msra.mxu0 0
      %1801 = vmatprep.subr.bf16.mxu0 0
      %1802 = vmatpush2.bf16.xpose.msra.mxu0 0
      %1803 = vmatprep.subr.bf16.mxu0 0
      %1804 = vmatpush2.bf16.xpose.msra.mxu0 0
      %1805 = vmatprep.subr.bf16.mxu0 0
      %1806 = vmatpush2.bf16.xpose.msra.mxu0 0
      %1807 = vmatprep.subr.bf16.mxu0 0
      %1808 = vmatpush2.bf16.xpose.msra.mxu0 0
      %1809 = vmatprep.mubr.bf16.mxu0 0
      %1810 = vmatmul.mubr.bf16.gmra.mxu0 %v1772
      %v1811 = vpop.f32.mrf.mxu0
      %v1812 = vadd.f32 0.0, %v1811
      %v1813 = vpop.f32.mrf.mxu0
      %v1814 = vpop.f32.mrf.mxu0
      %v1815 = vpop.f32.mrf.mxu0
      %1816 = vdwg.mxu0
      %v1817 = vmul.f32 %v1812, 0.35355338
      %v1818 = vsel %vm816, %v1817, -inf
      %1819 = vmax.xlane.f32.xlu0 %v1818
      %v1820 = vpop.xlane.xlu0 %1819
      %vm1821 = vcmp.eq.f32.partialorder %v1820, -inf
      %v1822 = vsel %vm1821, 0.0, %v1820
      %v1823 = vsub.f32 %v1817, %v1822
      %v1824 = vmul.f32 %v1823, 1.442695
      %v1825 = vpow.pop %v1824
      %v1826 = vsel %vm816, %v1825, 0.0
      %1827 = vadd.xlane.f32.xlu0 %v1826
      %v1828 = vpop.xlane.xlu0 %1827
      %vm1829 = vcmp.eq.f32.partialorder %v1828, 0.0
      %v1830 = vsel %vm1829, 1.0, %v1828
      %v1831 = vrcp.pop %v1830
      %v1832 = vmul.f32 %v1825, %v1831
      %v1833 = vpack.c.bf16 %v1832, %v1832
      %1834 = vrot.lane.b32.xlu0 %v1652, 88
      %v1835 = vpop.permute.xlu0 %1834
      %v1837 = vsel %vm816, %v1833, 0
      %v1840 = vsel %vm892, %v1835, 0
      %1842 = vmatprep.subr.bf16.mxu0 0
      %1843 = vmatpush1.bf16.msra.mxu0 0
      %1844 = vmatprep.subr.bf16.mxu0 0
      %1845 = vmatpush1.bf16.msra.mxu0 0
      %1846 = vmatprep.subr.bf16.mxu0 0
      %1847 = vmatpush1.bf16.msra.mxu0 0
      %1848 = vmatprep.subr.bf16.mxu0 0
      %1849 = vmatpush1.bf16.msra.mxu0 0
      %1850 = vmatprep.subr.bf16.mxu0 0
      %1851 = vmatpush1.bf16.msra.mxu0 0
      %1852 = vmatprep.subr.bf16.mxu0 0
      %1853 = vmatpush1.bf16.msra.mxu0 0
      %1854 = vmatprep.subr.bf16.mxu0 0
      %1855 = vmatpush1.bf16.msra.mxu0 0
      %1856 = vmatprep.subr.bf16.mxu0 0
      %1857 = vmatpush1.bf16.msra.mxu0 %v1840
      %1858 = vmatprep.subr.bf16.mxu0 0
      %1859 = vmatpush2.bf16.msra.mxu0 0
      %1860 = vmatprep.subr.bf16.mxu0 0
      %1861 = vmatpush2.bf16.msra.mxu0 0
      %1862 = vmatprep.subr.bf16.mxu0 0
      %1863 = vmatpush2.bf16.msra.mxu0 0
      %1864 = vmatprep.subr.bf16.mxu0 0
      %1865 = vmatpush2.bf16.msra.mxu0 0
      %1866 = vmatprep.subr.bf16.mxu0 0
      %1867 = vmatpush2.bf16.msra.mxu0 0
      %1868 = vmatprep.subr.bf16.mxu0 0
      %1869 = vmatpush2.bf16.msra.mxu0 0
      %1870 = vmatprep.subr.bf16.mxu0 0
      %1871 = vmatpush2.bf16.msra.mxu0 0
      %1872 = vmatprep.subr.bf16.mxu0 0
      %1873 = vmatpush2.bf16.msra.mxu0 0
      %1874 = vmatprep.mubr.bf16.mxu0 0
      %1875 = vmatmul.mubr.bf16.gmra.mxu0 %v1837
      %v1876 = vpop.f32.mrf.mxu0
      %v1877 = vadd.f32 0.0, %v1876
      %v1878 = vpop.f32.mrf.mxu0
      %v1879 = vpop.f32.mrf.mxu0
      %v1880 = vpop.f32.mrf.mxu0
      %1881 = vdwg.mxu0
      %v1882 = vpack.c.bf16 %v1877, %v1877
      %v1884 = vsel %vm816, %v1882, 0
      %v1887 = vsel %vm892, %v1648, 0
      %1889 = vmatprep.subr.bf16.mxu0 0
      %1890 = vmatpush1.bf16.msra.mxu0 0
      %1891 = vmatprep.subr.bf16.mxu0 0
      %1892 = vmatpush1.bf16.msra.mxu0 0
      %1893 = vmatprep.subr.bf16.mxu0 0
      %1894 = vmatpush1.bf16.msra.mxu0 0
      %1895 = vmatprep.subr.bf16.mxu0 0
      %1896 = vmatpush1.bf16.msra.mxu0 0
      %1897 = vmatprep.subr.bf16.mxu0 0
      %1898 = vmatpush1.bf16.msra.mxu0 0
      %1899 = vmatprep.subr.bf16.mxu0 0
      %1900 = vmatpush1.bf16.msra.mxu0 0
      %1901 = vmatprep.subr.bf16.mxu0 0
      %1902 = vmatpush1.bf16.msra.mxu0 0
      %1903 = vmatprep.subr.bf16.mxu0 0
      %1904 = vmatpush1.bf16.msra.mxu0 %v1887
      %1905 = vmatprep.subr.bf16.mxu0 0
      %1906 = vmatpush2.bf16.msra.mxu0 0
      %1907 = vmatprep.subr.bf16.mxu0 0
      %1908 = vmatpush2.bf16.msra.mxu0 0
      %1909 = vmatprep.subr.bf16.mxu0 0
      %1910 = vmatpush2.bf16.msra.mxu0 0
      %1911 = vmatprep.subr.bf16.mxu0 0
      %1912 = vmatpush2.bf16.msra.mxu0 0
      %1913 = vmatprep.subr.bf16.mxu0 0
      %1914 = vmatpush2.bf16.msra.mxu0 0
      %1915 = vmatprep.subr.bf16.mxu0 0
      %1916 = vmatpush2.bf16.msra.mxu0 0
      %1917 = vmatprep.subr.bf16.mxu0 0
      %1918 = vmatpush2.bf16.msra.mxu0 0
      %1919 = vmatprep.subr.bf16.mxu0 0
      %1920 = vmatpush2.bf16.msra.mxu0 0
      %1921 = vmatprep.mubr.bf16.mxu0 0
      %1922 = vmatmul.mubr.bf16.gmra.mxu0 %v1884
      %v1923 = vpop.f32.mrf.mxu0
      %v1924 = vadd.f32 0.0, %v1923
      %v1925 = vpop.f32.mrf.mxu0
      %v1926 = vpop.f32.mrf.mxu0
      %v1927 = vpop.f32.mrf.mxu0
      %1928 = vdwg.mxu0
      %v1930 = vsel %vm816, %v1765, 0
      %v1933 = vsel %vm892, %v1647, 0
      %1935 = vmatprep.subr.bf16.mxu0 0
      %1936 = vmatpush1.bf16.msra.mxu0 0
      %1937 = vmatprep.subr.bf16.mxu0 0
      %1938 = vmatpush1.bf16.msra.mxu0 0
      %1939 = vmatprep.subr.bf16.mxu0 0
      %1940 = vmatpush1.bf16.msra.mxu0 0
      %1941 = vmatprep.subr.bf16.mxu0 0
      %1942 = vmatpush1.bf16.msra.mxu0 0
      %1943 = vmatprep.subr.bf16.mxu0 0
      %1944 = vmatpush1.bf16.msra.mxu0 0
      %1945 = vmatprep.subr.bf16.mxu0 0
      %1946 = vmatpush1.bf16.msra.mxu0 0
      %1947 = vmatprep.subr.bf16.mxu0 0
      %1948 = vmatpush1.bf16.msra.mxu0 0
      %1949 = vmatprep.subr.bf16.mxu0 0
      %1950 = vmatpush1.bf16.msra.mxu0 %v1933
      %1951 = vmatprep.subr.bf16.mxu0 0
      %1952 = vmatpush2.bf16.msra.mxu0 0
      %1953 = vmatprep.subr.bf16.mxu0 0
      %1954 = vmatpush2.bf16.msra.mxu0 0
      %1955 = vmatprep.subr.bf16.mxu0 0
      %1956 = vmatpush2.bf16.msra.mxu0 0
      %1957 = vmatprep.subr.bf16.mxu0 0
      %1958 = vmatpush2.bf16.msra.mxu0 0
      %1959 = vmatprep.subr.bf16.mxu0 0
      %1960 = vmatpush2.bf16.msra.mxu0 0
      %1961 = vmatprep.subr.bf16.mxu0 0
      %1962 = vmatpush2.bf16.msra.mxu0 0
      %1963 = vmatprep.subr.bf16.mxu0 0
      %1964 = vmatpush2.bf16.msra.mxu0 0
      %1965 = vmatprep.subr.bf16.mxu0 0
      %1966 = vmatpush2.bf16.msra.mxu0 0
      %1967 = vmatprep.mubr.bf16.mxu0 0
      %1968 = vmatmul.mubr.bf16.gmra.mxu0 %v1930
      %v1969 = vpop.f32.mrf.mxu0
      %v1970 = vadd.f32 %v1924, %v1969
      %v1971 = vpop.f32.mrf.mxu0
      %v1972 = vpop.f32.mrf.mxu0
      %v1973 = vpop.f32.mrf.mxu0
      %1974 = vdwg.mxu0
      %1975 = vrot.lane.b32.xlu0 %v1651, 112
      %v1976 = vpop.permute.xlu0 %1975
      %1977 = vrot.lane.b32.xlu0 %v1652, 112
      %v1978 = vpop.permute.xlu0 %1977
      %v1980 = vsel %vm816, %v1976, 0
      %v1983 = vsel %vm816, %v1978, 0
      %1985 = vmatprep.subr.bf16.mxu0 0
      %1986 = vmatpush1.bf16.xpose.msra.mxu0 0
      %1987 = vmatprep.subr.bf16.mxu0 0
      %1988 = vmatpush1.bf16.xpose.msra.mxu0 0
      %1989 = vmatprep.subr.bf16.mxu0 0
      %1990 = vmatpush1.bf16.xpose.msra.mxu0 0
      %1991 = vmatprep.subr.bf16.mxu0 0
      %1992 = vmatpush1.bf16.xpose.msra.mxu0 0
      %1993 = vmatprep.subr.bf16.mxu0 0
      %1994 = vmatpush1.bf16.xpose.msra.mxu0 0
      %1995 = vmatprep.subr.bf16.mxu0 0
      %1996 = vmatpush1.bf16.xpose.msra.mxu0 0
      %1997 = vmatprep.subr.bf16.mxu0 0
      %1998 = vmatpush1.bf16.xpose.msra.mxu0 0
      %1999 = vmatprep.subr.bf16.mxu0 0
      %2000 = vmatpush1.bf16.xpose.msra.mxu0 %v1983
      %2001 = vmatprep.subr.bf16.mxu0 0
      %2002 = vmatpush2.bf16.xpose.msra.mxu0 0
      %2003 = vmatprep.subr.bf16.mxu0 0
      %2004 = vmatpush2.bf16.xpose.msra.mxu0 0
      %2005 = vmatprep.subr.bf16.mxu0 0
      %2006 = vmatpush2.bf16.xpose.msra.mxu0 0
      %2007 = vmatprep.subr.bf16.mxu0 0
      %2008 = vmatpush2.bf16.xpose.msra.mxu0 0
      %2009 = vmatprep.subr.bf16.mxu0 0
      %2010 = vmatpush2.bf16.xpose.msra.mxu0 0
      %2011 = vmatprep.subr.bf16.mxu0 0
      %2012 = vmatpush2.bf16.xpose.msra.mxu0 0
      %2013 = vmatprep.subr.bf16.mxu0 0
      %2014 = vmatpush2.bf16.xpose.msra.mxu0 0
      %2015 = vmatprep.subr.bf16.mxu0 0
      %2016 = vmatpush2.bf16.xpose.msra.mxu0 0
      %2017 = vmatprep.mubr.bf16.mxu0 0
      %2018 = vmatmul.mubr.bf16.gmra.mxu0 %v1980
      %v2019 = vpop.f32.mrf.mxu0
      %v2020 = vadd.f32 0.0, %v2019
      %v2021 = vpop.f32.mrf.mxu0
      %v2022 = vpop.f32.mrf.mxu0
      %v2023 = vpop.f32.mrf.mxu0
      %2024 = vdwg.mxu0
      %v2025 = vmul.f32 %v2020, 0.35355338
      %v2026 = vsel %vm816, %v2025, -inf
      %2027 = vmax.xlane.f32.xlu0 %v2026
      %v2028 = vpop.xlane.xlu0 %2027
      %vm2029 = vcmp.eq.f32.partialorder %v2028, -inf
      %v2030 = vsel %vm2029, 0.0, %v2028
      %v2031 = vsub.f32 %v2025, %v2030
      %v2032 = vmul.f32 %v2031, 1.442695
      %v2033 = vpow.pop %v2032
      %v2034 = vsel %vm816, %v2033, 0.0
      %2035 = vadd.xlane.f32.xlu0 %v2034
      %v2036 = vpop.xlane.xlu0 %2035
      %vm2037 = vcmp.eq.f32.partialorder %v2036, 0.0
      %v2038 = vsel %vm2037, 1.0, %v2036
      %v2039 = vrcp.pop %v2038
      %v2040 = vmul.f32 %v2033, %v2039
      %v2041 = vpack.c.bf16 %v2040, %v2040
      %2042 = vrot.lane.b32.xlu0 %v1652, 80
      %v2043 = vpop.permute.xlu0 %2042
      %v2045 = vsel %vm816, %v2041, 0
      %v2048 = vsel %vm892, %v2043, 0
      %2050 = vmatprep.subr.bf16.mxu0 0
      %2051 = vmatpush1.bf16.msra.mxu0 0
      %2052 = vmatprep.subr.bf16.mxu0 0
      %2053 = vmatpush1.bf16.msra.mxu0 0
      %2054 = vmatprep.subr.bf16.mxu0 0
      %2055 = vmatpush1.bf16.msra.mxu0 0
      %2056 = vmatprep.subr.bf16.mxu0 0
      %2057 = vmatpush1.bf16.msra.mxu0 0
      %2058 = vmatprep.subr.bf16.mxu0 0
      %2059 = vmatpush1.bf16.msra.mxu0 0
      %2060 = vmatprep.subr.bf16.mxu0 0
      %2061 = vmatpush1.bf16.msra.mxu0 0
      %2062 = vmatprep.subr.bf16.mxu0 0
      %2063 = vmatpush1.bf16.msra.mxu0 0
      %2064 = vmatprep.subr.bf16.mxu0 0
      %2065 = vmatpush1.bf16.msra.mxu0 %v2048
      %2066 = vmatprep.subr.bf16.mxu0 0
      %2067 = vmatpush2.bf16.msra.mxu0 0
      %2068 = vmatprep.subr.bf16.mxu0 0
      %2069 = vmatpush2.bf16.msra.mxu0 0
      %2070 = vmatprep.subr.bf16.mxu0 0
      %2071 = vmatpush2.bf16.msra.mxu0 0
      %2072 = vmatprep.subr.bf16.mxu0 0
      %2073 = vmatpush2.bf16.msra.mxu0 0
      %2074 = vmatprep.subr.bf16.mxu0 0
      %2075 = vmatpush2.bf16.msra.mxu0 0
      %2076 = vmatprep.subr.bf16.mxu0 0
      %2077 = vmatpush2.bf16.msra.mxu0 0
      %2078 = vmatprep.subr.bf16.mxu0 0
      %2079 = vmatpush2.bf16.msra.mxu0 0
      %2080 = vmatprep.subr.bf16.mxu0 0
      %2081 = vmatpush2.bf16.msra.mxu0 0
      %2082 = vmatprep.mubr.bf16.mxu0 0
      %2083 = vmatmul.mubr.bf16.gmra.mxu0 %v2045
      %v2084 = vpop.f32.mrf.mxu0
      %v2085 = vadd.f32 0.0, %v2084
      %v2086 = vpop.f32.mrf.mxu0
      %v2087 = vpop.f32.mrf.mxu0
      %v2088 = vpop.f32.mrf.mxu0
      %2089 = vdwg.mxu0
      %v2090 = vpack.c.bf16 %v2085, %v2085
      %v2092 = vsel %vm816, %v2090, 0
      %v2095 = vsel %vm892, %v1649, 0
      %2097 = vmatprep.subr.bf16.mxu0 0
      %2098 = vmatpush1.bf16.msra.mxu0 0
      %2099 = vmatprep.subr.bf16.mxu0 0
      %2100 = vmatpush1.bf16.msra.mxu0 0
      %2101 = vmatprep.subr.bf16.mxu0 0
      %2102 = vmatpush1.bf16.msra.mxu0 0
      %2103 = vmatprep.subr.bf16.mxu0 0
      %2104 = vmatpush1.bf16.msra.mxu0 0
      %2105 = vmatprep.subr.bf16.mxu0 0
      %2106 = vmatpush1.bf16.msra.mxu0 0
      %2107 = vmatprep.subr.bf16.mxu0 0
      %2108 = vmatpush1.bf16.msra.mxu0 0
      %2109 = vmatprep.subr.bf16.mxu0 0
      %2110 = vmatpush1.bf16.msra.mxu0 0
      %2111 = vmatprep.subr.bf16.mxu0 0
      %2112 = vmatpush1.bf16.msra.mxu0 %v2095
      %2113 = vmatprep.subr.bf16.mxu0 0
      %2114 = vmatpush2.bf16.msra.mxu0 0
      %2115 = vmatprep.subr.bf16.mxu0 0
      %2116 = vmatpush2.bf16.msra.mxu0 0
      %2117 = vmatprep.subr.bf16.mxu0 0
      %2118 = vmatpush2.bf16.msra.mxu0 0
      %2119 = vmatprep.subr.bf16.mxu0 0
      %2120 = vmatpush2.bf16.msra.mxu0 0
      %2121 = vmatprep.subr.bf16.mxu0 0
      %2122 = vmatpush2.bf16.msra.mxu0 0
      %2123 = vmatprep.subr.bf16.mxu0 0
      %2124 = vmatpush2.bf16.msra.mxu0 0
      %2125 = vmatprep.subr.bf16.mxu0 0
      %2126 = vmatpush2.bf16.msra.mxu0 0
      %2127 = vmatprep.subr.bf16.mxu0 0
      %2128 = vmatpush2.bf16.msra.mxu0 0
      %2129 = vmatprep.mubr.bf16.mxu0 0
      %2130 = vmatmul.mubr.bf16.gmra.mxu0 %v2092
      %v2131 = vpop.f32.mrf.mxu0
      %v2132 = vadd.f32 0.0, %v2131
      %v2133 = vpop.f32.mrf.mxu0
      %v2134 = vpop.f32.mrf.mxu0
      %v2135 = vpop.f32.mrf.mxu0
      %2136 = vdwg.mxu0
      %v2137 = vadd.f32 %v1970, %v2132
      %2138 = vrot.lane.b32.xlu0 %v1651, 104
      %v2139 = vpop.permute.xlu0 %2138
      %2140 = vrot.lane.b32.xlu0 %v1652, 104
      %v2141 = vpop.permute.xlu0 %2140
      %v2143 = vsel %vm816, %v2139, 0
      %v2146 = vsel %vm816, %v2141, 0
      %2148 = vmatprep.subr.bf16.mxu0 0
      %2149 = vmatpush1.bf16.xpose.msra.mxu0 0
      %2150 = vmatprep.subr.bf16.mxu0 0
      %2151 = vmatpush1.bf16.xpose.msra.mxu0 0
      %2152 = vmatprep.subr.bf16.mxu0 0
      %2153 = vmatpush1.bf16.xpose.msra.mxu0 0
      %2154 = vmatprep.subr.bf16.mxu0 0
      %2155 = vmatpush1.bf16.xpose.msra.mxu0 0
      %2156 = vmatprep.subr.bf16.mxu0 0
      %2157 = vmatpush1.bf16.xpose.msra.mxu0 0
      %2158 = vmatprep.subr.bf16.mxu0 0
      %2159 = vmatpush1.bf16.xpose.msra.mxu0 0
      %2160 = vmatprep.subr.bf16.mxu0 0
      %2161 = vmatpush1.bf16.xpose.msra.mxu0 0
      %2162 = vmatprep.subr.bf16.mxu0 0
      %2163 = vmatpush1.bf16.xpose.msra.mxu0 %v2146
      %2164 = vmatprep.subr.bf16.mxu0 0
      %2165 = vmatpush2.bf16.xpose.msra.mxu0 0
      %2166 = vmatprep.subr.bf16.mxu0 0
      %2167 = vmatpush2.bf16.xpose.msra.mxu0 0
      %2168 = vmatprep.subr.bf16.mxu0 0
      %2169 = vmatpush2.bf16.xpose.msra.mxu0 0
      %2170 = vmatprep.subr.bf16.mxu0 0
      %2171 = vmatpush2.bf16.xpose.msra.mxu0 0
      %2172 = vmatprep.subr.bf16.mxu0 0
      %2173 = vmatpush2.bf16.xpose.msra.mxu0 0
      %2174 = vmatprep.subr.bf16.mxu0 0
      %2175 = vmatpush2.bf16.xpose.msra.mxu0 0
      %2176 = vmatprep.subr.bf16.mxu0 0
      %2177 = vmatpush2.bf16.xpose.msra.mxu0 0
      %2178 = vmatprep.subr.bf16.mxu0 0
      %2179 = vmatpush2.bf16.xpose.msra.mxu0 0
      %2180 = vmatprep.mubr.bf16.mxu0 0
      %2181 = vmatmul.mubr.bf16.gmra.mxu0 %v2143
      %v2182 = vpop.f32.mrf.mxu0
      %v2183 = vadd.f32 0.0, %v2182
      %v2184 = vpop.f32.mrf.mxu0
      %v2185 = vpop.f32.mrf.mxu0
      %v2186 = vpop.f32.mrf.mxu0
      %2187 = vdwg.mxu0
      %v2188 = vmul.f32 %v2183, 0.35355338
      %v2189 = vsel %vm816, %v2188, -inf
      %2190 = vmax.xlane.f32.xlu0 %v2189
      %v2191 = vpop.xlane.xlu0 %2190
      %vm2192 = vcmp.eq.f32.partialorder %v2191, -inf
      %v2193 = vsel %vm2192, 0.0, %v2191
      %v2194 = vsub.f32 %v2188, %v2193
      %v2195 = vmul.f32 %v2194, 1.442695
      %v2196 = vpow.pop %v2195
      %v2197 = vsel %vm816, %v2196, 0.0
      %2198 = vadd.xlane.f32.xlu0 %v2197
      %v2199 = vpop.xlane.xlu0 %2198
      %vm2200 = vcmp.eq.f32.partialorder %v2199, 0.0
      %v2201 = vsel %vm2200, 1.0, %v2199
      %v2202 = vrcp.pop %v2201
      %v2203 = vmul.f32 %v2196, %v2202
      %v2204 = vpack.c.bf16 %v2203, %v2203
      %2205 = vrot.lane.b32.xlu0 %v1652, 72
      %v2206 = vpop.permute.xlu0 %2205
      %v2208 = vsel %vm816, %v2204, 0
      %v2211 = vsel %vm892, %v2206, 0
      %2213 = vmatprep.subr.bf16.mxu0 0
      %2214 = vmatpush1.bf16.msra.mxu0 0
      %2215 = vmatprep.subr.bf16.mxu0 0
      %2216 = vmatpush1.bf16.msra.mxu0 0
      %2217 = vmatprep.subr.bf16.mxu0 0
      %2218 = vmatpush1.bf16.msra.mxu0 0
      %2219 = vmatprep.subr.bf16.mxu0 0
      %2220 = vmatpush1.bf16.msra.mxu0 0
      %2221 = vmatprep.subr.bf16.mxu0 0
      %2222 = vmatpush1.bf16.msra.mxu0 0
      %2223 = vmatprep.subr.bf16.mxu0 0
      %2224 = vmatpush1.bf16.msra.mxu0 0
      %2225 = vmatprep.subr.bf16.mxu0 0
      %2226 = vmatpush1.bf16.msra.mxu0 0
      %2227 = vmatprep.subr.bf16.mxu0 0
      %2228 = vmatpush1.bf16.msra.mxu0 %v2211
      %2229 = vmatprep.subr.bf16.mxu0 0
      %2230 = vmatpush2.bf16.msra.mxu0 0
      %2231 = vmatprep.subr.bf16.mxu0 0
      %2232 = vmatpush2.bf16.msra.mxu0 0
      %2233 = vmatprep.subr.bf16.mxu0 0
      %2234 = vmatpush2.bf16.msra.mxu0 0
      %2235 = vmatprep.subr.bf16.mxu0 0
      %2236 = vmatpush2.bf16.msra.mxu0 0
      %2237 = vmatprep.subr.bf16.mxu0 0
      %2238 = vmatpush2.bf16.msra.mxu0 0
      %2239 = vmatprep.subr.bf16.mxu0 0
      %2240 = vmatpush2.bf16.msra.mxu0 0
      %2241 = vmatprep.subr.bf16.mxu0 0
      %2242 = vmatpush2.bf16.msra.mxu0 0
      %2243 = vmatprep.subr.bf16.mxu0 0
      %2244 = vmatpush2.bf16.msra.mxu0 0
      %2245 = vmatprep.mubr.bf16.mxu0 0
      %2246 = vmatmul.mubr.bf16.gmra.mxu0 %v2208
      %v2247 = vpop.f32.mrf.mxu0
      %v2248 = vadd.f32 0.0, %v2247
      %v2249 = vpop.f32.mrf.mxu0
      %v2250 = vpop.f32.mrf.mxu0
      %v2251 = vpop.f32.mrf.mxu0
      %2252 = vdwg.mxu0
      %v2253 = vpack.c.bf16 %v2248, %v2248
      %v2255 = vsel %vm816, %v2253, 0
      %v2258 = vsel %vm892, %v1650, 0
      %2260 = vmatprep.subr.bf16.mxu0 0
      %2261 = vmatpush1.bf16.msra.mxu0 0
      %2262 = vmatprep.subr.bf16.mxu0 0
      %2263 = vmatpush1.bf16.msra.mxu0 0
      %2264 = vmatprep.subr.bf16.mxu0 0
      %2265 = vmatpush1.bf16.msra.mxu0 0
      %2266 = vmatprep.subr.bf16.mxu0 0
      %2267 = vmatpush1.bf16.msra.mxu0 0
      %2268 = vmatprep.subr.bf16.mxu0 0
      %2269 = vmatpush1.bf16.msra.mxu0 0
      %2270 = vmatprep.subr.bf16.mxu0 0
      %2271 = vmatpush1.bf16.msra.mxu0 0
      %2272 = vmatprep.subr.bf16.mxu0 0
      %2273 = vmatpush1.bf16.msra.mxu0 0
      %2274 = vmatprep.subr.bf16.mxu0 0
      %2275 = vmatpush1.bf16.msra.mxu0 %v2258
      %2276 = vmatprep.subr.bf16.mxu0 0
      %2277 = vmatpush2.bf16.msra.mxu0 0
      %2278 = vmatprep.subr.bf16.mxu0 0
      %2279 = vmatpush2.bf16.msra.mxu0 0
      %2280 = vmatprep.subr.bf16.mxu0 0
      %2281 = vmatpush2.bf16.msra.mxu0 0
      %2282 = vmatprep.subr.bf16.mxu0 0
      %2283 = vmatpush2.bf16.msra.mxu0 0
      %2284 = vmatprep.subr.bf16.mxu0 0
      %2285 = vmatpush2.bf16.msra.mxu0 0
      %2286 = vmatprep.subr.bf16.mxu0 0
      %2287 = vmatpush2.bf16.msra.mxu0 0
      %2288 = vmatprep.subr.bf16.mxu0 0
      %2289 = vmatpush2.bf16.msra.mxu0 0
      %2290 = vmatprep.subr.bf16.mxu0 0
      %2291 = vmatpush2.bf16.msra.mxu0 0
      %2292 = vmatprep.mubr.bf16.mxu0 0
      %2293 = vmatmul.mubr.bf16.gmra.mxu0 %v2255
      %v2294 = vpop.f32.mrf.mxu0
      %v2295 = vadd.f32 0.0, %v2294
      %v2296 = vpop.f32.mrf.mxu0
      %v2297 = vpop.f32.mrf.mxu0
      %v2298 = vpop.f32.mrf.mxu0
      %2299 = vdwg.mxu0
      %v2300 = vadd.f32 %v2137, %v2295
      %v2301 = vld [vmem:[%s14] sm:$0x1]
      %v2303 = vlaneseq
      %v2304 = vshrl.u32 %v2303, 7
      %v2305 = vsub.s32 0, %v2304
      %v2306 = vrot.slane %v2301, %v2305
      %v2308 = vadd.f32 %v2300, %v2306
      %v2309 = vadd.f32 %v1512, %v2308
      %v2310 = vld [vmem:[%s15] sm:$0x1]
      %v2311 = vld [vmem:[%s16] sm:$0x1]
      %v2312 = vsel %vm764, %v2309, 0.0
      %2313 = vadd.xlane.f32.xlu0 %v2312
      %v2314 = vpop.xlane.xlu0 %2313
      %v2315 = vmul.f32 %v2314, %v1488
      %v2316 = vsub.f32 %v2309, %v2315
      %v2317 = vmul.f32 %v2316, %v2316
      %v2318 = vsel %vm764, %v2317, 0.0
      %2319 = vadd.xlane.f32.xlu0 %v2318
      %v2320 = vpop.xlane.xlu0 %2319
      %v2321 = vmul.f32 %v2320, %v1488
      %v2322 = vadd.f32 %v2321, 1e-05
      %v2323 = vrsqrt.pop %v2322
      %v2324 = vmul.f32 %v2316, %v2323
      %v2326 = vlaneseq
      %v2327 = vshrl.u32 %v2326, 7
      %v2328 = vsub.s32 0, %v2327
      %v2329 = vrot.slane %v2310, %v2328
      %v2331 = vmul.f32 %v2324, %v2329
      %v2333 = vlaneseq
      %v2334 = vshrl.u32 %v2333, 7
      %v2335 = vsub.s32 0, %v2334
      %v2336 = vrot.slane %v2311, %v2335
      %v2338 = vadd.f32 %v2331, %v2336
      %v2339 = vpack.c.bf16 %v2338, %v2338
      %v2340 = vld [vmem:[%s17] sm:$0xf]
      %v2341 = vld [vmem:[%s17 + $0x4] sm:$0xf]
      %v2342 = vld [vmem:[%s17 + $0x8] sm:$0xf]
      %v2343 = vld [vmem:[%s17 + $0xc] sm:$0xf]
      %v2344 = vld [vmem:[%s18] sm:$0x1]
      %v2346 = vlaneseq
      %v2347 = vshrl.u32 %v2346, 7
      %v2348 = vsub.s32 0, %v2347
      %v2349 = vrot.slane %v2344, %v2348
      %v2355 = vunpack.c.l.b16 %v2340
      %v2356 = vunpack.c.l.b16 %v2341
      %v2357 = vunpack.c.l.b16 %v2342
      %v2358 = vunpack.c.l.b16 %v2343
      %v2359 = vpack.c.b16 %v2356, %v2355
      %v2360 = vpack.c.b16 %v2358, %v2357
      %v2364 = vsel %vm764, %v2339, 0
      %2366 = vmatprep.subr.bf16.mxu0 0
      %2367 = vmatpush1.bf16.msra.mxu0 0
      %2368 = vmatprep.subr.bf16.mxu0 0
      %2369 = vmatpush1.bf16.msra.mxu0 0
      %2370 = vmatprep.subr.bf16.mxu0 0
      %2371 = vmatpush1.bf16.msra.mxu0 0
      %2372 = vmatprep.subr.bf16.mxu0 0
      %2373 = vmatpush1.bf16.msra.mxu0 0
      %2374 = vmatprep.subr.bf16.mxu0 0
      %2375 = vmatpush1.bf16.msra.mxu0 0
      %2376 = vmatprep.subr.bf16.mxu0 0
      %2377 = vmatpush1.bf16.msra.mxu0 0
      %2378 = vmatprep.subr.bf16.mxu0 0
      %2379 = vmatpush1.bf16.msra.mxu0 %v2360
      %2380 = vmatprep.subr.bf16.mxu0 0
      %2381 = vmatpush1.bf16.msra.mxu0 %v2359
      %2382 = vmatprep.subr.bf16.mxu0 0
      %2383 = vmatpush2.bf16.msra.mxu0 0
      %2384 = vmatprep.subr.bf16.mxu0 0
      %2385 = vmatpush2.bf16.msra.mxu0 0
      %2386 = vmatprep.subr.bf16.mxu0 0
      %2387 = vmatpush2.bf16.msra.mxu0 0
      %2388 = vmatprep.subr.bf16.mxu0 0
      %2389 = vmatpush2.bf16.msra.mxu0 0
      %2390 = vmatprep.subr.bf16.mxu0 0
      %2391 = vmatpush2.bf16.msra.mxu0 0
      %2392 = vmatprep.subr.bf16.mxu0 0
      %2393 = vmatpush2.bf16.msra.mxu0 0
      %2394 = vmatprep.subr.bf16.mxu0 0
      %2395 = vmatpush2.bf16.msra.mxu0 0
      %2396 = vmatprep.subr.bf16.mxu0 0
      %2397 = vmatpush2.bf16.msra.mxu0 0
      %2398 = vmatprep.mubr.bf16.mxu0 0
      %2399 = vmatmul.mubr.bf16.gmra.mxu0 %v2364
      %v2400 = vpop.f32.mrf.mxu0
      %v2401 = vadd.f32 %v2349, %v2400
      %v2402 = vpop.f32.mrf.mxu0
      %v2403 = vpop.f32.mrf.mxu0
      %v2404 = vpop.f32.mrf.mxu0
      %2405 = vdwg.mxu0
      %v2406 = vmax.f32 %v2401, 0.0
      %v2407 = vpack.c.bf16 %v2406, %v2406
      %v2408 = vld [vmem:[%s19] sm:$0xf]
      %v2409 = vld [vmem:[%s19 + $0x4] sm:$0xf]
      %v2410 = vld [vmem:[%s19 + $0x8] sm:$0xf]
      %v2411 = vld [vmem:[%s19 + $0xc] sm:$0xf]
      %v2412 = vld [vmem:[%s19 + $0x10] sm:$0xf]
      %v2413 = vld [vmem:[%s19 + $0x14] sm:$0xf]
      %v2414 = vld [vmem:[%s19 + $0x18] sm:$0xf]
      %v2415 = vld [vmem:[%s19 + $0x1c] sm:$0xf]
      %v2416 = vld [vmem:[%s19 + $0x20] sm:$0xf]
      %v2417 = vld [vmem:[%s19 + $0x24] sm:$0xf]
      %v2418 = vld [vmem:[%s19 + $0x28] sm:$0xf]
      %v2419 = vld [vmem:[%s19 + $0x2c] sm:$0xf]
      %v2420 = vld [vmem:[%s19 + $0x30] sm:$0xf]
      %v2421 = vld [vmem:[%s19 + $0x34] sm:$0xf]
      %v2422 = vld [vmem:[%s19 + $0x38] sm:$0xf]
      %v2423 = vld [vmem:[%s19 + $0x3c] sm:$0xf]
      %v2424 = vld [vmem:[%s20] sm:$0x1]
      %v2426 = vlaneseq
      %v2427 = vshrl.u32 %v2426, 7
      %v2428 = vsub.s32 0, %v2427
      %v2429 = vrot.slane %v2424, %v2428
      %v2447 = vunpack.c.l.b16 %v2408
      %v2448 = vunpack.c.l.b16 %v2409
      %v2449 = vunpack.c.l.b16 %v2410
      %v2450 = vunpack.c.l.b16 %v2411
      %v2451 = vunpack.c.l.b16 %v2412
      %v2452 = vunpack.c.l.b16 %v2413
      %v2453 = vunpack.c.l.b16 %v2414
      %v2454 = vunpack.c.l.b16 %v2415
      %v2455 = vunpack.c.l.b16 %v2416
      %v2456 = vunpack.c.l.b16 %v2417
      %v2457 = vunpack.c.l.b16 %v2418
      %v2458 = vunpack.c.l.b16 %v2419
      %v2459 = vunpack.c.l.b16 %v2420
      %v2460 = vunpack.c.l.b16 %v2421
      %v2461 = vunpack.c.l.b16 %v2422
      %v2462 = vunpack.c.l.b16 %v2423
      %v2463 = vpack.c.b16 %v2448, %v2447
      %v2464 = vpack.c.b16 %v2450, %v2449
      %v2465 = vpack.c.b16 %v2452, %v2451
      %v2466 = vpack.c.b16 %v2454, %v2453
      %v2467 = vpack.c.b16 %v2456, %v2455
      %v2468 = vpack.c.b16 %v2458, %v2457
      %v2469 = vpack.c.b16 %v2460, %v2459
      %v2470 = vpack.c.b16 %v2462, %v2461
      %2479 = vmatprep.subr.bf16.mxu0 0
      %2480 = vmatpush1.bf16.msra.mxu0 %v2470
      %2481 = vmatprep.subr.bf16.mxu0 0
      %2482 = vmatpush1.bf16.msra.mxu0 %v2469
      %2483 = vmatprep.subr.bf16.mxu0 0
      %2484 = vmatpush1.bf16.msra.mxu0 %v2468
      %2485 = vmatprep.subr.bf16.mxu0 0
      %2486 = vmatpush1.bf16.msra.mxu0 %v2467
      %2487 = vmatprep.subr.bf16.mxu0 0
      %2488 = vmatpush1.bf16.msra.mxu0 %v2466
      %2489 = vmatprep.subr.bf16.mxu0 0
      %2490 = vmatpush1.bf16.msra.mxu0 %v2465
      %2491 = vmatprep.subr.bf16.mxu0 0
      %2492 = vmatpush1.bf16.msra.mxu0 %v2464
      %2493 = vmatprep.subr.bf16.mxu0 0
      %2494 = vmatpush1.bf16.msra.mxu0 %v2463
      %2495 = vmatprep.subr.bf16.mxu0 0
      %2496 = vmatpush2.bf16.msra.mxu0 0
      %2497 = vmatprep.subr.bf16.mxu0 0
      %2498 = vmatpush2.bf16.msra.mxu0 0
      %2499 = vmatprep.subr.bf16.mxu0 0
      %2500 = vmatpush2.bf16.msra.mxu0 0
      %2501 = vmatprep.subr.bf16.mxu0 0
      %2502 = vmatpush2.bf16.msra.mxu0 0
      %2503 = vmatprep.subr.bf16.mxu0 0
      %2504 = vmatpush2.bf16.msra.mxu0 0
      %2505 = vmatprep.subr.bf16.mxu0 0
      %2506 = vmatpush2.bf16.msra.mxu0 0
      %2507 = vmatprep.subr.bf16.mxu0 0
      %2508 = vmatpush2.bf16.msra.mxu0 0
      %2509 = vmatprep.subr.bf16.mxu0 0
      %2510 = vmatpush2.bf16.msra.mxu0 0
      %2511 = vmatprep.mubr.bf16.mxu0 0
      %2512 = vmatmul.mubr.bf16.gmra.mxu0 %v2407
      %v2513 = vpop.f32.mrf.mxu0
      %v2514 = vadd.f32 %v2429, %v2513
      %v2515 = vpop.f32.mrf.mxu0
      %v2516 = vpop.f32.mrf.mxu0
      %v2517 = vpop.f32.mrf.mxu0
      %2518 = vdwg.mxu0
      %v2519 = vadd.f32 %v2338, %v2514
      %v2520 = vld [vmem:[%s21] sm:$0x1]
      %v2521 = vld [vmem:[%s22] sm:$0x1]
      %v2522 = vsel %vm764, %v2519, 0.0
      %2523 = vadd.xlane.f32.xlu0 %v2522
      %v2524 = vpop.xlane.xlu0 %2523
      %v2525 = vmul.f32 %v2524, %v1488
      %v2526 = vsub.f32 %v2519, %v2525
      %v2527 = vmul.f32 %v2526, %v2526
      %v2528 = vsel %vm764, %v2527, 0.0
      %2529 = vadd.xlane.f32.xlu0 %v2528
      %v2530 = vpop.xlane.xlu0 %2529
      %v2531 = vmul.f32 %v2530, %v1488
      %v2532 = vadd.f32 %v2531, 1e-05
      %v2533 = vrsqrt.pop %v2532
      %v2534 = vmul.f32 %v2526, %v2533
      %v2536 = vlaneseq
      %v2537 = vshrl.u32 %v2536, 7
      %v2538 = vsub.s32 0, %v2537
      %v2539 = vrot.slane %v2520, %v2538
      %v2541 = vmul.f32 %v2534, %v2539
      %v2543 = vlaneseq
      %v2544 = vshrl.u32 %v2543, 7
      %v2545 = vsub.s32 0, %v2544
      %v2546 = vrot.slane %v2521, %v2545
      %v2548 = vadd.f32 %v2541, %v2546
      %v2549 = vpack.c.bf16 %v2548, %v2548
      %vm2550 = vcmask 257024
      %2551 = vst.msk [vmem:[%s736] sm:$0xf] %vm2550, %v2549
      %p2552 = scmp.lt.s32.totalorder %s34, 1
      %s2553 = scalar_select %p2552, %s34, 1
      %s2554 = smul.addr %s2553, 4
      %s2555 = scalar_lea.vmem %s23, %s2554
      // Predicated region
      $region113: #{seq2seq_trans_forward.9} parent=111 // pred_check
        %p2556 = pneg %p550
      $region114: #{seq2seq_trans_forward.9} parent=111 // pred_check_branch
        %2558 = sbr.rel (%p2556) target = $region116
      $region115: #{seq2seq_trans_forward.9} parent=111 // pred_region
        _
      $region116: #{seq2seq_trans_forward.9} parent=111 // pred_fallthru
        _
    $region112: #{seq2seq_trans_forward.9} parent=5 // pred_fallthru
      _
    %p2559 = scmp.le.s32.totalorder 2, %s29
    // Predicated region
    $region117: #{seq2seq_trans_forward.9} parent=5 // pred_check
      %p2560 = pneg %p2559
    $region118: #{seq2seq_trans_forward.9} parent=5 // pred_check_branch
      %2562 = sbr.rel (%p2560) target = $region120
    $region119: #{seq2seq_trans_forward.9} parent=5 // pred_region
      %s2563 = ssub.s32 %s29, 2
      // Predicated region
      $region121: #{seq2seq_trans_forward.9} parent=119 // pred_check
        %p2564 = pneg %p556
      $region122: #{seq2seq_trans_forward.9} parent=119 // pred_check_branch
        %2566 = sbr.rel (%p2564) target = $region124
      $region123: #{seq2seq_trans_forward.9} parent=119 // pred_region
        %p2567 = scmp.lt.s32.totalorder %s35, 1
        %s2568 = scalar_select %p2567, %s35, 1
        %s2569 = smul.addr %s2568, 4
        %s2570 = scalar_lea.vmem %s23, %s2569
      $region124: #{seq2seq_trans_forward.9} parent=119 // pred_fallthru
        _
    $region120: #{seq2seq_trans_forward.9} parent=5 // pred_fallthru
      _
  $region6: #{seq2seq_trans_forward.9} parent=0 // loop_footer
    %s33 = sadd.s32 1, %s29
  $region7: #{seq2seq_trans_forward.9} parent=0 // loop_footer_branch
    %28 = sbr.rel target = $region3
  $region8: #{seq2seq_trans_forward.9} parent=0 // loop_exit
    _

// kernel: seq2seq_trans_forward.10
$region0: #{seq2seq_trans_forward.10}
  #allocation0 [shape = 'u32[]', space=smem, size = 0x4, offset = 0x4, fixed_abs, tag = 'smem constant byte address 0x4 - core index']
  #allocation1 [shape = 'u32[144,128]{1,0:T(1,128)}', space=vmem, size = 0x12000, scoped, tag = 'internal scratch']
  %s0 = inlined_call_operand.vmem [shape: bf16[2,8,32], index: 0, kind: input, shape index: {}]
  %s1 = inlined_call_operand.vmem [shape: bf16[2,8,32], index: 1, kind: input, shape index: {}]
  %s2 = inlined_call_operand.vmem [shape: f32[2,1,8], index: 2, kind: input, shape index: {}]
  %s3 = inlined_call_operand.vmem [shape: bf16[32,96], index: 3, kind: input, shape index: {}]
  %s4 = inlined_call_operand.vmem [shape: f32[1,96], index: 4, kind: input, shape index: {}]
  %s5 = inlined_call_operand.vmem [shape: bf16[32,32], index: 5, kind: input, shape index: {}]
  %s6 = inlined_call_operand.vmem [shape: f32[1,32], index: 6, kind: input, shape index: {}]
  %s7 = inlined_call_operand.vmem [shape: f32[1,32], index: 7, kind: input, shape index: {}]
  %s8 = inlined_call_operand.vmem [shape: f32[1,32], index: 8, kind: input, shape index: {}]
  %s9 = inlined_call_operand.vmem [shape: bf16[32,32], index: 9, kind: input, shape index: {}]
  %s10 = inlined_call_operand.vmem [shape: f32[1,32], index: 10, kind: input, shape index: {}]
  %s11 = inlined_call_operand.vmem [shape: bf16[32,64], index: 11, kind: input, shape index: {}]
  %s12 = inlined_call_operand.vmem [shape: f32[1,64], index: 12, kind: input, shape index: {}]
  %s13 = inlined_call_operand.vmem [shape: bf16[32,32], index: 13, kind: input, shape index: {}]
  %s14 = inlined_call_operand.vmem [shape: f32[1,32], index: 14, kind: input, shape index: {}]
  %s15 = inlined_call_operand.vmem [shape: f32[1,32], index: 15, kind: input, shape index: {}]
  %s16 = inlined_call_operand.vmem [shape: f32[1,32], index: 16, kind: input, shape index: {}]
  %s17 = inlined_call_operand.vmem [shape: bf16[32,128], index: 17, kind: input, shape index: {}]
  %s18 = inlined_call_operand.vmem [shape: f32[1,128], index: 18, kind: input, shape index: {}]
  %s19 = inlined_call_operand.vmem [shape: bf16[128,32], index: 19, kind: input, shape index: {}]
  %s20 = inlined_call_operand.vmem [shape: f32[1,32], index: 20, kind: input, shape index: {}]
  %s21 = inlined_call_operand.vmem [shape: f32[1,32], index: 21, kind: input, shape index: {}]
  %s22 = inlined_call_operand.hbm [shape: f32[1,32], index: 22, kind: input, shape index: {}]
  %s23 = inlined_call_operand.vmem [shape: bf16[2,8,32], index: 23, kind: output, shape index: {}]
  %s24 = sld [smem:[#allocation0]]
  $region129: #{seq2seq_trans_forward.10} parent=0
    _
  %s26 = ssub.s32 1, %s24
  %s27 = scalar_select 0, %s26, %s24
  $region1: #{seq2seq_trans_forward.10} parent=0
    #allocation2 [shape = 'u8[512]{0}', space=vmem, size = 0x400, scoped, tag = 'input window, operand 22, single buffered']
    #allocation3 [shape = 's32[2]{0}', space=sflag, size = 0x8, scoped, tag = 'scoped memory for seq2seq_trans_forward.10']
    %28 = vsyncpa [#allocation3], 0
    loop: start=0, step=1, limit=4
    $region2: #{seq2seq_trans_forward.10} parent=1 // loop_pre_header
      _
    $region3: #{seq2seq_trans_forward.10} parent=1 // loop_header
      %s30 = sphi 0, %s34
      %p31 = scmp.ge.s32.totalorder %s30, 4
      %s40 = sphi 0, %s42
      %s43 = sphi 0, %s40
      %s44 = sphi 0, %s43
      %s60 = sphi 0, %s44
      %s66 = sphi 0, %s68
      %s69 = sphi 0, %s66
      %s70 = sphi 0, %s69
      %s86 = sphi 0, %s70
      %s92 = sphi 0, %s94
      %s95 = sphi 0, %s92
      %s96 = sphi 0, %s95
      %s112 = sphi 0, %s96
      %s116 = sphi 0, %s116
      %s118 = sphi 0, %s116
      %s119 = sphi 0, %s118
      %s133 = sphi 0, %s119
      %s137 = sphi 0, %s137
      %s139 = sphi 0, %s137
      %s140 = sphi 0, %s139
      %s154 = sphi 0, %s140
      %s158 = sphi 0, %s158
      %s160 = sphi 0, %s158
      %s161 = sphi 0, %s160
      %s175 = sphi 0, %s161
      %s179 = sphi 0, %s179
      %s181 = sphi 0, %s179
      %s182 = sphi 0, %s181
      %s196 = sphi 0, %s182
      %s200 = sphi 0, %s200
      %s202 = sphi 0, %s200
      %s203 = sphi 0, %s202
      %s217 = sphi 0, %s203
      %s221 = sphi 0, %s221
      %s223 = sphi 0, %s221
      %s224 = sphi 0, %s223
      %s238 = sphi 0, %s224
      %s242 = sphi 0, %s242
      %s244 = sphi 0, %s242
      %s245 = sphi 0, %s244
      %s259 = sphi 0, %s245
      %s263 = sphi 0, %s263
      %s265 = sphi 0, %s263
      %s266 = sphi 0, %s265
      %s280 = sphi 0, %s266
      %s284 = sphi 0, %s284
      %s286 = sphi 0, %s284
      %s287 = sphi 0, %s286
      %s301 = sphi 0, %s287
      %s305 = sphi 0, %s305
      %s307 = sphi 0, %s305
      %s308 = sphi 0, %s307
      %s322 = sphi 0, %s308
      %s326 = sphi 0, %s326
      %s328 = sphi 0, %s326
      %s329 = sphi 0, %s328
      %s343 = sphi 0, %s329
      %s347 = sphi 0, %s347
      %s349 = sphi 0, %s347
      %s350 = sphi 0, %s349
      %s364 = sphi 0, %s350
      %s368 = sphi 0, %s368
      %s370 = sphi 0, %s368
      %s371 = sphi 0, %s370
      %s385 = sphi 0, %s371
      %s389 = sphi 0, %s389
      %s391 = sphi 0, %s389
      %s392 = sphi 0, %s391
      %s406 = sphi 0, %s392
      %s410 = sphi 0, %s410
      %s412 = sphi 0, %s410
      %s413 = sphi 0, %s412
      %s427 = sphi 0, %s413
      %s431 = sphi 0, %s431
      %s433 = sphi 0, %s431
      %s434 = sphi 0, %s433
      %s448 = sphi 0, %s434
      %s452 = sphi 0, %s452
      %s454 = sphi 0, %s452
      %s455 = sphi 0, %s454
      %s469 = sphi 0, %s455
      %s473 = sphi 0, %s473
      %s475 = sphi 0, %s473
      %s476 = sphi 0, %s475
      %s490 = sphi 0, %s476
      %s494 = sphi 0, %s494
      %s496 = sphi 0, %s494
      %s497 = sphi 0, %s496
      %s511 = sphi 0, %s497
      %s515 = sphi 0, %s515
      %s517 = sphi 0, %s515
      %s518 = sphi 0, %s517
      %s532 = sphi 0, %s518
      %s538 = sphi 0, %s540
      %s541 = sphi 0, %s538
      %s542 = sphi 0, %s541
      %s558 = sphi 0, %s542
    $region4: #{seq2seq_trans_forward.10} parent=1 // loop_header_branch
      %33 = sbr.rel (%p31) target = $region8
    $region5: #{seq2seq_trans_forward.10} parent=1 // loop_body
      %s35 = ssub.s32 %s30, 1
      %s36 = ssub.s32 %s30, 2
      %s37 = sadd.s32 %s30, 1
      %s38 = ssub.s32 %s30, %s37
      %p39 = scmp.eq.s32.totalorder %s38, 0
      %s41 = sadd.s32 %s40, 1
      %s42 = scalar_select %p39, %s40, %s41
      %p45 = pneg %p39
      %p46 = scmp.eq.s32.totalorder %s30, 1
      %p47 = por %p45, %p46
      %p48 = scmp.ne.s32.totalorder %s40, %s43
      %p49 = scmp.eq.s32.totalorder %s30, 0
      %p50 = por %p48, %p49
      %p51 = scmp.ne.s32.totalorder %s40, %s43
      %p52 = scmp.eq.s32.totalorder %s35, 1
      %p53 = por %p51, %p52
      %p54 = scmp.ne.s32.totalorder %s43, %s44
      %p55 = scmp.eq.s32.totalorder %s35, 0
      %p56 = por %p54, %p55
      %p57 = scmp.ne.s32.totalorder %s43, %s44
      %p58 = scmp.eq.s32.totalorder %s36, 1
      %p59 = por %p57, %p58
      %p61 = scmp.ne.s32.totalorder %s44, %s60
      %p62 = scmp.eq.s32.totalorder %s36, 0
      %p63 = por %p61, %p62
      %s64 = ssub.s32 %s30, %s37
      %p65 = scmp.eq.s32.totalorder %s64, 0
      %s67 = sadd.s32 %s66, 1
      %s68 = scalar_select %p65, %s66, %s67
      %p71 = pneg %p65
      %p72 = scmp.eq.s32.totalorder %s30, 1
      %p73 = por %p71, %p72
      %p74 = scmp.ne.s32.totalorder %s66, %s69
      %p75 = scmp.eq.s32.totalorder %s30, 0
      %p76 = por %p74, %p75
      %p77 = scmp.ne.s32.totalorder %s66, %s69
      %p78 = scmp.eq.s32.totalorder %s35, 1
      %p79 = por %p77, %p78
      %p80 = scmp.ne.s32.totalorder %s69, %s70
      %p81 = scmp.eq.s32.totalorder %s35, 0
      %p82 = por %p80, %p81
      %p83 = scmp.ne.s32.totalorder %s69, %s70
      %p84 = scmp.eq.s32.totalorder %s36, 1
      %p85 = por %p83, %p84
      %p87 = scmp.ne.s32.totalorder %s70, %s86
      %p88 = scmp.eq.s32.totalorder %s36, 0
      %p89 = por %p87, %p88
      %s90 = ssub.s32 %s30, %s37
      %p91 = scmp.eq.s32.totalorder %s90, 0
      %s93 = sadd.s32 %s92, 1
      %s94 = scalar_select %p91, %s92, %s93
      %p97 = pneg %p91
      %p98 = scmp.eq.s32.totalorder %s30, 1
      %p99 = por %p97, %p98
      %p100 = scmp.ne.s32.totalorder %s92, %s95
      %p101 = scmp.eq.s32.totalorder %s30, 0
      %p102 = por %p100, %p101
      %p103 = scmp.ne.s32.totalorder %s92, %s95
      %p104 = scmp.eq.s32.totalorder %s35, 1
      %p105 = por %p103, %p104
      %p106 = scmp.ne.s32.totalorder %s95, %s96
      %p107 = scmp.eq.s32.totalorder %s35, 0
      %p108 = por %p106, %p107
      %p109 = scmp.ne.s32.totalorder %s95, %s96
      %p110 = scmp.eq.s32.totalorder %s36, 1
      %p111 = por %p109, %p110
      %p113 = scmp.ne.s32.totalorder %s96, %s112
      %p114 = scmp.eq.s32.totalorder %s36, 0
      %p115 = por %p113, %p114
      %s117 = sadd.s32 %s116, 1
      %p120 = scmp.eq.s32.totalorder %s30, 1
      %p121 = scmp.ne.s32.totalorder %s116, %s118
      %p122 = scmp.eq.s32.totalorder %s30, 0
      %p123 = por %p121, %p122
      %p124 = scmp.ne.s32.totalorder %s116, %s118
      %p125 = scmp.eq.s32.totalorder %s35, 1
      %p126 = por %p124, %p125
      %p127 = scmp.ne.s32.totalorder %s118, %s119
      %p128 = scmp.eq.s32.totalorder %s35, 0
      %p129 = por %p127, %p128
      %p130 = scmp.ne.s32.totalorder %s118, %s119
      %p131 = scmp.eq.s32.totalorder %s36, 1
      %p132 = por %p130, %p131
      %p134 = scmp.ne.s32.totalorder %s119, %s133
      %p135 = scmp.eq.s32.totalorder %s36, 0
      %p136 = por %p134, %p135
      %s138 = sadd.s32 %s137, 1
      %p141 = scmp.eq.s32.totalorder %s30, 1
      %p142 = scmp.ne.s32.totalorder %s137, %s139
      %p143 = scmp.eq.s32.totalorder %s30, 0
      %p144 = por %p142, %p143
      %p145 = scmp.ne.s32.totalorder %s137, %s139
      %p146 = scmp.eq.s32.totalorder %s35, 1
      %p147 = por %p145, %p146
      %p148 = scmp.ne.s32.totalorder %s139, %s140
      %p149 = scmp.eq.s32.totalorder %s35, 0
      %p150 = por %p148, %p149
      %p151 = scmp.ne.s32.totalorder %s139, %s140
      %p152 = scmp.eq.s32.totalorder %s36, 1
      %p153 = por %p151, %p152
      %p155 = scmp.ne.s32.totalorder %s140, %s154
      %p156 = scmp.eq.s32.totalorder %s36, 0
      %p157 = por %p155, %p156
      %s159 = sadd.s32 %s158, 1
      %p162 = scmp.eq.s32.totalorder %s30, 1
      %p163 = scmp.ne.s32.totalorder %s158, %s160
      %p164 = scmp.eq.s32.totalorder %s30, 0
      %p165 = por %p163, %p164
      %p166 = scmp.ne.s32.totalorder %s158, %s160
      %p167 = scmp.eq.s32.totalorder %s35, 1
      %p168 = por %p166, %p167
      %p169 = scmp.ne.s32.totalorder %s160, %s161
      %p170 = scmp.eq.s32.totalorder %s35, 0
      %p171 = por %p169, %p170
      %p172 = scmp.ne.s32.totalorder %s160, %s161
      %p173 = scmp.eq.s32.totalorder %s36, 1
      %p174 = por %p172, %p173
      %p176 = scmp.ne.s32.totalorder %s161, %s175
      %p177 = scmp.eq.s32.totalorder %s36, 0
      %p178 = por %p176, %p177
      %s180 = sadd.s32 %s179, 1
      %p183 = scmp.eq.s32.totalorder %s30, 1
      %p184 = scmp.ne.s32.totalorder %s179, %s181
      %p185 = scmp.eq.s32.totalorder %s30, 0
      %p186 = por %p184, %p185
      %p187 = scmp.ne.s32.totalorder %s179, %s181
      %p188 = scmp.eq.s32.totalorder %s35, 1
      %p189 = por %p187, %p188
      %p190 = scmp.ne.s32.totalorder %s181, %s182
      %p191 = scmp.eq.s32.totalorder %s35, 0
      %p192 = por %p190, %p191
      %p193 = scmp.ne.s32.totalorder %s181, %s182
      %p194 = scmp.eq.s32.totalorder %s36, 1
      %p195 = por %p193, %p194
      %p197 = scmp.ne.s32.totalorder %s182, %s196
      %p198 = scmp.eq.s32.totalorder %s36, 0
      %p199 = por %p197, %p198
      %s201 = sadd.s32 %s200, 1
      %p204 = scmp.eq.s32.totalorder %s30, 1
      %p205 = scmp.ne.s32.totalorder %s200, %s202
      %p206 = scmp.eq.s32.totalorder %s30, 0
      %p207 = por %p205, %p206
      %p208 = scmp.ne.s32.totalorder %s200, %s202
      %p209 = scmp.eq.s32.totalorder %s35, 1
      %p210 = por %p208, %p209
      %p211 = scmp.ne.s32.totalorder %s202, %s203
      %p212 = scmp.eq.s32.totalorder %s35, 0
      %p213 = por %p211, %p212
      %p214 = scmp.ne.s32.totalorder %s202, %s203
      %p215 = scmp.eq.s32.totalorder %s36, 1
      %p216 = por %p214, %p215
      %p218 = scmp.ne.s32.totalorder %s203, %s217
      %p219 = scmp.eq.s32.totalorder %s36, 0
      %p220 = por %p218, %p219
      %s222 = sadd.s32 %s221, 1
      %p225 = scmp.eq.s32.totalorder %s30, 1
      %p226 = scmp.ne.s32.totalorder %s221, %s223
      %p227 = scmp.eq.s32.totalorder %s30, 0
      %p228 = por %p226, %p227
      %p229 = scmp.ne.s32.totalorder %s221, %s223
      %p230 = scmp.eq.s32.totalorder %s35, 1
      %p231 = por %p229, %p230
      %p232 = scmp.ne.s32.totalorder %s223, %s224
      %p233 = scmp.eq.s32.totalorder %s35, 0
      %p234 = por %p232, %p233
      %p235 = scmp.ne.s32.totalorder %s223, %s224
      %p236 = scmp.eq.s32.totalorder %s36, 1
      %p237 = por %p235, %p236
      %p239 = scmp.ne.s32.totalorder %s224, %s238
      %p240 = scmp.eq.s32.totalorder %s36, 0
      %p241 = por %p239, %p240
      %s243 = sadd.s32 %s242, 1
      %p246 = scmp.eq.s32.totalorder %s30, 1
      %p247 = scmp.ne.s32.totalorder %s242, %s244
      %p248 = scmp.eq.s32.totalorder %s30, 0
      %p249 = por %p247, %p248
      %p250 = scmp.ne.s32.totalorder %s242, %s244
      %p251 = scmp.eq.s32.totalorder %s35, 1
      %p252 = por %p250, %p251
      %p253 = scmp.ne.s32.totalorder %s244, %s245
      %p254 = scmp.eq.s32.totalorder %s35, 0
      %p255 = por %p253, %p254
      %p256 = scmp.ne.s32.totalorder %s244, %s245
      %p257 = scmp.eq.s32.totalorder %s36, 1
      %p258 = por %p256, %p257
      %p260 = scmp.ne.s32.totalorder %s245, %s259
      %p261 = scmp.eq.s32.totalorder %s36, 0
      %p262 = por %p260, %p261
      %s264 = sadd.s32 %s263, 1
      %p267 = scmp.eq.s32.totalorder %s30, 1
      %p268 = scmp.ne.s32.totalorder %s263, %s265
      %p269 = scmp.eq.s32.totalorder %s30, 0
      %p270 = por %p268, %p269
      %p271 = scmp.ne.s32.totalorder %s263, %s265
      %p272 = scmp.eq.s32.totalorder %s35, 1
      %p273 = por %p271, %p272
      %p274 = scmp.ne.s32.totalorder %s265, %s266
      %p275 = scmp.eq.s32.totalorder %s35, 0
      %p276 = por %p274, %p275
      %p277 = scmp.ne.s32.totalorder %s265, %s266
      %p278 = scmp.eq.s32.totalorder %s36, 1
      %p279 = por %p277, %p278
      %p281 = scmp.ne.s32.totalorder %s266, %s280
      %p282 = scmp.eq.s32.totalorder %s36, 0
      %p283 = por %p281, %p282
      %s285 = sadd.s32 %s284, 1
      %p288 = scmp.eq.s32.totalorder %s30, 1
      %p289 = scmp.ne.s32.totalorder %s284, %s286
      %p290 = scmp.eq.s32.totalorder %s30, 0
      %p291 = por %p289, %p290
      %p292 = scmp.ne.s32.totalorder %s284, %s286
      %p293 = scmp.eq.s32.totalorder %s35, 1
      %p294 = por %p292, %p293
      %p295 = scmp.ne.s32.totalorder %s286, %s287
      %p296 = scmp.eq.s32.totalorder %s35, 0
      %p297 = por %p295, %p296
      %p298 = scmp.ne.s32.totalorder %s286, %s287
      %p299 = scmp.eq.s32.totalorder %s36, 1
      %p300 = por %p298, %p299
      %p302 = scmp.ne.s32.totalorder %s287, %s301
      %p303 = scmp.eq.s32.totalorder %s36, 0
      %p304 = por %p302, %p303
      %s306 = sadd.s32 %s305, 1
      %p309 = scmp.eq.s32.totalorder %s30, 1
      %p310 = scmp.ne.s32.totalorder %s305, %s307
      %p311 = scmp.eq.s32.totalorder %s30, 0
      %p312 = por %p310, %p311
      %p313 = scmp.ne.s32.totalorder %s305, %s307
      %p314 = scmp.eq.s32.totalorder %s35, 1
      %p315 = por %p313, %p314
      %p316 = scmp.ne.s32.totalorder %s307, %s308
      %p317 = scmp.eq.s32.totalorder %s35, 0
      %p318 = por %p316, %p317
      %p319 = scmp.ne.s32.totalorder %s307, %s308
      %p320 = scmp.eq.s32.totalorder %s36, 1
      %p321 = por %p319, %p320
      %p323 = scmp.ne.s32.totalorder %s308, %s322
      %p324 = scmp.eq.s32.totalorder %s36, 0
      %p325 = por %p323, %p324
      %s327 = sadd.s32 %s326, 1
      %p330 = scmp.eq.s32.totalorder %s30, 1
      %p331 = scmp.ne.s32.totalorder %s326, %s328
      %p332 = scmp.eq.s32.totalorder %s30, 0
      %p333 = por %p331, %p332
      %p334 = scmp.ne.s32.totalorder %s326, %s328
      %p335 = scmp.eq.s32.totalorder %s35, 1
      %p336 = por %p334, %p335
      %p337 = scmp.ne.s32.totalorder %s328, %s329
      %p338 = scmp.eq.s32.totalorder %s35, 0
      %p339 = por %p337, %p338
      %p340 = scmp.ne.s32.totalorder %s328, %s329
      %p341 = scmp.eq.s32.totalorder %s36, 1
      %p342 = por %p340, %p341
      %p344 = scmp.ne.s32.totalorder %s329, %s343
      %p345 = scmp.eq.s32.totalorder %s36, 0
      %p346 = por %p344, %p345
      %s348 = sadd.s32 %s347, 1
      %p351 = scmp.eq.s32.totalorder %s30, 1
      %p352 = scmp.ne.s32.totalorder %s347, %s349
      %p353 = scmp.eq.s32.totalorder %s30, 0
      %p354 = por %p352, %p353
      %p355 = scmp.ne.s32.totalorder %s347, %s349
      %p356 = scmp.eq.s32.totalorder %s35, 1
      %p357 = por %p355, %p356
      %p358 = scmp.ne.s32.totalorder %s349, %s350
      %p359 = scmp.eq.s32.totalorder %s35, 0
      %p360 = por %p358, %p359
      %p361 = scmp.ne.s32.totalorder %s349, %s350
      %p362 = scmp.eq.s32.totalorder %s36, 1
      %p363 = por %p361, %p362
      %p365 = scmp.ne.s32.totalorder %s350, %s364
      %p366 = scmp.eq.s32.totalorder %s36, 0
      %p367 = por %p365, %p366
      %s369 = sadd.s32 %s368, 1
      %p372 = scmp.eq.s32.totalorder %s30, 1
      %p373 = scmp.ne.s32.totalorder %s368, %s370
      %p374 = scmp.eq.s32.totalorder %s30, 0
      %p375 = por %p373, %p374
      %p376 = scmp.ne.s32.totalorder %s368, %s370
      %p377 = scmp.eq.s32.totalorder %s35, 1
      %p378 = por %p376, %p377
      %p379 = scmp.ne.s32.totalorder %s370, %s371
      %p380 = scmp.eq.s32.totalorder %s35, 0
      %p381 = por %p379, %p380
      %p382 = scmp.ne.s32.totalorder %s370, %s371
      %p383 = scmp.eq.s32.totalorder %s36, 1
      %p384 = por %p382, %p383
      %p386 = scmp.ne.s32.totalorder %s371, %s385
      %p387 = scmp.eq.s32.totalorder %s36, 0
      %p388 = por %p386, %p387
      %s390 = sadd.s32 %s389, 1
      %p393 = scmp.eq.s32.totalorder %s30, 1
      %p394 = scmp.ne.s32.totalorder %s389, %s391
      %p395 = scmp.eq.s32.totalorder %s30, 0
      %p396 = por %p394, %p395
      %p397 = scmp.ne.s32.totalorder %s389, %s391
      %p398 = scmp.eq.s32.totalorder %s35, 1
      %p399 = por %p397, %p398
      %p400 = scmp.ne.s32.totalorder %s391, %s392
      %p401 = scmp.eq.s32.totalorder %s35, 0
      %p402 = por %p400, %p401
      %p403 = scmp.ne.s32.totalorder %s391, %s392
      %p404 = scmp.eq.s32.totalorder %s36, 1
      %p405 = por %p403, %p404
      %p407 = scmp.ne.s32.totalorder %s392, %s406
      %p408 = scmp.eq.s32.totalorder %s36, 0
      %p409 = por %p407, %p408
      %s411 = sadd.s32 %s410, 1
      %p414 = scmp.eq.s32.totalorder %s30, 1
      %p415 = scmp.ne.s32.totalorder %s410, %s412
      %p416 = scmp.eq.s32.totalorder %s30, 0
      %p417 = por %p415, %p416
      %p418 = scmp.ne.s32.totalorder %s410, %s412
      %p419 = scmp.eq.s32.totalorder %s35, 1
      %p420 = por %p418, %p419
      %p421 = scmp.ne.s32.totalorder %s412, %s413
      %p422 = scmp.eq.s32.totalorder %s35, 0
      %p423 = por %p421, %p422
      %p424 = scmp.ne.s32.totalorder %s412, %s413
      %p425 = scmp.eq.s32.totalorder %s36, 1
      %p426 = por %p424, %p425
      %p428 = scmp.ne.s32.totalorder %s413, %s427
      %p429 = scmp.eq.s32.totalorder %s36, 0
      %p430 = por %p428, %p429
      %s432 = sadd.s32 %s431, 1
      %p435 = scmp.eq.s32.totalorder %s30, 1
      %p436 = scmp.ne.s32.totalorder %s431, %s433
      %p437 = scmp.eq.s32.totalorder %s30, 0
      %p438 = por %p436, %p437
      %p439 = scmp.ne.s32.totalorder %s431, %s433
      %p440 = scmp.eq.s32.totalorder %s35, 1
      %p441 = por %p439, %p440
      %p442 = scmp.ne.s32.totalorder %s433, %s434
      %p443 = scmp.eq.s32.totalorder %s35, 0
      %p444 = por %p442, %p443
      %p445 = scmp.ne.s32.totalorder %s433, %s434
      %p446 = scmp.eq.s32.totalorder %s36, 1
      %p447 = por %p445, %p446
      %p449 = scmp.ne.s32.totalorder %s434, %s448
      %p450 = scmp.eq.s32.totalorder %s36, 0
      %p451 = por %p449, %p450
      %s453 = sadd.s32 %s452, 1
      %p456 = scmp.eq.s32.totalorder %s30, 1
      %p457 = scmp.ne.s32.totalorder %s452, %s454
      %p458 = scmp.eq.s32.totalorder %s30, 0
      %p459 = por %p457, %p458
      %p460 = scmp.ne.s32.totalorder %s452, %s454
      %p461 = scmp.eq.s32.totalorder %s35, 1
      %p462 = por %p460, %p461
      %p463 = scmp.ne.s32.totalorder %s454, %s455
      %p464 = scmp.eq.s32.totalorder %s35, 0
      %p465 = por %p463, %p464
      %p466 = scmp.ne.s32.totalorder %s454, %s455
      %p467 = scmp.eq.s32.totalorder %s36, 1
      %p468 = por %p466, %p467
      %p470 = scmp.ne.s32.totalorder %s455, %s469
      %p471 = scmp.eq.s32.totalorder %s36, 0
      %p472 = por %p470, %p471
      %s474 = sadd.s32 %s473, 1
      %p477 = scmp.eq.s32.totalorder %s30, 1
      %p478 = scmp.ne.s32.totalorder %s473, %s475
      %p479 = scmp.eq.s32.totalorder %s30, 0
      %p480 = por %p478, %p479
      %p481 = scmp.ne.s32.totalorder %s473, %s475
      %p482 = scmp.eq.s32.totalorder %s35, 1
      %p483 = por %p481, %p482
      %p484 = scmp.ne.s32.totalorder %s475, %s476
      %p485 = scmp.eq.s32.totalorder %s35, 0
      %p486 = por %p484, %p485
      %p487 = scmp.ne.s32.totalorder %s475, %s476
      %p488 = scmp.eq.s32.totalorder %s36, 1
      %p489 = por %p487, %p488
      %p491 = scmp.ne.s32.totalorder %s476, %s490
      %p492 = scmp.eq.s32.totalorder %s36, 0
      %p493 = por %p491, %p492
      %s495 = sadd.s32 %s494, 1
      %p498 = scmp.eq.s32.totalorder %s30, 1
      %p499 = scmp.ne.s32.totalorder %s494, %s496
      %p500 = scmp.eq.s32.totalorder %s30, 0
      %p501 = por %p499, %p500
      %p502 = scmp.ne.s32.totalorder %s494, %s496
      %p503 = scmp.eq.s32.totalorder %s35, 1
      %p504 = por %p502, %p503
      %p505 = scmp.ne.s32.totalorder %s496, %s497
      %p506 = scmp.eq.s32.totalorder %s35, 0
      %p507 = por %p505, %p506
      %p508 = scmp.ne.s32.totalorder %s496, %s497
      %p509 = scmp.eq.s32.totalorder %s36, 1
      %p510 = por %p508, %p509
      %p512 = scmp.ne.s32.totalorder %s497, %s511
      %p513 = scmp.eq.s32.totalorder %s36, 0
      %p514 = por %p512, %p513
      %s516 = sadd.s32 %s515, 1
      %p519 = scmp.eq.s32.totalorder %s30, 1
      %p520 = scmp.ne.s32.totalorder %s515, %s517
      %p521 = scmp.eq.s32.totalorder %s30, 0
      %p522 = por %p520, %p521
      %p523 = scmp.ne.s32.totalorder %s515, %s517
      %p524 = scmp.eq.s32.totalorder %s35, 1
      %p525 = por %p523, %p524
      %p526 = scmp.ne.s32.totalorder %s517, %s518
      %p527 = scmp.eq.s32.totalorder %s35, 0
      %p528 = por %p526, %p527
      %p529 = scmp.ne.s32.totalorder %s517, %s518
      %p530 = scmp.eq.s32.totalorder %s36, 1
      %p531 = por %p529, %p530
      %p533 = scmp.ne.s32.totalorder %s518, %s532
      %p534 = scmp.eq.s32.totalorder %s36, 0
      %p535 = por %p533, %p534
      %s536 = ssub.s32 %s30, %s37
      %p537 = scmp.eq.s32.totalorder %s536, 0
      %s539 = sadd.s32 %s538, 1
      %s540 = scalar_select %p537, %s538, %s539
      %p543 = pneg %p537
      %p544 = scmp.eq.s32.totalorder %s30, 1
      %p545 = por %p543, %p544
      %p546 = scmp.ne.s32.totalorder %s538, %s541
      %p547 = scmp.eq.s32.totalorder %s30, 0
      %p548 = por %p546, %p547
      %p549 = scmp.ne.s32.totalorder %s538, %s541
      %p550 = scmp.eq.s32.totalorder %s35, 1
      %p551 = por %p549, %p550
      %p552 = scmp.ne.s32.totalorder %s541, %s542
      %p553 = scmp.eq.s32.totalorder %s35, 0
      %p554 = por %p552, %p553
      %p555 = scmp.ne.s32.totalorder %s541, %s542
      %p556 = scmp.eq.s32.totalorder %s36, 1
      %p557 = por %p555, %p556
      %p559 = scmp.ne.s32.totalorder %s542, %s558
      %p560 = scmp.eq.s32.totalorder %s36, 0
      %p561 = por %p559, %p560
      %p562 = scmp.le.s32.totalorder 1, %s30
      %p563 = scmp.lt.s32.totalorder %s30, 3
      %p564 = pnand %p562, %p563
      %p565 = pneg %p564
      // Predicated region
      $region9: #{seq2seq_trans_forward.10} parent=5 // pred_check
        _
      $region10: #{seq2seq_trans_forward.10} parent=5 // pred_check_branch
        %567 = sbr.rel (%p564) target = $region12
      $region11: #{seq2seq_trans_forward.10} parent=5 // pred_region
        %s568 = ssub.s32 %s30, 1
        // Predicated region
        $region13: #{seq2seq_trans_forward.10} parent=11 // pred_check
          %p569 = pneg %p129
        $region14: #{seq2seq_trans_forward.10} parent=11 // pred_check_branch
          %571 = sbr.rel (%p569) target = $region16
        $region15: #{seq2seq_trans_forward.10} parent=11 // pred_region
          _
        $region16: #{seq2seq_trans_forward.10} parent=11 // pred_fallthru
          _
        // Predicated region
        $region17: #{seq2seq_trans_forward.10} parent=11 // pred_check
          %p572 = pneg %p150
        $region18: #{seq2seq_trans_forward.10} parent=11 // pred_check_branch
          %574 = sbr.rel (%p572) target = $region20
        $region19: #{seq2seq_trans_forward.10} parent=11 // pred_region
          _
        $region20: #{seq2seq_trans_forward.10} parent=11 // pred_fallthru
          _
        // Predicated region
        $region21: #{seq2seq_trans_forward.10} parent=11 // pred_check
          %p575 = pneg %p171
        $region22: #{seq2seq_trans_forward.10} parent=11 // pred_check_branch
          %577 = sbr.rel (%p575) target = $region24
        $region23: #{seq2seq_trans_forward.10} parent=11 // pred_region
          _
        $region24: #{seq2seq_trans_forward.10} parent=11 // pred_fallthru
          _
        // Predicated region
        $region25: #{seq2seq_trans_forward.10} parent=11 // pred_check
          %p578 = pneg %p192
        $region26: #{seq2seq_trans_forward.10} parent=11 // pred_check_branch
          %580 = sbr.rel (%p578) target = $region28
        $region27: #{seq2seq_trans_forward.10} parent=11 // pred_region
          _
        $region28: #{seq2seq_trans_forward.10} parent=11 // pred_fallthru
          _
        // Predicated region
        $region29: #{seq2seq_trans_forward.10} parent=11 // pred_check
          %p581 = pneg %p213
        $region30: #{seq2seq_trans_forward.10} parent=11 // pred_check_branch
          %583 = sbr.rel (%p581) target = $region32
        $region31: #{seq2seq_trans_forward.10} parent=11 // pred_region
          _
        $region32: #{seq2seq_trans_forward.10} parent=11 // pred_fallthru
          _
        // Predicated region
        $region33: #{seq2seq_trans_forward.10} parent=11 // pred_check
          %p584 = pneg %p234
        $region34: #{seq2seq_trans_forward.10} parent=11 // pred_check_branch
          %586 = sbr.rel (%p584) target = $region36
        $region35: #{seq2seq_trans_forward.10} parent=11 // pred_region
          _
        $region36: #{seq2seq_trans_forward.10} parent=11 // pred_fallthru
          _
        // Predicated region
        $region37: #{seq2seq_trans_forward.10} parent=11 // pred_check
          %p587 = pneg %p255
        $region38: #{seq2seq_trans_forward.10} parent=11 // pred_check_branch
          %589 = sbr.rel (%p587) target = $region40
        $region39: #{seq2seq_trans_forward.10} parent=11 // pred_region
          _
        $region40: #{seq2seq_trans_forward.10} parent=11 // pred_fallthru
          _
        // Predicated region
        $region41: #{seq2seq_trans_forward.10} parent=11 // pred_check
          %p590 = pneg %p276
        $region42: #{seq2seq_trans_forward.10} parent=11 // pred_check_branch
          %592 = sbr.rel (%p590) target = $region44
        $region43: #{seq2seq_trans_forward.10} parent=11 // pred_region
          _
        $region44: #{seq2seq_trans_forward.10} parent=11 // pred_fallthru
          _
        // Predicated region
        $region45: #{seq2seq_trans_forward.10} parent=11 // pred_check
          %p593 = pneg %p297
        $region46: #{seq2seq_trans_forward.10} parent=11 // pred_check_branch
          %595 = sbr.rel (%p593) target = $region48
        $region47: #{seq2seq_trans_forward.10} parent=11 // pred_region
          _
        $region48: #{seq2seq_trans_forward.10} parent=11 // pred_fallthru
          _
        // Predicated region
        $region49: #{seq2seq_trans_forward.10} parent=11 // pred_check
          %p596 = pneg %p318
        $region50: #{seq2seq_trans_forward.10} parent=11 // pred_check_branch
          %598 = sbr.rel (%p596) target = $region52
        $region51: #{seq2seq_trans_forward.10} parent=11 // pred_region
          _
        $region52: #{seq2seq_trans_forward.10} parent=11 // pred_fallthru
          _
        // Predicated region
        $region53: #{seq2seq_trans_forward.10} parent=11 // pred_check
          %p599 = pneg %p339
        $region54: #{seq2seq_trans_forward.10} parent=11 // pred_check_branch
          %601 = sbr.rel (%p599) target = $region56
        $region55: #{seq2seq_trans_forward.10} parent=11 // pred_region
          _
        $region56: #{seq2seq_trans_forward.10} parent=11 // pred_fallthru
          _
        // Predicated region
        $region57: #{seq2seq_trans_forward.10} parent=11 // pred_check
          %p602 = pneg %p360
        $region58: #{seq2seq_trans_forward.10} parent=11 // pred_check_branch
          %604 = sbr.rel (%p602) target = $region60
        $region59: #{seq2seq_trans_forward.10} parent=11 // pred_region
          _
        $region60: #{seq2seq_trans_forward.10} parent=11 // pred_fallthru
          _
        // Predicated region
        $region61: #{seq2seq_trans_forward.10} parent=11 // pred_check
          %p605 = pneg %p381
        $region62: #{seq2seq_trans_forward.10} parent=11 // pred_check_branch
          %607 = sbr.rel (%p605) target = $region64
        $region63: #{seq2seq_trans_forward.10} parent=11 // pred_region
          _
        $region64: #{seq2seq_trans_forward.10} parent=11 // pred_fallthru
          _
        // Predicated region
        $region65: #{seq2seq_trans_forward.10} parent=11 // pred_check
          %p608 = pneg %p402
        $region66: #{seq2seq_trans_forward.10} parent=11 // pred_check_branch
          %610 = sbr.rel (%p608) target = $region68
        $region67: #{seq2seq_trans_forward.10} parent=11 // pred_region
          _
        $region68: #{seq2seq_trans_forward.10} parent=11 // pred_fallthru
          _
        // Predicated region
        $region69: #{seq2seq_trans_forward.10} parent=11 // pred_check
          %p611 = pneg %p423
        $region70: #{seq2seq_trans_forward.10} parent=11 // pred_check_branch
          %613 = sbr.rel (%p611) target = $region72
        $region71: #{seq2seq_trans_forward.10} parent=11 // pred_region
          _
        $region72: #{seq2seq_trans_forward.10} parent=11 // pred_fallthru
          _
        // Predicated region
        $region73: #{seq2seq_trans_forward.10} parent=11 // pred_check
          %p614 = pneg %p444
        $region74: #{seq2seq_trans_forward.10} parent=11 // pred_check_branch
          %616 = sbr.rel (%p614) target = $region76
        $region75: #{seq2seq_trans_forward.10} parent=11 // pred_region
          _
        $region76: #{seq2seq_trans_forward.10} parent=11 // pred_fallthru
          _
        // Predicated region
        $region77: #{seq2seq_trans_forward.10} parent=11 // pred_check
          %p617 = pneg %p465
        $region78: #{seq2seq_trans_forward.10} parent=11 // pred_check_branch
          %619 = sbr.rel (%p617) target = $region80
        $region79: #{seq2seq_trans_forward.10} parent=11 // pred_region
          _
        $region80: #{seq2seq_trans_forward.10} parent=11 // pred_fallthru
          _
        // Predicated region
        $region81: #{seq2seq_trans_forward.10} parent=11 // pred_check
          %p620 = pneg %p486
        $region82: #{seq2seq_trans_forward.10} parent=11 // pred_check_branch
          %622 = sbr.rel (%p620) target = $region84
        $region83: #{seq2seq_trans_forward.10} parent=11 // pred_region
          _
        $region84: #{seq2seq_trans_forward.10} parent=11 // pred_fallthru
          _
        // Predicated region
        $region85: #{seq2seq_trans_forward.10} parent=11 // pred_check
          %p623 = pneg %p507
        $region86: #{seq2seq_trans_forward.10} parent=11 // pred_check_branch
          %625 = sbr.rel (%p623) target = $region88
        $region87: #{seq2seq_trans_forward.10} parent=11 // pred_region
          _
        $region88: #{seq2seq_trans_forward.10} parent=11 // pred_fallthru
          _
        // Predicated region
        $region89: #{seq2seq_trans_forward.10} parent=11 // pred_check
          %p626 = pneg %p528
        $region90: #{seq2seq_trans_forward.10} parent=11 // pred_check_branch
          %628 = sbr.rel (%p626) target = $region92
        $region91: #{seq2seq_trans_forward.10} parent=11 // pred_region
          %s630 = ssub.s32 16, 16
          %631 = vsyncadd [#allocation3], %s630
          %s633 = sshll.u32 [#allocation2], 4
          %s634 = int_to_ptr.vmem [resolvable:$true] %s633
          %636 = dma.hbm_to_vmem [thread:$0]  %s22, 16, %s634, [#allocation3]
        $region92: #{seq2seq_trans_forward.10} parent=11 // pred_fallthru
          _
      $region12: #{seq2seq_trans_forward.10} parent=5 // pred_fallthru
        _
      %p637 = scmp.lt.s32.totalorder %s30, 2
      // Predicated region
      $region93: #{seq2seq_trans_forward.10} parent=5 // pred_check
        %p638 = pneg %p637
      $region94: #{seq2seq_trans_forward.10} parent=5 // pred_check_branch
        %640 = sbr.rel (%p638) target = $region96
      $region95: #{seq2seq_trans_forward.10} parent=5 // pred_region
        // Predicated region
        $region97: #{seq2seq_trans_forward.10} parent=95 // pred_check
          %p641 = pneg %p50
        $region98: #{seq2seq_trans_forward.10} parent=95 // pred_check_branch
          %643 = sbr.rel (%p641) target = $region100
        $region99: #{seq2seq_trans_forward.10} parent=95 // pred_region
          %p644 = scmp.lt.s32.totalorder %s30, 1
          %s645 = scalar_select %p644, %s30, 1
          %s646 = smul.addr %s645, 4
          %s647 = scalar_lea.vmem %s0, %s646
        $region100: #{seq2seq_trans_forward.10} parent=95 // pred_fallthru
          _
        // Predicated region
        $region101: #{seq2seq_trans_forward.10} parent=95 // pred_check
          %p648 = pneg %p76
        $region102: #{seq2seq_trans_forward.10} parent=95 // pred_check_branch
          %650 = sbr.rel (%p648) target = $region104
        $region103: #{seq2seq_trans_forward.10} parent=95 // pred_region
          %p651 = scmp.lt.s32.totalorder %s30, 1
          %s652 = scalar_select %p651, %s30, 1
          %s653 = smul.addr %s652, 4
          %s654 = scalar_lea.vmem %s1, %s653
        $region104: #{seq2seq_trans_forward.10} parent=95 // pred_fallthru
          _
        // Predicated region
        $region105: #{seq2seq_trans_forward.10} parent=95 // pred_check
          %p655 = pneg %p102
        $region106: #{seq2seq_trans_forward.10} parent=95 // pred_check_branch
          %657 = sbr.rel (%p655) target = $region108
        $region107: #{seq2seq_trans_forward.10} parent=95 // pred_region
          %p658 = scmp.lt.s32.totalorder %s30, 1
          %s659 = scalar_select %p658, %s30, 1
          %s660 = scalar_lea.vmem %s2, %s659
        $region108: #{seq2seq_trans_forward.10} parent=95 // pred_fallthru
          _
      $region96: #{seq2seq_trans_forward.10} parent=5 // pred_fallthru
        _
      %p661 = scmp.le.s32.totalorder 1, %s30
      %p662 = scmp.lt.s32.totalorder %s30, 3
      %p663 = pnand %p661, %p662
      %p664 = pneg %p663
      // Predicated region
      $region109: #{seq2seq_trans_forward.10} parent=5 // pred_check
        _
      $region110: #{seq2seq_trans_forward.10} parent=5 // pred_check_branch
        %666 = sbr.rel (%p663) target = $region112
      $region111: #{seq2seq_trans_forward.10} parent=5 // pred_region
        %s667 = ssub.s32 %s30, 1
        // Predicated region
        $region113: #{seq2seq_trans_forward.10} parent=111 // pred_check
          %p668 = pneg %p528
        $region114: #{seq2seq_trans_forward.10} parent=111 // pred_check_branch
          %670 = sbr.rel (%p668) target = $region116
        $region115: #{seq2seq_trans_forward.10} parent=111 // pred_region
          %671 = dma.done [#allocation3], 16
        $region116: #{seq2seq_trans_forward.10} parent=111 // pred_fallthru
          _
        %p672 = scmp.lt.s32.totalorder %s35, 1
        %s673 = scalar_select %p672, %s35, 1
        %s674 = smul.addr %s673, 4
        %s675 = scalar_lea.vmem %s0, %s674
        %p676 = pneg %p56
        %p677 = pneg %p53
        %p678 = scmp.lt.s32.totalorder %s35, 1
        %s679 = scalar_select %p678, %s35, 1
        %s680 = smul.addr %s679, 4
        %s681 = scalar_lea.vmem %s1, %s680
        %p682 = pneg %p82
        %p683 = pneg %p79
        %p684 = scmp.lt.s32.totalorder %s35, 1
        %s685 = scalar_select %p684, %s35, 1
        %s686 = scalar_lea.vmem %s2, %s685
        %p687 = pneg %p108
        %p688 = pneg %p105
        %p689 = pneg %p129
        %p690 = pneg %p126
        %p691 = pneg %p150
        %p692 = pneg %p147
        %p693 = pneg %p171
        %p694 = pneg %p168
        %p695 = pneg %p192
        %p696 = pneg %p189
        %p697 = pneg %p213
        %p698 = pneg %p210
        %p699 = pneg %p234
        %p700 = pneg %p231
        %p701 = pneg %p255
        %p702 = pneg %p252
        %p703 = pneg %p276
        %p704 = pneg %p273
        %p705 = pneg %p297
        %p706 = pneg %p294
        %p707 = pneg %p318
        %p708 = pneg %p315
        %p709 = pneg %p339
        %p710 = pneg %p336
        %p711 = pneg %p360
        %p712 = pneg %p357
        %p713 = pneg %p381
        %p714 = pneg %p378
        %p715 = pneg %p402
        %p716 = pneg %p399
        %p717 = pneg %p423
        %p718 = pneg %p420
        %p719 = pneg %p444
        %p720 = pneg %p441
        %p721 = pneg %p465
        %p722 = pneg %p462
        %p723 = pneg %p486
        %p724 = pneg %p483
        %p725 = pneg %p507
        %p726 = pneg %p504
        %p727 = pneg %p528
        %p728 = pneg %p525
        %p729 = pneg %p554
        %p730 = pneg %p551
        %p731 = scmp.lt.s32.totalorder %s35, 1
        %s732 = scalar_select %p731, %s35, 1
        %s733 = smul.addr %s732, 4
        %s734 = scalar_lea.vmem %s23, %s733
        %p735 = scmp.lt.s32.totalorder %s35, 1
        %s736 = scalar_select %p735, %s35, 1
        %s737 = smul.addr %s736, 4
        %s738 = scalar_lea.vmem %s0, %s737
        %p739 = scmp.lt.s32.totalorder %s35, 1
        %s740 = scalar_select %p739, %s35, 1
        %s741 = smul.addr %s740, 4
        %s742 = scalar_lea.vmem %s1, %s741
        %p743 = scmp.lt.s32.totalorder %s35, 1
        %s744 = scalar_select %p743, %s35, 1
        %s745 = scalar_lea.vmem %s2, %s744
        %p746 = scmp.lt.s32.totalorder %s35, 1
        %s747 = scalar_select %p746, %s35, 1
        %s748 = smul.addr %s747, 4
        %s749 = scalar_lea.vmem %s23, %s748
        %v751 = vld [vmem:[%s738] sm:$0xf]
        %v752 = vunpack.c.l.bf16 %v751
        %v753 = vld [vmem:[%s745] sm:$0x1]
        %v754 = vld [vmem:[%s3] sm:$0xf]
        %v755 = vld [vmem:[%s3 + $0x4] sm:$0xf]
        %v756 = vld [vmem:[%s3 + $0x8] sm:$0xf]
        %v757 = vld [vmem:[%s3 + $0xc] sm:$0xf]
        %v758 = vld [vmem:[%s4] sm:$0x1]
        %v760 = vlaneseq
        %v761 = vshrl.u32 %v760, 7
        %v762 = vsub.s32 0, %v761
        %v763 = vrot.slane %v758, %v762
        %v769 = vunpack.c.l.b16 %v754
        %v770 = vunpack.c.l.b16 %v755
        %v771 = vunpack.c.l.b16 %v756
        %v772 = vunpack.c.l.b16 %v757
        %v773 = vpack.c.b16 %v770, %v769
        %v774 = vpack.c.b16 %v772, %v771
        %vm777 = vcmask 261120
        %v779 = vsel %vm777, %v751, 0
        %781 = vmatprep.subr.bf16.mxu0 0
        %782 = vmatpush1.bf16.msra.mxu0 0
        %783 = vmatprep.subr.bf16.mxu0 0
        %784 = vmatpush1.bf16.msra.mxu0 0
        %785 = vmatprep.subr.bf16.mxu0 0
        %786 = vmatpush1.bf16.msra.mxu0 0
        %787 = vmatprep.subr.bf16.mxu0 0
        %788 = vmatpush1.bf16.msra.mxu0 0
        %789 = vmatprep.subr.bf16.mxu0 0
        %790 = vmatpush1.bf16.msra.mxu0 0
        %791 = vmatprep.subr.bf16.mxu0 0
        %792 = vmatpush1.bf16.msra.mxu0 0
        %793 = vmatprep.subr.bf16.mxu0 0
        %794 = vmatpush1.bf16.msra.mxu0 %v774
        %795 = vmatprep.subr.bf16.mxu0 0
        %796 = vmatpush1.bf16.msra.mxu0 %v773
        %797 = vmatprep.subr.bf16.mxu0 0
        %798 = vmatpush2.bf16.msra.mxu0 0
        %799 = vmatprep.subr.bf16.mxu0 0
        %800 = vmatpush2.bf16.msra.mxu0 0
        %801 = vmatprep.subr.bf16.mxu0 0
        %802 = vmatpush2.bf16.msra.mxu0 0
        %803 = vmatprep.subr.bf16.mxu0 0
        %804 = vmatpush2.bf16.msra.mxu0 0
        %805 = vmatprep.subr.bf16.mxu0 0
        %806 = vmatpush2.bf16.msra.mxu0 0
        %807 = vmatprep.subr.bf16.mxu0 0
        %808 = vmatpush2.bf16.msra.mxu0 0
        %809 = vmatprep.subr.bf16.mxu0 0
        %810 = vmatpush2.bf16.msra.mxu0 0
        %811 = vmatprep.subr.bf16.mxu0 0
        %812 = vmatpush2.bf16.msra.mxu0 0
        %813 = vmatprep.mubr.bf16.mxu0 0
        %814 = vmatmul.mubr.bf16.gmra.mxu0 %v779
        %v815 = vpop.f32.mrf.mxu0
        %v816 = vadd.f32 %v763, %v815
        %v817 = vpop.f32.mrf.mxu0
        %v818 = vpop.f32.mrf.mxu0
        %v819 = vpop.f32.mrf.mxu0
        %820 = vdwg.mxu0
        %v821 = vld [vmem:[%s5] sm:$0xf]
        %v822 = vld [vmem:[%s5 + $0x4] sm:$0xf]
        %v823 = vld [vmem:[%s5 + $0x8] sm:$0xf]
        %v824 = vld [vmem:[%s5 + $0xc] sm:$0xf]
        %v825 = vpack.c.bf16 %v816, %v816
        %827 = vrot.lane.b32.xlu0 %v825, 96
        %v828 = vpop.permute.xlu0 %827
        %vm829 = vcmask 64512
        %v831 = vsel %vm829, %v825, 0
        %v834 = vsel %vm829, %v828, 0
        %836 = vmatprep.subr.bf16.mxu0 0
        %837 = vmatpush1.bf16.xpose.msra.mxu0 0
        %838 = vmatprep.subr.bf16.mxu0 0
        %839 = vmatpush1.bf16.xpose.msra.mxu0 0
        %840 = vmatprep.subr.bf16.mxu0 0
        %841 = vmatpush1.bf16.xpose.msra.mxu0 0
        %842 = vmatprep.subr.bf16.mxu0 0
        %843 = vmatpush1.bf16.xpose.msra.mxu0 0
        %844 = vmatprep.subr.bf16.mxu0 0
        %845 = vmatpush1.bf16.xpose.msra.mxu0 0
        %846 = vmatprep.subr.bf16.mxu0 0
        %847 = vmatpush1.bf16.xpose.msra.mxu0 0
        %848 = vmatprep.subr.bf16.mxu0 0
        %849 = vmatpush1.bf16.xpose.msra.mxu0 0
        %850 = vmatprep.subr.bf16.mxu0 0
        %851 = vmatpush1.bf16.xpose.msra.mxu0 %v834
        %852 = vmatprep.subr.bf16.mxu0 0
        %853 = vmatpush2.bf16.xpose.msra.mxu0 0
        %854 = vmatprep.subr.bf16.mxu0 0
        %855 = vmatpush2.bf16.xpose.msra.mxu0 0
        %856 = vmatprep.subr.bf16.mxu0 0
        %857 = vmatpush2.bf16.xpose.msra.mxu0 0
        %858 = vmatprep.subr.bf16.mxu0 0
        %859 = vmatpush2.bf16.xpose.msra.mxu0 0
        %860 = vmatprep.subr.bf16.mxu0 0
        %861 = vmatpush2.bf16.xpose.msra.mxu0 0
        %862 = vmatprep.subr.bf16.mxu0 0
        %863 = vmatpush2.bf16.xpose.msra.mxu0 0
        %864 = vmatprep.subr.bf16.mxu0 0
        %865 = vmatpush2.bf16.xpose.msra.mxu0 0
        %866 = vmatprep.subr.bf16.mxu0 0
        %867 = vmatpush2.bf16.xpose.msra.mxu0 0
        %868 = vmatprep.mubr.bf16.mxu0 0
        %869 = vmatmul.mubr.bf16.gmra.mxu0 %v831
        %v870 = vpop.f32.mrf.mxu0
        %v871 = vadd.f32 0.0, %v870
        %v872 = vpop.f32.mrf.mxu0
        %v873 = vpop.f32.mrf.mxu0
        %v874 = vpop.f32.mrf.mxu0
        %875 = vdwg.mxu0
        %v876 = vmul.f32 %v871, 0.35355338
        %v878 = vlaneseq
        %v879 = vshrl.u32 %v878, 7
        %v880 = vsub.s32 0, %v879
        %v881 = vrot.slane %v753, %v880
        %v883 = vadd.f32 %v876, %v881
        %v884 = vsel %vm829, %v883, -inf
        %885 = vmax.xlane.f32.xlu0 %v884
        %v886 = vpop.xlane.xlu0 %885
        %vm887 = vcmp.eq.f32.partialorder %v886, -inf
        %v888 = vsel %vm887, 0.0, %v886
        %v889 = vsub.f32 %v883, %v888
        %v890 = vmul.f32 %v889, 1.442695
        %v891 = vpow.pop %v890
        %v892 = vsel %vm829, %v891, 0.0
        %893 = vadd.xlane.f32.xlu0 %v892
        %v894 = vpop.xlane.xlu0 %893
        %vm895 = vcmp.eq.f32.partialorder %v894, 0.0
        %v896 = vsel %vm895, 1.0, %v894
        %v897 = vrcp.pop %v896
        %v898 = vmul.f32 %v891, %v897
        %v899 = vpack.c.bf16 %v898, %v898
        %900 = vrot.lane.b32.xlu0 %v825, 64
        %v901 = vpop.permute.xlu0 %900
        %v903 = vsel %vm829, %v899, 0
        %vm905 = vcmask 1043456
        %v907 = vsel %vm905, %v901, 0
        %909 = vmatprep.subr.bf16.mxu0 0
        %910 = vmatpush1.bf16.msra.mxu0 0
        %911 = vmatprep.subr.bf16.mxu0 0
        %912 = vmatpush1.bf16.msra.mxu0 0
        %913 = vmatprep.subr.bf16.mxu0 0
        %914 = vmatpush1.bf16.msra.mxu0 0
        %915 = vmatprep.subr.bf16.mxu0 0
        %916 = vmatpush1.bf16.msra.mxu0 0
        %917 = vmatprep.subr.bf16.mxu0 0
        %918 = vmatpush1.bf16.msra.mxu0 0
        %919 = vmatprep.subr.bf16.mxu0 0
        %920 = vmatpush1.bf16.msra.mxu0 0
        %921 = vmatprep.subr.bf16.mxu0 0
        %922 = vmatpush1.bf16.msra.mxu0 0
        %923 = vmatprep.subr.bf16.mxu0 0
        %924 = vmatpush1.bf16.msra.mxu0 %v907
        %925 = vmatprep.subr.bf16.mxu0 0
        %926 = vmatpush2.bf16.msra.mxu0 0
        %927 = vmatprep.subr.bf16.mxu0 0
        %928 = vmatpush2.bf16.msra.mxu0 0
        %929 = vmatprep.subr.bf16.mxu0 0
        %930 = vmatpush2.bf16.msra.mxu0 0
        %931 = vmatprep.subr.bf16.mxu0 0
        %932 = vmatpush2.bf16.msra.mxu0 0
        %933 = vmatprep.subr.bf16.mxu0 0
        %934 = vmatpush2.bf16.msra.mxu0 0
        %935 = vmatprep.subr.bf16.mxu0 0
        %936 = vmatpush2.bf16.msra.mxu0 0
        %937 = vmatprep.subr.bf16.mxu0 0
        %938 = vmatpush2.bf16.msra.mxu0 0
        %939 = vmatprep.subr.bf16.mxu0 0
        %940 = vmatpush2.bf16.msra.mxu0 0
        %941 = vmatprep.mubr.bf16.mxu0 0
        %942 = vmatmul.mubr.bf16.gmra.mxu0 %v903
        %v943 = vpop.f32.mrf.mxu0
        %v944 = vadd.f32 0.0, %v943
        %v945 = vpop.f32.mrf.mxu0
        %v946 = vpop.f32.mrf.mxu0
        %v947 = vpop.f32.mrf.mxu0
        %948 = vdwg.mxu0
        %v949 = vpack.c.bf16 %v944, %v944
        %950 = vrot.lane.b32.xlu0 %v825, 120
        %v951 = vpop.permute.xlu0 %950
        %952 = vrot.lane.b32.xlu0 %v825, 88
        %v953 = vpop.permute.xlu0 %952
        %v955 = vsel %vm829, %v951, 0
        %v958 = vsel %vm829, %v953, 0
        %960 = vmatprep.subr.bf16.mxu0 0
        %961 = vmatpush1.bf16.xpose.msra.mxu0 0
        %962 = vmatprep.subr.bf16.mxu0 0
        %963 = vmatpush1.bf16.xpose.msra.mxu0 0
        %964 = vmatprep.subr.bf16.mxu0 0
        %965 = vmatpush1.bf16.xpose.msra.mxu0 0
        %966 = vmatprep.subr.bf16.mxu0 0
        %967 = vmatpush1.bf16.xpose.msra.mxu0 0
        %968 = vmatprep.subr.bf16.mxu0 0
        %969 = vmatpush1.bf16.xpose.msra.mxu0 0
        %970 = vmatprep.subr.bf16.mxu0 0
        %971 = vmatpush1.bf16.xpose.msra.mxu0 0
        %972 = vmatprep.subr.bf16.mxu0 0
        %973 = vmatpush1.bf16.xpose.msra.mxu0 0
        %974 = vmatprep.subr.bf16.mxu0 0
        %975 = vmatpush1.bf16.xpose.msra.mxu0 %v958
        %976 = vmatprep.subr.bf16.mxu0 0
        %977 = vmatpush2.bf16.xpose.msra.mxu0 0
        %978 = vmatprep.subr.bf16.mxu0 0
        %979 = vmatpush2.bf16.xpose.msra.mxu0 0
        %980 = vmatprep.subr.bf16.mxu0 0
        %981 = vmatpush2.bf16.xpose.msra.mxu0 0
        %982 = vmatprep.subr.bf16.mxu0 0
        %983 = vmatpush2.bf16.xpose.msra.mxu0 0
        %984 = vmatprep.subr.bf16.mxu0 0
        %985 = vmatpush2.bf16.xpose.msra.mxu0 0
        %986 = vmatprep.subr.bf16.mxu0 0
        %987 = vmatpush2.bf16.xpose.msra.mxu0 0
        %988 = vmatprep.subr.bf16.mxu0 0
        %989 = vmatpush2.bf16.xpose.msra.mxu0 0
        %990 = vmatprep.subr.bf16.mxu0 0
        %991 = vmatpush2.bf16.xpose.msra.mxu0 0
        %992 = vmatprep.mubr.bf16.mxu0 0
        %993 = vmatmul.mubr.bf16.gmra.mxu0 %v955
        %v994 = vpop.f32.mrf.mxu0
        %v995 = vadd.f32 0.0, %v994
        %v996 = vpop.f32.mrf.mxu0
        %v997 = vpop.f32.mrf.mxu0
        %v998 = vpop.f32.mrf.mxu0
        %999 = vdwg.mxu0
        %v1000 = vmul.f32 %v995, 0.35355338
        %v1001 = vadd.f32 %v1000, %v881
        %v1002 = vsel %vm829, %v1001, -inf
        %1003 = vmax.xlane.f32.xlu0 %v1002
        %v1004 = vpop.xlane.xlu0 %1003
        %vm1005 = vcmp.eq.f32.partialorder %v1004, -inf
        %v1006 = vsel %vm1005, 0.0, %v1004
        %v1007 = vsub.f32 %v1001, %v1006
        %v1008 = vmul.f32 %v1007, 1.442695
        %v1009 = vpow.pop %v1008
        %v1010 = vsel %vm829, %v1009, 0.0
        %1011 = vadd.xlane.f32.xlu0 %v1010
        %v1012 = vpop.xlane.xlu0 %1011
        %vm1013 = vcmp.eq.f32.partialorder %v1012, 0.0
        %v1014 = vsel %vm1013, 1.0, %v1012
        %v1015 = vrcp.pop %v1014
        %v1016 = vmul.f32 %v1009, %v1015
        %v1017 = vpack.c.bf16 %v1016, %v1016
        %1018 = vrot.lane.b32.xlu0 %v825, 56
        %v1019 = vpop.permute.xlu0 %1018
        %v1021 = vsel %vm829, %v1017, 0
        %v1024 = vsel %vm905, %v1019, 0
        %1026 = vmatprep.subr.bf16.mxu0 0
        %1027 = vmatpush1.bf16.msra.mxu0 0
        %1028 = vmatprep.subr.bf16.mxu0 0
        %1029 = vmatpush1.bf16.msra.mxu0 0
        %1030 = vmatprep.subr.bf16.mxu0 0
        %1031 = vmatpush1.bf16.msra.mxu0 0
        %1032 = vmatprep.subr.bf16.mxu0 0
        %1033 = vmatpush1.bf16.msra.mxu0 0
        %1034 = vmatprep.subr.bf16.mxu0 0
        %1035 = vmatpush1.bf16.msra.mxu0 0
        %1036 = vmatprep.subr.bf16.mxu0 0
        %1037 = vmatpush1.bf16.msra.mxu0 0
        %1038 = vmatprep.subr.bf16.mxu0 0
        %1039 = vmatpush1.bf16.msra.mxu0 0
        %1040 = vmatprep.subr.bf16.mxu0 0
        %1041 = vmatpush1.bf16.msra.mxu0 %v1024
        %1042 = vmatprep.subr.bf16.mxu0 0
        %1043 = vmatpush2.bf16.msra.mxu0 0
        %1044 = vmatprep.subr.bf16.mxu0 0
        %1045 = vmatpush2.bf16.msra.mxu0 0
        %1046 = vmatprep.subr.bf16.mxu0 0
        %1047 = vmatpush2.bf16.msra.mxu0 0
        %1048 = vmatprep.subr.bf16.mxu0 0
        %1049 = vmatpush2.bf16.msra.mxu0 0
        %1050 = vmatprep.subr.bf16.mxu0 0
        %1051 = vmatpush2.bf16.msra.mxu0 0
        %1052 = vmatprep.subr.bf16.mxu0 0
        %1053 = vmatpush2.bf16.msra.mxu0 0
        %1054 = vmatprep.subr.bf16.mxu0 0
        %1055 = vmatpush2.bf16.msra.mxu0 0
        %1056 = vmatprep.subr.bf16.mxu0 0
        %1057 = vmatpush2.bf16.msra.mxu0 0
        %1058 = vmatprep.mubr.bf16.mxu0 0
        %1059 = vmatmul.mubr.bf16.gmra.mxu0 %v1021
        %v1060 = vpop.f32.mrf.mxu0
        %v1061 = vadd.f32 0.0, %v1060
        %v1062 = vpop.f32.mrf.mxu0
        %v1063 = vpop.f32.mrf.mxu0
        %v1064 = vpop.f32.mrf.mxu0
        %1065 = vdwg.mxu0
        %v1066 = vpack.c.bf16 %v1061, %v1061
        %v1068 = vsel %vm829, %v1066, 0
        %v1071 = vsel %vm905, %v822, 0
        %1073 = vmatprep.subr.bf16.mxu0 0
        %1074 = vmatpush1.bf16.msra.mxu0 0
        %1075 = vmatprep.subr.bf16.mxu0 0
        %1076 = vmatpush1.bf16.msra.mxu0 0
        %1077 = vmatprep.subr.bf16.mxu0 0
        %1078 = vmatpush1.bf16.msra.mxu0 0
        %1079 = vmatprep.subr.bf16.mxu0 0
        %1080 = vmatpush1.bf16.msra.mxu0 0
        %1081 = vmatprep.subr.bf16.mxu0 0
        %1082 = vmatpush1.bf16.msra.mxu0 0
        %1083 = vmatprep.subr.bf16.mxu0 0
        %1084 = vmatpush1.bf16.msra.mxu0 0
        %1085 = vmatprep.subr.bf16.mxu0 0
        %1086 = vmatpush1.bf16.msra.mxu0 0
        %1087 = vmatprep.subr.bf16.mxu0 0
        %1088 = vmatpush1.bf16.msra.mxu0 %v1071
        %1089 = vmatprep.subr.bf16.mxu0 0
        %1090 = vmatpush2.bf16.msra.mxu0 0
        %1091 = vmatprep.subr.bf16.mxu0 0
        %1092 = vmatpush2.bf16.msra.mxu0 0
        %1093 = vmatprep.subr.bf16.mxu0 0
        %1094 = vmatpush2.bf16.msra.mxu0 0
        %1095 = vmatprep.subr.bf16.mxu0 0
        %1096 = vmatpush2.bf16.msra.mxu0 0
        %1097 = vmatprep.subr.bf16.mxu0 0
        %1098 = vmatpush2.bf16.msra.mxu0 0
        %1099 = vmatprep.subr.bf16.mxu0 0
        %1100 = vmatpush2.bf16.msra.mxu0 0
        %1101 = vmatprep.subr.bf16.mxu0 0
        %1102 = vmatpush2.bf16.msra.mxu0 0
        %1103 = vmatprep.subr.bf16.mxu0 0
        %1104 = vmatpush2.bf16.msra.mxu0 0
        %1105 = vmatprep.mubr.bf16.mxu0 0
        %1106 = vmatmul.mubr.bf16.gmra.mxu0 %v1068
        %v1107 = vpop.f32.mrf.mxu0
        %v1108 = vadd.f32 0.0, %v1107
        %v1109 = vpop.f32.mrf.mxu0
        %v1110 = vpop.f32.mrf.mxu0
        %v1111 = vpop.f32.mrf.mxu0
        %1112 = vdwg.mxu0
        %v1114 = vsel %vm829, %v949, 0
        %v1117 = vsel %vm905, %v821, 0
        %1119 = vmatprep.subr.bf16.mxu0 0
        %1120 = vmatpush1.bf16.msra.mxu0 0
        %1121 = vmatprep.subr.bf16.mxu0 0
        %1122 = vmatpush1.bf16.msra.mxu0 0
        %1123 = vmatprep.subr.bf16.mxu0 0
        %1124 = vmatpush1.bf16.msra.mxu0 0
        %1125 = vmatprep.subr.bf16.mxu0 0
        %1126 = vmatpush1.bf16.msra.mxu0 0
        %1127 = vmatprep.subr.bf16.mxu0 0
        %1128 = vmatpush1.bf16.msra.mxu0 0
        %1129 = vmatprep.subr.bf16.mxu0 0
        %1130 = vmatpush1.bf16.msra.mxu0 0
        %1131 = vmatprep.subr.bf16.mxu0 0
        %1132 = vmatpush1.bf16.msra.mxu0 0
        %1133 = vmatprep.subr.bf16.mxu0 0
        %1134 = vmatpush1.bf16.msra.mxu0 %v1117
        %1135 = vmatprep.subr.bf16.mxu0 0
        %1136 = vmatpush2.bf16.msra.mxu0 0
        %1137 = vmatprep.subr.bf16.mxu0 0
        %1138 = vmatpush2.bf16.msra.mxu0 0
        %1139 = vmatprep.subr.bf16.mxu0 0
        %1140 = vmatpush2.bf16.msra.mxu0 0
        %1141 = vmatprep.subr.bf16.mxu0 0
        %1142 = vmatpush2.bf16.msra.mxu0 0
        %1143 = vmatprep.subr.bf16.mxu0 0
        %1144 = vmatpush2.bf16.msra.mxu0 0
        %1145 = vmatprep.subr.bf16.mxu0 0
        %1146 = vmatpush2.bf16.msra.mxu0 0
        %1147 = vmatprep.subr.bf16.mxu0 0
        %1148 = vmatpush2.bf16.msra.mxu0 0
        %1149 = vmatprep.subr.bf16.mxu0 0
        %1150 = vmatpush2.bf16.msra.mxu0 0
        %1151 = vmatprep.mubr.bf16.mxu0 0
        %1152 = vmatmul.mubr.bf16.gmra.mxu0 %v1114
        %v1153 = vpop.f32.mrf.mxu0
        %v1154 = vadd.f32 %v1108, %v1153
        %v1155 = vpop.f32.mrf.mxu0
        %v1156 = vpop.f32.mrf.mxu0
        %v1157 = vpop.f32.mrf.mxu0
        %1158 = vdwg.mxu0
        %1159 = vrot.lane.b32.xlu0 %v825, 112
        %v1160 = vpop.permute.xlu0 %1159
        %1161 = vrot.lane.b32.xlu0 %v825, 80
        %v1162 = vpop.permute.xlu0 %1161
        %v1164 = vsel %vm829, %v1160, 0
        %v1167 = vsel %vm829, %v1162, 0
        %1169 = vmatprep.subr.bf16.mxu0 0
        %1170 = vmatpush1.bf16.xpose.msra.mxu0 0
        %1171 = vmatprep.subr.bf16.mxu0 0
        %1172 = vmatpush1.bf16.xpose.msra.mxu0 0
        %1173 = vmatprep.subr.bf16.mxu0 0
        %1174 = vmatpush1.bf16.xpose.msra.mxu0 0
        %1175 = vmatprep.subr.bf16.mxu0 0
        %1176 = vmatpush1.bf16.xpose.msra.mxu0 0
        %1177 = vmatprep.subr.bf16.mxu0 0
        %1178 = vmatpush1.bf16.xpose.msra.mxu0 0
        %1179 = vmatprep.subr.bf16.mxu0 0
        %1180 = vmatpush1.bf16.xpose.msra.mxu0 0
        %1181 = vmatprep.subr.bf16.mxu0 0
        %1182 = vmatpush1.bf16.xpose.msra.mxu0 0
        %1183 = vmatprep.subr.bf16.mxu0 0
        %1184 = vmatpush1.bf16.xpose.msra.mxu0 %v1167
        %1185 = vmatprep.subr.bf16.mxu0 0
        %1186 = vmatpush2.bf16.xpose.msra.mxu0 0
        %1187 = vmatprep.subr.bf16.mxu0 0
        %1188 = vmatpush2.bf16.xpose.msra.mxu0 0
        %1189 = vmatprep.subr.bf16.mxu0 0
        %1190 = vmatpush2.bf16.xpose.msra.mxu0 0
        %1191 = vmatprep.subr.bf16.mxu0 0
        %1192 = vmatpush2.bf16.xpose.msra.mxu0 0
        %1193 = vmatprep.subr.bf16.mxu0 0
        %1194 = vmatpush2.bf16.xpose.msra.mxu0 0
        %1195 = vmatprep.subr.bf16.mxu0 0
        %1196 = vmatpush2.bf16.xpose.msra.mxu0 0
        %1197 = vmatprep.subr.bf16.mxu0 0
        %1198 = vmatpush2.bf16.xpose.msra.mxu0 0
        %1199 = vmatprep.subr.bf16.mxu0 0
        %1200 = vmatpush2.bf16.xpose.msra.mxu0 0
        %1201 = vmatprep.mubr.bf16.mxu0 0
        %1202 = vmatmul.mubr.bf16.gmra.mxu0 %v1164
        %v1203 = vpop.f32.mrf.mxu0
        %v1204 = vadd.f32 0.0, %v1203
        %v1205 = vpop.f32.mrf.mxu0
        %v1206 = vpop.f32.mrf.mxu0
        %v1207 = vpop.f32.mrf.mxu0
        %1208 = vdwg.mxu0
        %v1209 = vmul.f32 %v1204, 0.35355338
        %v1210 = vadd.f32 %v1209, %v881
        %v1211 = vsel %vm829, %v1210, -inf
        %1212 = vmax.xlane.f32.xlu0 %v1211
        %v1213 = vpop.xlane.xlu0 %1212
        %vm1214 = vcmp.eq.f32.partialorder %v1213, -inf
        %v1215 = vsel %vm1214, 0.0, %v1213
        %v1216 = vsub.f32 %v1210, %v1215
        %v1217 = vmul.f32 %v1216, 1.442695
        %v1218 = vpow.pop %v1217
        %v1219 = vsel %vm829, %v1218, 0.0
        %1220 = vadd.xlane.f32.xlu0 %v1219
        %v1221 = vpop.xlane.xlu0 %1220
        %vm1222 = vcmp.eq.f32.partialorder %v1221, 0.0
        %v1223 = vsel %vm1222, 1.0, %v1221
        %v1224 = vrcp.pop %v1223
        %v1225 = vmul.f32 %v1218, %v1224
        %v1226 = vpack.c.bf16 %v1225, %v1225
        %1227 = vrot.lane.b32.xlu0 %v825, 48
        %v1228 = vpop.permute.xlu0 %1227
        %v1230 = vsel %vm829, %v1226, 0
        %v1233 = vsel %vm905, %v1228, 0
        %1235 = vmatprep.subr.bf16.mxu0 0
        %1236 = vmatpush1.bf16.msra.mxu0 0
        %1237 = vmatprep.subr.bf16.mxu0 0
        %1238 = vmatpush1.bf16.msra.mxu0 0
        %1239 = vmatprep.subr.bf16.mxu0 0
        %1240 = vmatpush1.bf16.msra.mxu0 0
        %1241 = vmatprep.subr.bf16.mxu0 0
        %1242 = vmatpush1.bf16.msra.mxu0 0
        %1243 = vmatprep.subr.bf16.mxu0 0
        %1244 = vmatpush1.bf16.msra.mxu0 0
        %1245 = vmatprep.subr.bf16.mxu0 0
        %1246 = vmatpush1.bf16.msra.mxu0 0
        %1247 = vmatprep.subr.bf16.mxu0 0
        %1248 = vmatpush1.bf16.msra.mxu0 0
        %1249 = vmatprep.subr.bf16.mxu0 0
        %1250 = vmatpush1.bf16.msra.mxu0 %v1233
        %1251 = vmatprep.subr.bf16.mxu0 0
        %1252 = vmatpush2.bf16.msra.mxu0 0
        %1253 = vmatprep.subr.bf16.mxu0 0
        %1254 = vmatpush2.bf16.msra.mxu0 0
        %1255 = vmatprep.subr.bf16.mxu0 0
        %1256 = vmatpush2.bf16.msra.mxu0 0
        %1257 = vmatprep.subr.bf16.mxu0 0
        %1258 = vmatpush2.bf16.msra.mxu0 0
        %1259 = vmatprep.subr.bf16.mxu0 0
        %1260 = vmatpush2.bf16.msra.mxu0 0
        %1261 = vmatprep.subr.bf16.mxu0 0
        %1262 = vmatpush2.bf16.msra.mxu0 0
        %1263 = vmatprep.subr.bf16.mxu0 0
        %1264 = vmatpush2.bf16.msra.mxu0 0
        %1265 = vmatprep.subr.bf16.mxu0 0
        %1266 = vmatpush2.bf16.msra.mxu0 0
        %1267 = vmatprep.mubr.bf16.mxu0 0
        %1268 = vmatmul.mubr.bf16.gmra.mxu0 %v1230
        %v1269 = vpop.f32.mrf.mxu0
        %v1270 = vadd.f32 0.0, %v1269
        %v1271 = vpop.f32.mrf.mxu0
        %v1272 = vpop.f32.mrf.mxu0
        %v1273 = vpop.f32.mrf.mxu0
        %1274 = vdwg.mxu0
        %v1275 = vpack.c.bf16 %v1270, %v1270
        %v1277 = vsel %vm829, %v1275, 0
        %v1280 = vsel %vm905, %v823, 0
        %1282 = vmatprep.subr.bf16.mxu0 0
        %1283 = vmatpush1.bf16.msra.mxu0 0
        %1284 = vmatprep.subr.bf16.mxu0 0
        %1285 = vmatpush1.bf16.msra.mxu0 0
        %1286 = vmatprep.subr.bf16.mxu0 0
        %1287 = vmatpush1.bf16.msra.mxu0 0
        %1288 = vmatprep.subr.bf16.mxu0 0
        %1289 = vmatpush1.bf16.msra.mxu0 0
        %1290 = vmatprep.subr.bf16.mxu0 0
        %1291 = vmatpush1.bf16.msra.mxu0 0
        %1292 = vmatprep.subr.bf16.mxu0 0
        %1293 = vmatpush1.bf16.msra.mxu0 0
        %1294 = vmatprep.subr.bf16.mxu0 0
        %1295 = vmatpush1.bf16.msra.mxu0 0
        %1296 = vmatprep.subr.bf16.mxu0 0
        %1297 = vmatpush1.bf16.msra.mxu0 %v1280
        %1298 = vmatprep.subr.bf16.mxu0 0
        %1299 = vmatpush2.bf16.msra.mxu0 0
        %1300 = vmatprep.subr.bf16.mxu0 0
        %1301 = vmatpush2.bf16.msra.mxu0 0
        %1302 = vmatprep.subr.bf16.mxu0 0
        %1303 = vmatpush2.bf16.msra.mxu0 0
        %1304 = vmatprep.subr.bf16.mxu0 0
        %1305 = vmatpush2.bf16.msra.mxu0 0
        %1306 = vmatprep.subr.bf16.mxu0 0
        %1307 = vmatpush2.bf16.msra.mxu0 0
        %1308 = vmatprep.subr.bf16.mxu0 0
        %1309 = vmatpush2.bf16.msra.mxu0 0
        %1310 = vmatprep.subr.bf16.mxu0 0
        %1311 = vmatpush2.bf16.msra.mxu0 0
        %1312 = vmatprep.subr.bf16.mxu0 0
        %1313 = vmatpush2.bf16.msra.mxu0 0
        %1314 = vmatprep.mubr.bf16.mxu0 0
        %1315 = vmatmul.mubr.bf16.gmra.mxu0 %v1277
        %v1316 = vpop.f32.mrf.mxu0
        %v1317 = vadd.f32 0.0, %v1316
        %v1318 = vpop.f32.mrf.mxu0
        %v1319 = vpop.f32.mrf.mxu0
        %v1320 = vpop.f32.mrf.mxu0
        %1321 = vdwg.mxu0
        %v1322 = vadd.f32 %v1154, %v1317
        %1323 = vrot.lane.b32.xlu0 %v825, 104
        %v1324 = vpop.permute.xlu0 %1323
        %1325 = vrot.lane.b32.xlu0 %v825, 72
        %v1326 = vpop.permute.xlu0 %1325
        %v1328 = vsel %vm829, %v1324, 0
        %v1331 = vsel %vm829, %v1326, 0
        %1333 = vmatprep.subr.bf16.mxu0 0
        %1334 = vmatpush1.bf16.xpose.msra.mxu0 0
        %1335 = vmatprep.subr.bf16.mxu0 0
        %1336 = vmatpush1.bf16.xpose.msra.mxu0 0
        %1337 = vmatprep.subr.bf16.mxu0 0
        %1338 = vmatpush1.bf16.xpose.msra.mxu0 0
        %1339 = vmatprep.subr.bf16.mxu0 0
        %1340 = vmatpush1.bf16.xpose.msra.mxu0 0
        %1341 = vmatprep.subr.bf16.mxu0 0
        %1342 = vmatpush1.bf16.xpose.msra.mxu0 0
        %1343 = vmatprep.subr.bf16.mxu0 0
        %1344 = vmatpush1.bf16.xpose.msra.mxu0 0
        %1345 = vmatprep.subr.bf16.mxu0 0
        %1346 = vmatpush1.bf16.xpose.msra.mxu0 0
        %1347 = vmatprep.subr.bf16.mxu0 0
        %1348 = vmatpush1.bf16.xpose.msra.mxu0 %v1331
        %1349 = vmatprep.subr.bf16.mxu0 0
        %1350 = vmatpush2.bf16.xpose.msra.mxu0 0
        %1351 = vmatprep.subr.bf16.mxu0 0
        %1352 = vmatpush2.bf16.xpose.msra.mxu0 0
        %1353 = vmatprep.subr.bf16.mxu0 0
        %1354 = vmatpush2.bf16.xpose.msra.mxu0 0
        %1355 = vmatprep.subr.bf16.mxu0 0
        %1356 = vmatpush2.bf16.xpose.msra.mxu0 0
        %1357 = vmatprep.subr.bf16.mxu0 0
        %1358 = vmatpush2.bf16.xpose.msra.mxu0 0
        %1359 = vmatprep.subr.bf16.mxu0 0
        %1360 = vmatpush2.bf16.xpose.msra.mxu0 0
        %1361 = vmatprep.subr.bf16.mxu0 0
        %1362 = vmatpush2.bf16.xpose.msra.mxu0 0
        %1363 = vmatprep.subr.bf16.mxu0 0
        %1364 = vmatpush2.bf16.xpose.msra.mxu0 0
        %1365 = vmatprep.mubr.bf16.mxu0 0
        %1366 = vmatmul.mubr.bf16.gmra.mxu0 %v1328
        %v1367 = vpop.f32.mrf.mxu0
        %v1368 = vadd.f32 0.0, %v1367
        %v1369 = vpop.f32.mrf.mxu0
        %v1370 = vpop.f32.mrf.mxu0
        %v1371 = vpop.f32.mrf.mxu0
        %1372 = vdwg.mxu0
        %v1373 = vmul.f32 %v1368, 0.35355338
        %v1374 = vadd.f32 %v1373, %v881
        %v1375 = vsel %vm829, %v1374, -inf
        %1376 = vmax.xlane.f32.xlu0 %v1375
        %v1377 = vpop.xlane.xlu0 %1376
        %vm1378 = vcmp.eq.f32.partialorder %v1377, -inf
        %v1379 = vsel %vm1378, 0.0, %v1377
        %v1380 = vsub.f32 %v1374, %v1379
        %v1381 = vmul.f32 %v1380, 1.442695
        %v1382 = vpow.pop %v1381
        %v1383 = vsel %vm829, %v1382, 0.0
        %1384 = vadd.xlane.f32.xlu0 %v1383
        %v1385 = vpop.xlane.xlu0 %1384
        %vm1386 = vcmp.eq.f32.partialorder %v1385, 0.0
        %v1387 = vsel %vm1386, 1.0, %v1385
        %v1388 = vrcp.pop %v1387
        %v1389 = vmul.f32 %v1382, %v1388
        %v1390 = vpack.c.bf16 %v1389, %v1389
        %1391 = vrot.lane.b32.xlu0 %v825, 40
        %v1392 = vpop.permute.xlu0 %1391
        %v1394 = vsel %vm829, %v1390, 0
        %v1397 = vsel %vm905, %v1392, 0
        %1399 = vmatprep.subr.bf16.mxu0 0
        %1400 = vmatpush1.bf16.msra.mxu0 0
        %1401 = vmatprep.subr.bf16.mxu0 0
        %1402 = vmatpush1.bf16.msra.mxu0 0
        %1403 = vmatprep.subr.bf16.mxu0 0
        %1404 = vmatpush1.bf16.msra.mxu0 0
        %1405 = vmatprep.subr.bf16.mxu0 0
        %1406 = vmatpush1.bf16.msra.mxu0 0
        %1407 = vmatprep.subr.bf16.mxu0 0
        %1408 = vmatpush1.bf16.msra.mxu0 0
        %1409 = vmatprep.subr.bf16.mxu0 0
        %1410 = vmatpush1.bf16.msra.mxu0 0
        %1411 = vmatprep.subr.bf16.mxu0 0
        %1412 = vmatpush1.bf16.msra.mxu0 0
        %1413 = vmatprep.subr.bf16.mxu0 0
        %1414 = vmatpush1.bf16.msra.mxu0 %v1397
        %1415 = vmatprep.subr.bf16.mxu0 0
        %1416 = vmatpush2.bf16.msra.mxu0 0
        %1417 = vmatprep.subr.bf16.mxu0 0
        %1418 = vmatpush2.bf16.msra.mxu0 0
        %1419 = vmatprep.subr.bf16.mxu0 0
        %1420 = vmatpush2.bf16.msra.mxu0 0
        %1421 = vmatprep.subr.bf16.mxu0 0
        %1422 = vmatpush2.bf16.msra.mxu0 0
        %1423 = vmatprep.subr.bf16.mxu0 0
        %1424 = vmatpush2.bf16.msra.mxu0 0
        %1425 = vmatprep.subr.bf16.mxu0 0
        %1426 = vmatpush2.bf16.msra.mxu0 0
        %1427 = vmatprep.subr.bf16.mxu0 0
        %1428 = vmatpush2.bf16.msra.mxu0 0
        %1429 = vmatprep.subr.bf16.mxu0 0
        %1430 = vmatpush2.bf16.msra.mxu0 0
        %1431 = vmatprep.mubr.bf16.mxu0 0
        %1432 = vmatmul.mubr.bf16.gmra.mxu0 %v1394
        %v1433 = vpop.f32.mrf.mxu0
        %v1434 = vadd.f32 0.0, %v1433
        %v1435 = vpop.f32.mrf.mxu0
        %v1436 = vpop.f32.mrf.mxu0
        %v1437 = vpop.f32.mrf.mxu0
        %1438 = vdwg.mxu0
        %v1439 = vpack.c.bf16 %v1434, %v1434
        %v1441 = vsel %vm829, %v1439, 0
        %v1444 = vsel %vm905, %v824, 0
        %1446 = vmatprep.subr.bf16.mxu0 0
        %1447 = vmatpush1.bf16.msra.mxu0 0
        %1448 = vmatprep.subr.bf16.mxu0 0
        %1449 = vmatpush1.bf16.msra.mxu0 0
        %1450 = vmatprep.subr.bf16.mxu0 0
        %1451 = vmatpush1.bf16.msra.mxu0 0
        %1452 = vmatprep.subr.bf16.mxu0 0
        %1453 = vmatpush1.bf16.msra.mxu0 0
        %1454 = vmatprep.subr.bf16.mxu0 0
        %1455 = vmatpush1.bf16.msra.mxu0 0
        %1456 = vmatprep.subr.bf16.mxu0 0
        %1457 = vmatpush1.bf16.msra.mxu0 0
        %1458 = vmatprep.subr.bf16.mxu0 0
        %1459 = vmatpush1.bf16.msra.mxu0 0
        %1460 = vmatprep.subr.bf16.mxu0 0
        %1461 = vmatpush1.bf16.msra.mxu0 %v1444
        %1462 = vmatprep.subr.bf16.mxu0 0
        %1463 = vmatpush2.bf16.msra.mxu0 0
        %1464 = vmatprep.subr.bf16.mxu0 0
        %1465 = vmatpush2.bf16.msra.mxu0 0
        %1466 = vmatprep.subr.bf16.mxu0 0
        %1467 = vmatpush2.bf16.msra.mxu0 0
        %1468 = vmatprep.subr.bf16.mxu0 0
        %1469 = vmatpush2.bf16.msra.mxu0 0
        %1470 = vmatprep.subr.bf16.mxu0 0
        %1471 = vmatpush2.bf16.msra.mxu0 0
        %1472 = vmatprep.subr.bf16.mxu0 0
        %1473 = vmatpush2.bf16.msra.mxu0 0
        %1474 = vmatprep.subr.bf16.mxu0 0
        %1475 = vmatpush2.bf16.msra.mxu0 0
        %1476 = vmatprep.subr.bf16.mxu0 0
        %1477 = vmatpush2.bf16.msra.mxu0 0
        %1478 = vmatprep.mubr.bf16.mxu0 0
        %1479 = vmatmul.mubr.bf16.gmra.mxu0 %v1441
        %v1480 = vpop.f32.mrf.mxu0
        %v1481 = vadd.f32 0.0, %v1480
        %v1482 = vpop.f32.mrf.mxu0
        %v1483 = vpop.f32.mrf.mxu0
        %v1484 = vpop.f32.mrf.mxu0
        %1485 = vdwg.mxu0
        %v1486 = vadd.f32 %v1322, %v1481
        %v1487 = vld [vmem:[%s6] sm:$0x1]
        %v1489 = vlaneseq
        %v1490 = vshrl.u32 %v1489, 7
        %v1491 = vsub.s32 0, %v1490
        %v1492 = vrot.slane %v1487, %v1491
        %v1494 = vadd.f32 %v1486, %v1492
        %v1495 = vadd.f32 %v752, %v1494
        %v1496 = vld [vmem:[%s7] sm:$0x1]
        %v1497 = vld [vmem:[%s8] sm:$0x1]
        %v1498 = vsel %vm777, %v1495, 0.0
        %1499 = vadd.xlane.f32.xlu0 %v1498
        %v1500 = vpop.xlane.xlu0 %1499
        %v1501 = vrcp.pop 32.0
        %v1502 = vmul.f32 %v1500, %v1501
        %v1503 = vsub.f32 %v1495, %v1502
        %v1504 = vmul.f32 %v1503, %v1503
        %v1505 = vsel %vm777, %v1504, 0.0
        %1506 = vadd.xlane.f32.xlu0 %v1505
        %v1507 = vpop.xlane.xlu0 %1506
        %v1508 = vmul.f32 %v1507, %v1501
        %v1509 = vadd.f32 %v1508, 1e-05
        %v1510 = vrsqrt.pop %v1509
        %v1511 = vmul.f32 %v1503, %v1510
        %v1513 = vlaneseq
        %v1514 = vshrl.u32 %v1513, 7
        %v1515 = vsub.s32 0, %v1514
        %v1516 = vrot.slane %v1496, %v1515
        %v1518 = vmul.f32 %v1511, %v1516
        %v1520 = vlaneseq
        %v1521 = vshrl.u32 %v1520, 7
        %v1522 = vsub.s32 0, %v1521
        %v1523 = vrot.slane %v1497, %v1522
        %v1525 = vadd.f32 %v1518, %v1523
        %v1526 = vpack.c.bf16 %v1525, %v1525
        %v1527 = vld [vmem:[%s9] sm:$0xf]
        %v1528 = vld [vmem:[%s9 + $0x4] sm:$0xf]
        %v1529 = vld [vmem:[%s9 + $0x8] sm:$0xf]
        %v1530 = vld [vmem:[%s9 + $0xc] sm:$0xf]
        %v1531 = vld [vmem:[%s10] sm:$0x1]
        %v1533 = vlaneseq
        %v1534 = vshrl.u32 %v1533, 7
        %v1535 = vsub.s32 0, %v1534
        %v1536 = vrot.slane %v1531, %v1535
        %v1542 = vunpack.c.l.b16 %v1527
        %v1543 = vunpack.c.l.b16 %v1528
        %v1544 = vunpack.c.l.b16 %v1529
        %v1545 = vunpack.c.l.b16 %v1530
        %v1546 = vpack.c.b16 %v1543, %v1542
        %v1547 = vpack.c.b16 %v1545, %v1544
        %v1551 = vsel %vm777, %v1526, 0
        %1553 = vmatprep.subr.bf16.mxu0 0
        %1554 = vmatpush1.bf16.msra.mxu0 0
        %1555 = vmatprep.subr.bf16.mxu0 0
        %1556 = vmatpush1.bf16.msra.mxu0 0
        %1557 = vmatprep.subr.bf16.mxu0 0
        %1558 = vmatpush1.bf16.msra.mxu0 0
        %1559 = vmatprep.subr.bf16.mxu0 0
        %1560 = vmatpush1.bf16.msra.mxu0 0
        %1561 = vmatprep.subr.bf16.mxu0 0
        %1562 = vmatpush1.bf16.msra.mxu0 0
        %1563 = vmatprep.subr.bf16.mxu0 0
        %1564 = vmatpush1.bf16.msra.mxu0 0
        %1565 = vmatprep.subr.bf16.mxu0 0
        %1566 = vmatpush1.bf16.msra.mxu0 %v1547
        %1567 = vmatprep.subr.bf16.mxu0 0
        %1568 = vmatpush1.bf16.msra.mxu0 %v1546
        %1569 = vmatprep.subr.bf16.mxu0 0
        %1570 = vmatpush2.bf16.msra.mxu0 0
        %1571 = vmatprep.subr.bf16.mxu0 0
        %1572 = vmatpush2.bf16.msra.mxu0 0
        %1573 = vmatprep.subr.bf16.mxu0 0
        %1574 = vmatpush2.bf16.msra.mxu0 0
        %1575 = vmatprep.subr.bf16.mxu0 0
        %1576 = vmatpush2.bf16.msra.mxu0 0
        %1577 = vmatprep.subr.bf16.mxu0 0
        %1578 = vmatpush2.bf16.msra.mxu0 0
        %1579 = vmatprep.subr.bf16.mxu0 0
        %1580 = vmatpush2.bf16.msra.mxu0 0
        %1581 = vmatprep.subr.bf16.mxu0 0
        %1582 = vmatpush2.bf16.msra.mxu0 0
        %1583 = vmatprep.subr.bf16.mxu0 0
        %1584 = vmatpush2.bf16.msra.mxu0 0
        %1585 = vmatprep.mubr.bf16.mxu0 0
        %1586 = vmatmul.mubr.bf16.gmra.mxu0 %v1551
        %v1587 = vpop.f32.mrf.mxu0
        %v1588 = vadd.f32 %v1536, %v1587
        %v1589 = vpop.f32.mrf.mxu0
        %v1590 = vpop.f32.mrf.mxu0
        %v1591 = vpop.f32.mrf.mxu0
        %1592 = vdwg.mxu0
        %v1593 = vld [vmem:[%s742] sm:$0xf]
        %v1594 = vld [vmem:[%s11] sm:$0xf]
        %v1595 = vld [vmem:[%s11 + $0x4] sm:$0xf]
        %v1596 = vld [vmem:[%s11 + $0x8] sm:$0xf]
        %v1597 = vld [vmem:[%s11 + $0xc] sm:$0xf]
        %v1598 = vld [vmem:[%s12] sm:$0x1]
        %v1600 = vlaneseq
        %v1601 = vshrl.u32 %v1600, 7
        %v1602 = vsub.s32 0, %v1601
        %v1603 = vrot.slane %v1598, %v1602
        %v1609 = vunpack.c.l.b16 %v1594
        %v1610 = vunpack.c.l.b16 %v1595
        %v1611 = vunpack.c.l.b16 %v1596
        %v1612 = vunpack.c.l.b16 %v1597
        %v1613 = vpack.c.b16 %v1610, %v1609
        %v1614 = vpack.c.b16 %v1612, %v1611
        %v1618 = vsel %vm777, %v1593, 0
        %1620 = vmatprep.subr.bf16.mxu0 0
        %1621 = vmatpush1.bf16.msra.mxu0 0
        %1622 = vmatprep.subr.bf16.mxu0 0
        %1623 = vmatpush1.bf16.msra.mxu0 0
        %1624 = vmatprep.subr.bf16.mxu0 0
        %1625 = vmatpush1.bf16.msra.mxu0 0
        %1626 = vmatprep.subr.bf16.mxu0 0
        %1627 = vmatpush1.bf16.msra.mxu0 0
        %1628 = vmatprep.subr.bf16.mxu0 0
        %1629 = vmatpush1.bf16.msra.mxu0 0
        %1630 = vmatprep.subr.bf16.mxu0 0
        %1631 = vmatpush1.bf16.msra.mxu0 0
        %1632 = vmatprep.subr.bf16.mxu0 0
        %1633 = vmatpush1.bf16.msra.mxu0 %v1614
        %1634 = vmatprep.subr.bf16.mxu0 0
        %1635 = vmatpush1.bf16.msra.mxu0 %v1613
        %1636 = vmatprep.subr.bf16.mxu0 0
        %1637 = vmatpush2.bf16.msra.mxu0 0
        %1638 = vmatprep.subr.bf16.mxu0 0
        %1639 = vmatpush2.bf16.msra.mxu0 0
        %1640 = vmatprep.subr.bf16.mxu0 0
        %1641 = vmatpush2.bf16.msra.mxu0 0
        %1642 = vmatprep.subr.bf16.mxu0 0
        %1643 = vmatpush2.bf16.msra.mxu0 0
        %1644 = vmatprep.subr.bf16.mxu0 0
        %1645 = vmatpush2.bf16.msra.mxu0 0
        %1646 = vmatprep.subr.bf16.mxu0 0
        %1647 = vmatpush2.bf16.msra.mxu0 0
        %1648 = vmatprep.subr.bf16.mxu0 0
        %1649 = vmatpush2.bf16.msra.mxu0 0
        %1650 = vmatprep.subr.bf16.mxu0 0
        %1651 = vmatpush2.bf16.msra.mxu0 0
        %1652 = vmatprep.mubr.bf16.mxu0 0
        %1653 = vmatmul.mubr.bf16.gmra.mxu0 %v1618
        %v1654 = vpop.f32.mrf.mxu0
        %v1655 = vadd.f32 %v1603, %v1654
        %v1656 = vpop.f32.mrf.mxu0
        %v1657 = vpop.f32.mrf.mxu0
        %v1658 = vpop.f32.mrf.mxu0
        %1659 = vdwg.mxu0
        %v1660 = vld [vmem:[%s13] sm:$0xf]
        %v1661 = vld [vmem:[%s13 + $0x4] sm:$0xf]
        %v1662 = vld [vmem:[%s13 + $0x8] sm:$0xf]
        %v1663 = vld [vmem:[%s13 + $0xc] sm:$0xf]
        %v1664 = vpack.c.bf16 %v1588, %v1588
        %v1665 = vpack.c.bf16 %v1655, %v1655
        %v1667 = vsel %vm829, %v1664, 0
        %v1670 = vsel %vm829, %v1665, 0
        %1672 = vmatprep.subr.bf16.mxu0 0
        %1673 = vmatpush1.bf16.xpose.msra.mxu0 0
        %1674 = vmatprep.subr.bf16.mxu0 0
        %1675 = vmatpush1.bf16.xpose.msra.mxu0 0
        %1676 = vmatprep.subr.bf16.mxu0 0
        %1677 = vmatpush1.bf16.xpose.msra.mxu0 0
        %1678 = vmatprep.subr.bf16.mxu0 0
        %1679 = vmatpush1.bf16.xpose.msra.mxu0 0
        %1680 = vmatprep.subr.bf16.mxu0 0
        %1681 = vmatpush1.bf16.xpose.msra.mxu0 0
        %1682 = vmatprep.subr.bf16.mxu0 0
        %1683 = vmatpush1.bf16.xpose.msra.mxu0 0
        %1684 = vmatprep.subr.bf16.mxu0 0
        %1685 = vmatpush1.bf16.xpose.msra.mxu0 0
        %1686 = vmatprep.subr.bf16.mxu0 0
        %1687 = vmatpush1.bf16.xpose.msra.mxu0 %v1670
        %1688 = vmatprep.subr.bf16.mxu0 0
        %1689 = vmatpush2.bf16.xpose.msra.mxu0 0
        %1690 = vmatprep.subr.bf16.mxu0 0
        %1691 = vmatpush2.bf16.xpose.msra.mxu0 0
        %1692 = vmatprep.subr.bf16.mxu0 0
        %1693 = vmatpush2.bf16.xpose.msra.mxu0 0
        %1694 = vmatprep.subr.bf16.mxu0 0
        %1695 = vmatpush2.bf16.xpose.msra.mxu0 0
        %1696 = vmatprep.subr.bf16.mxu0 0
        %1697 = vmatpush2.bf16.xpose.msra.mxu0 0
        %1698 = vmatprep.subr.bf16.mxu0 0
        %1699 = vmatpush2.bf16.xpose.msra.mxu0 0
        %1700 = vmatprep.subr.bf16.mxu0 0
        %1701 = vmatpush2.bf16.xpose.msra.mxu0 0
        %1702 = vmatprep.subr.bf16.mxu0 0
        %1703 = vmatpush2.bf16.xpose.msra.mxu0 0
        %1704 = vmatprep.mubr.bf16.mxu0 0
        %1705 = vmatmul.mubr.bf16.gmra.mxu0 %v1667
        %v1706 = vpop.f32.mrf.mxu0
        %v1707 = vadd.f32 0.0, %v1706
        %v1708 = vpop.f32.mrf.mxu0
        %v1709 = vpop.f32.mrf.mxu0
        %v1710 = vpop.f32.mrf.mxu0
        %1711 = vdwg.mxu0
        %v1712 = vmul.f32 %v1707, 0.35355338
        %v1713 = vsel %vm829, %v1712, -inf
        %1714 = vmax.xlane.f32.xlu0 %v1713
        %v1715 = vpop.xlane.xlu0 %1714
        %vm1716 = vcmp.eq.f32.partialorder %v1715, -inf
        %v1717 = vsel %vm1716, 0.0, %v1715
        %v1718 = vsub.f32 %v1712, %v1717
        %v1719 = vmul.f32 %v1718, 1.442695
        %v1720 = vpow.pop %v1719
        %v1721 = vsel %vm829, %v1720, 0.0
        %1722 = vadd.xlane.f32.xlu0 %v1721
        %v1723 = vpop.xlane.xlu0 %1722
        %vm1724 = vcmp.eq.f32.partialorder %v1723, 0.0
        %v1725 = vsel %vm1724, 1.0, %v1723
        %v1726 = vrcp.pop %v1725
        %v1727 = vmul.f32 %v1720, %v1726
        %v1728 = vpack.c.bf16 %v1727, %v1727
        %1730 = vrot.lane.b32.xlu0 %v1665, 96
        %v1731 = vpop.permute.xlu0 %1730
        %v1733 = vsel %vm829, %v1728, 0
        %v1736 = vsel %vm905, %v1731, 0
        %1738 = vmatprep.subr.bf16.mxu0 0
        %1739 = vmatpush1.bf16.msra.mxu0 0
        %1740 = vmatprep.subr.bf16.mxu0 0
        %1741 = vmatpush1.bf16.msra.mxu0 0
        %1742 = vmatprep.subr.bf16.mxu0 0
        %1743 = vmatpush1.bf16.msra.mxu0 0
        %1744 = vmatprep.subr.bf16.mxu0 0
        %1745 = vmatpush1.bf16.msra.mxu0 0
        %1746 = vmatprep.subr.bf16.mxu0 0
        %1747 = vmatpush1.bf16.msra.mxu0 0
        %1748 = vmatprep.subr.bf16.mxu0 0
        %1749 = vmatpush1.bf16.msra.mxu0 0
        %1750 = vmatprep.subr.bf16.mxu0 0
        %1751 = vmatpush1.bf16.msra.mxu0 0
        %1752 = vmatprep.subr.bf16.mxu0 0
        %1753 = vmatpush1.bf16.msra.mxu0 %v1736
        %1754 = vmatprep.subr.bf16.mxu0 0
        %1755 = vmatpush2.bf16.msra.mxu0 0
        %1756 = vmatprep.subr.bf16.mxu0 0
        %1757 = vmatpush2.bf16.msra.mxu0 0
        %1758 = vmatprep.subr.bf16.mxu0 0
        %1759 = vmatpush2.bf16.msra.mxu0 0
        %1760 = vmatprep.subr.bf16.mxu0 0
        %1761 = vmatpush2.bf16.msra.mxu0 0
        %1762 = vmatprep.subr.bf16.mxu0 0
        %1763 = vmatpush2.bf16.msra.mxu0 0
        %1764 = vmatprep.subr.bf16.mxu0 0
        %1765 = vmatpush2.bf16.msra.mxu0 0
        %1766 = vmatprep.subr.bf16.mxu0 0
        %1767 = vmatpush2.bf16.msra.mxu0 0
        %1768 = vmatprep.subr.bf16.mxu0 0
        %1769 = vmatpush2.bf16.msra.mxu0 0
        %1770 = vmatprep.mubr.bf16.mxu0 0
        %1771 = vmatmul.mubr.bf16.gmra.mxu0 %v1733
        %v1772 = vpop.f32.mrf.mxu0
        %v1773 = vadd.f32 0.0, %v1772
        %v1774 = vpop.f32.mrf.mxu0
        %v1775 = vpop.f32.mrf.mxu0
        %v1776 = vpop.f32.mrf.mxu0
        %1777 = vdwg.mxu0
        %v1778 = vpack.c.bf16 %v1773, %v1773
        %1780 = vrot.lane.b32.xlu0 %v1664, 120
        %v1781 = vpop.permute.xlu0 %1780
        %1782 = vrot.lane.b32.xlu0 %v1665, 120
        %v1783 = vpop.permute.xlu0 %1782
        %v1785 = vsel %vm829, %v1781, 0
        %v1788 = vsel %vm829, %v1783, 0
        %1790 = vmatprep.subr.bf16.mxu0 0
        %1791 = vmatpush1.bf16.xpose.msra.mxu0 0
        %1792 = vmatprep.subr.bf16.mxu0 0
        %1793 = vmatpush1.bf16.xpose.msra.mxu0 0
        %1794 = vmatprep.subr.bf16.mxu0 0
        %1795 = vmatpush1.bf16.xpose.msra.mxu0 0
        %1796 = vmatprep.subr.bf16.mxu0 0
        %1797 = vmatpush1.bf16.xpose.msra.mxu0 0
        %1798 = vmatprep.subr.bf16.mxu0 0
        %1799 = vmatpush1.bf16.xpose.msra.mxu0 0
        %1800 = vmatprep.subr.bf16.mxu0 0
        %1801 = vmatpush1.bf16.xpose.msra.mxu0 0
        %1802 = vmatprep.subr.bf16.mxu0 0
        %1803 = vmatpush1.bf16.xpose.msra.mxu0 0
        %1804 = vmatprep.subr.bf16.mxu0 0
        %1805 = vmatpush1.bf16.xpose.msra.mxu0 %v1788
        %1806 = vmatprep.subr.bf16.mxu0 0
        %1807 = vmatpush2.bf16.xpose.msra.mxu0 0
        %1808 = vmatprep.subr.bf16.mxu0 0
        %1809 = vmatpush2.bf16.xpose.msra.mxu0 0
        %1810 = vmatprep.subr.bf16.mxu0 0
        %1811 = vmatpush2.bf16.xpose.msra.mxu0 0
        %1812 = vmatprep.subr.bf16.mxu0 0
        %1813 = vmatpush2.bf16.xpose.msra.mxu0 0
        %1814 = vmatprep.subr.bf16.mxu0 0
        %1815 = vmatpush2.bf16.xpose.msra.mxu0 0
        %1816 = vmatprep.subr.bf16.mxu0 0
        %1817 = vmatpush2.bf16.xpose.msra.mxu0 0
        %1818 = vmatprep.subr.bf16.mxu0 0
        %1819 = vmatpush2.bf16.xpose.msra.mxu0 0
        %1820 = vmatprep.subr.bf16.mxu0 0
        %1821 = vmatpush2.bf16.xpose.msra.mxu0 0
        %1822 = vmatprep.mubr.bf16.mxu0 0
        %1823 = vmatmul.mubr.bf16.gmra.mxu0 %v1785
        %v1824 = vpop.f32.mrf.mxu0
        %v1825 = vadd.f32 0.0, %v1824
        %v1826 = vpop.f32.mrf.mxu0
        %v1827 = vpop.f32.mrf.mxu0
        %v1828 = vpop.f32.mrf.mxu0
        %1829 = vdwg.mxu0
        %v1830 = vmul.f32 %v1825, 0.35355338
        %v1831 = vsel %vm829, %v1830, -inf
        %1832 = vmax.xlane.f32.xlu0 %v1831
        %v1833 = vpop.xlane.xlu0 %1832
        %vm1834 = vcmp.eq.f32.partialorder %v1833, -inf
        %v1835 = vsel %vm1834, 0.0, %v1833
        %v1836 = vsub.f32 %v1830, %v1835
        %v1837 = vmul.f32 %v1836, 1.442695
        %v1838 = vpow.pop %v1837
        %v1839 = vsel %vm829, %v1838, 0.0
        %1840 = vadd.xlane.f32.xlu0 %v1839
        %v1841 = vpop.xlane.xlu0 %1840
        %vm1842 = vcmp.eq.f32.partialorder %v1841, 0.0
        %v1843 = vsel %vm1842, 1.0, %v1841
        %v1844 = vrcp.pop %v1843
        %v1845 = vmul.f32 %v1838, %v1844
        %v1846 = vpack.c.bf16 %v1845, %v1845
        %1847 = vrot.lane.b32.xlu0 %v1665, 88
        %v1848 = vpop.permute.xlu0 %1847
        %v1850 = vsel %vm829, %v1846, 0
        %v1853 = vsel %vm905, %v1848, 0
        %1855 = vmatprep.subr.bf16.mxu0 0
        %1856 = vmatpush1.bf16.msra.mxu0 0
        %1857 = vmatprep.subr.bf16.mxu0 0
        %1858 = vmatpush1.bf16.msra.mxu0 0
        %1859 = vmatprep.subr.bf16.mxu0 0
        %1860 = vmatpush1.bf16.msra.mxu0 0
        %1861 = vmatprep.subr.bf16.mxu0 0
        %1862 = vmatpush1.bf16.msra.mxu0 0
        %1863 = vmatprep.subr.bf16.mxu0 0
        %1864 = vmatpush1.bf16.msra.mxu0 0
        %1865 = vmatprep.subr.bf16.mxu0 0
        %1866 = vmatpush1.bf16.msra.mxu0 0
        %1867 = vmatprep.subr.bf16.mxu0 0
        %1868 = vmatpush1.bf16.msra.mxu0 0
        %1869 = vmatprep.subr.bf16.mxu0 0
        %1870 = vmatpush1.bf16.msra.mxu0 %v1853
        %1871 = vmatprep.subr.bf16.mxu0 0
        %1872 = vmatpush2.bf16.msra.mxu0 0
        %1873 = vmatprep.subr.bf16.mxu0 0
        %1874 = vmatpush2.bf16.msra.mxu0 0
        %1875 = vmatprep.subr.bf16.mxu0 0
        %1876 = vmatpush2.bf16.msra.mxu0 0
        %1877 = vmatprep.subr.bf16.mxu0 0
        %1878 = vmatpush2.bf16.msra.mxu0 0
        %1879 = vmatprep.subr.bf16.mxu0 0
        %1880 = vmatpush2.bf16.msra.mxu0 0
        %1881 = vmatprep.subr.bf16.mxu0 0
        %1882 = vmatpush2.bf16.msra.mxu0 0
        %1883 = vmatprep.subr.bf16.mxu0 0
        %1884 = vmatpush2.bf16.msra.mxu0 0
        %1885 = vmatprep.subr.bf16.mxu0 0
        %1886 = vmatpush2.bf16.msra.mxu0 0
        %1887 = vmatprep.mubr.bf16.mxu0 0
        %1888 = vmatmul.mubr.bf16.gmra.mxu0 %v1850
        %v1889 = vpop.f32.mrf.mxu0
        %v1890 = vadd.f32 0.0, %v1889
        %v1891 = vpop.f32.mrf.mxu0
        %v1892 = vpop.f32.mrf.mxu0
        %v1893 = vpop.f32.mrf.mxu0
        %1894 = vdwg.mxu0
        %v1895 = vpack.c.bf16 %v1890, %v1890
        %v1897 = vsel %vm829, %v1895, 0
        %v1900 = vsel %vm905, %v1661, 0
        %1902 = vmatprep.subr.bf16.mxu0 0
        %1903 = vmatpush1.bf16.msra.mxu0 0
        %1904 = vmatprep.subr.bf16.mxu0 0
        %1905 = vmatpush1.bf16.msra.mxu0 0
        %1906 = vmatprep.subr.bf16.mxu0 0
        %1907 = vmatpush1.bf16.msra.mxu0 0
        %1908 = vmatprep.subr.bf16.mxu0 0
        %1909 = vmatpush1.bf16.msra.mxu0 0
        %1910 = vmatprep.subr.bf16.mxu0 0
        %1911 = vmatpush1.bf16.msra.mxu0 0
        %1912 = vmatprep.subr.bf16.mxu0 0
        %1913 = vmatpush1.bf16.msra.mxu0 0
        %1914 = vmatprep.subr.bf16.mxu0 0
        %1915 = vmatpush1.bf16.msra.mxu0 0
        %1916 = vmatprep.subr.bf16.mxu0 0
        %1917 = vmatpush1.bf16.msra.mxu0 %v1900
        %1918 = vmatprep.subr.bf16.mxu0 0
        %1919 = vmatpush2.bf16.msra.mxu0 0
        %1920 = vmatprep.subr.bf16.mxu0 0
        %1921 = vmatpush2.bf16.msra.mxu0 0
        %1922 = vmatprep.subr.bf16.mxu0 0
        %1923 = vmatpush2.bf16.msra.mxu0 0
        %1924 = vmatprep.subr.bf16.mxu0 0
        %1925 = vmatpush2.bf16.msra.mxu0 0
        %1926 = vmatprep.subr.bf16.mxu0 0
        %1927 = vmatpush2.bf16.msra.mxu0 0
        %1928 = vmatprep.subr.bf16.mxu0 0
        %1929 = vmatpush2.bf16.msra.mxu0 0
        %1930 = vmatprep.subr.bf16.mxu0 0
        %1931 = vmatpush2.bf16.msra.mxu0 0
        %1932 = vmatprep.subr.bf16.mxu0 0
        %1933 = vmatpush2.bf16.msra.mxu0 0
        %1934 = vmatprep.mubr.bf16.mxu0 0
        %1935 = vmatmul.mubr.bf16.gmra.mxu0 %v1897
        %v1936 = vpop.f32.mrf.mxu0
        %v1937 = vadd.f32 0.0, %v1936
        %v1938 = vpop.f32.mrf.mxu0
        %v1939 = vpop.f32.mrf.mxu0
        %v1940 = vpop.f32.mrf.mxu0
        %1941 = vdwg.mxu0
        %v1943 = vsel %vm829, %v1778, 0
        %v1946 = vsel %vm905, %v1660, 0
        %1948 = vmatprep.subr.bf16.mxu0 0
        %1949 = vmatpush1.bf16.msra.mxu0 0
        %1950 = vmatprep.subr.bf16.mxu0 0
        %1951 = vmatpush1.bf16.msra.mxu0 0
        %1952 = vmatprep.subr.bf16.mxu0 0
        %1953 = vmatpush1.bf16.msra.mxu0 0
        %1954 = vmatprep.subr.bf16.mxu0 0
        %1955 = vmatpush1.bf16.msra.mxu0 0
        %1956 = vmatprep.subr.bf16.mxu0 0
        %1957 = vmatpush1.bf16.msra.mxu0 0
        %1958 = vmatprep.subr.bf16.mxu0 0
        %1959 = vmatpush1.bf16.msra.mxu0 0
        %1960 = vmatprep.subr.bf16.mxu0 0
        %1961 = vmatpush1.bf16.msra.mxu0 0
        %1962 = vmatprep.subr.bf16.mxu0 0
        %1963 = vmatpush1.bf16.msra.mxu0 %v1946
        %1964 = vmatprep.subr.bf16.mxu0 0
        %1965 = vmatpush2.bf16.msra.mxu0 0
        %1966 = vmatprep.subr.bf16.mxu0 0
        %1967 = vmatpush2.bf16.msra.mxu0 0
        %1968 = vmatprep.subr.bf16.mxu0 0
        %1969 = vmatpush2.bf16.msra.mxu0 0
        %1970 = vmatprep.subr.bf16.mxu0 0
        %1971 = vmatpush2.bf16.msra.mxu0 0
        %1972 = vmatprep.subr.bf16.mxu0 0
        %1973 = vmatpush2.bf16.msra.mxu0 0
        %1974 = vmatprep.subr.bf16.mxu0 0
        %1975 = vmatpush2.bf16.msra.mxu0 0
        %1976 = vmatprep.subr.bf16.mxu0 0
        %1977 = vmatpush2.bf16.msra.mxu0 0
        %1978 = vmatprep.subr.bf16.mxu0 0
        %1979 = vmatpush2.bf16.msra.mxu0 0
        %1980 = vmatprep.mubr.bf16.mxu0 0
        %1981 = vmatmul.mubr.bf16.gmra.mxu0 %v1943
        %v1982 = vpop.f32.mrf.mxu0
        %v1983 = vadd.f32 %v1937, %v1982
        %v1984 = vpop.f32.mrf.mxu0
        %v1985 = vpop.f32.mrf.mxu0
        %v1986 = vpop.f32.mrf.mxu0
        %1987 = vdwg.mxu0
        %1988 = vrot.lane.b32.xlu0 %v1664, 112
        %v1989 = vpop.permute.xlu0 %1988
        %1990 = vrot.lane.b32.xlu0 %v1665, 112
        %v1991 = vpop.permute.xlu0 %1990
        %v1993 = vsel %vm829, %v1989, 0
        %v1996 = vsel %vm829, %v1991, 0
        %1998 = vmatprep.subr.bf16.mxu0 0
        %1999 = vmatpush1.bf16.xpose.msra.mxu0 0
        %2000 = vmatprep.subr.bf16.mxu0 0
        %2001 = vmatpush1.bf16.xpose.msra.mxu0 0
        %2002 = vmatprep.subr.bf16.mxu0 0
        %2003 = vmatpush1.bf16.xpose.msra.mxu0 0
        %2004 = vmatprep.subr.bf16.mxu0 0
        %2005 = vmatpush1.bf16.xpose.msra.mxu0 0
        %2006 = vmatprep.subr.bf16.mxu0 0
        %2007 = vmatpush1.bf16.xpose.msra.mxu0 0
        %2008 = vmatprep.subr.bf16.mxu0 0
        %2009 = vmatpush1.bf16.xpose.msra.mxu0 0
        %2010 = vmatprep.subr.bf16.mxu0 0
        %2011 = vmatpush1.bf16.xpose.msra.mxu0 0
        %2012 = vmatprep.subr.bf16.mxu0 0
        %2013 = vmatpush1.bf16.xpose.msra.mxu0 %v1996
        %2014 = vmatprep.subr.bf16.mxu0 0
        %2015 = vmatpush2.bf16.xpose.msra.mxu0 0
        %2016 = vmatprep.subr.bf16.mxu0 0
        %2017 = vmatpush2.bf16.xpose.msra.mxu0 0
        %2018 = vmatprep.subr.bf16.mxu0 0
        %2019 = vmatpush2.bf16.xpose.msra.mxu0 0
        %2020 = vmatprep.subr.bf16.mxu0 0
        %2021 = vmatpush2.bf16.xpose.msra.mxu0 0
        %2022 = vmatprep.subr.bf16.mxu0 0
        %2023 = vmatpush2.bf16.xpose.msra.mxu0 0
        %2024 = vmatprep.subr.bf16.mxu0 0
        %2025 = vmatpush2.bf16.xpose.msra.mxu0 0
        %2026 = vmatprep.subr.bf16.mxu0 0
        %2027 = vmatpush2.bf16.xpose.msra.mxu0 0
        %2028 = vmatprep.subr.bf16.mxu0 0
        %2029 = vmatpush2.bf16.xpose.msra.mxu0 0
        %2030 = vmatprep.mubr.bf16.mxu0 0
        %2031 = vmatmul.mubr.bf16.gmra.mxu0 %v1993
        %v2032 = vpop.f32.mrf.mxu0
        %v2033 = vadd.f32 0.0, %v2032
        %v2034 = vpop.f32.mrf.mxu0
        %v2035 = vpop.f32.mrf.mxu0
        %v2036 = vpop.f32.mrf.mxu0
        %2037 = vdwg.mxu0
        %v2038 = vmul.f32 %v2033, 0.35355338
        %v2039 = vsel %vm829, %v2038, -inf
        %2040 = vmax.xlane.f32.xlu0 %v2039
        %v2041 = vpop.xlane.xlu0 %2040
        %vm2042 = vcmp.eq.f32.partialorder %v2041, -inf
        %v2043 = vsel %vm2042, 0.0, %v2041
        %v2044 = vsub.f32 %v2038, %v2043
        %v2045 = vmul.f32 %v2044, 1.442695
        %v2046 = vpow.pop %v2045
        %v2047 = vsel %vm829, %v2046, 0.0
        %2048 = vadd.xlane.f32.xlu0 %v2047
        %v2049 = vpop.xlane.xlu0 %2048
        %vm2050 = vcmp.eq.f32.partialorder %v2049, 0.0
        %v2051 = vsel %vm2050, 1.0, %v2049
        %v2052 = vrcp.pop %v2051
        %v2053 = vmul.f32 %v2046, %v2052
        %v2054 = vpack.c.bf16 %v2053, %v2053
        %2055 = vrot.lane.b32.xlu0 %v1665, 80
        %v2056 = vpop.permute.xlu0 %2055
        %v2058 = vsel %vm829, %v2054, 0
        %v2061 = vsel %vm905, %v2056, 0
        %2063 = vmatprep.subr.bf16.mxu0 0
        %2064 = vmatpush1.bf16.msra.mxu0 0
        %2065 = vmatprep.subr.bf16.mxu0 0
        %2066 = vmatpush1.bf16.msra.mxu0 0
        %2067 = vmatprep.subr.bf16.mxu0 0
        %2068 = vmatpush1.bf16.msra.mxu0 0
        %2069 = vmatprep.subr.bf16.mxu0 0
        %2070 = vmatpush1.bf16.msra.mxu0 0
        %2071 = vmatprep.subr.bf16.mxu0 0
        %2072 = vmatpush1.bf16.msra.mxu0 0
        %2073 = vmatprep.subr.bf16.mxu0 0
        %2074 = vmatpush1.bf16.msra.mxu0 0
        %2075 = vmatprep.subr.bf16.mxu0 0
        %2076 = vmatpush1.bf16.msra.mxu0 0
        %2077 = vmatprep.subr.bf16.mxu0 0
        %2078 = vmatpush1.bf16.msra.mxu0 %v2061
        %2079 = vmatprep.subr.bf16.mxu0 0
        %2080 = vmatpush2.bf16.msra.mxu0 0
        %2081 = vmatprep.subr.bf16.mxu0 0
        %2082 = vmatpush2.bf16.msra.mxu0 0
        %2083 = vmatprep.subr.bf16.mxu0 0
        %2084 = vmatpush2.bf16.msra.mxu0 0
        %2085 = vmatprep.subr.bf16.mxu0 0
        %2086 = vmatpush2.bf16.msra.mxu0 0
        %2087 = vmatprep.subr.bf16.mxu0 0
        %2088 = vmatpush2.bf16.msra.mxu0 0
        %2089 = vmatprep.subr.bf16.mxu0 0
        %2090 = vmatpush2.bf16.msra.mxu0 0
        %2091 = vmatprep.subr.bf16.mxu0 0
        %2092 = vmatpush2.bf16.msra.mxu0 0
        %2093 = vmatprep.subr.bf16.mxu0 0
        %2094 = vmatpush2.bf16.msra.mxu0 0
        %2095 = vmatprep.mubr.bf16.mxu0 0
        %2096 = vmatmul.mubr.bf16.gmra.mxu0 %v2058
        %v2097 = vpop.f32.mrf.mxu0
        %v2098 = vadd.f32 0.0, %v2097
        %v2099 = vpop.f32.mrf.mxu0
        %v2100 = vpop.f32.mrf.mxu0
        %v2101 = vpop.f32.mrf.mxu0
        %2102 = vdwg.mxu0
        %v2103 = vpack.c.bf16 %v2098, %v2098
        %v2105 = vsel %vm829, %v2103, 0
        %v2108 = vsel %vm905, %v1662, 0
        %2110 = vmatprep.subr.bf16.mxu0 0
        %2111 = vmatpush1.bf16.msra.mxu0 0
        %2112 = vmatprep.subr.bf16.mxu0 0
        %2113 = vmatpush1.bf16.msra.mxu0 0
        %2114 = vmatprep.subr.bf16.mxu0 0
        %2115 = vmatpush1.bf16.msra.mxu0 0
        %2116 = vmatprep.subr.bf16.mxu0 0
        %2117 = vmatpush1.bf16.msra.mxu0 0
        %2118 = vmatprep.subr.bf16.mxu0 0
        %2119 = vmatpush1.bf16.msra.mxu0 0
        %2120 = vmatprep.subr.bf16.mxu0 0
        %2121 = vmatpush1.bf16.msra.mxu0 0
        %2122 = vmatprep.subr.bf16.mxu0 0
        %2123 = vmatpush1.bf16.msra.mxu0 0
        %2124 = vmatprep.subr.bf16.mxu0 0
        %2125 = vmatpush1.bf16.msra.mxu0 %v2108
        %2126 = vmatprep.subr.bf16.mxu0 0
        %2127 = vmatpush2.bf16.msra.mxu0 0
        %2128 = vmatprep.subr.bf16.mxu0 0
        %2129 = vmatpush2.bf16.msra.mxu0 0
        %2130 = vmatprep.subr.bf16.mxu0 0
        %2131 = vmatpush2.bf16.msra.mxu0 0
        %2132 = vmatprep.subr.bf16.mxu0 0
        %2133 = vmatpush2.bf16.msra.mxu0 0
        %2134 = vmatprep.subr.bf16.mxu0 0
        %2135 = vmatpush2.bf16.msra.mxu0 0
        %2136 = vmatprep.subr.bf16.mxu0 0
        %2137 = vmatpush2.bf16.msra.mxu0 0
        %2138 = vmatprep.subr.bf16.mxu0 0
        %2139 = vmatpush2.bf16.msra.mxu0 0
        %2140 = vmatprep.subr.bf16.mxu0 0
        %2141 = vmatpush2.bf16.msra.mxu0 0
        %2142 = vmatprep.mubr.bf16.mxu0 0
        %2143 = vmatmul.mubr.bf16.gmra.mxu0 %v2105
        %v2144 = vpop.f32.mrf.mxu0
        %v2145 = vadd.f32 0.0, %v2144
        %v2146 = vpop.f32.mrf.mxu0
        %v2147 = vpop.f32.mrf.mxu0
        %v2148 = vpop.f32.mrf.mxu0
        %2149 = vdwg.mxu0
        %v2150 = vadd.f32 %v1983, %v2145
        %2151 = vrot.lane.b32.xlu0 %v1664, 104
        %v2152 = vpop.permute.xlu0 %2151
        %2153 = vrot.lane.b32.xlu0 %v1665, 104
        %v2154 = vpop.permute.xlu0 %2153
        %v2156 = vsel %vm829, %v2152, 0
        %v2159 = vsel %vm829, %v2154, 0
        %2161 = vmatprep.subr.bf16.mxu0 0
        %2162 = vmatpush1.bf16.xpose.msra.mxu0 0
        %2163 = vmatprep.subr.bf16.mxu0 0
        %2164 = vmatpush1.bf16.xpose.msra.mxu0 0
        %2165 = vmatprep.subr.bf16.mxu0 0
        %2166 = vmatpush1.bf16.xpose.msra.mxu0 0
        %2167 = vmatprep.subr.bf16.mxu0 0
        %2168 = vmatpush1.bf16.xpose.msra.mxu0 0
        %2169 = vmatprep.subr.bf16.mxu0 0
        %2170 = vmatpush1.bf16.xpose.msra.mxu0 0
        %2171 = vmatprep.subr.bf16.mxu0 0
        %2172 = vmatpush1.bf16.xpose.msra.mxu0 0
        %2173 = vmatprep.subr.bf16.mxu0 0
        %2174 = vmatpush1.bf16.xpose.msra.mxu0 0
        %2175 = vmatprep.subr.bf16.mxu0 0
        %2176 = vmatpush1.bf16.xpose.msra.mxu0 %v2159
        %2177 = vmatprep.subr.bf16.mxu0 0
        %2178 = vmatpush2.bf16.xpose.msra.mxu0 0
        %2179 = vmatprep.subr.bf16.mxu0 0
        %2180 = vmatpush2.bf16.xpose.msra.mxu0 0
        %2181 = vmatprep.subr.bf16.mxu0 0
        %2182 = vmatpush2.bf16.xpose.msra.mxu0 0
        %2183 = vmatprep.subr.bf16.mxu0 0
        %2184 = vmatpush2.bf16.xpose.msra.mxu0 0
        %2185 = vmatprep.subr.bf16.mxu0 0
        %2186 = vmatpush2.bf16.xpose.msra.mxu0 0
        %2187 = vmatprep.subr.bf16.mxu0 0
        %2188 = vmatpush2.bf16.xpose.msra.mxu0 0
        %2189 = vmatprep.subr.bf16.mxu0 0
        %2190 = vmatpush2.bf16.xpose.msra.mxu0 0
        %2191 = vmatprep.subr.bf16.mxu0 0
        %2192 = vmatpush2.bf16.xpose.msra.mxu0 0
        %2193 = vmatprep.mubr.bf16.mxu0 0
        %2194 = vmatmul.mubr.bf16.gmra.mxu0 %v2156
        %v2195 = vpop.f32.mrf.mxu0
        %v2196 = vadd.f32 0.0, %v2195
        %v2197 = vpop.f32.mrf.mxu0
        %v2198 = vpop.f32.mrf.mxu0
        %v2199 = vpop.f32.mrf.mxu0
        %2200 = vdwg.mxu0
        %v2201 = vmul.f32 %v2196, 0.35355338
        %v2202 = vsel %vm829, %v2201, -inf
        %2203 = vmax.xlane.f32.xlu0 %v2202
        %v2204 = vpop.xlane.xlu0 %2203
        %vm2205 = vcmp.eq.f32.partialorder %v2204, -inf
        %v2206 = vsel %vm2205, 0.0, %v2204
        %v2207 = vsub.f32 %v2201, %v2206
        %v2208 = vmul.f32 %v2207, 1.442695
        %v2209 = vpow.pop %v2208
        %v2210 = vsel %vm829, %v2209, 0.0
        %2211 = vadd.xlane.f32.xlu0 %v2210
        %v2212 = vpop.xlane.xlu0 %2211
        %vm2213 = vcmp.eq.f32.partialorder %v2212, 0.0
        %v2214 = vsel %vm2213, 1.0, %v2212
        %v2215 = vrcp.pop %v2214
        %v2216 = vmul.f32 %v2209, %v2215
        %v2217 = vpack.c.bf16 %v2216, %v2216
        %2218 = vrot.lane.b32.xlu0 %v1665, 72
        %v2219 = vpop.permute.xlu0 %2218
        %v2221 = vsel %vm829, %v2217, 0
        %v2224 = vsel %vm905, %v2219, 0
        %2226 = vmatprep.subr.bf16.mxu0 0
        %2227 = vmatpush1.bf16.msra.mxu0 0
        %2228 = vmatprep.subr.bf16.mxu0 0
        %2229 = vmatpush1.bf16.msra.mxu0 0
        %2230 = vmatprep.subr.bf16.mxu0 0
        %2231 = vmatpush1.bf16.msra.mxu0 0
        %2232 = vmatprep.subr.bf16.mxu0 0
        %2233 = vmatpush1.bf16.msra.mxu0 0
        %2234 = vmatprep.subr.bf16.mxu0 0
        %2235 = vmatpush1.bf16.msra.mxu0 0
        %2236 = vmatprep.subr.bf16.mxu0 0
        %2237 = vmatpush1.bf16.msra.mxu0 0
        %2238 = vmatprep.subr.bf16.mxu0 0
        %2239 = vmatpush1.bf16.msra.mxu0 0
        %2240 = vmatprep.subr.bf16.mxu0 0
        %2241 = vmatpush1.bf16.msra.mxu0 %v2224
        %2242 = vmatprep.subr.bf16.mxu0 0
        %2243 = vmatpush2.bf16.msra.mxu0 0
        %2244 = vmatprep.subr.bf16.mxu0 0
        %2245 = vmatpush2.bf16.msra.mxu0 0
        %2246 = vmatprep.subr.bf16.mxu0 0
        %2247 = vmatpush2.bf16.msra.mxu0 0
        %2248 = vmatprep.subr.bf16.mxu0 0
        %2249 = vmatpush2.bf16.msra.mxu0 0
        %2250 = vmatprep.subr.bf16.mxu0 0
        %2251 = vmatpush2.bf16.msra.mxu0 0
        %2252 = vmatprep.subr.bf16.mxu0 0
        %2253 = vmatpush2.bf16.msra.mxu0 0
        %2254 = vmatprep.subr.bf16.mxu0 0
        %2255 = vmatpush2.bf16.msra.mxu0 0
        %2256 = vmatprep.subr.bf16.mxu0 0
        %2257 = vmatpush2.bf16.msra.mxu0 0
        %2258 = vmatprep.mubr.bf16.mxu0 0
        %2259 = vmatmul.mubr.bf16.gmra.mxu0 %v2221
        %v2260 = vpop.f32.mrf.mxu0
        %v2261 = vadd.f32 0.0, %v2260
        %v2262 = vpop.f32.mrf.mxu0
        %v2263 = vpop.f32.mrf.mxu0
        %v2264 = vpop.f32.mrf.mxu0
        %2265 = vdwg.mxu0
        %v2266 = vpack.c.bf16 %v2261, %v2261
        %v2268 = vsel %vm829, %v2266, 0
        %v2271 = vsel %vm905, %v1663, 0
        %2273 = vmatprep.subr.bf16.mxu0 0
        %2274 = vmatpush1.bf16.msra.mxu0 0
        %2275 = vmatprep.subr.bf16.mxu0 0
        %2276 = vmatpush1.bf16.msra.mxu0 0
        %2277 = vmatprep.subr.bf16.mxu0 0
        %2278 = vmatpush1.bf16.msra.mxu0 0
        %2279 = vmatprep.subr.bf16.mxu0 0
        %2280 = vmatpush1.bf16.msra.mxu0 0
        %2281 = vmatprep.subr.bf16.mxu0 0
        %2282 = vmatpush1.bf16.msra.mxu0 0
        %2283 = vmatprep.subr.bf16.mxu0 0
        %2284 = vmatpush1.bf16.msra.mxu0 0
        %2285 = vmatprep.subr.bf16.mxu0 0
        %2286 = vmatpush1.bf16.msra.mxu0 0
        %2287 = vmatprep.subr.bf16.mxu0 0
        %2288 = vmatpush1.bf16.msra.mxu0 %v2271
        %2289 = vmatprep.subr.bf16.mxu0 0
        %2290 = vmatpush2.bf16.msra.mxu0 0
        %2291 = vmatprep.subr.bf16.mxu0 0
        %2292 = vmatpush2.bf16.msra.mxu0 0
        %2293 = vmatprep.subr.bf16.mxu0 0
        %2294 = vmatpush2.bf16.msra.mxu0 0
        %2295 = vmatprep.subr.bf16.mxu0 0
        %2296 = vmatpush2.bf16.msra.mxu0 0
        %2297 = vmatprep.subr.bf16.mxu0 0
        %2298 = vmatpush2.bf16.msra.mxu0 0
        %2299 = vmatprep.subr.bf16.mxu0 0
        %2300 = vmatpush2.bf16.msra.mxu0 0
        %2301 = vmatprep.subr.bf16.mxu0 0
        %2302 = vmatpush2.bf16.msra.mxu0 0
        %2303 = vmatprep.subr.bf16.mxu0 0
        %2304 = vmatpush2.bf16.msra.mxu0 0
        %2305 = vmatprep.mubr.bf16.mxu0 0
        %2306 = vmatmul.mubr.bf16.gmra.mxu0 %v2268
        %v2307 = vpop.f32.mrf.mxu0
        %v2308 = vadd.f32 0.0, %v2307
        %v2309 = vpop.f32.mrf.mxu0
        %v2310 = vpop.f32.mrf.mxu0
        %v2311 = vpop.f32.mrf.mxu0
        %2312 = vdwg.mxu0
        %v2313 = vadd.f32 %v2150, %v2308
        %v2314 = vld [vmem:[%s14] sm:$0x1]
        %v2316 = vlaneseq
        %v2317 = vshrl.u32 %v2316, 7
        %v2318 = vsub.s32 0, %v2317
        %v2319 = vrot.slane %v2314, %v2318
        %v2321 = vadd.f32 %v2313, %v2319
        %v2322 = vadd.f32 %v1525, %v2321
        %v2323 = vld [vmem:[%s15] sm:$0x1]
        %v2324 = vld [vmem:[%s16] sm:$0x1]
        %v2325 = vsel %vm777, %v2322, 0.0
        %2326 = vadd.xlane.f32.xlu0 %v2325
        %v2327 = vpop.xlane.xlu0 %2326
        %v2328 = vmul.f32 %v2327, %v1501
        %v2329 = vsub.f32 %v2322, %v2328
        %v2330 = vmul.f32 %v2329, %v2329
        %v2331 = vsel %vm777, %v2330, 0.0
        %2332 = vadd.xlane.f32.xlu0 %v2331
        %v2333 = vpop.xlane.xlu0 %2332
        %v2334 = vmul.f32 %v2333, %v1501
        %v2335 = vadd.f32 %v2334, 1e-05
        %v2336 = vrsqrt.pop %v2335
        %v2337 = vmul.f32 %v2329, %v2336
        %v2339 = vlaneseq
        %v2340 = vshrl.u32 %v2339, 7
        %v2341 = vsub.s32 0, %v2340
        %v2342 = vrot.slane %v2323, %v2341
        %v2344 = vmul.f32 %v2337, %v2342
        %v2346 = vlaneseq
        %v2347 = vshrl.u32 %v2346, 7
        %v2348 = vsub.s32 0, %v2347
        %v2349 = vrot.slane %v2324, %v2348
        %v2351 = vadd.f32 %v2344, %v2349
        %v2352 = vpack.c.bf16 %v2351, %v2351
        %v2353 = vld [vmem:[%s17] sm:$0xf]
        %v2354 = vld [vmem:[%s17 + $0x4] sm:$0xf]
        %v2355 = vld [vmem:[%s17 + $0x8] sm:$0xf]
        %v2356 = vld [vmem:[%s17 + $0xc] sm:$0xf]
        %v2357 = vld [vmem:[%s18] sm:$0x1]
        %v2359 = vlaneseq
        %v2360 = vshrl.u32 %v2359, 7
        %v2361 = vsub.s32 0, %v2360
        %v2362 = vrot.slane %v2357, %v2361
        %v2368 = vunpack.c.l.b16 %v2353
        %v2369 = vunpack.c.l.b16 %v2354
        %v2370 = vunpack.c.l.b16 %v2355
        %v2371 = vunpack.c.l.b16 %v2356
        %v2372 = vpack.c.b16 %v2369, %v2368
        %v2373 = vpack.c.b16 %v2371, %v2370
        %v2377 = vsel %vm777, %v2352, 0
        %2379 = vmatprep.subr.bf16.mxu0 0
        %2380 = vmatpush1.bf16.msra.mxu0 0
        %2381 = vmatprep.subr.bf16.mxu0 0
        %2382 = vmatpush1.bf16.msra.mxu0 0
        %2383 = vmatprep.subr.bf16.mxu0 0
        %2384 = vmatpush1.bf16.msra.mxu0 0
        %2385 = vmatprep.subr.bf16.mxu0 0
        %2386 = vmatpush1.bf16.msra.mxu0 0
        %2387 = vmatprep.subr.bf16.mxu0 0
        %2388 = vmatpush1.bf16.msra.mxu0 0
        %2389 = vmatprep.subr.bf16.mxu0 0
        %2390 = vmatpush1.bf16.msra.mxu0 0
        %2391 = vmatprep.subr.bf16.mxu0 0
        %2392 = vmatpush1.bf16.msra.mxu0 %v2373
        %2393 = vmatprep.subr.bf16.mxu0 0
        %2394 = vmatpush1.bf16.msra.mxu0 %v2372
        %2395 = vmatprep.subr.bf16.mxu0 0
        %2396 = vmatpush2.bf16.msra.mxu0 0
        %2397 = vmatprep.subr.bf16.mxu0 0
        %2398 = vmatpush2.bf16.msra.mxu0 0
        %2399 = vmatprep.subr.bf16.mxu0 0
        %2400 = vmatpush2.bf16.msra.mxu0 0
        %2401 = vmatprep.subr.bf16.mxu0 0
        %2402 = vmatpush2.bf16.msra.mxu0 0
        %2403 = vmatprep.subr.bf16.mxu0 0
        %2404 = vmatpush2.bf16.msra.mxu0 0
        %2405 = vmatprep.subr.bf16.mxu0 0
        %2406 = vmatpush2.bf16.msra.mxu0 0
        %2407 = vmatprep.subr.bf16.mxu0 0
        %2408 = vmatpush2.bf16.msra.mxu0 0
        %2409 = vmatprep.subr.bf16.mxu0 0
        %2410 = vmatpush2.bf16.msra.mxu0 0
        %2411 = vmatprep.mubr.bf16.mxu0 0
        %2412 = vmatmul.mubr.bf16.gmra.mxu0 %v2377
        %v2413 = vpop.f32.mrf.mxu0
        %v2414 = vadd.f32 %v2362, %v2413
        %v2415 = vpop.f32.mrf.mxu0
        %v2416 = vpop.f32.mrf.mxu0
        %v2417 = vpop.f32.mrf.mxu0
        %2418 = vdwg.mxu0
        %v2419 = vmax.f32 %v2414, 0.0
        %v2420 = vpack.c.bf16 %v2419, %v2419
        %v2421 = vld [vmem:[%s19] sm:$0xf]
        %v2422 = vld [vmem:[%s19 + $0x4] sm:$0xf]
        %v2423 = vld [vmem:[%s19 + $0x8] sm:$0xf]
        %v2424 = vld [vmem:[%s19 + $0xc] sm:$0xf]
        %v2425 = vld [vmem:[%s19 + $0x10] sm:$0xf]
        %v2426 = vld [vmem:[%s19 + $0x14] sm:$0xf]
        %v2427 = vld [vmem:[%s19 + $0x18] sm:$0xf]
        %v2428 = vld [vmem:[%s19 + $0x1c] sm:$0xf]
        %v2429 = vld [vmem:[%s19 + $0x20] sm:$0xf]
        %v2430 = vld [vmem:[%s19 + $0x24] sm:$0xf]
        %v2431 = vld [vmem:[%s19 + $0x28] sm:$0xf]
        %v2432 = vld [vmem:[%s19 + $0x2c] sm:$0xf]
        %v2433 = vld [vmem:[%s19 + $0x30] sm:$0xf]
        %v2434 = vld [vmem:[%s19 + $0x34] sm:$0xf]
        %v2435 = vld [vmem:[%s19 + $0x38] sm:$0xf]
        %v2436 = vld [vmem:[%s19 + $0x3c] sm:$0xf]
        %v2437 = vld [vmem:[%s20] sm:$0x1]
        %v2439 = vlaneseq
        %v2440 = vshrl.u32 %v2439, 7
        %v2441 = vsub.s32 0, %v2440
        %v2442 = vrot.slane %v2437, %v2441
        %v2460 = vunpack.c.l.b16 %v2421
        %v2461 = vunpack.c.l.b16 %v2422
        %v2462 = vunpack.c.l.b16 %v2423
        %v2463 = vunpack.c.l.b16 %v2424
        %v2464 = vunpack.c.l.b16 %v2425
        %v2465 = vunpack.c.l.b16 %v2426
        %v2466 = vunpack.c.l.b16 %v2427
        %v2467 = vunpack.c.l.b16 %v2428
        %v2468 = vunpack.c.l.b16 %v2429
        %v2469 = vunpack.c.l.b16 %v2430
        %v2470 = vunpack.c.l.b16 %v2431
        %v2471 = vunpack.c.l.b16 %v2432
        %v2472 = vunpack.c.l.b16 %v2433
        %v2473 = vunpack.c.l.b16 %v2434
        %v2474 = vunpack.c.l.b16 %v2435
        %v2475 = vunpack.c.l.b16 %v2436
        %v2476 = vpack.c.b16 %v2461, %v2460
        %v2477 = vpack.c.b16 %v2463, %v2462
        %v2478 = vpack.c.b16 %v2465, %v2464
        %v2479 = vpack.c.b16 %v2467, %v2466
        %v2480 = vpack.c.b16 %v2469, %v2468
        %v2481 = vpack.c.b16 %v2471, %v2470
        %v2482 = vpack.c.b16 %v2473, %v2472
        %v2483 = vpack.c.b16 %v2475, %v2474
        %2492 = vmatprep.subr.bf16.mxu0 0
        %2493 = vmatpush1.bf16.msra.mxu0 %v2483
        %2494 = vmatprep.subr.bf16.mxu0 0
        %2495 = vmatpush1.bf16.msra.mxu0 %v2482
        %2496 = vmatprep.subr.bf16.mxu0 0
        %2497 = vmatpush1.bf16.msra.mxu0 %v2481
        %2498 = vmatprep.subr.bf16.mxu0 0
        %2499 = vmatpush1.bf16.msra.mxu0 %v2480
        %2500 = vmatprep.subr.bf16.mxu0 0
        %2501 = vmatpush1.bf16.msra.mxu0 %v2479
        %2502 = vmatprep.subr.bf16.mxu0 0
        %2503 = vmatpush1.bf16.msra.mxu0 %v2478
        %2504 = vmatprep.subr.bf16.mxu0 0
        %2505 = vmatpush1.bf16.msra.mxu0 %v2477
        %2506 = vmatprep.subr.bf16.mxu0 0
        %2507 = vmatpush1.bf16.msra.mxu0 %v2476
        %2508 = vmatprep.subr.bf16.mxu0 0
        %2509 = vmatpush2.bf16.msra.mxu0 0
        %2510 = vmatprep.subr.bf16.mxu0 0
        %2511 = vmatpush2.bf16.msra.mxu0 0
        %2512 = vmatprep.subr.bf16.mxu0 0
        %2513 = vmatpush2.bf16.msra.mxu0 0
        %2514 = vmatprep.subr.bf16.mxu0 0
        %2515 = vmatpush2.bf16.msra.mxu0 0
        %2516 = vmatprep.subr.bf16.mxu0 0
        %2517 = vmatpush2.bf16.msra.mxu0 0
        %2518 = vmatprep.subr.bf16.mxu0 0
        %2519 = vmatpush2.bf16.msra.mxu0 0
        %2520 = vmatprep.subr.bf16.mxu0 0
        %2521 = vmatpush2.bf16.msra.mxu0 0
        %2522 = vmatprep.subr.bf16.mxu0 0
        %2523 = vmatpush2.bf16.msra.mxu0 0
        %2524 = vmatprep.mubr.bf16.mxu0 0
        %2525 = vmatmul.mubr.bf16.gmra.mxu0 %v2420
        %v2526 = vpop.f32.mrf.mxu0
        %v2527 = vadd.f32 %v2442, %v2526
        %v2528 = vpop.f32.mrf.mxu0
        %v2529 = vpop.f32.mrf.mxu0
        %v2530 = vpop.f32.mrf.mxu0
        %2531 = vdwg.mxu0
        %v2532 = vadd.f32 %v2351, %v2527
        %v2533 = vld [vmem:[%s21] sm:$0x1]
        %v2534 = vld [vmem:[#allocation2] sm:$0x1]
        %v2535 = vsel %vm777, %v2532, 0.0
        %2536 = vadd.xlane.f32.xlu0 %v2535
        %v2537 = vpop.xlane.xlu0 %2536
        %v2538 = vmul.f32 %v2537, %v1501
        %v2539 = vsub.f32 %v2532, %v2538
        %v2540 = vmul.f32 %v2539, %v2539
        %v2541 = vsel %vm777, %v2540, 0.0
        %2542 = vadd.xlane.f32.xlu0 %v2541
        %v2543 = vpop.xlane.xlu0 %2542
        %v2544 = vmul.f32 %v2543, %v1501
        %v2545 = vadd.f32 %v2544, 1e-05
        %v2546 = vrsqrt.pop %v2545
        %v2547 = vmul.f32 %v2539, %v2546
        %v2549 = vlaneseq
        %v2550 = vshrl.u32 %v2549, 7
        %v2551 = vsub.s32 0, %v2550
        %v2552 = vrot.slane %v2533, %v2551
        %v2554 = vmul.f32 %v2547, %v2552
        %v2556 = vlaneseq
        %v2557 = vshrl.u32 %v2556, 7
        %v2558 = vsub.s32 0, %v2557
        %v2559 = vrot.slane %v2534, %v2558
        %v2561 = vadd.f32 %v2554, %v2559
        %v2562 = vpack.c.bf16 %v2561, %v2561
        %vm2563 = vcmask 257024
        %2564 = vst.msk [vmem:[%s749] sm:$0xf] %vm2563, %v2562
        %p2565 = scmp.lt.s32.totalorder %s35, 1
        %s2566 = scalar_select %p2565, %s35, 1
        %s2567 = smul.addr %s2566, 4
        %s2568 = scalar_lea.vmem %s23, %s2567
        // Predicated region
        $region117: #{seq2seq_trans_forward.10} parent=111 // pred_check
          %p2569 = pneg %p551
        $region118: #{seq2seq_trans_forward.10} parent=111 // pred_check_branch
          %2571 = sbr.rel (%p2569) target = $region120
        $region119: #{seq2seq_trans_forward.10} parent=111 // pred_region
          _
        $region120: #{seq2seq_trans_forward.10} parent=111 // pred_fallthru
          _
      $region112: #{seq2seq_trans_forward.10} parent=5 // pred_fallthru
        _
      %p2572 = scmp.le.s32.totalorder 2, %s30
      // Predicated region
      $region121: #{seq2seq_trans_forward.10} parent=5 // pred_check
        %p2573 = pneg %p2572
      $region122: #{seq2seq_trans_forward.10} parent=5 // pred_check_branch
        %2575 = sbr.rel (%p2573) target = $region124
      $region123: #{seq2seq_trans_forward.10} parent=5 // pred_region
        %s2576 = ssub.s32 %s30, 2
        // Predicated region
        $region125: #{seq2seq_trans_forward.10} parent=123 // pred_check
          %p2577 = pneg %p557
        $region126: #{seq2seq_trans_forward.10} parent=123 // pred_check_branch
          %2579 = sbr.rel (%p2577) target = $region128
        $region127: #{seq2seq_trans_forward.10} parent=123 // pred_region
          %p2580 = scmp.lt.s32.totalorder %s36, 1
          %s2581 = scalar_select %p2580, %s36, 1
          %s2582 = smul.addr %s2581, 4
          %s2583 = scalar_lea.vmem %s23, %s2582
        $region128: #{seq2seq_trans_forward.10} parent=123 // pred_fallthru
          _
      $region124: #{seq2seq_trans_forward.10} parent=5 // pred_fallthru
        _
    $region6: #{seq2seq_trans_forward.10} parent=1 // loop_footer
      %s34 = sadd.s32 1, %s30
    $region7: #{seq2seq_trans_forward.10} parent=1 // loop_footer_branch
      %29 = sbr.rel target = $region3
    $region8: #{seq2seq_trans_forward.10} parent=1 // loop_exit
      _
    %2584 = vsyncpa [#allocation3], 1
    %s2585 = scalar_lea.sflag [#allocation3], 1
    %2586 = vsyncpa %s2585, 1

// kernel: seq2seq_trans_forward.11
$region0: #{seq2seq_trans_forward.11}
  #allocation0 [shape = 'u32[]', space=smem, size = 0x4, offset = 0x4, fixed_abs, tag = 'smem constant byte address 0x4 - core index']
  #allocation1 [shape = 'u32[144,128]{1,0:T(1,128)}', space=vmem, size = 0x12000, scoped, tag = 'internal scratch']
  %s0 = inlined_call_operand.vmem [shape: bf16[2,8,32], index: 0, kind: input, shape index: {}]
  %s1 = inlined_call_operand.vmem [shape: f32[1,32], index: 1, kind: input, shape index: {}]
  %s2 = inlined_call_operand.vmem [shape: f32[1,32], index: 2, kind: input, shape index: {}]
  %s3 = inlined_call_operand.vmem [shape: bf16[32,17], index: 3, kind: input, shape index: {}]
  %s4 = inlined_call_operand.vmem [shape: f32[1,17], index: 4, kind: input, shape index: {}]
  %s5 = inlined_call_operand.hbm [shape: f32[2,8,17], index: 5, kind: output, shape index: {}]
  %s6 = sld [smem:[#allocation0]]
  $region53: #{seq2seq_trans_forward.11} parent=0
    _
  %s8 = ssub.s32 1, %s6
  %s9 = scalar_select 0, %s8, %s6
  $region1: #{seq2seq_trans_forward.11} parent=0
    #allocation2 [shape = 'u8[8192]{0}', space=vmem, size = 0x2000, scoped, tag = 'output window, operand 0']
    #allocation3 [shape = 's32[2]{0}', space=sflag, size = 0x8, scoped, tag = 'scoped memory for seq2seq_trans_forward.11']
    %10 = vsyncpa [#allocation3], 0
    %s11 = scalar_lea.sflag [#allocation3], 1
    %12 = vsyncpa %s11, 0
    loop: start=0, step=1, limit=4
    $region2: #{seq2seq_trans_forward.11} parent=1 // loop_pre_header
      _
    $region3: #{seq2seq_trans_forward.11} parent=1 // loop_header
      %s14 = sphi 0, %s18
      %p15 = scmp.ge.s32.totalorder %s14, 4
      %s21 = sphi 0, %s33
      %s22 = sphi 0, %s29
      %s23 = sphi 0, %s21
      %s24 = sphi 0, %s22
      %s25 = sphi 0, %s23
      %s26 = sphi 0, %s24
      %s36 = sphi 0, %s38
      %s39 = sphi 0, %s36
      %s40 = sphi 0, %s39
      %s56 = sphi 0, %s40
      %s60 = sphi 0, %s60
      %s62 = sphi 0, %s60
      %s63 = sphi 0, %s62
      %s77 = sphi 0, %s63
      %s81 = sphi 0, %s81
      %s83 = sphi 0, %s81
      %s84 = sphi 0, %s83
      %s98 = sphi 0, %s84
      %s104 = sphi 0, %s106
      %s107 = sphi 0, %s104
      %s108 = sphi 0, %s107
      %s124 = sphi 0, %s108
      %s130 = sphi 0, %s132
      %s133 = sphi 0, %s130
      %s134 = sphi 0, %s133
      %s150 = sphi 0, %s134
      %s158 = sphi 0, %s160
      %s161 = sphi 0, %s158
      %s162 = sphi 0, %s161
      %s178 = sphi 0, %s162
    $region4: #{seq2seq_trans_forward.11} parent=1 // loop_header_branch
      %17 = sbr.rel (%p15) target = $region8
    $region5: #{seq2seq_trans_forward.11} parent=1 // loop_body
      %s19 = ssub.s32 %s14, 1
      %s20 = ssub.s32 %s14, 2
      %s27 = sadd.s32 1, %s22
      %p28 = scmp.ge.s32.totalorder %s27, 1
      %s29 = scalar_select %p28, 0, %s27
      %s30 = sadd.s32 1, %s21
      %s31 = scalar_select %p28, %s30, %s21
      %p32 = scmp.ge.s32.totalorder %s31, 2
      %s33 = scalar_select %p32, 0, %s31
      %s34 = ssub.s32 %s21, %s33
      %p35 = scmp.eq.s32.totalorder %s34, 0
      %s37 = sadd.s32 %s36, 1
      %s38 = scalar_select %p35, %s36, %s37
      %p41 = pneg %p35
      %p42 = scmp.eq.s32.totalorder %s14, 1
      %p43 = por %p41, %p42
      %p44 = scmp.ne.s32.totalorder %s36, %s39
      %p45 = scmp.eq.s32.totalorder %s14, 0
      %p46 = por %p44, %p45
      %p47 = scmp.ne.s32.totalorder %s36, %s39
      %p48 = scmp.eq.s32.totalorder %s19, 1
      %p49 = por %p47, %p48
      %p50 = scmp.ne.s32.totalorder %s39, %s40
      %p51 = scmp.eq.s32.totalorder %s19, 0
      %p52 = por %p50, %p51
      %p53 = scmp.ne.s32.totalorder %s39, %s40
      %p54 = scmp.eq.s32.totalorder %s20, 1
      %p55 = por %p53, %p54
      %p57 = scmp.ne.s32.totalorder %s40, %s56
      %p58 = scmp.eq.s32.totalorder %s20, 0
      %p59 = por %p57, %p58
      %s61 = sadd.s32 %s60, 1
      %p64 = scmp.eq.s32.totalorder %s14, 1
      %p65 = scmp.ne.s32.totalorder %s60, %s62
      %p66 = scmp.eq.s32.totalorder %s14, 0
      %p67 = por %p65, %p66
      %p68 = scmp.ne.s32.totalorder %s60, %s62
      %p69 = scmp.eq.s32.totalorder %s19, 1
      %p70 = por %p68, %p69
      %p71 = scmp.ne.s32.totalorder %s62, %s63
      %p72 = scmp.eq.s32.totalorder %s19, 0
      %p73 = por %p71, %p72
      %p74 = scmp.ne.s32.totalorder %s62, %s63
      %p75 = scmp.eq.s32.totalorder %s20, 1
      %p76 = por %p74, %p75
      %p78 = scmp.ne.s32.totalorder %s63, %s77
      %p79 = scmp.eq.s32.totalorder %s20, 0
      %p80 = por %p78, %p79
      %s82 = sadd.s32 %s81, 1
      %p85 = scmp.eq.s32.totalorder %s14, 1
      %p86 = scmp.ne.s32.totalorder %s81, %s83
      %p87 = scmp.eq.s32.totalorder %s14, 0
      %p88 = por %p86, %p87
      %p89 = scmp.ne.s32.totalorder %s81, %s83
      %p90 = scmp.eq.s32.totalorder %s19, 1
      %p91 = por %p89, %p90
      %p92 = scmp.ne.s32.totalorder %s83, %s84
      %p93 = scmp.eq.s32.totalorder %s19, 0
      %p94 = por %p92, %p93
      %p95 = scmp.ne.s32.totalorder %s83, %s84
      %p96 = scmp.eq.s32.totalorder %s20, 1
      %p97 = por %p95, %p96
      %p99 = scmp.ne.s32.totalorder %s84, %s98
      %p100 = scmp.eq.s32.totalorder %s20, 0
      %p101 = por %p99, %p100
      %s102 = ssub.s32 %s22, %s29
      %p103 = scmp.eq.s32.totalorder %s102, 0
      %s105 = sadd.s32 %s104, 1
      %s106 = scalar_select %p103, %s104, %s105
      %p109 = pneg %p103
      %p110 = scmp.eq.s32.totalorder %s14, 1
      %p111 = por %p109, %p110
      %p112 = scmp.ne.s32.totalorder %s104, %s107
      %p113 = scmp.eq.s32.totalorder %s14, 0
      %p114 = por %p112, %p113
      %p115 = scmp.ne.s32.totalorder %s104, %s107
      %p116 = scmp.eq.s32.totalorder %s19, 1
      %p117 = por %p115, %p116
      %p118 = scmp.ne.s32.totalorder %s107, %s108
      %p119 = scmp.eq.s32.totalorder %s19, 0
      %p120 = por %p118, %p119
      %p121 = scmp.ne.s32.totalorder %s107, %s108
      %p122 = scmp.eq.s32.totalorder %s20, 1
      %p123 = por %p121, %p122
      %p125 = scmp.ne.s32.totalorder %s108, %s124
      %p126 = scmp.eq.s32.totalorder %s20, 0
      %p127 = por %p125, %p126
      %s128 = ssub.s32 %s22, %s29
      %p129 = scmp.eq.s32.totalorder %s128, 0
      %s131 = sadd.s32 %s130, 1
      %s132 = scalar_select %p129, %s130, %s131
      %p135 = pneg %p129
      %p136 = scmp.eq.s32.totalorder %s14, 1
      %p137 = por %p135, %p136
      %p138 = scmp.ne.s32.totalorder %s130, %s133
      %p139 = scmp.eq.s32.totalorder %s14, 0
      %p140 = por %p138, %p139
      %p141 = scmp.ne.s32.totalorder %s130, %s133
      %p142 = scmp.eq.s32.totalorder %s19, 1
      %p143 = por %p141, %p142
      %p144 = scmp.ne.s32.totalorder %s133, %s134
      %p145 = scmp.eq.s32.totalorder %s19, 0
      %p146 = por %p144, %p145
      %p147 = scmp.ne.s32.totalorder %s133, %s134
      %p148 = scmp.eq.s32.totalorder %s20, 1
      %p149 = por %p147, %p148
      %p151 = scmp.ne.s32.totalorder %s134, %s150
      %p152 = scmp.eq.s32.totalorder %s20, 0
      %p153 = por %p151, %p152
      %s154 = ssub.s32 %s21, %s33
      %s155 = ssub.s32 %s22, %s29
      %s156 = sor.u32 %s154, %s155
      %p157 = scmp.eq.s32.totalorder %s156, 0
      %s159 = sadd.s32 %s158, 1
      %s160 = scalar_select %p157, %s158, %s159
      %p163 = pneg %p157
      %p164 = scmp.eq.s32.totalorder %s14, 1
      %p165 = por %p163, %p164
      %p166 = scmp.ne.s32.totalorder %s158, %s161
      %p167 = scmp.eq.s32.totalorder %s14, 0
      %p168 = por %p166, %p167
      %p169 = scmp.ne.s32.totalorder %s158, %s161
      %p170 = scmp.eq.s32.totalorder %s19, 1
      %p171 = por %p169, %p170
      %p172 = scmp.ne.s32.totalorder %s161, %s162
      %p173 = scmp.eq.s32.totalorder %s19, 0
      %p174 = por %p172, %p173
      %p175 = scmp.ne.s32.totalorder %s161, %s162
      %p176 = scmp.eq.s32.totalorder %s20, 1
      %p177 = por %p175, %p176
      %p179 = scmp.ne.s32.totalorder %s162, %s178
      %p180 = scmp.eq.s32.totalorder %s20, 0
      %p181 = por %p179, %p180
      %p182 = scmp.le.s32.totalorder 1, %s14
      %p183 = scmp.lt.s32.totalorder %s14, 3
      %p184 = pnand %p182, %p183
      %p185 = pneg %p184
      // Predicated region
      $region9: #{seq2seq_trans_forward.11} parent=5 // pred_check
        _
      $region10: #{seq2seq_trans_forward.11} parent=5 // pred_check_branch
        %187 = sbr.rel (%p184) target = $region12
      $region11: #{seq2seq_trans_forward.11} parent=5 // pred_region
        %s188 = ssub.s32 %s14, 1
        // Predicated region
        $region13: #{seq2seq_trans_forward.11} parent=11 // pred_check
          %p189 = pneg %p73
        $region14: #{seq2seq_trans_forward.11} parent=11 // pred_check_branch
          %191 = sbr.rel (%p189) target = $region16
        $region15: #{seq2seq_trans_forward.11} parent=11 // pred_region
          _
        $region16: #{seq2seq_trans_forward.11} parent=11 // pred_fallthru
          _
        // Predicated region
        $region17: #{seq2seq_trans_forward.11} parent=11 // pred_check
          %p192 = pneg %p94
        $region18: #{seq2seq_trans_forward.11} parent=11 // pred_check_branch
          %194 = sbr.rel (%p192) target = $region20
        $region19: #{seq2seq_trans_forward.11} parent=11 // pred_region
          _
        $region20: #{seq2seq_trans_forward.11} parent=11 // pred_fallthru
          _
        // Predicated region
        $region21: #{seq2seq_trans_forward.11} parent=11 // pred_check
          %p195 = pneg %p120
        $region22: #{seq2seq_trans_forward.11} parent=11 // pred_check_branch
          %197 = sbr.rel (%p195) target = $region24
        $region23: #{seq2seq_trans_forward.11} parent=11 // pred_region
          %p198 = scmp.lt.s32.totalorder %s24, 0
          %s199 = scalar_select %p198, %s24, 0
          %s200 = smul.addr %s199, 4
          %s201 = scalar_lea.vmem %s3, %s200
        $region24: #{seq2seq_trans_forward.11} parent=11 // pred_fallthru
          _
        // Predicated region
        $region25: #{seq2seq_trans_forward.11} parent=11 // pred_check
          %p202 = pneg %p146
        $region26: #{seq2seq_trans_forward.11} parent=11 // pred_check_branch
          %204 = sbr.rel (%p202) target = $region28
        $region27: #{seq2seq_trans_forward.11} parent=11 // pred_region
          %p205 = scmp.lt.s32.totalorder %s24, 0
          %s206 = scalar_select %p205, %s24, 0
          %s207 = scalar_lea.vmem %s4, %s206
        $region28: #{seq2seq_trans_forward.11} parent=11 // pred_fallthru
          _
      $region12: #{seq2seq_trans_forward.11} parent=5 // pred_fallthru
        _
      %p208 = scmp.lt.s32.totalorder %s14, 2
      // Predicated region
      $region29: #{seq2seq_trans_forward.11} parent=5 // pred_check
        %p209 = pneg %p208
      $region30: #{seq2seq_trans_forward.11} parent=5 // pred_check_branch
        %211 = sbr.rel (%p209) target = $region32
      $region31: #{seq2seq_trans_forward.11} parent=5 // pred_region
        // Predicated region
        $region33: #{seq2seq_trans_forward.11} parent=31 // pred_check
          %p212 = pneg %p46
        $region34: #{seq2seq_trans_forward.11} parent=31 // pred_check_branch
          %214 = sbr.rel (%p212) target = $region36
        $region35: #{seq2seq_trans_forward.11} parent=31 // pred_region
          %p215 = scmp.lt.s32.totalorder %s21, 1
          %s216 = scalar_select %p215, %s21, 1
          %s217 = smul.addr %s216, 4
          %s218 = scalar_lea.vmem %s0, %s217
        $region36: #{seq2seq_trans_forward.11} parent=31 // pred_fallthru
          _
      $region32: #{seq2seq_trans_forward.11} parent=5 // pred_fallthru
        _
      %p219 = scmp.le.s32.totalorder 1, %s14
      %p220 = scmp.lt.s32.totalorder %s14, 3
      %p221 = pnand %p219, %p220
      %p222 = pneg %p221
      // Predicated region
      $region37: #{seq2seq_trans_forward.11} parent=5 // pred_check
        _
      $region38: #{seq2seq_trans_forward.11} parent=5 // pred_check_branch
        %224 = sbr.rel (%p221) target = $region40
      $region39: #{seq2seq_trans_forward.11} parent=5 // pred_region
        %s225 = ssub.s32 %s14, 1
        %p226 = scmp.lt.s32.totalorder %s23, 1
        %s227 = scalar_select %p226, %s23, 1
        %s228 = smul.addr %s227, 4
        %s229 = scalar_lea.vmem %s0, %s228
        %p230 = pneg %p52
        %p231 = pneg %p49
        %p232 = pneg %p73
        %p233 = pneg %p70
        %p234 = pneg %p94
        %p235 = pneg %p91
        %p236 = scmp.lt.s32.totalorder %s24, 0
        %s237 = scalar_select %p236, %s24, 0
        %s238 = smul.addr %s237, 4
        %s239 = scalar_lea.vmem %s3, %s238
        %p240 = pneg %p120
        %p241 = pneg %p117
        %p242 = scmp.lt.s32.totalorder %s24, 0
        %s243 = scalar_select %p242, %s24, 0
        %s244 = scalar_lea.vmem %s4, %s243
        %p245 = pneg %p146
        %p246 = pneg %p143
        %p247 = pneg %p174
        %p248 = pneg %p171
        %s249 = sand.u32 %s161, 1
        %s250 = scalar_lea.sflag [#allocation3], %s249
        %s251 = sand.u32 %s161, 1
        %s252 = smul.addr %s251, 8
        %s253 = scalar_lea.vmem [#allocation2], %s252
        %p254 = scmp.lt.s32.totalorder %s23, 1
        %s255 = scalar_select %p254, %s23, 1
        %s256 = smul.addr %s255, 4
        %s257 = scalar_lea.vmem %s0, %s256
        %p258 = scmp.lt.s32.totalorder %s24, 0
        %s259 = scalar_select %p258, %s24, 0
        %s260 = smul.addr %s259, 4
        %s261 = scalar_lea.vmem %s3, %s260
        %p262 = scmp.lt.s32.totalorder %s24, 0
        %s263 = scalar_select %p262, %s24, 0
        %s264 = scalar_lea.vmem %s4, %s263
        %v266 = vld [vmem:[%s257] sm:$0xf]
        %v267 = vunpack.c.l.bf16 %v266
        %v268 = vld [vmem:[%s1] sm:$0x1]
        %v269 = vld [vmem:[%s2] sm:$0x1]
        %vm270 = vcmask 261120
        %v271 = vsel %vm270, %v267, 0.0
        %272 = vadd.xlane.f32.xlu0 %v271
        %v273 = vpop.xlane.xlu0 %272
        %v274 = vrcp.pop 32.0
        %v275 = vmul.f32 %v273, %v274
        %v276 = vsub.f32 %v267, %v275
        %v277 = vmul.f32 %v276, %v276
        %v278 = vsel %vm270, %v277, 0.0
        %279 = vadd.xlane.f32.xlu0 %v278
        %v280 = vpop.xlane.xlu0 %279
        %v281 = vmul.f32 %v280, %v274
        %v282 = vadd.f32 %v281, 1e-05
        %v283 = vrsqrt.pop %v282
        %v284 = vmul.f32 %v276, %v283
        %v286 = vlaneseq
        %v287 = vshrl.u32 %v286, 7
        %v288 = vsub.s32 0, %v287
        %v289 = vrot.slane %v268, %v288
        %v291 = vmul.f32 %v284, %v289
        %v293 = vlaneseq
        %v294 = vshrl.u32 %v293, 7
        %v295 = vsub.s32 0, %v294
        %v296 = vrot.slane %v269, %v295
        %v298 = vadd.f32 %v291, %v296
        %v299 = vpack.c.bf16 %v298, %v298
        %v300 = vld [vmem:[%s261] sm:$0xf]
        %v301 = vld [vmem:[%s261 + $0x4] sm:$0xf]
        %v302 = vld [vmem:[%s261 + $0x8] sm:$0xf]
        %v303 = vld [vmem:[%s261 + $0xc] sm:$0xf]
        %v304 = vld [vmem:[%s264] sm:$0x1]
        %v306 = vlaneseq
        %v307 = vshrl.u32 %v306, 7
        %v308 = vsub.s32 0, %v307
        %v309 = vrot.slane %v304, %v308
        %v315 = vunpack.c.l.b16 %v300
        %v316 = vunpack.c.l.b16 %v301
        %v317 = vunpack.c.l.b16 %v302
        %v318 = vunpack.c.l.b16 %v303
        %v319 = vpack.c.b16 %v316, %v315
        %v320 = vpack.c.b16 %v318, %v317
        %v324 = vsel %vm270, %v299, 0
        %326 = vmatprep.subr.bf16.mxu0 0
        %327 = vmatpush1.bf16.msra.mxu0 0
        %328 = vmatprep.subr.bf16.mxu0 0
        %329 = vmatpush1.bf16.msra.mxu0 0
        %330 = vmatprep.subr.bf16.mxu0 0
        %331 = vmatpush1.bf16.msra.mxu0 0
        %332 = vmatprep.subr.bf16.mxu0 0
        %333 = vmatpush1.bf16.msra.mxu0 0
        %334 = vmatprep.subr.bf16.mxu0 0
        %335 = vmatpush1.bf16.msra.mxu0 0
        %336 = vmatprep.subr.bf16.mxu0 0
        %337 = vmatpush1.bf16.msra.mxu0 0
        %338 = vmatprep.subr.bf16.mxu0 0
        %339 = vmatpush1.bf16.msra.mxu0 %v320
        %340 = vmatprep.subr.bf16.mxu0 0
        %341 = vmatpush1.bf16.msra.mxu0 %v319
        %342 = vmatprep.subr.bf16.mxu0 0
        %343 = vmatpush2.bf16.msra.mxu0 0
        %344 = vmatprep.subr.bf16.mxu0 0
        %345 = vmatpush2.bf16.msra.mxu0 0
        %346 = vmatprep.subr.bf16.mxu0 0
        %347 = vmatpush2.bf16.msra.mxu0 0
        %348 = vmatprep.subr.bf16.mxu0 0
        %349 = vmatpush2.bf16.msra.mxu0 0
        %350 = vmatprep.subr.bf16.mxu0 0
        %351 = vmatpush2.bf16.msra.mxu0 0
        %352 = vmatprep.subr.bf16.mxu0 0
        %353 = vmatpush2.bf16.msra.mxu0 0
        %354 = vmatprep.subr.bf16.mxu0 0
        %355 = vmatpush2.bf16.msra.mxu0 0
        %356 = vmatprep.subr.bf16.mxu0 0
        %357 = vmatpush2.bf16.msra.mxu0 0
        %358 = vmatprep.mubr.bf16.mxu0 0
        %359 = vmatmul.mubr.bf16.gmra.mxu0 %v324
        %v360 = vpop.f32.mrf.mxu0
        %v361 = vadd.f32 %v309, %v360
        %v362 = vpop.f32.mrf.mxu0
        %v363 = vpop.f32.mrf.mxu0
        %v364 = vpop.f32.mrf.mxu0
        %365 = vdwg.mxu0
        %vm366 = vcmask 138240
        %367 = vst.msk [vmem:[%s253] sm:$0xff] %vm366, %v361
        %s368 = sand.u32 %s161, 1
        %s369 = scalar_lea.sflag [#allocation3], %s368
        %s370 = sand.u32 %s161, 1
        %s371 = smul.addr %s370, 8
        %s372 = scalar_lea.vmem [#allocation2], %s371
        // Predicated region
        $region41: #{seq2seq_trans_forward.11} parent=39 // pred_check
          %p373 = pneg %p171
        $region42: #{seq2seq_trans_forward.11} parent=39 // pred_check_branch
          %375 = sbr.rel (%p373) target = $region44
        $region43: #{seq2seq_trans_forward.11} parent=39 // pred_region
          %s377 = ssub.s32 128, 128
          %378 = vsyncadd %s369, %s377
          %s379 = sadd.s32 %s24, %s23
          %s380 = smul.addr %s379, 128
          %s381 = scalar_lea.hbm %s5, %s380
          %s383 = sshll.u32 %s372, 4
          %s384 = int_to_ptr.vmem [resolvable:$true] %s383
          %386 = dma.vmem_to_hbm [thread:$0]  %s384, 128, %s381, %s369
        $region44: #{seq2seq_trans_forward.11} parent=39 // pred_fallthru
          _
      $region40: #{seq2seq_trans_forward.11} parent=5 // pred_fallthru
        _
      %p387 = scmp.le.s32.totalorder 2, %s14
      // Predicated region
      $region45: #{seq2seq_trans_forward.11} parent=5 // pred_check
        %p388 = pneg %p387
      $region46: #{seq2seq_trans_forward.11} parent=5 // pred_check_branch
        %390 = sbr.rel (%p388) target = $region48
      $region47: #{seq2seq_trans_forward.11} parent=5 // pred_region
        %s391 = ssub.s32 %s14, 2
        // Predicated region
        $region49: #{seq2seq_trans_forward.11} parent=47 // pred_check
          %p392 = pneg %p177
        $region50: #{seq2seq_trans_forward.11} parent=47 // pred_check_branch
          %394 = sbr.rel (%p392) target = $region52
        $region51: #{seq2seq_trans_forward.11} parent=47 // pred_region
          %s395 = sand.u32 %s162, 1
          %s396 = scalar_lea.sflag [#allocation3], %s395
          %s397 = sand.u32 %s162, 1
          %s398 = smul.addr %s397, 8
          %s399 = scalar_lea.vmem [#allocation2], %s398
          %400 = dma.done %s396, 128
        $region52: #{seq2seq_trans_forward.11} parent=47 // pred_fallthru
          _
      $region48: #{seq2seq_trans_forward.11} parent=5 // pred_fallthru
        _
    $region6: #{seq2seq_trans_forward.11} parent=1 // loop_footer
      %s18 = sadd.s32 1, %s14
    $region7: #{seq2seq_trans_forward.11} parent=1 // loop_footer_branch
      %13 = sbr.rel target = $region3
    $region8: #{seq2seq_trans_forward.11} parent=1 // loop_exit
      _
    %401 = vsyncpa [#allocation3], 1
    %s402 = scalar_lea.sflag [#allocation3], 1
    %403 = vsyncpa %s402, 1

</llo_original>
